<compile_context>
chip_gen: v7x
topology: tpu7x:2x2x1
jax: 0.10.0
libtpu: 0.0.40
codegen_flags: <defaults>
</compile_context>

<pallas_src>
import math

import jax
import jax.numpy as jnp
from jax.experimental import pallas as pl
from jax.experimental.pallas import tpu as pltpu


# ------------------------------ helpers ------------------------------

def _round_up(x, m):
    return ((x + m - 1) // m) * m


def _erf_approx(x):
    """erf(x) via Abramowitz & Stegun 7.1.26 (max abs error ~1.5e-7).

    The inner divide is offloaded to the EUP via pl.reciprocal(approx=True); everything
    else is VPU ops with guaranteed Mosaic lowering (abs/mul/add/exp/where).
    """
    a1 = jnp.float32(0.254829592)
    a2 = jnp.float32(-0.284496736)
    a3 = jnp.float32(1.421413741)
    a4 = jnp.float32(-1.453152027)
    a5 = jnp.float32(1.061405429)
    p = jnp.float32(0.3275911)
    ax = jnp.abs(x)
    t = pl.reciprocal(1.0 + p * ax, approx=True)   # EUP slot, frees VALU ops
    poly = ((((a5 * t + a4) * t + a3) * t + a2) * t + a1) * t
    y = 1.0 - poly * jnp.exp(-ax * ax)
    return jnp.where(x >= 0, y, -y)


_INV_SQRT2 = 1.0 / math.sqrt(2.0)


def _gelu_exact(x):
    # Exact (erf-based) GELU, matching torch.nn.functional.gelu default semantics.
    return 0.5 * x * (1.0 + _erf_approx(x * jnp.float32(_INV_SQRT2)))


# ----------------------------- Pallas kernel -----------------------------

def _fourier_mlp_kernel(coord_ref, bscaled_ref, *refs):
    """One row tile, feature-major: fourier map -> (Linear+GELU)* -> Linear -> sigmoid.

    refs = (w0, w1, ..., w_last, b_packed, out).  Weights are bf16 (out, in); activations
    are cast to bf16 right before each MXU dot; accumulation + elementwise stay f32.
    """
    out_ref = refs[-1]
    b_ref = refs[-2]
    w_refs = refs[:-2]
    n_layers = len(w_refs)

    xt = coord_ref[...].astype(jnp.float32)          # (cdim, TM), rows in lanes
    cdim = xt.shape[0]
    bsc = bscaled_ref[...]                           # (mapping, cdim) = 2*pi*B

    # Fourier projection on the VPU (degenerate K=cdim matmul not worth the MXU).
    proj = bsc[:, 0:1] * xt[0:1, :]                  # (mapping, TM)
    for c in range(1, cdim):
        proj = proj + bsc[:, c:c + 1] * xt[c:c + 1, :]

    # concat([sin, cos]) along the SUBLANE axis (mapping is 8-aligned -> cheap copy),
    # so layer 0 is a single K=2*mapping matmul against the original W0.
    h = jnp.concatenate([jnp.sin(proj), jnp.cos(proj)], axis=0)   # (2*mapping, TM) f32

    b_all = b_ref[...]                               # (Cmax, n_layers) f32
    for li in range(n_layers):
        w = w_refs[li][...]                          # (out, in) bf16
        out_dim = w.shape[0]
        b = b_all[:out_dim, li:li + 1]               # (out, 1) f32
        h = jnp.dot(w, h.astype(jnp.bfloat16),
                    preferred_element_type=jnp.float32) + b
        if li < n_layers - 1:
            h = _gelu_exact(h)
        else:
            h = jax.nn.sigmoid(h)
    out_ref[...] = h.astype(out_ref.dtype)           # (out_dim, TM): lane-dense store


def fourier_mlp_forward(coords_t, b_scaled, weights_bf16, b_packed, *, tile_m=4096):
    """coords_t: (coord_dim, N) f32 (rows in lanes).  Returns (out_dim, N) f32."""
    cdim, N = coords_t.shape
    out_dim = weights_bf16[-1].shape[0]

    # Keep >=4 grid steps for mid/large N (prefetch/writeback overlap + room to shard
    # across v7x's 2 TensorCores) while TM >= 512 amortizes the ~0.35us per-step cost.
    tm = max(512, min(int(tile_m), _round_up(pl.cdiv(N, 8), 128)))
    n_pad = _round_up(N, tm)
    if n_pad != N:
        coords_t = jnp.pad(coords_t, ((0, 0), (0, n_pad - N)))
    grid = (n_pad // tm,)

    in_specs = [
        pl.BlockSpec((cdim, tm), lambda i: (0, i)),          # coords tile (rows in lanes)
        pl.BlockSpec(b_scaled.shape, lambda i: (0, 0)),      # 2*pi*B (full, resident)
    ]
    args = [coords_t, b_scaled]
    for w in weights_bf16:
        in_specs.append(pl.BlockSpec(w.shape, lambda i: (0, 0)))
        args.append(w)
    in_specs.append(pl.BlockSpec(b_packed.shape, lambda i: (0, 0)))
    args.append(b_packed)

    out_spec = pl.BlockSpec((out_dim, tm), lambda i: (0, i))  # lane-dense output tile

    # Advisory cost estimate so XLA schedules neighbors around a correctly-sized call.
    mapping = b_scaled.shape[0]
    flops_row = 2 * cdim * mapping
    trans_row = 2 * mapping
    for w in weights_bf16:
        flops_row += 2 * w.shape[0] * w.shape[1]
        trans_row += 2 * w.shape[0]                    # exp + reciprocal per gelu/sigmoid
    param_bytes = sum(int(a.size) * a.dtype.itemsize for a in args[1:])
    cost = pl.CostEstimate(
        flops=int(flops_row) * N,
        transcendentals=int(trans_row) * N,
        bytes_accessed=(cdim + out_dim) * 4 * N + param_bytes,
    )

    # TODO(synk): on v7x, confirm "parallel" actually shards the 1-D row grid across
    #             both TensorCores; otherwise add an explicit CORE_PARALLEL leading axis.
    out_t = pl.pallas_call(
        _fourier_mlp_kernel,
        out_shape=jax.ShapeDtypeStruct((out_dim, n_pad), jnp.float32),
        grid_spec=pltpu.PrefetchScalarGridSpec(
            num_scalar_prefetch=0,
            grid=grid,
            in_specs=in_specs,
            out_specs=out_spec,
        ),
        compiler_params=pltpu.CompilerParams(
            dimension_semantics=("parallel",),
            vmem_limit_bytes=32 * 1024 * 1024),
        cost_estimate=cost,
    )(*args)
    return out_t[:, :N]


# -------------------------- module-level wrapper --------------------------

class TransformFourierNetworkPallas:
    """JAX/Pallas re-implementation of TransformFourierNetwork (sample_idx=None path)."""

    def __init__(self, input_dim, num_layers, num_channels, num_samples,
                 coordinate_dim=2, key=jax.random.PRNGKey(0)):
        self.input_dim = input_dim
        self.coordinate_dim = coordinate_dim
        mapping_size = input_dim // 2

        n_keys = 1 + 2 * num_layers + num_samples * coordinate_dim
        keys = list(jax.random.split(key, n_keys))
        kit = iter(keys)

        # B = randn(mapping_size, coordinate_dim) * 10   (get_B_gauss)
        self.B = jax.random.normal(next(kit), (mapping_size, coordinate_dim),
                                   dtype=jnp.float32) * 10.0
        # 2*pi folded into B on host so the kernel never re-multiplies it.
        self.B_scaled = (2.0 * math.pi) * self.B

        # Linear stack: input_dim -> C -> ... -> C -> 3.  Weights kept in PyTorch
        # (out, in) layout, which is exactly what the feature-major kernel consumes.
        dims = [input_dim] + [num_channels] * (num_layers - 1) + [3]
        self.weights = []
        self.biases = []
        for li in range(num_layers):
            fan_in, fan_out = dims[li], dims[li + 1]
            bound = 1.0 / math.sqrt(fan_in)
            w = jax.random.uniform(next(kit), (fan_out, fan_in),
                                   minval=-bound, maxval=bound, dtype=jnp.float32)
            b = jax.random.uniform(next(kit), (fan_out, 1),
                                   minval=-bound, maxval=bound, dtype=jnp.float32)
            self.weights.append(w)
            self.biases.append(b)

        # bf16 weights feed the MXU; accumulation stays f32 in-kernel.
        self.weights_bf16 = [w.astype(jnp.bfloat16) for w in self.weights]

        # Pack all biases into a single (Cmax, num_layers) f32 array (one kernel input;
        # bias for layer li is column li, zero-padded on the sublane axis).
        c_max = max(w.shape[0] for w in self.weights)
        b_packed = jnp.zeros((c_max, num_layers), jnp.float32)
        for li, b in enumerate(self.biases):
            b_packed = b_packed.at[:b.shape[0], li].set(b[:, 0])
        self.b_packed = b_packed

        # Unused in the sample_idx=None forward path; kept for parity with __init__.
        self.learnable_transform_scale = jnp.ones((1,), jnp.float32)
        self.transform_vectors = []
        for i in range(num_samples):
            row = []
            for _ in range(coordinate_dim):
                k = next(kit)
                row.append(jnp.zeros((1,), jnp.float32) if i == 0
                           else (jax.random.normal(k, (1,)) - 0.5) * 0.01)
            self.transform_vectors.append(row)

    def __call__(self, x):
        # x: (B, H, W, coordinate_dim)
        Bn, H, W, cdim = x.shape
        assert cdim == self.coordinate_dim
        coords_t = x.reshape(Bn * H * W, cdim).astype(jnp.float32).T   # (cdim, N)
        out_t = fourier_mlp_forward(coords_t, self.B_scaled,
                                    self.weights_bf16, self.b_packed)
        out = out_t.T.reshape(Bn, H, W, 3)
        return out, None

    # pure-JAX reference: independent XLA path (einsum, concat on last dim, exact erf /
    # sigmoid); matmuls use the same bf16-operand / f32-accumulation precision as the
    # kernel's MXU dots so precision choices are matched, not hidden.
    def reference(self, x):
        proj = 2.0 * jnp.pi * jnp.einsum('bhwc,mc->bhwm', x, self.B)
        h = jnp.concatenate([jnp.sin(proj), jnp.cos(proj)], axis=-1)
        n = len(self.weights)
        for li in range(n):
            w_bf = self.weights[li].astype(jnp.bfloat16)
            h = jnp.dot(h.astype(jnp.bfloat16), w_bf.T,
                        preferred_element_type=jnp.float32) + self.biases[li][:, 0]
            if li < n - 1:
                h = 0.5 * h * (1.0 + jax.scipy.special.erf(h / jnp.sqrt(2.0)))
            else:
                h = jax.nn.sigmoid(h)
        return h


# --------------------------------- main ----------------------------------

if __name__ == "__main__":
    key = jax.random.PRNGKey(0)
    k_param, k_x = jax.random.split(key)

    input_dim = 64          # -> mapping_size = 32
    num_layers = 4
    num_channels = 64
    num_samples = 3
    coordinate_dim = 2
    Bn, H, W = 2, 32, 32    # N = 2048 rows -> 4 row tiles of 512

    net = TransformFourierNetworkPallas(
        input_dim, num_layers, num_channels, num_samples,
        coordinate_dim=coordinate_dim, key=k_param)

    x = jax.random.uniform(k_x, (Bn, H, W, coordinate_dim), dtype=jnp.float32)

    out, _ = net(x)
    out = jax.block_until_ready(out)

    ref = jax.block_until_ready(net.reference(x))
    assert out.shape == (Bn, H, W, 3)
    # Tolerance covers the ~1.5e-7 in-kernel erf polynomial, the EUP approximate
    # reciprocal, and bf16 rounding-boundary divergence between the two bf16/f32 paths.
    err = jnp.max(jnp.abs(out - ref))
    assert jnp.allclose(out, ref, atol=5e-3, rtol=5e-3), \
        f"mismatch: max abs err {err}"

    print("KERNEL_OK")
</pallas_src>

<mosaic_0001>
module attributes {stable_mosaic.version = 11 : i64} {
  func.func @_fourier_mlp_kernel(%arg0: i32, %arg1: memref<2x512xf32, #tpu.memory_space<vmem>>, %arg2: memref<32x2xf32, #tpu.memory_space<vmem>>, %arg3: memref<64x64xbf16, #tpu.memory_space<vmem>>, %arg4: memref<64x64xbf16, #tpu.memory_space<vmem>>, %arg5: memref<64x64xbf16, #tpu.memory_space<vmem>>, %arg6: memref<3x64xbf16, #tpu.memory_space<vmem>>, %arg7: memref<64x4xf32, #tpu.memory_space<vmem>>, %arg8: memref<3x512xf32, #tpu.memory_space<vmem>>) attributes {dimension_semantics = [#tpu.dimension_semantics<parallel>], iteration_bounds = array<i64: 4>, scalar_prefetch = 0 : i64, scratch_operands = 0 : i64, tpu.core_type = #tpu.core_type<tc>, window_params = [{transform_indices = @transform_0, window_bounds = array<i64: 2, 512>}, {pipeline_mode = #tpu.pipeline_mode<synchronous>, transform_indices = @transform_1, window_bounds = array<i64: 32, 2>}, {pipeline_mode = #tpu.pipeline_mode<synchronous>, transform_indices = @transform_2, window_bounds = array<i64: 64, 64>}, {pipeline_mode = #tpu.pipeline_mode<synchronous>, transform_indices = @transform_3, window_bounds = array<i64: 64, 64>}, {pipeline_mode = #tpu.pipeline_mode<synchronous>, transform_indices = @transform_4, window_bounds = array<i64: 64, 64>}, {pipeline_mode = #tpu.pipeline_mode<synchronous>, transform_indices = @transform_5, window_bounds = array<i64: 3, 64>}, {pipeline_mode = #tpu.pipeline_mode<synchronous>, transform_indices = @transform_6, window_bounds = array<i64: 64, 4>}, {transform_indices = @transform_7, window_bounds = array<i64: 3, 512>}]} {
    %c0 = arith.constant 0 : index
    %c0_0 = arith.constant 0 : index
    %0 = vector.load %arg1[%c0, %c0_0] : memref<2x512xf32, #tpu.memory_space<vmem>>, vector<2x512xf32>
    %c0_1 = arith.constant 0 : index
    %c0_2 = arith.constant 0 : index
    %1 = vector.load %arg2[%c0_1, %c0_2] : memref<32x2xf32, #tpu.memory_space<vmem>>, vector<32x2xf32>
    %2 = vector.extract_strided_slice %1 {offsets = [0, 0], sizes = [32, 1], strides = [1, 1]} : vector<32x2xf32> to vector<32x1xf32>
    %3 = vector.extract_strided_slice %0 {offsets = [0, 0], sizes = [1, 512], strides = [1, 1]} : vector<2x512xf32> to vector<1x512xf32>
    %4 = vector.broadcast %2 : vector<32x1xf32> to vector<32x512xf32>
    %5 = vector.broadcast %3 : vector<1x512xf32> to vector<32x512xf32>
    %6 = arith.mulf %4, %5 : vector<32x512xf32>
    %7 = vector.extract_strided_slice %1 {offsets = [0, 1], sizes = [32, 1], strides = [1, 1]} : vector<32x2xf32> to vector<32x1xf32>
    %8 = vector.extract_strided_slice %0 {offsets = [1, 0], sizes = [1, 512], strides = [1, 1]} : vector<2x512xf32> to vector<1x512xf32>
    %9 = vector.broadcast %7 : vector<32x1xf32> to vector<32x512xf32>
    %10 = vector.broadcast %8 : vector<1x512xf32> to vector<32x512xf32>
    %11 = arith.mulf %9, %10 : vector<32x512xf32>
    %12 = arith.addf %6, %11 : vector<32x512xf32>
    %13 = math.sin %12 : vector<32x512xf32>
    %14 = math.cos %12 : vector<32x512xf32>
    %15 = tpu.concatenate %13, %14 in 0 : vector<32x512xf32>, vector<32x512xf32> -> vector<64x512xf32>
    %c0_3 = arith.constant 0 : index
    %c0_4 = arith.constant 0 : index
    %16 = vector.load %arg7[%c0_3, %c0_4] : memref<64x4xf32, #tpu.memory_space<vmem>>, vector<64x4xf32>
    %c0_5 = arith.constant 0 : index
    %c0_6 = arith.constant 0 : index
    %17 = vector.load %arg3[%c0_5, %c0_6] : memref<64x64xbf16, #tpu.memory_space<vmem>>, vector<64x64xbf16>
    %18 = vector.extract_strided_slice %16 {offsets = [0, 0], sizes = [64, 1], strides = [1, 1]} : vector<64x4xf32> to vector<64x1xf32>
    %19 = arith.truncf %15 : vector<64x512xf32> to vector<64x512xbf16>
    %cst = arith.constant dense<0.000000e+00> : vector<64x512xf32>
    %20 = tpu.matmul %17, %19, %cst {dimension_numbers = #tpu.dot_dimension_numbers<[1], [0], [0], [1], [0, 0, 1, 1], [], []>} : vector<64x64xbf16>, vector<64x512xbf16>, vector<64x512xf32> -> vector<64x512xf32>
    %21 = vector.broadcast %18 : vector<64x1xf32> to vector<64x512xf32>
    %22 = arith.addf %20, %21 : vector<64x512xf32>
    %cst_7 = arith.constant 5.000000e-01 : f32
    %23 = vector.broadcast %cst_7 : f32 to vector<64x512xf32>
    %24 = arith.mulf %23, %22 : vector<64x512xf32>
    %cst_8 = arith.constant 0.707106769 : f32
    %25 = vector.broadcast %cst_8 : f32 to vector<64x512xf32>
    %26 = arith.mulf %22, %25 : vector<64x512xf32>
    %27 = math.absf %26 : vector<64x512xf32>
    %cst_9 = arith.constant 0.327591091 : f32
    %28 = vector.broadcast %cst_9 : f32 to vector<64x512xf32>
    %29 = arith.mulf %28, %27 : vector<64x512xf32>
    %cst_10 = arith.constant 1.000000e+00 : f32
    %30 = vector.broadcast %cst_10 : f32 to vector<64x512xf32>
    %31 = arith.addf %30, %29 : vector<64x512xf32>
    %32 = tpu.reciprocal %31 {approx = true} : vector<64x512xf32> -> vector<64x512xf32>
    %cst_11 = arith.constant 1.06140542 : f32
    %33 = vector.broadcast %cst_11 : f32 to vector<64x512xf32>
    %34 = arith.mulf %33, %32 : vector<64x512xf32>
    %cst_12 = arith.constant -1.45315206 : f32
    %35 = vector.broadcast %cst_12 : f32 to vector<64x512xf32>
    %36 = arith.addf %34, %35 : vector<64x512xf32>
    %37 = arith.mulf %36, %32 : vector<64x512xf32>
    %cst_13 = arith.constant 1.42141378 : f32
    %38 = vector.broadcast %cst_13 : f32 to vector<64x512xf32>
    %39 = arith.addf %37, %38 : vector<64x512xf32>
    %40 = arith.mulf %39, %32 : vector<64x512xf32>
    %cst_14 = arith.constant -0.284496725 : f32
    %41 = vector.broadcast %cst_14 : f32 to vector<64x512xf32>
    %42 = arith.addf %40, %41 : vector<64x512xf32>
    %43 = arith.mulf %42, %32 : vector<64x512xf32>
    %cst_15 = arith.constant 0.254829586 : f32
    %44 = vector.broadcast %cst_15 : f32 to vector<64x512xf32>
    %45 = arith.addf %43, %44 : vector<64x512xf32>
    %46 = arith.mulf %45, %32 : vector<64x512xf32>
    %cst_16 = arith.constant 0.000000e+00 : f32
    %47 = vector.broadcast %cst_16 : f32 to vector<64x512xf32>
    %48 = arith.subf %47, %27 : vector<64x512xf32>
    %49 = arith.mulf %48, %27 : vector<64x512xf32>
    %50 = math.exp %49 : vector<64x512xf32>
    %51 = arith.mulf %46, %50 : vector<64x512xf32>
    %cst_17 = arith.constant 1.000000e+00 : f32
    %52 = vector.broadcast %cst_17 : f32 to vector<64x512xf32>
    %53 = arith.subf %52, %51 : vector<64x512xf32>
    %cst_18 = arith.constant 0.000000e+00 : f32
    %54 = vector.broadcast %cst_18 : f32 to vector<64x512xf32>
    %55 = arith.cmpf oge, %26, %54 : vector<64x512xf32>
    %cst_19 = arith.constant 0.000000e+00 : f32
    %56 = vector.broadcast %cst_19 : f32 to vector<64x512xf32>
    %57 = arith.subf %56, %53 : vector<64x512xf32>
    %58 = arith.select %55, %53, %57 : vector<64x512xi1>, vector<64x512xf32>
    %cst_20 = arith.constant 1.000000e+00 : f32
    %59 = vector.broadcast %cst_20 : f32 to vector<64x512xf32>
    %60 = arith.addf %59, %58 : vector<64x512xf32>
    %61 = arith.mulf %24, %60 : vector<64x512xf32>
    %c0_21 = arith.constant 0 : index
    %c0_22 = arith.constant 0 : index
    %62 = vector.load %arg4[%c0_21, %c0_22] : memref<64x64xbf16, #tpu.memory_space<vmem>>, vector<64x64xbf16>
    %63 = vector.extract_strided_slice %16 {offsets = [0, 1], sizes = [64, 1], strides = [1, 1]} : vector<64x4xf32> to vector<64x1xf32>
    %64 = arith.truncf %61 : vector<64x512xf32> to vector<64x512xbf16>
    %cst_23 = arith.constant dense<0.000000e+00> : vector<64x512xf32>
    %65 = tpu.matmul %62, %64, %cst_23 {dimension_numbers = #tpu.dot_dimension_numbers<[1], [0], [0], [1], [0, 0, 1, 1], [], []>} : vector<64x64xbf16>, vector<64x512xbf16>, vector<64x512xf32> -> vector<64x512xf32>
    %66 = vector.broadcast %63 : vector<64x1xf32> to vector<64x512xf32>
    %67 = arith.addf %65, %66 : vector<64x512xf32>
    %cst_24 = arith.constant 5.000000e-01 : f32
    %68 = vector.broadcast %cst_24 : f32 to vector<64x512xf32>
    %69 = arith.mulf %68, %67 : vector<64x512xf32>
    %cst_25 = arith.constant 0.707106769 : f32
    %70 = vector.broadcast %cst_25 : f32 to vector<64x512xf32>
    %71 = arith.mulf %67, %70 : vector<64x512xf32>
    %72 = math.absf %71 : vector<64x512xf32>
    %cst_26 = arith.constant 0.327591091 : f32
    %73 = vector.broadcast %cst_26 : f32 to vector<64x512xf32>
    %74 = arith.mulf %73, %72 : vector<64x512xf32>
    %cst_27 = arith.constant 1.000000e+00 : f32
    %75 = vector.broadcast %cst_27 : f32 to vector<64x512xf32>
    %76 = arith.addf %75, %74 : vector<64x512xf32>
    %77 = tpu.reciprocal %76 {approx = true} : vector<64x512xf32> -> vector<64x512xf32>
    %cst_28 = arith.constant 1.06140542 : f32
    %78 = vector.broadcast %cst_28 : f32 to vector<64x512xf32>
    %79 = arith.mulf %78, %77 : vector<64x512xf32>
    %cst_29 = arith.constant -1.45315206 : f32
    %80 = vector.broadcast %cst_29 : f32 to vector<64x512xf32>
    %81 = arith.addf %79, %80 : vector<64x512xf32>
    %82 = arith.mulf %81, %77 : vector<64x512xf32>
    %cst_30 = arith.constant 1.42141378 : f32
    %83 = vector.broadcast %cst_30 : f32 to vector<64x512xf32>
    %84 = arith.addf %82, %83 : vector<64x512xf32>
    %85 = arith.mulf %84, %77 : vector<64x512xf32>
    %cst_31 = arith.constant -0.284496725 : f32
    %86 = vector.broadcast %cst_31 : f32 to vector<64x512xf32>
    %87 = arith.addf %85, %86 : vector<64x512xf32>
    %88 = arith.mulf %87, %77 : vector<64x512xf32>
    %cst_32 = arith.constant 0.254829586 : f32
    %89 = vector.broadcast %cst_32 : f32 to vector<64x512xf32>
    %90 = arith.addf %88, %89 : vector<64x512xf32>
    %91 = arith.mulf %90, %77 : vector<64x512xf32>
    %cst_33 = arith.constant 0.000000e+00 : f32
    %92 = vector.broadcast %cst_33 : f32 to vector<64x512xf32>
    %93 = arith.subf %92, %72 : vector<64x512xf32>
    %94 = arith.mulf %93, %72 : vector<64x512xf32>
    %95 = math.exp %94 : vector<64x512xf32>
    %96 = arith.mulf %91, %95 : vector<64x512xf32>
    %cst_34 = arith.constant 1.000000e+00 : f32
    %97 = vector.broadcast %cst_34 : f32 to vector<64x512xf32>
    %98 = arith.subf %97, %96 : vector<64x512xf32>
    %cst_35 = arith.constant 0.000000e+00 : f32
    %99 = vector.broadcast %cst_35 : f32 to vector<64x512xf32>
    %100 = arith.cmpf oge, %71, %99 : vector<64x512xf32>
    %cst_36 = arith.constant 0.000000e+00 : f32
    %101 = vector.broadcast %cst_36 : f32 to vector<64x512xf32>
    %102 = arith.subf %101, %98 : vector<64x512xf32>
    %103 = arith.select %100, %98, %102 : vector<64x512xi1>, vector<64x512xf32>
    %cst_37 = arith.constant 1.000000e+00 : f32
    %104 = vector.broadcast %cst_37 : f32 to vector<64x512xf32>
    %105 = arith.addf %104, %103 : vector<64x512xf32>
    %106 = arith.mulf %69, %105 : vector<64x512xf32>
    %c0_38 = arith.constant 0 : index
    %c0_39 = arith.constant 0 : index
    %107 = vector.load %arg5[%c0_38, %c0_39] : memref<64x64xbf16, #tpu.memory_space<vmem>>, vector<64x64xbf16>
    %108 = vector.extract_strided_slice %16 {offsets = [0, 2], sizes = [64, 1], strides = [1, 1]} : vector<64x4xf32> to vector<64x1xf32>
    %109 = arith.truncf %106 : vector<64x512xf32> to vector<64x512xbf16>
    %cst_40 = arith.constant dense<0.000000e+00> : vector<64x512xf32>
    %110 = tpu.matmul %107, %109, %cst_40 {dimension_numbers = #tpu.dot_dimension_numbers<[1], [0], [0], [1], [0, 0, 1, 1], [], []>} : vector<64x64xbf16>, vector<64x512xbf16>, vector<64x512xf32> -> vector<64x512xf32>
    %111 = vector.broadcast %108 : vector<64x1xf32> to vector<64x512xf32>
    %112 = arith.addf %110, %111 : vector<64x512xf32>
    %cst_41 = arith.constant 5.000000e-01 : f32
    %113 = vector.broadcast %cst_41 : f32 to vector<64x512xf32>
    %114 = arith.mulf %113, %112 : vector<64x512xf32>
    %cst_42 = arith.constant 0.707106769 : f32
    %115 = vector.broadcast %cst_42 : f32 to vector<64x512xf32>
    %116 = arith.mulf %112, %115 : vector<64x512xf32>
    %117 = math.absf %116 : vector<64x512xf32>
    %cst_43 = arith.constant 0.327591091 : f32
    %118 = vector.broadcast %cst_43 : f32 to vector<64x512xf32>
    %119 = arith.mulf %118, %117 : vector<64x512xf32>
    %cst_44 = arith.constant 1.000000e+00 : f32
    %120 = vector.broadcast %cst_44 : f32 to vector<64x512xf32>
    %121 = arith.addf %120, %119 : vector<64x512xf32>
    %122 = tpu.reciprocal %121 {approx = true} : vector<64x512xf32> -> vector<64x512xf32>
    %cst_45 = arith.constant 1.06140542 : f32
    %123 = vector.broadcast %cst_45 : f32 to vector<64x512xf32>
    %124 = arith.mulf %123, %122 : vector<64x512xf32>
    %cst_46 = arith.constant -1.45315206 : f32
    %125 = vector.broadcast %cst_46 : f32 to vector<64x512xf32>
    %126 = arith.addf %124, %125 : vector<64x512xf32>
    %127 = arith.mulf %126, %122 : vector<64x512xf32>
    %cst_47 = arith.constant 1.42141378 : f32
    %128 = vector.broadcast %cst_47 : f32 to vector<64x512xf32>
    %129 = arith.addf %127, %128 : vector<64x512xf32>
    %130 = arith.mulf %129, %122 : vector<64x512xf32>
    %cst_48 = arith.constant -0.284496725 : f32
    %131 = vector.broadcast %cst_48 : f32 to vector<64x512xf32>
    %132 = arith.addf %130, %131 : vector<64x512xf32>
    %133 = arith.mulf %132, %122 : vector<64x512xf32>
    %cst_49 = arith.constant 0.254829586 : f32
    %134 = vector.broadcast %cst_49 : f32 to vector<64x512xf32>
    %135 = arith.addf %133, %134 : vector<64x512xf32>
    %136 = arith.mulf %135, %122 : vector<64x512xf32>
    %cst_50 = arith.constant 0.000000e+00 : f32
    %137 = vector.broadcast %cst_50 : f32 to vector<64x512xf32>
    %138 = arith.subf %137, %117 : vector<64x512xf32>
    %139 = arith.mulf %138, %117 : vector<64x512xf32>
    %140 = math.exp %139 : vector<64x512xf32>
    %141 = arith.mulf %136, %140 : vector<64x512xf32>
    %cst_51 = arith.constant 1.000000e+00 : f32
    %142 = vector.broadcast %cst_51 : f32 to vector<64x512xf32>
    %143 = arith.subf %142, %141 : vector<64x512xf32>
    %cst_52 = arith.constant 0.000000e+00 : f32
    %144 = vector.broadcast %cst_52 : f32 to vector<64x512xf32>
    %145 = arith.cmpf oge, %116, %144 : vector<64x512xf32>
    %cst_53 = arith.constant 0.000000e+00 : f32
    %146 = vector.broadcast %cst_53 : f32 to vector<64x512xf32>
    %147 = arith.subf %146, %143 : vector<64x512xf32>
    %148 = arith.select %145, %143, %147 : vector<64x512xi1>, vector<64x512xf32>
    %cst_54 = arith.constant 1.000000e+00 : f32
    %149 = vector.broadcast %cst_54 : f32 to vector<64x512xf32>
    %150 = arith.addf %149, %148 : vector<64x512xf32>
    %151 = arith.mulf %114, %150 : vector<64x512xf32>
    %c0_55 = arith.constant 0 : index
    %c0_56 = arith.constant 0 : index
    %152 = vector.load %arg6[%c0_55, %c0_56] : memref<3x64xbf16, #tpu.memory_space<vmem>>, vector<3x64xbf16>
    %153 = vector.extract_strided_slice %16 {offsets = [0, 3], sizes = [3, 1], strides = [1, 1]} : vector<64x4xf32> to vector<3x1xf32>
    %154 = arith.truncf %151 : vector<64x512xf32> to vector<64x512xbf16>
    %cst_57 = arith.constant dense<0.000000e+00> : vector<3x512xf32>
    %155 = tpu.matmul %152, %154, %cst_57 {dimension_numbers = #tpu.dot_dimension_numbers<[1], [0], [0], [1], [0, 0, 1, 1], [], []>} : vector<3x64xbf16>, vector<64x512xbf16>, vector<3x512xf32> -> vector<3x512xf32>
    %156 = vector.broadcast %153 : vector<3x1xf32> to vector<3x512xf32>
    %157 = arith.addf %155, %156 : vector<3x512xf32>
    %158 = arith.negf %157 : vector<3x512xf32>
    %159 = math.exp %158 : vector<3x512xf32>
    %cst_58 = arith.constant 1.000000e+00 : f32
    %160 = vector.broadcast %cst_58 : f32 to vector<3x512xf32>
    %161 = arith.addf %160, %159 : vector<3x512xf32>
    %162 = arith.divf %160, %161 : vector<3x512xf32>
    %c0_59 = arith.constant 0 : index
    %c0_60 = arith.constant 0 : index
    %163 = vector.load %arg8[%c0_59, %c0_60] : memref<3x512xf32, #tpu.memory_space<vmem>>, vector<3x512xf32>
    tpu.vector_store %arg8[%c0_59, %c0_60], %162 {strides = array<i32>} : memref<3x512xf32, #tpu.memory_space<vmem>>, vector<3x512xf32>,
    return
  }
  func.func @transform_0(%arg0: i32) -> (i32, i32) {
    %c0_i32 = arith.constant 0 : i32
    %c0_i32_0 = arith.constant 0 : i32
    return %c0_i32, %arg0 : i32, i32
  }
  func.func @transform_1(%arg0: i32) -> (i32, i32) {
    %c0_i32 = arith.constant 0 : i32
    %c0_i32_0 = arith.constant 0 : i32
    %c0_i32_1 = arith.constant 0 : i32
    return %c0_i32, %c0_i32_0 : i32, i32
  }
  func.func @transform_2(%arg0: i32) -> (i32, i32) {
    %c0_i32 = arith.constant 0 : i32
    %c0_i32_0 = arith.constant 0 : i32
    %c0_i32_1 = arith.constant 0 : i32
    return %c0_i32, %c0_i32_0 : i32, i32
  }
  func.func @transform_3(%arg0: i32) -> (i32, i32) {
    %c0_i32 = arith.constant 0 : i32
    %c0_i32_0 = arith.constant 0 : i32
    %c0_i32_1 = arith.constant 0 : i32
    return %c0_i32, %c0_i32_0 : i32, i32
  }
  func.func @transform_4(%arg0: i32) -> (i32, i32) {
    %c0_i32 = arith.constant 0 : i32
    %c0_i32_0 = arith.constant 0 : i32
    %c0_i32_1 = arith.constant 0 : i32
    return %c0_i32, %c0_i32_0 : i32, i32
  }
  func.func @transform_5(%arg0: i32) -> (i32, i32) {
    %c0_i32 = arith.constant 0 : i32
    %c0_i32_0 = arith.constant 0 : i32
    %c0_i32_1 = arith.constant 0 : i32
    return %c0_i32, %c0_i32_0 : i32, i32
  }
  func.func @transform_6(%arg0: i32) -> (i32, i32) {
    %c0_i32 = arith.constant 0 : i32
    %c0_i32_0 = arith.constant 0 : i32
    %c0_i32_1 = arith.constant 0 : i32
    return %c0_i32, %c0_i32_0 : i32, i32
  }
  func.func @transform_7(%arg0: i32) -> (i32, i32) {
    %c0_i32 = arith.constant 0 : i32
    %c0_i32_0 = arith.constant 0 : i32
    return %c0_i32, %arg0 : i32, i32
  }
}

</mosaic_0001>

<llo_original>
// kernel: tpu_custom_call.1
$region0: #{tpu_custom_call.1}
  #allocation0 [shape = 'u32[]', space=smem, size = 0x4, offset = 0x4, fixed_abs, tag = 'smem constant byte address 0x4 - core index']
  #allocation1 [shape = 'u32[144,128]{1,0:T(1,128)}', space=vmem, size = 0x12000, scoped, tag = 'internal scratch']
  %s0 = inlined_call_operand.vmem [shape: f32[2,2048], index: 0, kind: input, shape index: {}]
  %s1 = inlined_call_operand.vmem [shape: f32[32,2], index: 1, kind: input, shape index: {}]
  %s2 = inlined_call_operand.vmem [shape: bf16[64,64], index: 2, kind: input, shape index: {}]
  %s3 = inlined_call_operand.vmem [shape: bf16[64,64], index: 3, kind: input, shape index: {}]
  %s4 = inlined_call_operand.hbm [shape: bf16[64,64], index: 4, kind: input, shape index: {}]
  %s5 = inlined_call_operand.vmem [shape: bf16[3,64], index: 5, kind: input, shape index: {}]
  %s6 = inlined_call_operand.vmem [shape: f32[64,4], index: 6, kind: input, shape index: {}]
  %s7 = inlined_call_operand.hbm [shape: f32[3,2048], index: 7, kind: output, shape index: {}]
  %s8 = sld [smem:[#allocation0]]
  $region65: #{tpu_custom_call.1} parent=0
    _
  %s10 = ssub.s32 1, %s8
  %s11 = scalar_select 0, %s10, %s8
  $region1: #{tpu_custom_call.1} parent=0
    #allocation2 [shape = 'u8[16384]{0}', space=vmem, size = 0x4000, scoped, tag = 'input window, operand 4, single buffered']
    #allocation3 [shape = 's32[2]{0}', space=sflag, size = 0x8, scoped, tag = 'scoped memory for tpu_custom_call.1']
    #allocation4 [shape = 's32[2]{0}', space=sflag, size = 0x8, scoped, tag = 'scoped memory for tpu_custom_call.1']
    #allocation5 [shape = 'u8[16384]{0}', space=vmem, size = 0x4000, scoped, tag = 'output window, operand 0']
    %12 = vsyncpa [#allocation3], 0
    %13 = vsyncpa [#allocation4], 0
    %s14 = scalar_lea.sflag [#allocation4], 1
    %15 = vsyncpa %s14, 0
    loop: start=0, step=1, limit=6
    $region2: #{tpu_custom_call.1} parent=1 // loop_pre_header
      _
    $region3: #{tpu_custom_call.1} parent=1 // loop_header
      %s17 = sphi 0, %s21
      %p18 = scmp.ge.s32.totalorder %s17, 6
      %s27 = sphi 0, %s29
      %s30 = sphi 0, %s27
      %s31 = sphi 0, %s30
      %s47 = sphi 0, %s31
      %s51 = sphi 0, %s51
      %s53 = sphi 0, %s51
      %s54 = sphi 0, %s53
      %s68 = sphi 0, %s54
      %s72 = sphi 0, %s72
      %s74 = sphi 0, %s72
      %s75 = sphi 0, %s74
      %s89 = sphi 0, %s75
      %s93 = sphi 0, %s93
      %s95 = sphi 0, %s93
      %s96 = sphi 0, %s95
      %s110 = sphi 0, %s96
      %s114 = sphi 0, %s114
      %s116 = sphi 0, %s114
      %s117 = sphi 0, %s116
      %s131 = sphi 0, %s117
      %s135 = sphi 0, %s135
      %s137 = sphi 0, %s135
      %s138 = sphi 0, %s137
      %s152 = sphi 0, %s138
      %s156 = sphi 0, %s156
      %s158 = sphi 0, %s156
      %s159 = sphi 0, %s158
      %s173 = sphi 0, %s159
      %s179 = sphi 0, %s181
      %s182 = sphi 0, %s179
      %s183 = sphi 0, %s182
      %s199 = sphi 0, %s183
    $region4: #{tpu_custom_call.1} parent=1 // loop_header_branch
      %20 = sbr.rel (%p18) target = $region8
    $region5: #{tpu_custom_call.1} parent=1 // loop_body
      %s22 = ssub.s32 %s17, 1
      %s23 = ssub.s32 %s17, 2
      %s24 = sadd.s32 %s17, 1
      %s25 = ssub.s32 %s17, %s24
      %p26 = scmp.eq.s32.totalorder %s25, 0
      %s28 = sadd.s32 %s27, 1
      %s29 = scalar_select %p26, %s27, %s28
      %p32 = pneg %p26
      %p33 = scmp.eq.s32.totalorder %s17, 3
      %p34 = por %p32, %p33
      %p35 = scmp.ne.s32.totalorder %s27, %s30
      %p36 = scmp.eq.s32.totalorder %s17, 0
      %p37 = por %p35, %p36
      %p38 = scmp.ne.s32.totalorder %s27, %s30
      %p39 = scmp.eq.s32.totalorder %s22, 3
      %p40 = por %p38, %p39
      %p41 = scmp.ne.s32.totalorder %s30, %s31
      %p42 = scmp.eq.s32.totalorder %s22, 0
      %p43 = por %p41, %p42
      %p44 = scmp.ne.s32.totalorder %s30, %s31
      %p45 = scmp.eq.s32.totalorder %s23, 3
      %p46 = por %p44, %p45
      %p48 = scmp.ne.s32.totalorder %s31, %s47
      %p49 = scmp.eq.s32.totalorder %s23, 0
      %p50 = por %p48, %p49
      %s52 = sadd.s32 %s51, 1
      %p55 = scmp.eq.s32.totalorder %s17, 3
      %p56 = scmp.ne.s32.totalorder %s51, %s53
      %p57 = scmp.eq.s32.totalorder %s17, 0
      %p58 = por %p56, %p57
      %p59 = scmp.ne.s32.totalorder %s51, %s53
      %p60 = scmp.eq.s32.totalorder %s22, 3
      %p61 = por %p59, %p60
      %p62 = scmp.ne.s32.totalorder %s53, %s54
      %p63 = scmp.eq.s32.totalorder %s22, 0
      %p64 = por %p62, %p63
      %p65 = scmp.ne.s32.totalorder %s53, %s54
      %p66 = scmp.eq.s32.totalorder %s23, 3
      %p67 = por %p65, %p66
      %p69 = scmp.ne.s32.totalorder %s54, %s68
      %p70 = scmp.eq.s32.totalorder %s23, 0
      %p71 = por %p69, %p70
      %s73 = sadd.s32 %s72, 1
      %p76 = scmp.eq.s32.totalorder %s17, 3
      %p77 = scmp.ne.s32.totalorder %s72, %s74
      %p78 = scmp.eq.s32.totalorder %s17, 0
      %p79 = por %p77, %p78
      %p80 = scmp.ne.s32.totalorder %s72, %s74
      %p81 = scmp.eq.s32.totalorder %s22, 3
      %p82 = por %p80, %p81
      %p83 = scmp.ne.s32.totalorder %s74, %s75
      %p84 = scmp.eq.s32.totalorder %s22, 0
      %p85 = por %p83, %p84
      %p86 = scmp.ne.s32.totalorder %s74, %s75
      %p87 = scmp.eq.s32.totalorder %s23, 3
      %p88 = por %p86, %p87
      %p90 = scmp.ne.s32.totalorder %s75, %s89
      %p91 = scmp.eq.s32.totalorder %s23, 0
      %p92 = por %p90, %p91
      %s94 = sadd.s32 %s93, 1
      %p97 = scmp.eq.s32.totalorder %s17, 3
      %p98 = scmp.ne.s32.totalorder %s93, %s95
      %p99 = scmp.eq.s32.totalorder %s17, 0
      %p100 = por %p98, %p99
      %p101 = scmp.ne.s32.totalorder %s93, %s95
      %p102 = scmp.eq.s32.totalorder %s22, 3
      %p103 = por %p101, %p102
      %p104 = scmp.ne.s32.totalorder %s95, %s96
      %p105 = scmp.eq.s32.totalorder %s22, 0
      %p106 = por %p104, %p105
      %p107 = scmp.ne.s32.totalorder %s95, %s96
      %p108 = scmp.eq.s32.totalorder %s23, 3
      %p109 = por %p107, %p108
      %p111 = scmp.ne.s32.totalorder %s96, %s110
      %p112 = scmp.eq.s32.totalorder %s23, 0
      %p113 = por %p111, %p112
      %s115 = sadd.s32 %s114, 1
      %p118 = scmp.eq.s32.totalorder %s17, 3
      %p119 = scmp.ne.s32.totalorder %s114, %s116
      %p120 = scmp.eq.s32.totalorder %s17, 0
      %p121 = por %p119, %p120
      %p122 = scmp.ne.s32.totalorder %s114, %s116
      %p123 = scmp.eq.s32.totalorder %s22, 3
      %p124 = por %p122, %p123
      %p125 = scmp.ne.s32.totalorder %s116, %s117
      %p126 = scmp.eq.s32.totalorder %s22, 0
      %p127 = por %p125, %p126
      %p128 = scmp.ne.s32.totalorder %s116, %s117
      %p129 = scmp.eq.s32.totalorder %s23, 3
      %p130 = por %p128, %p129
      %p132 = scmp.ne.s32.totalorder %s117, %s131
      %p133 = scmp.eq.s32.totalorder %s23, 0
      %p134 = por %p132, %p133
      %s136 = sadd.s32 %s135, 1
      %p139 = scmp.eq.s32.totalorder %s17, 3
      %p140 = scmp.ne.s32.totalorder %s135, %s137
      %p141 = scmp.eq.s32.totalorder %s17, 0
      %p142 = por %p140, %p141
      %p143 = scmp.ne.s32.totalorder %s135, %s137
      %p144 = scmp.eq.s32.totalorder %s22, 3
      %p145 = por %p143, %p144
      %p146 = scmp.ne.s32.totalorder %s137, %s138
      %p147 = scmp.eq.s32.totalorder %s22, 0
      %p148 = por %p146, %p147
      %p149 = scmp.ne.s32.totalorder %s137, %s138
      %p150 = scmp.eq.s32.totalorder %s23, 3
      %p151 = por %p149, %p150
      %p153 = scmp.ne.s32.totalorder %s138, %s152
      %p154 = scmp.eq.s32.totalorder %s23, 0
      %p155 = por %p153, %p154
      %s157 = sadd.s32 %s156, 1
      %p160 = scmp.eq.s32.totalorder %s17, 3
      %p161 = scmp.ne.s32.totalorder %s156, %s158
      %p162 = scmp.eq.s32.totalorder %s17, 0
      %p163 = por %p161, %p162
      %p164 = scmp.ne.s32.totalorder %s156, %s158
      %p165 = scmp.eq.s32.totalorder %s22, 3
      %p166 = por %p164, %p165
      %p167 = scmp.ne.s32.totalorder %s158, %s159
      %p168 = scmp.eq.s32.totalorder %s22, 0
      %p169 = por %p167, %p168
      %p170 = scmp.ne.s32.totalorder %s158, %s159
      %p171 = scmp.eq.s32.totalorder %s23, 3
      %p172 = por %p170, %p171
      %p174 = scmp.ne.s32.totalorder %s159, %s173
      %p175 = scmp.eq.s32.totalorder %s23, 0
      %p176 = por %p174, %p175
      %s177 = ssub.s32 %s17, %s24
      %p178 = scmp.eq.s32.totalorder %s177, 0
      %s180 = sadd.s32 %s179, 1
      %s181 = scalar_select %p178, %s179, %s180
      %p184 = pneg %p178
      %p185 = scmp.eq.s32.totalorder %s17, 3
      %p186 = por %p184, %p185
      %p187 = scmp.ne.s32.totalorder %s179, %s182
      %p188 = scmp.eq.s32.totalorder %s17, 0
      %p189 = por %p187, %p188
      %p190 = scmp.ne.s32.totalorder %s179, %s182
      %p191 = scmp.eq.s32.totalorder %s22, 3
      %p192 = por %p190, %p191
      %p193 = scmp.ne.s32.totalorder %s182, %s183
      %p194 = scmp.eq.s32.totalorder %s22, 0
      %p195 = por %p193, %p194
      %p196 = scmp.ne.s32.totalorder %s182, %s183
      %p197 = scmp.eq.s32.totalorder %s23, 3
      %p198 = por %p196, %p197
      %p200 = scmp.ne.s32.totalorder %s183, %s199
      %p201 = scmp.eq.s32.totalorder %s23, 0
      %p202 = por %p200, %p201
      %p203 = scmp.le.s32.totalorder 1, %s17
      %p204 = scmp.lt.s32.totalorder %s17, 5
      %p205 = pnand %p203, %p204
      %p206 = pneg %p205
      // Predicated region
      $region9: #{tpu_custom_call.1} parent=5 // pred_check
        _
      $region10: #{tpu_custom_call.1} parent=5 // pred_check_branch
        %208 = sbr.rel (%p205) target = $region12
      $region11: #{tpu_custom_call.1} parent=5 // pred_region
        %s209 = ssub.s32 %s17, 1
        // Predicated region
        $region13: #{tpu_custom_call.1} parent=11 // pred_check
          %p210 = pneg %p64
        $region14: #{tpu_custom_call.1} parent=11 // pred_check_branch
          %212 = sbr.rel (%p210) target = $region16
        $region15: #{tpu_custom_call.1} parent=11 // pred_region
          _
        $region16: #{tpu_custom_call.1} parent=11 // pred_fallthru
          _
        // Predicated region
        $region17: #{tpu_custom_call.1} parent=11 // pred_check
          %p213 = pneg %p85
        $region18: #{tpu_custom_call.1} parent=11 // pred_check_branch
          %215 = sbr.rel (%p213) target = $region20
        $region19: #{tpu_custom_call.1} parent=11 // pred_region
          _
        $region20: #{tpu_custom_call.1} parent=11 // pred_fallthru
          _
        // Predicated region
        $region21: #{tpu_custom_call.1} parent=11 // pred_check
          %p216 = pneg %p106
        $region22: #{tpu_custom_call.1} parent=11 // pred_check_branch
          %218 = sbr.rel (%p216) target = $region24
        $region23: #{tpu_custom_call.1} parent=11 // pred_region
          _
        $region24: #{tpu_custom_call.1} parent=11 // pred_fallthru
          _
        // Predicated region
        $region25: #{tpu_custom_call.1} parent=11 // pred_check
          %p219 = pneg %p127
        $region26: #{tpu_custom_call.1} parent=11 // pred_check_branch
          %221 = sbr.rel (%p219) target = $region28
        $region27: #{tpu_custom_call.1} parent=11 // pred_region
          %s223 = ssub.s32 512, 512
          %224 = vsyncadd [#allocation3], %s223
          %s225 = sshll.u32 [#allocation2], 4
          %s226 = int_to_ptr.vmem [resolvable:$true] %s225
          %231 = dma.hbm_to_vmem [thread:$0]  %s4, 512, %s226, [#allocation3], 64, 64, 4
        $region28: #{tpu_custom_call.1} parent=11 // pred_fallthru
          _
        // Predicated region
        $region29: #{tpu_custom_call.1} parent=11 // pred_check
          %p232 = pneg %p148
        $region30: #{tpu_custom_call.1} parent=11 // pred_check_branch
          %234 = sbr.rel (%p232) target = $region32
        $region31: #{tpu_custom_call.1} parent=11 // pred_region
          _
        $region32: #{tpu_custom_call.1} parent=11 // pred_fallthru
          _
        // Predicated region
        $region33: #{tpu_custom_call.1} parent=11 // pred_check
          %p235 = pneg %p169
        $region34: #{tpu_custom_call.1} parent=11 // pred_check_branch
          %237 = sbr.rel (%p235) target = $region36
        $region35: #{tpu_custom_call.1} parent=11 // pred_region
          _
        $region36: #{tpu_custom_call.1} parent=11 // pred_fallthru
          _
      $region12: #{tpu_custom_call.1} parent=5 // pred_fallthru
        _
      %p238 = scmp.lt.s32.totalorder %s17, 4
      // Predicated region
      $region37: #{tpu_custom_call.1} parent=5 // pred_check
        %p239 = pneg %p238
      $region38: #{tpu_custom_call.1} parent=5 // pred_check_branch
        %241 = sbr.rel (%p239) target = $region40
      $region39: #{tpu_custom_call.1} parent=5 // pred_region
        // Predicated region
        $region41: #{tpu_custom_call.1} parent=39 // pred_check
          %p242 = pneg %p37
        $region42: #{tpu_custom_call.1} parent=39 // pred_check_branch
          %244 = sbr.rel (%p242) target = $region44
        $region43: #{tpu_custom_call.1} parent=39 // pred_region
          %s245 = smul.u32 4, %s17
          %p246 = scmp.lt.s32.totalorder %s245, 15
          %s247 = scalar_select %p246, %s245, 15
          %s248 = smul.addr %s247, 2
          %s249 = scalar_lea.vmem %s0, %s248
          %s250 = smul.u32 4, %s17
        $region44: #{tpu_custom_call.1} parent=39 // pred_fallthru
          _
      $region40: #{tpu_custom_call.1} parent=5 // pred_fallthru
        _
      %p251 = scmp.le.s32.totalorder 1, %s17
      %p252 = scmp.lt.s32.totalorder %s17, 5
      %p253 = pnand %p251, %p252
      %p254 = pneg %p253
      // Predicated region
      $region45: #{tpu_custom_call.1} parent=5 // pred_check
        _
      $region46: #{tpu_custom_call.1} parent=5 // pred_check_branch
        %256 = sbr.rel (%p253) target = $region48
      $region47: #{tpu_custom_call.1} parent=5 // pred_region
        %s257 = ssub.s32 %s17, 1
        // Predicated region
        $region49: #{tpu_custom_call.1} parent=47 // pred_check
          %p258 = pneg %p127
        $region50: #{tpu_custom_call.1} parent=47 // pred_check_branch
          %260 = sbr.rel (%p258) target = $region52
        $region51: #{tpu_custom_call.1} parent=47 // pred_region
          %261 = dma.done [#allocation3], 512
        $region52: #{tpu_custom_call.1} parent=47 // pred_fallthru
          _
        %s262 = smul.u32 4, %s22
        %p263 = scmp.lt.s32.totalorder %s262, 15
        %s264 = scalar_select %p263, %s262, 15
        %s265 = smul.addr %s264, 2
        %s266 = scalar_lea.vmem %s0, %s265
        %p267 = pneg %p43
        %p268 = pneg %p40
        %p269 = pneg %p64
        %p270 = pneg %p61
        %p271 = pneg %p85
        %p272 = pneg %p82
        %p273 = pneg %p106
        %p274 = pneg %p103
        %p275 = pneg %p127
        %p276 = pneg %p124
        %p277 = pneg %p148
        %p278 = pneg %p145
        %p279 = pneg %p169
        %p280 = pneg %p166
        %p281 = pneg %p195
        %p282 = pneg %p192
        %s283 = sand.u32 %s182, 1
        %s284 = scalar_lea.sflag [#allocation4], %s283
        %s285 = sand.u32 %s182, 1
        %s286 = smul.addr %s285, 16
        %s287 = scalar_lea.vmem [#allocation5], %s286
        %s288 = smul.u32 4, %s22
        %p289 = scmp.lt.s32.totalorder %s288, 15
        %s290 = scalar_select %p289, %s288, 15
        %s291 = smul.addr %s290, 2
        %s292 = scalar_lea.vmem %s0, %s291
        %s293 = smul.u32 4, %s22
        %s294 = smul.u32 4, %s22
        %v296 = vld [vmem:[%s292] sm:$0xff]
        %v297 = vld [vmem:[%s1] sm:$0xff]
        %v298 = vld [vmem:[%s1 + $0x8] sm:$0xff]
        %v299 = vld [vmem:[%s1 + $0x10] sm:$0xff]
        %v300 = vld [vmem:[%s1 + $0x18] sm:$0xff]
        %302 = vset.pattern.permute.xlu0 0
        %303 = vperm.xlu0 %302, %v297
        %v304 = vpop.permute.xlu0 %303
        %307 = vset.pattern.permute.xlu0 0
        %308 = vperm.xlu0 %307, %v298
        %v309 = vpop.permute.xlu0 %308
        %312 = vset.pattern.permute.xlu0 0
        %313 = vperm.xlu0 %312, %v299
        %v314 = vpop.permute.xlu0 %313
        %317 = vset.pattern.permute.xlu0 0
        %318 = vperm.xlu0 %317, %v300
        %v319 = vpop.permute.xlu0 %318
        %v322 = vlaneseq
        %v323 = vshrl.u32 %v322, 7
        %v324 = vsub.s32 0, %v323
        %v325 = vrot.slane %v296, %v324
        %v326 = vlaneseq
        %v327 = vshrl.u32 %v326, 7
        %v328 = vsub.s32 2, %v327
        %v329 = vrot.slane %v296, %v328
        %v330 = vlaneseq
        %v331 = vshrl.u32 %v330, 7
        %v332 = vsub.s32 4, %v331
        %v333 = vrot.slane %v296, %v332
        %v334 = vlaneseq
        %v335 = vshrl.u32 %v334, 7
        %v336 = vsub.s32 6, %v335
        %v337 = vrot.slane %v296, %v336
        %v342 = vlaneseq
        %v343 = vshrl.u32 %v342, 7
        %v344 = vsub.s32 0, %v343
        %v345 = vrot.slane %v325, %v344
        %v346 = vlaneseq
        %v347 = vshrl.u32 %v346, 7
        %v348 = vsub.s32 0, %v347
        %v349 = vrot.slane %v329, %v348
        %v350 = vlaneseq
        %v351 = vshrl.u32 %v350, 7
        %v352 = vsub.s32 0, %v351
        %v353 = vrot.slane %v333, %v352
        %v354 = vlaneseq
        %v355 = vshrl.u32 %v354, 7
        %v356 = vsub.s32 0, %v355
        %v357 = vrot.slane %v337, %v356
        %v358 = vmul.f32 %v304, %v345
        %v359 = vmul.f32 %v304, %v349
        %v360 = vmul.f32 %v304, %v353
        %v361 = vmul.f32 %v304, %v357
        %v362 = vmul.f32 %v309, %v345
        %v363 = vmul.f32 %v309, %v349
        %v364 = vmul.f32 %v309, %v353
        %v365 = vmul.f32 %v309, %v357
        %v366 = vmul.f32 %v314, %v345
        %v367 = vmul.f32 %v314, %v349
        %v368 = vmul.f32 %v314, %v353
        %v369 = vmul.f32 %v314, %v357
        %v370 = vmul.f32 %v319, %v345
        %v371 = vmul.f32 %v319, %v349
        %v372 = vmul.f32 %v319, %v353
        %v373 = vmul.f32 %v319, %v357
        %374 = vset.pattern.permute.xlu0 1
        %375 = vperm.xlu0 %374, %v297
        %v376 = vpop.permute.xlu0 %375
        %378 = vset.pattern.permute.xlu0 1
        %379 = vperm.xlu0 %378, %v298
        %v380 = vpop.permute.xlu0 %379
        %382 = vset.pattern.permute.xlu0 1
        %383 = vperm.xlu0 %382, %v299
        %v384 = vpop.permute.xlu0 %383
        %386 = vset.pattern.permute.xlu0 1
        %387 = vperm.xlu0 %386, %v300
        %v388 = vpop.permute.xlu0 %387
        %v390 = vlaneseq
        %v391 = vshrl.u32 %v390, 7
        %v392 = vsub.s32 1, %v391
        %v393 = vrot.slane %v296, %v392
        %v394 = vlaneseq
        %v395 = vshrl.u32 %v394, 7
        %v396 = vsub.s32 3, %v395
        %v397 = vrot.slane %v296, %v396
        %v398 = vlaneseq
        %v399 = vshrl.u32 %v398, 7
        %v400 = vsub.s32 5, %v399
        %v401 = vrot.slane %v296, %v400
        %v402 = vlaneseq
        %v403 = vshrl.u32 %v402, 7
        %v404 = vsub.s32 7, %v403
        %v405 = vrot.slane %v296, %v404
        %v410 = vlaneseq
        %v411 = vshrl.u32 %v410, 7
        %v412 = vsub.s32 1, %v411
        %v413 = vrot.slane %v393, %v412
        %v414 = vlaneseq
        %v415 = vshrl.u32 %v414, 7
        %v416 = vsub.s32 1, %v415
        %v417 = vrot.slane %v397, %v416
        %v418 = vlaneseq
        %v419 = vshrl.u32 %v418, 7
        %v420 = vsub.s32 1, %v419
        %v421 = vrot.slane %v401, %v420
        %v422 = vlaneseq
        %v423 = vshrl.u32 %v422, 7
        %v424 = vsub.s32 1, %v423
        %v425 = vrot.slane %v405, %v424
        %v426 = vmul.f32 %v376, %v413
        %v427 = vmul.f32 %v376, %v417
        %v428 = vmul.f32 %v376, %v421
        %v429 = vmul.f32 %v376, %v425
        %v430 = vmul.f32 %v380, %v413
        %v431 = vmul.f32 %v380, %v417
        %v432 = vmul.f32 %v380, %v421
        %v433 = vmul.f32 %v380, %v425
        %v434 = vmul.f32 %v384, %v413
        %v435 = vmul.f32 %v384, %v417
        %v436 = vmul.f32 %v384, %v421
        %v437 = vmul.f32 %v384, %v425
        %v438 = vmul.f32 %v388, %v413
        %v439 = vmul.f32 %v388, %v417
        %v440 = vmul.f32 %v388, %v421
        %v441 = vmul.f32 %v388, %v425
        %v442 = vadd.f32 %v358, %v426
        %v443 = vadd.f32 %v359, %v427
        %v444 = vadd.f32 %v360, %v428
        %v445 = vadd.f32 %v361, %v429
        %v446 = vadd.f32 %v362, %v430
        %v447 = vadd.f32 %v363, %v431
        %v448 = vadd.f32 %v364, %v432
        %v449 = vadd.f32 %v365, %v433
        %v450 = vadd.f32 %v366, %v434
        %v451 = vadd.f32 %v367, %v435
        %v452 = vadd.f32 %v368, %v436
        %v453 = vadd.f32 %v369, %v437
        %v454 = vadd.f32 %v370, %v438
        %v455 = vadd.f32 %v371, %v439
        %v456 = vadd.f32 %v372, %v440
        %v457 = vadd.f32 %v373, %v441
        %v458 = vand.u32 2147483647, %v442
        %vm459 = vcmp.le.f32.partialorder %v458, 0.7853982
        %vm460 = vcmp.lt.s32.totalorder %v442, 0
        %v461 = vand.u32 %v442, 2139095040
        %v462 = vshrl.u32 %v461, 23
        %v463 = vsub.s32 %v462, 127
        %v464 = vand.u32 2147483647, %v442
        %v465 = vand.u32 %v464, 8388607
        %v466 = vor.u32 %v465, 8388608
        %v467 = vsub.s32 0, %v466
        %v468 = vadd.s32 %v463, 1
        %vm469 = vcmp.gt.s32.totalorder %v468, 0
        %v470 = vsel %vm469, %v468, 0
        %v471 = vshrl.u32 %v470, 5
        %v472 = vand.u32 %v470, 31
        %v473 = vsub.s32 32, %v472
        %v474 = vshrl.u32 683565275, %v473
        %v475 = vshll.u32 683565275, %v472
        %v476 = vshrl.u32 2475754826, %v473
        %v477 = vor.u32 %v475, %v476
        %v478 = vshll.u32 2475754826, %v472
        %v479 = vshrl.u32 2131351028, %v473
        %v480 = vor.u32 %v478, %v479
        %v481 = vshll.u32 2131351028, %v472
        %v482 = vshrl.u32 2102212464, %v473
        %v483 = vor.u32 %v481, %v482
        %v484 = vshll.u32 2102212464, %v472
        %v485 = vshrl.u32 920167782, %v473
        %v486 = vor.u32 %v484, %v485
        %v487 = vshll.u32 920167782, %v472
        %v488 = vshrl.u32 1326507024, %v473
        %v489 = vor.u32 %v487, %v488
        %vm490 = vcmp.lt.s32.totalorder %v471, 1
        %vm491 = vcmp.lt.s32.totalorder %v471, 2
        %vm492 = vcmp.lt.s32.totalorder %v471, 3
        %vm493 = vcmp.lt.s32.totalorder %v471, 4
        %v494 = vsel %vm490, %v474, %v477
        %v495 = vsel %vm493, %v483, 2102212464
        %v496 = vsel %vm492, %v480, %v495
        %v497 = vsel %vm491, %v494, %v496
        %v498 = vsel %vm490, %v477, %v480
        %v499 = vsel %vm493, %v486, 920167782
        %v500 = vsel %vm492, %v483, %v499
        %v501 = vsel %vm491, %v498, %v500
        %v502 = vsel %vm490, %v480, %v483
        %v503 = vsel %vm493, %v489, 1326507024
        %v504 = vsel %vm492, %v486, %v503
        %v505 = vsel %vm491, %v502, %v504
        %v506 = vshll.u32 %v466, 8
        %v507 = vmul.u32.u64.compose %v506, %v505
        %v508 = vextract.low.u32 %v507
        %v509 = vextract.high.u32 %v507
        %v510 = vmul.u32.u64.compose %v506, %v501
        %v511 = vextract.low.u32 %v510
        %v512 = vextract.high.u32 %v510
        %v513 = vmul.u32 %v506, %v497
        %v514 = vadd.s32 %v509, %v511
        %vm515 = vc.u32 %v509, %v511
        %v516 = vadd.s32 %v512, 1
        %v517 = vsel %vm515, %v516, %v512
        %v518 = vadd.s32 %v513, %v517
        %v519 = vadd.s32 %v518, 536870912
        %v520 = vshrl.u32 %v519, 30
        %v521 = vshll.u32 %v520, 30
        %v522 = vsub.s32 %v518, %v521
        %vm523 = vcmp.lt.s32.totalorder %v522, 0
        %v524 = vsub.s32 0, %v522
        %v525 = vsel %vm523, %v524, %v522
        %v526 = vclz %v525
        %v527 = vsub.s32 %v526, 2
        %vm528 = vcmp.gt.s32.totalorder 0, %v527
        %v529 = vsel %vm528, 0, %v527
        %v530 = vsub.s32 32, %v529
        %v531 = vshll.u32 %v522, %v529
        %v532 = vshrl.u32 %v514, %v530
        %v533 = vor.u32 %v531, %v532
        %v534 = vsub.s32 4294967266, %v529
        %v535 = vadd.s32 %v534, 127
        %v536 = vshll.u32 %v535, 23
        %v537 = vor.u32 4788187, %v536
        %v538 = vand.u32 2147483647, %v537
        %v540 = vcvt.s32.f32 %v533
        %v541 = vmul.f32 %v540, %v538
        %v542 = vxor.u32 %v541, 2147483648
        %v543 = vsel %vm460, %v542, %v541
        %v544 = vsub.s32 4, %v520
        %v545 = vsel %vm460, %v544, %v520
        %v546 = vsel %vm459, %v442, %v543
        %v547 = vsel %vm459, 0, %v545
        %v548 = vcosq.f32.pop %v546
        %v549 = vsinq.f32.pop %v546
        %vm550 = vweird.f32 %v442
        %v551 = vadd.s32 %v547, 3
        %v552 = vand.u32 %v551, 3
        %vm553 = vcmp.lt.s32.totalorder %v552, 2
        %vm554 = vcmp.eq.s32.totalorder %v552, 0
        %v555 = vxor.u32 %v549, 2147483648
        %v556 = vsel %vm554, %v548, %v555
        %vm557 = vcmp.eq.s32.totalorder %v552, 2
        %v558 = vxor.u32 %v548, 2147483648
        %v559 = vsel %vm557, %v558, %v549
        %v560 = vsel %vm553, %v556, %v559
        %v561 = vsel %vm550, nan, %v560
        %v562 = vand.u32 2147483647, %v443
        %vm563 = vcmp.le.f32.partialorder %v562, 0.7853982
        %vm564 = vcmp.lt.s32.totalorder %v443, 0
        %v565 = vand.u32 %v443, 2139095040
        %v566 = vshrl.u32 %v565, 23
        %v567 = vsub.s32 %v566, 127
        %v568 = vand.u32 2147483647, %v443
        %v569 = vand.u32 %v568, 8388607
        %v570 = vor.u32 %v569, 8388608
        %v571 = vsub.s32 0, %v570
        %v572 = vadd.s32 %v567, 1
        %vm573 = vcmp.gt.s32.totalorder %v572, 0
        %v574 = vsel %vm573, %v572, 0
        %v575 = vshrl.u32 %v574, 5
        %v576 = vand.u32 %v574, 31
        %v577 = vsub.s32 32, %v576
        %v578 = vshrl.u32 683565275, %v577
        %v579 = vshll.u32 683565275, %v576
        %v580 = vshrl.u32 2475754826, %v577
        %v581 = vor.u32 %v579, %v580
        %v582 = vshll.u32 2475754826, %v576
        %v583 = vshrl.u32 2131351028, %v577
        %v584 = vor.u32 %v582, %v583
        %v585 = vshll.u32 2131351028, %v576
        %v586 = vshrl.u32 2102212464, %v577
        %v587 = vor.u32 %v585, %v586
        %v588 = vshll.u32 2102212464, %v576
        %v589 = vshrl.u32 920167782, %v577
        %v590 = vor.u32 %v588, %v589
        %v591 = vshll.u32 920167782, %v576
        %v592 = vshrl.u32 1326507024, %v577
        %v593 = vor.u32 %v591, %v592
        %vm594 = vcmp.lt.s32.totalorder %v575, 1
        %vm595 = vcmp.lt.s32.totalorder %v575, 2
        %vm596 = vcmp.lt.s32.totalorder %v575, 3
        %vm597 = vcmp.lt.s32.totalorder %v575, 4
        %v598 = vsel %vm594, %v578, %v581
        %v599 = vsel %vm597, %v587, 2102212464
        %v600 = vsel %vm596, %v584, %v599
        %v601 = vsel %vm595, %v598, %v600
        %v602 = vsel %vm594, %v581, %v584
        %v603 = vsel %vm597, %v590, 920167782
        %v604 = vsel %vm596, %v587, %v603
        %v605 = vsel %vm595, %v602, %v604
        %v606 = vsel %vm594, %v584, %v587
        %v607 = vsel %vm597, %v593, 1326507024
        %v608 = vsel %vm596, %v590, %v607
        %v609 = vsel %vm595, %v606, %v608
        %v610 = vshll.u32 %v570, 8
        %v611 = vmul.u32.u64.compose %v610, %v609
        %v612 = vextract.low.u32 %v611
        %v613 = vextract.high.u32 %v611
        %v614 = vmul.u32.u64.compose %v610, %v605
        %v615 = vextract.low.u32 %v614
        %v616 = vextract.high.u32 %v614
        %v617 = vmul.u32 %v610, %v601
        %v618 = vadd.s32 %v613, %v615
        %vm619 = vc.u32 %v613, %v615
        %v620 = vadd.s32 %v616, 1
        %v621 = vsel %vm619, %v620, %v616
        %v622 = vadd.s32 %v617, %v621
        %v623 = vadd.s32 %v622, 536870912
        %v624 = vshrl.u32 %v623, 30
        %v625 = vshll.u32 %v624, 30
        %v626 = vsub.s32 %v622, %v625
        %vm627 = vcmp.lt.s32.totalorder %v626, 0
        %v628 = vsub.s32 0, %v626
        %v629 = vsel %vm627, %v628, %v626
        %v630 = vclz %v629
        %v631 = vsub.s32 %v630, 2
        %vm632 = vcmp.gt.s32.totalorder 0, %v631
        %v633 = vsel %vm632, 0, %v631
        %v634 = vsub.s32 32, %v633
        %v635 = vshll.u32 %v626, %v633
        %v636 = vshrl.u32 %v618, %v634
        %v637 = vor.u32 %v635, %v636
        %v638 = vsub.s32 4294967266, %v633
        %v639 = vadd.s32 %v638, 127
        %v640 = vshll.u32 %v639, 23
        %v641 = vor.u32 4788187, %v640
        %v642 = vand.u32 2147483647, %v641
        %v644 = vcvt.s32.f32 %v637
        %v645 = vmul.f32 %v644, %v642
        %v646 = vxor.u32 %v645, 2147483648
        %v647 = vsel %vm564, %v646, %v645
        %v648 = vsub.s32 4, %v624
        %v649 = vsel %vm564, %v648, %v624
        %v650 = vsel %vm563, %v443, %v647
        %v651 = vsel %vm563, 0, %v649
        %v652 = vcosq.f32.pop %v650
        %v653 = vsinq.f32.pop %v650
        %vm654 = vweird.f32 %v443
        %v655 = vadd.s32 %v651, 3
        %v656 = vand.u32 %v655, 3
        %vm657 = vcmp.lt.s32.totalorder %v656, 2
        %vm658 = vcmp.eq.s32.totalorder %v656, 0
        %v659 = vxor.u32 %v653, 2147483648
        %v660 = vsel %vm658, %v652, %v659
        %vm661 = vcmp.eq.s32.totalorder %v656, 2
        %v662 = vxor.u32 %v652, 2147483648
        %v663 = vsel %vm661, %v662, %v653
        %v664 = vsel %vm657, %v660, %v663
        %v665 = vsel %vm654, nan, %v664
        %v666 = vand.u32 2147483647, %v444
        %vm667 = vcmp.le.f32.partialorder %v666, 0.7853982
        %vm668 = vcmp.lt.s32.totalorder %v444, 0
        %v669 = vand.u32 %v444, 2139095040
        %v670 = vshrl.u32 %v669, 23
        %v671 = vsub.s32 %v670, 127
        %v672 = vand.u32 2147483647, %v444
        %v673 = vand.u32 %v672, 8388607
        %v674 = vor.u32 %v673, 8388608
        %v675 = vsub.s32 0, %v674
        %v676 = vadd.s32 %v671, 1
        %vm677 = vcmp.gt.s32.totalorder %v676, 0
        %v678 = vsel %vm677, %v676, 0
        %v679 = vshrl.u32 %v678, 5
        %v680 = vand.u32 %v678, 31
        %v681 = vsub.s32 32, %v680
        %v682 = vshrl.u32 683565275, %v681
        %v683 = vshll.u32 683565275, %v680
        %v684 = vshrl.u32 2475754826, %v681
        %v685 = vor.u32 %v683, %v684
        %v686 = vshll.u32 2475754826, %v680
        %v687 = vshrl.u32 2131351028, %v681
        %v688 = vor.u32 %v686, %v687
        %v689 = vshll.u32 2131351028, %v680
        %v690 = vshrl.u32 2102212464, %v681
        %v691 = vor.u32 %v689, %v690
        %v692 = vshll.u32 2102212464, %v680
        %v693 = vshrl.u32 920167782, %v681
        %v694 = vor.u32 %v692, %v693
        %v695 = vshll.u32 920167782, %v680
        %v696 = vshrl.u32 1326507024, %v681
        %v697 = vor.u32 %v695, %v696
        %vm698 = vcmp.lt.s32.totalorder %v679, 1
        %vm699 = vcmp.lt.s32.totalorder %v679, 2
        %vm700 = vcmp.lt.s32.totalorder %v679, 3
        %vm701 = vcmp.lt.s32.totalorder %v679, 4
        %v702 = vsel %vm698, %v682, %v685
        %v703 = vsel %vm701, %v691, 2102212464
        %v704 = vsel %vm700, %v688, %v703
        %v705 = vsel %vm699, %v702, %v704
        %v706 = vsel %vm698, %v685, %v688
        %v707 = vsel %vm701, %v694, 920167782
        %v708 = vsel %vm700, %v691, %v707
        %v709 = vsel %vm699, %v706, %v708
        %v710 = vsel %vm698, %v688, %v691
        %v711 = vsel %vm701, %v697, 1326507024
        %v712 = vsel %vm700, %v694, %v711
        %v713 = vsel %vm699, %v710, %v712
        %v714 = vshll.u32 %v674, 8
        %v715 = vmul.u32.u64.compose %v714, %v713
        %v716 = vextract.low.u32 %v715
        %v717 = vextract.high.u32 %v715
        %v718 = vmul.u32.u64.compose %v714, %v709
        %v719 = vextract.low.u32 %v718
        %v720 = vextract.high.u32 %v718
        %v721 = vmul.u32 %v714, %v705
        %v722 = vadd.s32 %v717, %v719
        %vm723 = vc.u32 %v717, %v719
        %v724 = vadd.s32 %v720, 1
        %v725 = vsel %vm723, %v724, %v720
        %v726 = vadd.s32 %v721, %v725
        %v727 = vadd.s32 %v726, 536870912
        %v728 = vshrl.u32 %v727, 30
        %v729 = vshll.u32 %v728, 30
        %v730 = vsub.s32 %v726, %v729
        %vm731 = vcmp.lt.s32.totalorder %v730, 0
        %v732 = vsub.s32 0, %v730
        %v733 = vsel %vm731, %v732, %v730
        %v734 = vclz %v733
        %v735 = vsub.s32 %v734, 2
        %vm736 = vcmp.gt.s32.totalorder 0, %v735
        %v737 = vsel %vm736, 0, %v735
        %v738 = vsub.s32 32, %v737
        %v739 = vshll.u32 %v730, %v737
        %v740 = vshrl.u32 %v722, %v738
        %v741 = vor.u32 %v739, %v740
        %v742 = vsub.s32 4294967266, %v737
        %v743 = vadd.s32 %v742, 127
        %v744 = vshll.u32 %v743, 23
        %v745 = vor.u32 4788187, %v744
        %v746 = vand.u32 2147483647, %v745
        %v748 = vcvt.s32.f32 %v741
        %v749 = vmul.f32 %v748, %v746
        %v750 = vxor.u32 %v749, 2147483648
        %v751 = vsel %vm668, %v750, %v749
        %v752 = vsub.s32 4, %v728
        %v753 = vsel %vm668, %v752, %v728
        %v754 = vsel %vm667, %v444, %v751
        %v755 = vsel %vm667, 0, %v753
        %v756 = vcosq.f32.pop %v754
        %v757 = vsinq.f32.pop %v754
        %vm758 = vweird.f32 %v444
        %v759 = vadd.s32 %v755, 3
        %v760 = vand.u32 %v759, 3
        %vm761 = vcmp.lt.s32.totalorder %v760, 2
        %vm762 = vcmp.eq.s32.totalorder %v760, 0
        %v763 = vxor.u32 %v757, 2147483648
        %v764 = vsel %vm762, %v756, %v763
        %vm765 = vcmp.eq.s32.totalorder %v760, 2
        %v766 = vxor.u32 %v756, 2147483648
        %v767 = vsel %vm765, %v766, %v757
        %v768 = vsel %vm761, %v764, %v767
        %v769 = vsel %vm758, nan, %v768
        %v770 = vand.u32 2147483647, %v445
        %vm771 = vcmp.le.f32.partialorder %v770, 0.7853982
        %vm772 = vcmp.lt.s32.totalorder %v445, 0
        %v773 = vand.u32 %v445, 2139095040
        %v774 = vshrl.u32 %v773, 23
        %v775 = vsub.s32 %v774, 127
        %v776 = vand.u32 2147483647, %v445
        %v777 = vand.u32 %v776, 8388607
        %v778 = vor.u32 %v777, 8388608
        %v779 = vsub.s32 0, %v778
        %v780 = vadd.s32 %v775, 1
        %vm781 = vcmp.gt.s32.totalorder %v780, 0
        %v782 = vsel %vm781, %v780, 0
        %v783 = vshrl.u32 %v782, 5
        %v784 = vand.u32 %v782, 31
        %v785 = vsub.s32 32, %v784
        %v786 = vshrl.u32 683565275, %v785
        %v787 = vshll.u32 683565275, %v784
        %v788 = vshrl.u32 2475754826, %v785
        %v789 = vor.u32 %v787, %v788
        %v790 = vshll.u32 2475754826, %v784
        %v791 = vshrl.u32 2131351028, %v785
        %v792 = vor.u32 %v790, %v791
        %v793 = vshll.u32 2131351028, %v784
        %v794 = vshrl.u32 2102212464, %v785
        %v795 = vor.u32 %v793, %v794
        %v796 = vshll.u32 2102212464, %v784
        %v797 = vshrl.u32 920167782, %v785
        %v798 = vor.u32 %v796, %v797
        %v799 = vshll.u32 920167782, %v784
        %v800 = vshrl.u32 1326507024, %v785
        %v801 = vor.u32 %v799, %v800
        %vm802 = vcmp.lt.s32.totalorder %v783, 1
        %vm803 = vcmp.lt.s32.totalorder %v783, 2
        %vm804 = vcmp.lt.s32.totalorder %v783, 3
        %vm805 = vcmp.lt.s32.totalorder %v783, 4
        %v806 = vsel %vm802, %v786, %v789
        %v807 = vsel %vm805, %v795, 2102212464
        %v808 = vsel %vm804, %v792, %v807
        %v809 = vsel %vm803, %v806, %v808
        %v810 = vsel %vm802, %v789, %v792
        %v811 = vsel %vm805, %v798, 920167782
        %v812 = vsel %vm804, %v795, %v811
        %v813 = vsel %vm803, %v810, %v812
        %v814 = vsel %vm802, %v792, %v795
        %v815 = vsel %vm805, %v801, 1326507024
        %v816 = vsel %vm804, %v798, %v815
        %v817 = vsel %vm803, %v814, %v816
        %v818 = vshll.u32 %v778, 8
        %v819 = vmul.u32.u64.compose %v818, %v817
        %v820 = vextract.low.u32 %v819
        %v821 = vextract.high.u32 %v819
        %v822 = vmul.u32.u64.compose %v818, %v813
        %v823 = vextract.low.u32 %v822
        %v824 = vextract.high.u32 %v822
        %v825 = vmul.u32 %v818, %v809
        %v826 = vadd.s32 %v821, %v823
        %vm827 = vc.u32 %v821, %v823
        %v828 = vadd.s32 %v824, 1
        %v829 = vsel %vm827, %v828, %v824
        %v830 = vadd.s32 %v825, %v829
        %v831 = vadd.s32 %v830, 536870912
        %v832 = vshrl.u32 %v831, 30
        %v833 = vshll.u32 %v832, 30
        %v834 = vsub.s32 %v830, %v833
        %vm835 = vcmp.lt.s32.totalorder %v834, 0
        %v836 = vsub.s32 0, %v834
        %v837 = vsel %vm835, %v836, %v834
        %v838 = vclz %v837
        %v839 = vsub.s32 %v838, 2
        %vm840 = vcmp.gt.s32.totalorder 0, %v839
        %v841 = vsel %vm840, 0, %v839
        %v842 = vsub.s32 32, %v841
        %v843 = vshll.u32 %v834, %v841
        %v844 = vshrl.u32 %v826, %v842
        %v845 = vor.u32 %v843, %v844
        %v846 = vsub.s32 4294967266, %v841
        %v847 = vadd.s32 %v846, 127
        %v848 = vshll.u32 %v847, 23
        %v849 = vor.u32 4788187, %v848
        %v850 = vand.u32 2147483647, %v849
        %v852 = vcvt.s32.f32 %v845
        %v853 = vmul.f32 %v852, %v850
        %v854 = vxor.u32 %v853, 2147483648
        %v855 = vsel %vm772, %v854, %v853
        %v856 = vsub.s32 4, %v832
        %v857 = vsel %vm772, %v856, %v832
        %v858 = vsel %vm771, %v445, %v855
        %v859 = vsel %vm771, 0, %v857
        %v860 = vcosq.f32.pop %v858
        %v861 = vsinq.f32.pop %v858
        %vm862 = vweird.f32 %v445
        %v863 = vadd.s32 %v859, 3
        %v864 = vand.u32 %v863, 3
        %vm865 = vcmp.lt.s32.totalorder %v864, 2
        %vm866 = vcmp.eq.s32.totalorder %v864, 0
        %v867 = vxor.u32 %v861, 2147483648
        %v868 = vsel %vm866, %v860, %v867
        %vm869 = vcmp.eq.s32.totalorder %v864, 2
        %v870 = vxor.u32 %v860, 2147483648
        %v871 = vsel %vm869, %v870, %v861
        %v872 = vsel %vm865, %v868, %v871
        %v873 = vsel %vm862, nan, %v872
        %v874 = vand.u32 2147483647, %v446
        %vm875 = vcmp.le.f32.partialorder %v874, 0.7853982
        %vm876 = vcmp.lt.s32.totalorder %v446, 0
        %v877 = vand.u32 %v446, 2139095040
        %v878 = vshrl.u32 %v877, 23
        %v879 = vsub.s32 %v878, 127
        %v880 = vand.u32 2147483647, %v446
        %v881 = vand.u32 %v880, 8388607
        %v882 = vor.u32 %v881, 8388608
        %v883 = vsub.s32 0, %v882
        %v884 = vadd.s32 %v879, 1
        %vm885 = vcmp.gt.s32.totalorder %v884, 0
        %v886 = vsel %vm885, %v884, 0
        %v887 = vshrl.u32 %v886, 5
        %v888 = vand.u32 %v886, 31
        %v889 = vsub.s32 32, %v888
        %v890 = vshrl.u32 683565275, %v889
        %v891 = vshll.u32 683565275, %v888
        %v892 = vshrl.u32 2475754826, %v889
        %v893 = vor.u32 %v891, %v892
        %v894 = vshll.u32 2475754826, %v888
        %v895 = vshrl.u32 2131351028, %v889
        %v896 = vor.u32 %v894, %v895
        %v897 = vshll.u32 2131351028, %v888
        %v898 = vshrl.u32 2102212464, %v889
        %v899 = vor.u32 %v897, %v898
        %v900 = vshll.u32 2102212464, %v888
        %v901 = vshrl.u32 920167782, %v889
        %v902 = vor.u32 %v900, %v901
        %v903 = vshll.u32 920167782, %v888
        %v904 = vshrl.u32 1326507024, %v889
        %v905 = vor.u32 %v903, %v904
        %vm906 = vcmp.lt.s32.totalorder %v887, 1
        %vm907 = vcmp.lt.s32.totalorder %v887, 2
        %vm908 = vcmp.lt.s32.totalorder %v887, 3
        %vm909 = vcmp.lt.s32.totalorder %v887, 4
        %v910 = vsel %vm906, %v890, %v893
        %v911 = vsel %vm909, %v899, 2102212464
        %v912 = vsel %vm908, %v896, %v911
        %v913 = vsel %vm907, %v910, %v912
        %v914 = vsel %vm906, %v893, %v896
        %v915 = vsel %vm909, %v902, 920167782
        %v916 = vsel %vm908, %v899, %v915
        %v917 = vsel %vm907, %v914, %v916
        %v918 = vsel %vm906, %v896, %v899
        %v919 = vsel %vm909, %v905, 1326507024
        %v920 = vsel %vm908, %v902, %v919
        %v921 = vsel %vm907, %v918, %v920
        %v922 = vshll.u32 %v882, 8
        %v923 = vmul.u32.u64.compose %v922, %v921
        %v924 = vextract.low.u32 %v923
        %v925 = vextract.high.u32 %v923
        %v926 = vmul.u32.u64.compose %v922, %v917
        %v927 = vextract.low.u32 %v926
        %v928 = vextract.high.u32 %v926
        %v929 = vmul.u32 %v922, %v913
        %v930 = vadd.s32 %v925, %v927
        %vm931 = vc.u32 %v925, %v927
        %v932 = vadd.s32 %v928, 1
        %v933 = vsel %vm931, %v932, %v928
        %v934 = vadd.s32 %v929, %v933
        %v935 = vadd.s32 %v934, 536870912
        %v936 = vshrl.u32 %v935, 30
        %v937 = vshll.u32 %v936, 30
        %v938 = vsub.s32 %v934, %v937
        %vm939 = vcmp.lt.s32.totalorder %v938, 0
        %v940 = vsub.s32 0, %v938
        %v941 = vsel %vm939, %v940, %v938
        %v942 = vclz %v941
        %v943 = vsub.s32 %v942, 2
        %vm944 = vcmp.gt.s32.totalorder 0, %v943
        %v945 = vsel %vm944, 0, %v943
        %v946 = vsub.s32 32, %v945
        %v947 = vshll.u32 %v938, %v945
        %v948 = vshrl.u32 %v930, %v946
        %v949 = vor.u32 %v947, %v948
        %v950 = vsub.s32 4294967266, %v945
        %v951 = vadd.s32 %v950, 127
        %v952 = vshll.u32 %v951, 23
        %v953 = vor.u32 4788187, %v952
        %v954 = vand.u32 2147483647, %v953
        %v956 = vcvt.s32.f32 %v949
        %v957 = vmul.f32 %v956, %v954
        %v958 = vxor.u32 %v957, 2147483648
        %v959 = vsel %vm876, %v958, %v957
        %v960 = vsub.s32 4, %v936
        %v961 = vsel %vm876, %v960, %v936
        %v962 = vsel %vm875, %v446, %v959
        %v963 = vsel %vm875, 0, %v961
        %v964 = vcosq.f32.pop %v962
        %v965 = vsinq.f32.pop %v962
        %vm966 = vweird.f32 %v446
        %v967 = vadd.s32 %v963, 3
        %v968 = vand.u32 %v967, 3
        %vm969 = vcmp.lt.s32.totalorder %v968, 2
        %vm970 = vcmp.eq.s32.totalorder %v968, 0
        %v971 = vxor.u32 %v965, 2147483648
        %v972 = vsel %vm970, %v964, %v971
        %vm973 = vcmp.eq.s32.totalorder %v968, 2
        %v974 = vxor.u32 %v964, 2147483648
        %v975 = vsel %vm973, %v974, %v965
        %v976 = vsel %vm969, %v972, %v975
        %v977 = vsel %vm966, nan, %v976
        %v978 = vand.u32 2147483647, %v447
        %vm979 = vcmp.le.f32.partialorder %v978, 0.7853982
        %vm980 = vcmp.lt.s32.totalorder %v447, 0
        %v981 = vand.u32 %v447, 2139095040
        %v982 = vshrl.u32 %v981, 23
        %v983 = vsub.s32 %v982, 127
        %v984 = vand.u32 2147483647, %v447
        %v985 = vand.u32 %v984, 8388607
        %v986 = vor.u32 %v985, 8388608
        %v987 = vsub.s32 0, %v986
        %v988 = vadd.s32 %v983, 1
        %vm989 = vcmp.gt.s32.totalorder %v988, 0
        %v990 = vsel %vm989, %v988, 0
        %v991 = vshrl.u32 %v990, 5
        %v992 = vand.u32 %v990, 31
        %v993 = vsub.s32 32, %v992
        %v994 = vshrl.u32 683565275, %v993
        %v995 = vshll.u32 683565275, %v992
        %v996 = vshrl.u32 2475754826, %v993
        %v997 = vor.u32 %v995, %v996
        %v998 = vshll.u32 2475754826, %v992
        %v999 = vshrl.u32 2131351028, %v993
        %v1000 = vor.u32 %v998, %v999
        %v1001 = vshll.u32 2131351028, %v992
        %v1002 = vshrl.u32 2102212464, %v993
        %v1003 = vor.u32 %v1001, %v1002
        %v1004 = vshll.u32 2102212464, %v992
        %v1005 = vshrl.u32 920167782, %v993
        %v1006 = vor.u32 %v1004, %v1005
        %v1007 = vshll.u32 920167782, %v992
        %v1008 = vshrl.u32 1326507024, %v993
        %v1009 = vor.u32 %v1007, %v1008
        %vm1010 = vcmp.lt.s32.totalorder %v991, 1
        %vm1011 = vcmp.lt.s32.totalorder %v991, 2
        %vm1012 = vcmp.lt.s32.totalorder %v991, 3
        %vm1013 = vcmp.lt.s32.totalorder %v991, 4
        %v1014 = vsel %vm1010, %v994, %v997
        %v1015 = vsel %vm1013, %v1003, 2102212464
        %v1016 = vsel %vm1012, %v1000, %v1015
        %v1017 = vsel %vm1011, %v1014, %v1016
        %v1018 = vsel %vm1010, %v997, %v1000
        %v1019 = vsel %vm1013, %v1006, 920167782
        %v1020 = vsel %vm1012, %v1003, %v1019
        %v1021 = vsel %vm1011, %v1018, %v1020
        %v1022 = vsel %vm1010, %v1000, %v1003
        %v1023 = vsel %vm1013, %v1009, 1326507024
        %v1024 = vsel %vm1012, %v1006, %v1023
        %v1025 = vsel %vm1011, %v1022, %v1024
        %v1026 = vshll.u32 %v986, 8
        %v1027 = vmul.u32.u64.compose %v1026, %v1025
        %v1028 = vextract.low.u32 %v1027
        %v1029 = vextract.high.u32 %v1027
        %v1030 = vmul.u32.u64.compose %v1026, %v1021
        %v1031 = vextract.low.u32 %v1030
        %v1032 = vextract.high.u32 %v1030
        %v1033 = vmul.u32 %v1026, %v1017
        %v1034 = vadd.s32 %v1029, %v1031
        %vm1035 = vc.u32 %v1029, %v1031
        %v1036 = vadd.s32 %v1032, 1
        %v1037 = vsel %vm1035, %v1036, %v1032
        %v1038 = vadd.s32 %v1033, %v1037
        %v1039 = vadd.s32 %v1038, 536870912
        %v1040 = vshrl.u32 %v1039, 30
        %v1041 = vshll.u32 %v1040, 30
        %v1042 = vsub.s32 %v1038, %v1041
        %vm1043 = vcmp.lt.s32.totalorder %v1042, 0
        %v1044 = vsub.s32 0, %v1042
        %v1045 = vsel %vm1043, %v1044, %v1042
        %v1046 = vclz %v1045
        %v1047 = vsub.s32 %v1046, 2
        %vm1048 = vcmp.gt.s32.totalorder 0, %v1047
        %v1049 = vsel %vm1048, 0, %v1047
        %v1050 = vsub.s32 32, %v1049
        %v1051 = vshll.u32 %v1042, %v1049
        %v1052 = vshrl.u32 %v1034, %v1050
        %v1053 = vor.u32 %v1051, %v1052
        %v1054 = vsub.s32 4294967266, %v1049
        %v1055 = vadd.s32 %v1054, 127
        %v1056 = vshll.u32 %v1055, 23
        %v1057 = vor.u32 4788187, %v1056
        %v1058 = vand.u32 2147483647, %v1057
        %v1060 = vcvt.s32.f32 %v1053
        %v1061 = vmul.f32 %v1060, %v1058
        %v1062 = vxor.u32 %v1061, 2147483648
        %v1063 = vsel %vm980, %v1062, %v1061
        %v1064 = vsub.s32 4, %v1040
        %v1065 = vsel %vm980, %v1064, %v1040
        %v1066 = vsel %vm979, %v447, %v1063
        %v1067 = vsel %vm979, 0, %v1065
        %v1068 = vcosq.f32.pop %v1066
        %v1069 = vsinq.f32.pop %v1066
        %vm1070 = vweird.f32 %v447
        %v1071 = vadd.s32 %v1067, 3
        %v1072 = vand.u32 %v1071, 3
        %vm1073 = vcmp.lt.s32.totalorder %v1072, 2
        %vm1074 = vcmp.eq.s32.totalorder %v1072, 0
        %v1075 = vxor.u32 %v1069, 2147483648
        %v1076 = vsel %vm1074, %v1068, %v1075
        %vm1077 = vcmp.eq.s32.totalorder %v1072, 2
        %v1078 = vxor.u32 %v1068, 2147483648
        %v1079 = vsel %vm1077, %v1078, %v1069
        %v1080 = vsel %vm1073, %v1076, %v1079
        %v1081 = vsel %vm1070, nan, %v1080
        %v1082 = vand.u32 2147483647, %v448
        %vm1083 = vcmp.le.f32.partialorder %v1082, 0.7853982
        %vm1084 = vcmp.lt.s32.totalorder %v448, 0
        %v1085 = vand.u32 %v448, 2139095040
        %v1086 = vshrl.u32 %v1085, 23
        %v1087 = vsub.s32 %v1086, 127
        %v1088 = vand.u32 2147483647, %v448
        %v1089 = vand.u32 %v1088, 8388607
        %v1090 = vor.u32 %v1089, 8388608
        %v1091 = vsub.s32 0, %v1090
        %v1092 = vadd.s32 %v1087, 1
        %vm1093 = vcmp.gt.s32.totalorder %v1092, 0
        %v1094 = vsel %vm1093, %v1092, 0
        %v1095 = vshrl.u32 %v1094, 5
        %v1096 = vand.u32 %v1094, 31
        %v1097 = vsub.s32 32, %v1096
        %v1098 = vshrl.u32 683565275, %v1097
        %v1099 = vshll.u32 683565275, %v1096
        %v1100 = vshrl.u32 2475754826, %v1097
        %v1101 = vor.u32 %v1099, %v1100
        %v1102 = vshll.u32 2475754826, %v1096
        %v1103 = vshrl.u32 2131351028, %v1097
        %v1104 = vor.u32 %v1102, %v1103
        %v1105 = vshll.u32 2131351028, %v1096
        %v1106 = vshrl.u32 2102212464, %v1097
        %v1107 = vor.u32 %v1105, %v1106
        %v1108 = vshll.u32 2102212464, %v1096
        %v1109 = vshrl.u32 920167782, %v1097
        %v1110 = vor.u32 %v1108, %v1109
        %v1111 = vshll.u32 920167782, %v1096
        %v1112 = vshrl.u32 1326507024, %v1097
        %v1113 = vor.u32 %v1111, %v1112
        %vm1114 = vcmp.lt.s32.totalorder %v1095, 1
        %vm1115 = vcmp.lt.s32.totalorder %v1095, 2
        %vm1116 = vcmp.lt.s32.totalorder %v1095, 3
        %vm1117 = vcmp.lt.s32.totalorder %v1095, 4
        %v1118 = vsel %vm1114, %v1098, %v1101
        %v1119 = vsel %vm1117, %v1107, 2102212464
        %v1120 = vsel %vm1116, %v1104, %v1119
        %v1121 = vsel %vm1115, %v1118, %v1120
        %v1122 = vsel %vm1114, %v1101, %v1104
        %v1123 = vsel %vm1117, %v1110, 920167782
        %v1124 = vsel %vm1116, %v1107, %v1123
        %v1125 = vsel %vm1115, %v1122, %v1124
        %v1126 = vsel %vm1114, %v1104, %v1107
        %v1127 = vsel %vm1117, %v1113, 1326507024
        %v1128 = vsel %vm1116, %v1110, %v1127
        %v1129 = vsel %vm1115, %v1126, %v1128
        %v1130 = vshll.u32 %v1090, 8
        %v1131 = vmul.u32.u64.compose %v1130, %v1129
        %v1132 = vextract.low.u32 %v1131
        %v1133 = vextract.high.u32 %v1131
        %v1134 = vmul.u32.u64.compose %v1130, %v1125
        %v1135 = vextract.low.u32 %v1134
        %v1136 = vextract.high.u32 %v1134
        %v1137 = vmul.u32 %v1130, %v1121
        %v1138 = vadd.s32 %v1133, %v1135
        %vm1139 = vc.u32 %v1133, %v1135
        %v1140 = vadd.s32 %v1136, 1
        %v1141 = vsel %vm1139, %v1140, %v1136
        %v1142 = vadd.s32 %v1137, %v1141
        %v1143 = vadd.s32 %v1142, 536870912
        %v1144 = vshrl.u32 %v1143, 30
        %v1145 = vshll.u32 %v1144, 30
        %v1146 = vsub.s32 %v1142, %v1145
        %vm1147 = vcmp.lt.s32.totalorder %v1146, 0
        %v1148 = vsub.s32 0, %v1146
        %v1149 = vsel %vm1147, %v1148, %v1146
        %v1150 = vclz %v1149
        %v1151 = vsub.s32 %v1150, 2
        %vm1152 = vcmp.gt.s32.totalorder 0, %v1151
        %v1153 = vsel %vm1152, 0, %v1151
        %v1154 = vsub.s32 32, %v1153
        %v1155 = vshll.u32 %v1146, %v1153
        %v1156 = vshrl.u32 %v1138, %v1154
        %v1157 = vor.u32 %v1155, %v1156
        %v1158 = vsub.s32 4294967266, %v1153
        %v1159 = vadd.s32 %v1158, 127
        %v1160 = vshll.u32 %v1159, 23
        %v1161 = vor.u32 4788187, %v1160
        %v1162 = vand.u32 2147483647, %v1161
        %v1164 = vcvt.s32.f32 %v1157
        %v1165 = vmul.f32 %v1164, %v1162
        %v1166 = vxor.u32 %v1165, 2147483648
        %v1167 = vsel %vm1084, %v1166, %v1165
        %v1168 = vsub.s32 4, %v1144
        %v1169 = vsel %vm1084, %v1168, %v1144
        %v1170 = vsel %vm1083, %v448, %v1167
        %v1171 = vsel %vm1083, 0, %v1169
        %v1172 = vcosq.f32.pop %v1170
        %v1173 = vsinq.f32.pop %v1170
        %vm1174 = vweird.f32 %v448
        %v1175 = vadd.s32 %v1171, 3
        %v1176 = vand.u32 %v1175, 3
        %vm1177 = vcmp.lt.s32.totalorder %v1176, 2
        %vm1178 = vcmp.eq.s32.totalorder %v1176, 0
        %v1179 = vxor.u32 %v1173, 2147483648
        %v1180 = vsel %vm1178, %v1172, %v1179
        %vm1181 = vcmp.eq.s32.totalorder %v1176, 2
        %v1182 = vxor.u32 %v1172, 2147483648
        %v1183 = vsel %vm1181, %v1182, %v1173
        %v1184 = vsel %vm1177, %v1180, %v1183
        %v1185 = vsel %vm1174, nan, %v1184
        %v1186 = vand.u32 2147483647, %v449
        %vm1187 = vcmp.le.f32.partialorder %v1186, 0.7853982
        %vm1188 = vcmp.lt.s32.totalorder %v449, 0
        %v1189 = vand.u32 %v449, 2139095040
        %v1190 = vshrl.u32 %v1189, 23
        %v1191 = vsub.s32 %v1190, 127
        %v1192 = vand.u32 2147483647, %v449
        %v1193 = vand.u32 %v1192, 8388607
        %v1194 = vor.u32 %v1193, 8388608
        %v1195 = vsub.s32 0, %v1194
        %v1196 = vadd.s32 %v1191, 1
        %vm1197 = vcmp.gt.s32.totalorder %v1196, 0
        %v1198 = vsel %vm1197, %v1196, 0
        %v1199 = vshrl.u32 %v1198, 5
        %v1200 = vand.u32 %v1198, 31
        %v1201 = vsub.s32 32, %v1200
        %v1202 = vshrl.u32 683565275, %v1201
        %v1203 = vshll.u32 683565275, %v1200
        %v1204 = vshrl.u32 2475754826, %v1201
        %v1205 = vor.u32 %v1203, %v1204
        %v1206 = vshll.u32 2475754826, %v1200
        %v1207 = vshrl.u32 2131351028, %v1201
        %v1208 = vor.u32 %v1206, %v1207
        %v1209 = vshll.u32 2131351028, %v1200
        %v1210 = vshrl.u32 2102212464, %v1201
        %v1211 = vor.u32 %v1209, %v1210
        %v1212 = vshll.u32 2102212464, %v1200
        %v1213 = vshrl.u32 920167782, %v1201
        %v1214 = vor.u32 %v1212, %v1213
        %v1215 = vshll.u32 920167782, %v1200
        %v1216 = vshrl.u32 1326507024, %v1201
        %v1217 = vor.u32 %v1215, %v1216
        %vm1218 = vcmp.lt.s32.totalorder %v1199, 1
        %vm1219 = vcmp.lt.s32.totalorder %v1199, 2
        %vm1220 = vcmp.lt.s32.totalorder %v1199, 3
        %vm1221 = vcmp.lt.s32.totalorder %v1199, 4
        %v1222 = vsel %vm1218, %v1202, %v1205
        %v1223 = vsel %vm1221, %v1211, 2102212464
        %v1224 = vsel %vm1220, %v1208, %v1223
        %v1225 = vsel %vm1219, %v1222, %v1224
        %v1226 = vsel %vm1218, %v1205, %v1208
        %v1227 = vsel %vm1221, %v1214, 920167782
        %v1228 = vsel %vm1220, %v1211, %v1227
        %v1229 = vsel %vm1219, %v1226, %v1228
        %v1230 = vsel %vm1218, %v1208, %v1211
        %v1231 = vsel %vm1221, %v1217, 1326507024
        %v1232 = vsel %vm1220, %v1214, %v1231
        %v1233 = vsel %vm1219, %v1230, %v1232
        %v1234 = vshll.u32 %v1194, 8
        %v1235 = vmul.u32.u64.compose %v1234, %v1233
        %v1236 = vextract.low.u32 %v1235
        %v1237 = vextract.high.u32 %v1235
        %v1238 = vmul.u32.u64.compose %v1234, %v1229
        %v1239 = vextract.low.u32 %v1238
        %v1240 = vextract.high.u32 %v1238
        %v1241 = vmul.u32 %v1234, %v1225
        %v1242 = vadd.s32 %v1237, %v1239
        %vm1243 = vc.u32 %v1237, %v1239
        %v1244 = vadd.s32 %v1240, 1
        %v1245 = vsel %vm1243, %v1244, %v1240
        %v1246 = vadd.s32 %v1241, %v1245
        %v1247 = vadd.s32 %v1246, 536870912
        %v1248 = vshrl.u32 %v1247, 30
        %v1249 = vshll.u32 %v1248, 30
        %v1250 = vsub.s32 %v1246, %v1249
        %vm1251 = vcmp.lt.s32.totalorder %v1250, 0
        %v1252 = vsub.s32 0, %v1250
        %v1253 = vsel %vm1251, %v1252, %v1250
        %v1254 = vclz %v1253
        %v1255 = vsub.s32 %v1254, 2
        %vm1256 = vcmp.gt.s32.totalorder 0, %v1255
        %v1257 = vsel %vm1256, 0, %v1255
        %v1258 = vsub.s32 32, %v1257
        %v1259 = vshll.u32 %v1250, %v1257
        %v1260 = vshrl.u32 %v1242, %v1258
        %v1261 = vor.u32 %v1259, %v1260
        %v1262 = vsub.s32 4294967266, %v1257
        %v1263 = vadd.s32 %v1262, 127
        %v1264 = vshll.u32 %v1263, 23
        %v1265 = vor.u32 4788187, %v1264
        %v1266 = vand.u32 2147483647, %v1265
        %v1268 = vcvt.s32.f32 %v1261
        %v1269 = vmul.f32 %v1268, %v1266
        %v1270 = vxor.u32 %v1269, 2147483648
        %v1271 = vsel %vm1188, %v1270, %v1269
        %v1272 = vsub.s32 4, %v1248
        %v1273 = vsel %vm1188, %v1272, %v1248
        %v1274 = vsel %vm1187, %v449, %v1271
        %v1275 = vsel %vm1187, 0, %v1273
        %v1276 = vcosq.f32.pop %v1274
        %v1277 = vsinq.f32.pop %v1274
        %vm1278 = vweird.f32 %v449
        %v1279 = vadd.s32 %v1275, 3
        %v1280 = vand.u32 %v1279, 3
        %vm1281 = vcmp.lt.s32.totalorder %v1280, 2
        %vm1282 = vcmp.eq.s32.totalorder %v1280, 0
        %v1283 = vxor.u32 %v1277, 2147483648
        %v1284 = vsel %vm1282, %v1276, %v1283
        %vm1285 = vcmp.eq.s32.totalorder %v1280, 2
        %v1286 = vxor.u32 %v1276, 2147483648
        %v1287 = vsel %vm1285, %v1286, %v1277
        %v1288 = vsel %vm1281, %v1284, %v1287
        %v1289 = vsel %vm1278, nan, %v1288
        %v1290 = vand.u32 2147483647, %v450
        %vm1291 = vcmp.le.f32.partialorder %v1290, 0.7853982
        %vm1292 = vcmp.lt.s32.totalorder %v450, 0
        %v1293 = vand.u32 %v450, 2139095040
        %v1294 = vshrl.u32 %v1293, 23
        %v1295 = vsub.s32 %v1294, 127
        %v1296 = vand.u32 2147483647, %v450
        %v1297 = vand.u32 %v1296, 8388607
        %v1298 = vor.u32 %v1297, 8388608
        %v1299 = vsub.s32 0, %v1298
        %v1300 = vadd.s32 %v1295, 1
        %vm1301 = vcmp.gt.s32.totalorder %v1300, 0
        %v1302 = vsel %vm1301, %v1300, 0
        %v1303 = vshrl.u32 %v1302, 5
        %v1304 = vand.u32 %v1302, 31
        %v1305 = vsub.s32 32, %v1304
        %v1306 = vshrl.u32 683565275, %v1305
        %v1307 = vshll.u32 683565275, %v1304
        %v1308 = vshrl.u32 2475754826, %v1305
        %v1309 = vor.u32 %v1307, %v1308
        %v1310 = vshll.u32 2475754826, %v1304
        %v1311 = vshrl.u32 2131351028, %v1305
        %v1312 = vor.u32 %v1310, %v1311
        %v1313 = vshll.u32 2131351028, %v1304
        %v1314 = vshrl.u32 2102212464, %v1305
        %v1315 = vor.u32 %v1313, %v1314
        %v1316 = vshll.u32 2102212464, %v1304
        %v1317 = vshrl.u32 920167782, %v1305
        %v1318 = vor.u32 %v1316, %v1317
        %v1319 = vshll.u32 920167782, %v1304
        %v1320 = vshrl.u32 1326507024, %v1305
        %v1321 = vor.u32 %v1319, %v1320
        %vm1322 = vcmp.lt.s32.totalorder %v1303, 1
        %vm1323 = vcmp.lt.s32.totalorder %v1303, 2
        %vm1324 = vcmp.lt.s32.totalorder %v1303, 3
        %vm1325 = vcmp.lt.s32.totalorder %v1303, 4
        %v1326 = vsel %vm1322, %v1306, %v1309
        %v1327 = vsel %vm1325, %v1315, 2102212464
        %v1328 = vsel %vm1324, %v1312, %v1327
        %v1329 = vsel %vm1323, %v1326, %v1328
        %v1330 = vsel %vm1322, %v1309, %v1312
        %v1331 = vsel %vm1325, %v1318, 920167782
        %v1332 = vsel %vm1324, %v1315, %v1331
        %v1333 = vsel %vm1323, %v1330, %v1332
        %v1334 = vsel %vm1322, %v1312, %v1315
        %v1335 = vsel %vm1325, %v1321, 1326507024
        %v1336 = vsel %vm1324, %v1318, %v1335
        %v1337 = vsel %vm1323, %v1334, %v1336
        %v1338 = vshll.u32 %v1298, 8
        %v1339 = vmul.u32.u64.compose %v1338, %v1337
        %v1340 = vextract.low.u32 %v1339
        %v1341 = vextract.high.u32 %v1339
        %v1342 = vmul.u32.u64.compose %v1338, %v1333
        %v1343 = vextract.low.u32 %v1342
        %v1344 = vextract.high.u32 %v1342
        %v1345 = vmul.u32 %v1338, %v1329
        %v1346 = vadd.s32 %v1341, %v1343
        %vm1347 = vc.u32 %v1341, %v1343
        %v1348 = vadd.s32 %v1344, 1
        %v1349 = vsel %vm1347, %v1348, %v1344
        %v1350 = vadd.s32 %v1345, %v1349
        %v1351 = vadd.s32 %v1350, 536870912
        %v1352 = vshrl.u32 %v1351, 30
        %v1353 = vshll.u32 %v1352, 30
        %v1354 = vsub.s32 %v1350, %v1353
        %vm1355 = vcmp.lt.s32.totalorder %v1354, 0
        %v1356 = vsub.s32 0, %v1354
        %v1357 = vsel %vm1355, %v1356, %v1354
        %v1358 = vclz %v1357
        %v1359 = vsub.s32 %v1358, 2
        %vm1360 = vcmp.gt.s32.totalorder 0, %v1359
        %v1361 = vsel %vm1360, 0, %v1359
        %v1362 = vsub.s32 32, %v1361
        %v1363 = vshll.u32 %v1354, %v1361
        %v1364 = vshrl.u32 %v1346, %v1362
        %v1365 = vor.u32 %v1363, %v1364
        %v1366 = vsub.s32 4294967266, %v1361
        %v1367 = vadd.s32 %v1366, 127
        %v1368 = vshll.u32 %v1367, 23
        %v1369 = vor.u32 4788187, %v1368
        %v1370 = vand.u32 2147483647, %v1369
        %v1372 = vcvt.s32.f32 %v1365
        %v1373 = vmul.f32 %v1372, %v1370
        %v1374 = vxor.u32 %v1373, 2147483648
        %v1375 = vsel %vm1292, %v1374, %v1373
        %v1376 = vsub.s32 4, %v1352
        %v1377 = vsel %vm1292, %v1376, %v1352
        %v1378 = vsel %vm1291, %v450, %v1375
        %v1379 = vsel %vm1291, 0, %v1377
        %v1380 = vcosq.f32.pop %v1378
        %v1381 = vsinq.f32.pop %v1378
        %vm1382 = vweird.f32 %v450
        %v1383 = vadd.s32 %v1379, 3
        %v1384 = vand.u32 %v1383, 3
        %vm1385 = vcmp.lt.s32.totalorder %v1384, 2
        %vm1386 = vcmp.eq.s32.totalorder %v1384, 0
        %v1387 = vxor.u32 %v1381, 2147483648
        %v1388 = vsel %vm1386, %v1380, %v1387
        %vm1389 = vcmp.eq.s32.totalorder %v1384, 2
        %v1390 = vxor.u32 %v1380, 2147483648
        %v1391 = vsel %vm1389, %v1390, %v1381
        %v1392 = vsel %vm1385, %v1388, %v1391
        %v1393 = vsel %vm1382, nan, %v1392
        %v1394 = vand.u32 2147483647, %v451
        %vm1395 = vcmp.le.f32.partialorder %v1394, 0.7853982
        %vm1396 = vcmp.lt.s32.totalorder %v451, 0
        %v1397 = vand.u32 %v451, 2139095040
        %v1398 = vshrl.u32 %v1397, 23
        %v1399 = vsub.s32 %v1398, 127
        %v1400 = vand.u32 2147483647, %v451
        %v1401 = vand.u32 %v1400, 8388607
        %v1402 = vor.u32 %v1401, 8388608
        %v1403 = vsub.s32 0, %v1402
        %v1404 = vadd.s32 %v1399, 1
        %vm1405 = vcmp.gt.s32.totalorder %v1404, 0
        %v1406 = vsel %vm1405, %v1404, 0
        %v1407 = vshrl.u32 %v1406, 5
        %v1408 = vand.u32 %v1406, 31
        %v1409 = vsub.s32 32, %v1408
        %v1410 = vshrl.u32 683565275, %v1409
        %v1411 = vshll.u32 683565275, %v1408
        %v1412 = vshrl.u32 2475754826, %v1409
        %v1413 = vor.u32 %v1411, %v1412
        %v1414 = vshll.u32 2475754826, %v1408
        %v1415 = vshrl.u32 2131351028, %v1409
        %v1416 = vor.u32 %v1414, %v1415
        %v1417 = vshll.u32 2131351028, %v1408
        %v1418 = vshrl.u32 2102212464, %v1409
        %v1419 = vor.u32 %v1417, %v1418
        %v1420 = vshll.u32 2102212464, %v1408
        %v1421 = vshrl.u32 920167782, %v1409
        %v1422 = vor.u32 %v1420, %v1421
        %v1423 = vshll.u32 920167782, %v1408
        %v1424 = vshrl.u32 1326507024, %v1409
        %v1425 = vor.u32 %v1423, %v1424
        %vm1426 = vcmp.lt.s32.totalorder %v1407, 1
        %vm1427 = vcmp.lt.s32.totalorder %v1407, 2
        %vm1428 = vcmp.lt.s32.totalorder %v1407, 3
        %vm1429 = vcmp.lt.s32.totalorder %v1407, 4
        %v1430 = vsel %vm1426, %v1410, %v1413
        %v1431 = vsel %vm1429, %v1419, 2102212464
        %v1432 = vsel %vm1428, %v1416, %v1431
        %v1433 = vsel %vm1427, %v1430, %v1432
        %v1434 = vsel %vm1426, %v1413, %v1416
        %v1435 = vsel %vm1429, %v1422, 920167782
        %v1436 = vsel %vm1428, %v1419, %v1435
        %v1437 = vsel %vm1427, %v1434, %v1436
        %v1438 = vsel %vm1426, %v1416, %v1419
        %v1439 = vsel %vm1429, %v1425, 1326507024
        %v1440 = vsel %vm1428, %v1422, %v1439
        %v1441 = vsel %vm1427, %v1438, %v1440
        %v1442 = vshll.u32 %v1402, 8
        %v1443 = vmul.u32.u64.compose %v1442, %v1441
        %v1444 = vextract.low.u32 %v1443
        %v1445 = vextract.high.u32 %v1443
        %v1446 = vmul.u32.u64.compose %v1442, %v1437
        %v1447 = vextract.low.u32 %v1446
        %v1448 = vextract.high.u32 %v1446
        %v1449 = vmul.u32 %v1442, %v1433
        %v1450 = vadd.s32 %v1445, %v1447
        %vm1451 = vc.u32 %v1445, %v1447
        %v1452 = vadd.s32 %v1448, 1
        %v1453 = vsel %vm1451, %v1452, %v1448
        %v1454 = vadd.s32 %v1449, %v1453
        %v1455 = vadd.s32 %v1454, 536870912
        %v1456 = vshrl.u32 %v1455, 30
        %v1457 = vshll.u32 %v1456, 30
        %v1458 = vsub.s32 %v1454, %v1457
        %vm1459 = vcmp.lt.s32.totalorder %v1458, 0
        %v1460 = vsub.s32 0, %v1458
        %v1461 = vsel %vm1459, %v1460, %v1458
        %v1462 = vclz %v1461
        %v1463 = vsub.s32 %v1462, 2
        %vm1464 = vcmp.gt.s32.totalorder 0, %v1463
        %v1465 = vsel %vm1464, 0, %v1463
        %v1466 = vsub.s32 32, %v1465
        %v1467 = vshll.u32 %v1458, %v1465
        %v1468 = vshrl.u32 %v1450, %v1466
        %v1469 = vor.u32 %v1467, %v1468
        %v1470 = vsub.s32 4294967266, %v1465
        %v1471 = vadd.s32 %v1470, 127
        %v1472 = vshll.u32 %v1471, 23
        %v1473 = vor.u32 4788187, %v1472
        %v1474 = vand.u32 2147483647, %v1473
        %v1476 = vcvt.s32.f32 %v1469
        %v1477 = vmul.f32 %v1476, %v1474
        %v1478 = vxor.u32 %v1477, 2147483648
        %v1479 = vsel %vm1396, %v1478, %v1477
        %v1480 = vsub.s32 4, %v1456
        %v1481 = vsel %vm1396, %v1480, %v1456
        %v1482 = vsel %vm1395, %v451, %v1479
        %v1483 = vsel %vm1395, 0, %v1481
        %v1484 = vcosq.f32.pop %v1482
        %v1485 = vsinq.f32.pop %v1482
        %vm1486 = vweird.f32 %v451
        %v1487 = vadd.s32 %v1483, 3
        %v1488 = vand.u32 %v1487, 3
        %vm1489 = vcmp.lt.s32.totalorder %v1488, 2
        %vm1490 = vcmp.eq.s32.totalorder %v1488, 0
        %v1491 = vxor.u32 %v1485, 2147483648
        %v1492 = vsel %vm1490, %v1484, %v1491
        %vm1493 = vcmp.eq.s32.totalorder %v1488, 2
        %v1494 = vxor.u32 %v1484, 2147483648
        %v1495 = vsel %vm1493, %v1494, %v1485
        %v1496 = vsel %vm1489, %v1492, %v1495
        %v1497 = vsel %vm1486, nan, %v1496
        %v1498 = vand.u32 2147483647, %v452
        %vm1499 = vcmp.le.f32.partialorder %v1498, 0.7853982
        %vm1500 = vcmp.lt.s32.totalorder %v452, 0
        %v1501 = vand.u32 %v452, 2139095040
        %v1502 = vshrl.u32 %v1501, 23
        %v1503 = vsub.s32 %v1502, 127
        %v1504 = vand.u32 2147483647, %v452
        %v1505 = vand.u32 %v1504, 8388607
        %v1506 = vor.u32 %v1505, 8388608
        %v1507 = vsub.s32 0, %v1506
        %v1508 = vadd.s32 %v1503, 1
        %vm1509 = vcmp.gt.s32.totalorder %v1508, 0
        %v1510 = vsel %vm1509, %v1508, 0
        %v1511 = vshrl.u32 %v1510, 5
        %v1512 = vand.u32 %v1510, 31
        %v1513 = vsub.s32 32, %v1512
        %v1514 = vshrl.u32 683565275, %v1513
        %v1515 = vshll.u32 683565275, %v1512
        %v1516 = vshrl.u32 2475754826, %v1513
        %v1517 = vor.u32 %v1515, %v1516
        %v1518 = vshll.u32 2475754826, %v1512
        %v1519 = vshrl.u32 2131351028, %v1513
        %v1520 = vor.u32 %v1518, %v1519
        %v1521 = vshll.u32 2131351028, %v1512
        %v1522 = vshrl.u32 2102212464, %v1513
        %v1523 = vor.u32 %v1521, %v1522
        %v1524 = vshll.u32 2102212464, %v1512
        %v1525 = vshrl.u32 920167782, %v1513
        %v1526 = vor.u32 %v1524, %v1525
        %v1527 = vshll.u32 920167782, %v1512
        %v1528 = vshrl.u32 1326507024, %v1513
        %v1529 = vor.u32 %v1527, %v1528
        %vm1530 = vcmp.lt.s32.totalorder %v1511, 1
        %vm1531 = vcmp.lt.s32.totalorder %v1511, 2
        %vm1532 = vcmp.lt.s32.totalorder %v1511, 3
        %vm1533 = vcmp.lt.s32.totalorder %v1511, 4
        %v1534 = vsel %vm1530, %v1514, %v1517
        %v1535 = vsel %vm1533, %v1523, 2102212464
        %v1536 = vsel %vm1532, %v1520, %v1535
        %v1537 = vsel %vm1531, %v1534, %v1536
        %v1538 = vsel %vm1530, %v1517, %v1520
        %v1539 = vsel %vm1533, %v1526, 920167782
        %v1540 = vsel %vm1532, %v1523, %v1539
        %v1541 = vsel %vm1531, %v1538, %v1540
        %v1542 = vsel %vm1530, %v1520, %v1523
        %v1543 = vsel %vm1533, %v1529, 1326507024
        %v1544 = vsel %vm1532, %v1526, %v1543
        %v1545 = vsel %vm1531, %v1542, %v1544
        %v1546 = vshll.u32 %v1506, 8
        %v1547 = vmul.u32.u64.compose %v1546, %v1545
        %v1548 = vextract.low.u32 %v1547
        %v1549 = vextract.high.u32 %v1547
        %v1550 = vmul.u32.u64.compose %v1546, %v1541
        %v1551 = vextract.low.u32 %v1550
        %v1552 = vextract.high.u32 %v1550
        %v1553 = vmul.u32 %v1546, %v1537
        %v1554 = vadd.s32 %v1549, %v1551
        %vm1555 = vc.u32 %v1549, %v1551
        %v1556 = vadd.s32 %v1552, 1
        %v1557 = vsel %vm1555, %v1556, %v1552
        %v1558 = vadd.s32 %v1553, %v1557
        %v1559 = vadd.s32 %v1558, 536870912
        %v1560 = vshrl.u32 %v1559, 30
        %v1561 = vshll.u32 %v1560, 30
        %v1562 = vsub.s32 %v1558, %v1561
        %vm1563 = vcmp.lt.s32.totalorder %v1562, 0
        %v1564 = vsub.s32 0, %v1562
        %v1565 = vsel %vm1563, %v1564, %v1562
        %v1566 = vclz %v1565
        %v1567 = vsub.s32 %v1566, 2
        %vm1568 = vcmp.gt.s32.totalorder 0, %v1567
        %v1569 = vsel %vm1568, 0, %v1567
        %v1570 = vsub.s32 32, %v1569
        %v1571 = vshll.u32 %v1562, %v1569
        %v1572 = vshrl.u32 %v1554, %v1570
        %v1573 = vor.u32 %v1571, %v1572
        %v1574 = vsub.s32 4294967266, %v1569
        %v1575 = vadd.s32 %v1574, 127
        %v1576 = vshll.u32 %v1575, 23
        %v1577 = vor.u32 4788187, %v1576
        %v1578 = vand.u32 2147483647, %v1577
        %v1580 = vcvt.s32.f32 %v1573
        %v1581 = vmul.f32 %v1580, %v1578
        %v1582 = vxor.u32 %v1581, 2147483648
        %v1583 = vsel %vm1500, %v1582, %v1581
        %v1584 = vsub.s32 4, %v1560
        %v1585 = vsel %vm1500, %v1584, %v1560
        %v1586 = vsel %vm1499, %v452, %v1583
        %v1587 = vsel %vm1499, 0, %v1585
        %v1588 = vcosq.f32.pop %v1586
        %v1589 = vsinq.f32.pop %v1586
        %vm1590 = vweird.f32 %v452
        %v1591 = vadd.s32 %v1587, 3
        %v1592 = vand.u32 %v1591, 3
        %vm1593 = vcmp.lt.s32.totalorder %v1592, 2
        %vm1594 = vcmp.eq.s32.totalorder %v1592, 0
        %v1595 = vxor.u32 %v1589, 2147483648
        %v1596 = vsel %vm1594, %v1588, %v1595
        %vm1597 = vcmp.eq.s32.totalorder %v1592, 2
        %v1598 = vxor.u32 %v1588, 2147483648
        %v1599 = vsel %vm1597, %v1598, %v1589
        %v1600 = vsel %vm1593, %v1596, %v1599
        %v1601 = vsel %vm1590, nan, %v1600
        %v1602 = vand.u32 2147483647, %v453
        %vm1603 = vcmp.le.f32.partialorder %v1602, 0.7853982
        %vm1604 = vcmp.lt.s32.totalorder %v453, 0
        %v1605 = vand.u32 %v453, 2139095040
        %v1606 = vshrl.u32 %v1605, 23
        %v1607 = vsub.s32 %v1606, 127
        %v1608 = vand.u32 2147483647, %v453
        %v1609 = vand.u32 %v1608, 8388607
        %v1610 = vor.u32 %v1609, 8388608
        %v1611 = vsub.s32 0, %v1610
        %v1612 = vadd.s32 %v1607, 1
        %vm1613 = vcmp.gt.s32.totalorder %v1612, 0
        %v1614 = vsel %vm1613, %v1612, 0
        %v1615 = vshrl.u32 %v1614, 5
        %v1616 = vand.u32 %v1614, 31
        %v1617 = vsub.s32 32, %v1616
        %v1618 = vshrl.u32 683565275, %v1617
        %v1619 = vshll.u32 683565275, %v1616
        %v1620 = vshrl.u32 2475754826, %v1617
        %v1621 = vor.u32 %v1619, %v1620
        %v1622 = vshll.u32 2475754826, %v1616
        %v1623 = vshrl.u32 2131351028, %v1617
        %v1624 = vor.u32 %v1622, %v1623
        %v1625 = vshll.u32 2131351028, %v1616
        %v1626 = vshrl.u32 2102212464, %v1617
        %v1627 = vor.u32 %v1625, %v1626
        %v1628 = vshll.u32 2102212464, %v1616
        %v1629 = vshrl.u32 920167782, %v1617
        %v1630 = vor.u32 %v1628, %v1629
        %v1631 = vshll.u32 920167782, %v1616
        %v1632 = vshrl.u32 1326507024, %v1617
        %v1633 = vor.u32 %v1631, %v1632
        %vm1634 = vcmp.lt.s32.totalorder %v1615, 1
        %vm1635 = vcmp.lt.s32.totalorder %v1615, 2
        %vm1636 = vcmp.lt.s32.totalorder %v1615, 3
        %vm1637 = vcmp.lt.s32.totalorder %v1615, 4
        %v1638 = vsel %vm1634, %v1618, %v1621
        %v1639 = vsel %vm1637, %v1627, 2102212464
        %v1640 = vsel %vm1636, %v1624, %v1639
        %v1641 = vsel %vm1635, %v1638, %v1640
        %v1642 = vsel %vm1634, %v1621, %v1624
        %v1643 = vsel %vm1637, %v1630, 920167782
        %v1644 = vsel %vm1636, %v1627, %v1643
        %v1645 = vsel %vm1635, %v1642, %v1644
        %v1646 = vsel %vm1634, %v1624, %v1627
        %v1647 = vsel %vm1637, %v1633, 1326507024
        %v1648 = vsel %vm1636, %v1630, %v1647
        %v1649 = vsel %vm1635, %v1646, %v1648
        %v1650 = vshll.u32 %v1610, 8
        %v1651 = vmul.u32.u64.compose %v1650, %v1649
        %v1652 = vextract.low.u32 %v1651
        %v1653 = vextract.high.u32 %v1651
        %v1654 = vmul.u32.u64.compose %v1650, %v1645
        %v1655 = vextract.low.u32 %v1654
        %v1656 = vextract.high.u32 %v1654
        %v1657 = vmul.u32 %v1650, %v1641
        %v1658 = vadd.s32 %v1653, %v1655
        %vm1659 = vc.u32 %v1653, %v1655
        %v1660 = vadd.s32 %v1656, 1
        %v1661 = vsel %vm1659, %v1660, %v1656
        %v1662 = vadd.s32 %v1657, %v1661
        %v1663 = vadd.s32 %v1662, 536870912
        %v1664 = vshrl.u32 %v1663, 30
        %v1665 = vshll.u32 %v1664, 30
        %v1666 = vsub.s32 %v1662, %v1665
        %vm1667 = vcmp.lt.s32.totalorder %v1666, 0
        %v1668 = vsub.s32 0, %v1666
        %v1669 = vsel %vm1667, %v1668, %v1666
        %v1670 = vclz %v1669
        %v1671 = vsub.s32 %v1670, 2
        %vm1672 = vcmp.gt.s32.totalorder 0, %v1671
        %v1673 = vsel %vm1672, 0, %v1671
        %v1674 = vsub.s32 32, %v1673
        %v1675 = vshll.u32 %v1666, %v1673
        %v1676 = vshrl.u32 %v1658, %v1674
        %v1677 = vor.u32 %v1675, %v1676
        %v1678 = vsub.s32 4294967266, %v1673
        %v1679 = vadd.s32 %v1678, 127
        %v1680 = vshll.u32 %v1679, 23
        %v1681 = vor.u32 4788187, %v1680
        %v1682 = vand.u32 2147483647, %v1681
        %v1684 = vcvt.s32.f32 %v1677
        %v1685 = vmul.f32 %v1684, %v1682
        %v1686 = vxor.u32 %v1685, 2147483648
        %v1687 = vsel %vm1604, %v1686, %v1685
        %v1688 = vsub.s32 4, %v1664
        %v1689 = vsel %vm1604, %v1688, %v1664
        %v1690 = vsel %vm1603, %v453, %v1687
        %v1691 = vsel %vm1603, 0, %v1689
        %v1692 = vcosq.f32.pop %v1690
        %v1693 = vsinq.f32.pop %v1690
        %vm1694 = vweird.f32 %v453
        %v1695 = vadd.s32 %v1691, 3
        %v1696 = vand.u32 %v1695, 3
        %vm1697 = vcmp.lt.s32.totalorder %v1696, 2
        %vm1698 = vcmp.eq.s32.totalorder %v1696, 0
        %v1699 = vxor.u32 %v1693, 2147483648
        %v1700 = vsel %vm1698, %v1692, %v1699
        %vm1701 = vcmp.eq.s32.totalorder %v1696, 2
        %v1702 = vxor.u32 %v1692, 2147483648
        %v1703 = vsel %vm1701, %v1702, %v1693
        %v1704 = vsel %vm1697, %v1700, %v1703
        %v1705 = vsel %vm1694, nan, %v1704
        %v1706 = vand.u32 2147483647, %v454
        %vm1707 = vcmp.le.f32.partialorder %v1706, 0.7853982
        %vm1708 = vcmp.lt.s32.totalorder %v454, 0
        %v1709 = vand.u32 %v454, 2139095040
        %v1710 = vshrl.u32 %v1709, 23
        %v1711 = vsub.s32 %v1710, 127
        %v1712 = vand.u32 2147483647, %v454
        %v1713 = vand.u32 %v1712, 8388607
        %v1714 = vor.u32 %v1713, 8388608
        %v1715 = vsub.s32 0, %v1714
        %v1716 = vadd.s32 %v1711, 1
        %vm1717 = vcmp.gt.s32.totalorder %v1716, 0
        %v1718 = vsel %vm1717, %v1716, 0
        %v1719 = vshrl.u32 %v1718, 5
        %v1720 = vand.u32 %v1718, 31
        %v1721 = vsub.s32 32, %v1720
        %v1722 = vshrl.u32 683565275, %v1721
        %v1723 = vshll.u32 683565275, %v1720
        %v1724 = vshrl.u32 2475754826, %v1721
        %v1725 = vor.u32 %v1723, %v1724
        %v1726 = vshll.u32 2475754826, %v1720
        %v1727 = vshrl.u32 2131351028, %v1721
        %v1728 = vor.u32 %v1726, %v1727
        %v1729 = vshll.u32 2131351028, %v1720
        %v1730 = vshrl.u32 2102212464, %v1721
        %v1731 = vor.u32 %v1729, %v1730
        %v1732 = vshll.u32 2102212464, %v1720
        %v1733 = vshrl.u32 920167782, %v1721
        %v1734 = vor.u32 %v1732, %v1733
        %v1735 = vshll.u32 920167782, %v1720
        %v1736 = vshrl.u32 1326507024, %v1721
        %v1737 = vor.u32 %v1735, %v1736
        %vm1738 = vcmp.lt.s32.totalorder %v1719, 1
        %vm1739 = vcmp.lt.s32.totalorder %v1719, 2
        %vm1740 = vcmp.lt.s32.totalorder %v1719, 3
        %vm1741 = vcmp.lt.s32.totalorder %v1719, 4
        %v1742 = vsel %vm1738, %v1722, %v1725
        %v1743 = vsel %vm1741, %v1731, 2102212464
        %v1744 = vsel %vm1740, %v1728, %v1743
        %v1745 = vsel %vm1739, %v1742, %v1744
        %v1746 = vsel %vm1738, %v1725, %v1728
        %v1747 = vsel %vm1741, %v1734, 920167782
        %v1748 = vsel %vm1740, %v1731, %v1747
        %v1749 = vsel %vm1739, %v1746, %v1748
        %v1750 = vsel %vm1738, %v1728, %v1731
        %v1751 = vsel %vm1741, %v1737, 1326507024
        %v1752 = vsel %vm1740, %v1734, %v1751
        %v1753 = vsel %vm1739, %v1750, %v1752
        %v1754 = vshll.u32 %v1714, 8
        %v1755 = vmul.u32.u64.compose %v1754, %v1753
        %v1756 = vextract.low.u32 %v1755
        %v1757 = vextract.high.u32 %v1755
        %v1758 = vmul.u32.u64.compose %v1754, %v1749
        %v1759 = vextract.low.u32 %v1758
        %v1760 = vextract.high.u32 %v1758
        %v1761 = vmul.u32 %v1754, %v1745
        %v1762 = vadd.s32 %v1757, %v1759
        %vm1763 = vc.u32 %v1757, %v1759
        %v1764 = vadd.s32 %v1760, 1
        %v1765 = vsel %vm1763, %v1764, %v1760
        %v1766 = vadd.s32 %v1761, %v1765
        %v1767 = vadd.s32 %v1766, 536870912
        %v1768 = vshrl.u32 %v1767, 30
        %v1769 = vshll.u32 %v1768, 30
        %v1770 = vsub.s32 %v1766, %v1769
        %vm1771 = vcmp.lt.s32.totalorder %v1770, 0
        %v1772 = vsub.s32 0, %v1770
        %v1773 = vsel %vm1771, %v1772, %v1770
        %v1774 = vclz %v1773
        %v1775 = vsub.s32 %v1774, 2
        %vm1776 = vcmp.gt.s32.totalorder 0, %v1775
        %v1777 = vsel %vm1776, 0, %v1775
        %v1778 = vsub.s32 32, %v1777
        %v1779 = vshll.u32 %v1770, %v1777
        %v1780 = vshrl.u32 %v1762, %v1778
        %v1781 = vor.u32 %v1779, %v1780
        %v1782 = vsub.s32 4294967266, %v1777
        %v1783 = vadd.s32 %v1782, 127
        %v1784 = vshll.u32 %v1783, 23
        %v1785 = vor.u32 4788187, %v1784
        %v1786 = vand.u32 2147483647, %v1785
        %v1788 = vcvt.s32.f32 %v1781
        %v1789 = vmul.f32 %v1788, %v1786
        %v1790 = vxor.u32 %v1789, 2147483648
        %v1791 = vsel %vm1708, %v1790, %v1789
        %v1792 = vsub.s32 4, %v1768
        %v1793 = vsel %vm1708, %v1792, %v1768
        %v1794 = vsel %vm1707, %v454, %v1791
        %v1795 = vsel %vm1707, 0, %v1793
        %v1796 = vcosq.f32.pop %v1794
        %v1797 = vsinq.f32.pop %v1794
        %vm1798 = vweird.f32 %v454
        %v1799 = vadd.s32 %v1795, 3
        %v1800 = vand.u32 %v1799, 3
        %vm1801 = vcmp.lt.s32.totalorder %v1800, 2
        %vm1802 = vcmp.eq.s32.totalorder %v1800, 0
        %v1803 = vxor.u32 %v1797, 2147483648
        %v1804 = vsel %vm1802, %v1796, %v1803
        %vm1805 = vcmp.eq.s32.totalorder %v1800, 2
        %v1806 = vxor.u32 %v1796, 2147483648
        %v1807 = vsel %vm1805, %v1806, %v1797
        %v1808 = vsel %vm1801, %v1804, %v1807
        %v1809 = vsel %vm1798, nan, %v1808
        %v1810 = vand.u32 2147483647, %v455
        %vm1811 = vcmp.le.f32.partialorder %v1810, 0.7853982
        %vm1812 = vcmp.lt.s32.totalorder %v455, 0
        %v1813 = vand.u32 %v455, 2139095040
        %v1814 = vshrl.u32 %v1813, 23
        %v1815 = vsub.s32 %v1814, 127
        %v1816 = vand.u32 2147483647, %v455
        %v1817 = vand.u32 %v1816, 8388607
        %v1818 = vor.u32 %v1817, 8388608
        %v1819 = vsub.s32 0, %v1818
        %v1820 = vadd.s32 %v1815, 1
        %vm1821 = vcmp.gt.s32.totalorder %v1820, 0
        %v1822 = vsel %vm1821, %v1820, 0
        %v1823 = vshrl.u32 %v1822, 5
        %v1824 = vand.u32 %v1822, 31
        %v1825 = vsub.s32 32, %v1824
        %v1826 = vshrl.u32 683565275, %v1825
        %v1827 = vshll.u32 683565275, %v1824
        %v1828 = vshrl.u32 2475754826, %v1825
        %v1829 = vor.u32 %v1827, %v1828
        %v1830 = vshll.u32 2475754826, %v1824
        %v1831 = vshrl.u32 2131351028, %v1825
        %v1832 = vor.u32 %v1830, %v1831
        %v1833 = vshll.u32 2131351028, %v1824
        %v1834 = vshrl.u32 2102212464, %v1825
        %v1835 = vor.u32 %v1833, %v1834
        %v1836 = vshll.u32 2102212464, %v1824
        %v1837 = vshrl.u32 920167782, %v1825
        %v1838 = vor.u32 %v1836, %v1837
        %v1839 = vshll.u32 920167782, %v1824
        %v1840 = vshrl.u32 1326507024, %v1825
        %v1841 = vor.u32 %v1839, %v1840
        %vm1842 = vcmp.lt.s32.totalorder %v1823, 1
        %vm1843 = vcmp.lt.s32.totalorder %v1823, 2
        %vm1844 = vcmp.lt.s32.totalorder %v1823, 3
        %vm1845 = vcmp.lt.s32.totalorder %v1823, 4
        %v1846 = vsel %vm1842, %v1826, %v1829
        %v1847 = vsel %vm1845, %v1835, 2102212464
        %v1848 = vsel %vm1844, %v1832, %v1847
        %v1849 = vsel %vm1843, %v1846, %v1848
        %v1850 = vsel %vm1842, %v1829, %v1832
        %v1851 = vsel %vm1845, %v1838, 920167782
        %v1852 = vsel %vm1844, %v1835, %v1851
        %v1853 = vsel %vm1843, %v1850, %v1852
        %v1854 = vsel %vm1842, %v1832, %v1835
        %v1855 = vsel %vm1845, %v1841, 1326507024
        %v1856 = vsel %vm1844, %v1838, %v1855
        %v1857 = vsel %vm1843, %v1854, %v1856
        %v1858 = vshll.u32 %v1818, 8
        %v1859 = vmul.u32.u64.compose %v1858, %v1857
        %v1860 = vextract.low.u32 %v1859
        %v1861 = vextract.high.u32 %v1859
        %v1862 = vmul.u32.u64.compose %v1858, %v1853
        %v1863 = vextract.low.u32 %v1862
        %v1864 = vextract.high.u32 %v1862
        %v1865 = vmul.u32 %v1858, %v1849
        %v1866 = vadd.s32 %v1861, %v1863
        %vm1867 = vc.u32 %v1861, %v1863
        %v1868 = vadd.s32 %v1864, 1
        %v1869 = vsel %vm1867, %v1868, %v1864
        %v1870 = vadd.s32 %v1865, %v1869
        %v1871 = vadd.s32 %v1870, 536870912
        %v1872 = vshrl.u32 %v1871, 30
        %v1873 = vshll.u32 %v1872, 30
        %v1874 = vsub.s32 %v1870, %v1873
        %vm1875 = vcmp.lt.s32.totalorder %v1874, 0
        %v1876 = vsub.s32 0, %v1874
        %v1877 = vsel %vm1875, %v1876, %v1874
        %v1878 = vclz %v1877
        %v1879 = vsub.s32 %v1878, 2
        %vm1880 = vcmp.gt.s32.totalorder 0, %v1879
        %v1881 = vsel %vm1880, 0, %v1879
        %v1882 = vsub.s32 32, %v1881
        %v1883 = vshll.u32 %v1874, %v1881
        %v1884 = vshrl.u32 %v1866, %v1882
        %v1885 = vor.u32 %v1883, %v1884
        %v1886 = vsub.s32 4294967266, %v1881
        %v1887 = vadd.s32 %v1886, 127
        %v1888 = vshll.u32 %v1887, 23
        %v1889 = vor.u32 4788187, %v1888
        %v1890 = vand.u32 2147483647, %v1889
        %v1892 = vcvt.s32.f32 %v1885
        %v1893 = vmul.f32 %v1892, %v1890
        %v1894 = vxor.u32 %v1893, 2147483648
        %v1895 = vsel %vm1812, %v1894, %v1893
        %v1896 = vsub.s32 4, %v1872
        %v1897 = vsel %vm1812, %v1896, %v1872
        %v1898 = vsel %vm1811, %v455, %v1895
        %v1899 = vsel %vm1811, 0, %v1897
        %v1900 = vcosq.f32.pop %v1898
        %v1901 = vsinq.f32.pop %v1898
        %vm1902 = vweird.f32 %v455
        %v1903 = vadd.s32 %v1899, 3
        %v1904 = vand.u32 %v1903, 3
        %vm1905 = vcmp.lt.s32.totalorder %v1904, 2
        %vm1906 = vcmp.eq.s32.totalorder %v1904, 0
        %v1907 = vxor.u32 %v1901, 2147483648
        %v1908 = vsel %vm1906, %v1900, %v1907
        %vm1909 = vcmp.eq.s32.totalorder %v1904, 2
        %v1910 = vxor.u32 %v1900, 2147483648
        %v1911 = vsel %vm1909, %v1910, %v1901
        %v1912 = vsel %vm1905, %v1908, %v1911
        %v1913 = vsel %vm1902, nan, %v1912
        %v1914 = vand.u32 2147483647, %v456
        %vm1915 = vcmp.le.f32.partialorder %v1914, 0.7853982
        %vm1916 = vcmp.lt.s32.totalorder %v456, 0
        %v1917 = vand.u32 %v456, 2139095040
        %v1918 = vshrl.u32 %v1917, 23
        %v1919 = vsub.s32 %v1918, 127
        %v1920 = vand.u32 2147483647, %v456
        %v1921 = vand.u32 %v1920, 8388607
        %v1922 = vor.u32 %v1921, 8388608
        %v1923 = vsub.s32 0, %v1922
        %v1924 = vadd.s32 %v1919, 1
        %vm1925 = vcmp.gt.s32.totalorder %v1924, 0
        %v1926 = vsel %vm1925, %v1924, 0
        %v1927 = vshrl.u32 %v1926, 5
        %v1928 = vand.u32 %v1926, 31
        %v1929 = vsub.s32 32, %v1928
        %v1930 = vshrl.u32 683565275, %v1929
        %v1931 = vshll.u32 683565275, %v1928
        %v1932 = vshrl.u32 2475754826, %v1929
        %v1933 = vor.u32 %v1931, %v1932
        %v1934 = vshll.u32 2475754826, %v1928
        %v1935 = vshrl.u32 2131351028, %v1929
        %v1936 = vor.u32 %v1934, %v1935
        %v1937 = vshll.u32 2131351028, %v1928
        %v1938 = vshrl.u32 2102212464, %v1929
        %v1939 = vor.u32 %v1937, %v1938
        %v1940 = vshll.u32 2102212464, %v1928
        %v1941 = vshrl.u32 920167782, %v1929
        %v1942 = vor.u32 %v1940, %v1941
        %v1943 = vshll.u32 920167782, %v1928
        %v1944 = vshrl.u32 1326507024, %v1929
        %v1945 = vor.u32 %v1943, %v1944
        %vm1946 = vcmp.lt.s32.totalorder %v1927, 1
        %vm1947 = vcmp.lt.s32.totalorder %v1927, 2
        %vm1948 = vcmp.lt.s32.totalorder %v1927, 3
        %vm1949 = vcmp.lt.s32.totalorder %v1927, 4
        %v1950 = vsel %vm1946, %v1930, %v1933
        %v1951 = vsel %vm1949, %v1939, 2102212464
        %v1952 = vsel %vm1948, %v1936, %v1951
        %v1953 = vsel %vm1947, %v1950, %v1952
        %v1954 = vsel %vm1946, %v1933, %v1936
        %v1955 = vsel %vm1949, %v1942, 920167782
        %v1956 = vsel %vm1948, %v1939, %v1955
        %v1957 = vsel %vm1947, %v1954, %v1956
        %v1958 = vsel %vm1946, %v1936, %v1939
        %v1959 = vsel %vm1949, %v1945, 1326507024
        %v1960 = vsel %vm1948, %v1942, %v1959
        %v1961 = vsel %vm1947, %v1958, %v1960
        %v1962 = vshll.u32 %v1922, 8
        %v1963 = vmul.u32.u64.compose %v1962, %v1961
        %v1964 = vextract.low.u32 %v1963
        %v1965 = vextract.high.u32 %v1963
        %v1966 = vmul.u32.u64.compose %v1962, %v1957
        %v1967 = vextract.low.u32 %v1966
        %v1968 = vextract.high.u32 %v1966
        %v1969 = vmul.u32 %v1962, %v1953
        %v1970 = vadd.s32 %v1965, %v1967
        %vm1971 = vc.u32 %v1965, %v1967
        %v1972 = vadd.s32 %v1968, 1
        %v1973 = vsel %vm1971, %v1972, %v1968
        %v1974 = vadd.s32 %v1969, %v1973
        %v1975 = vadd.s32 %v1974, 536870912
        %v1976 = vshrl.u32 %v1975, 30
        %v1977 = vshll.u32 %v1976, 30
        %v1978 = vsub.s32 %v1974, %v1977
        %vm1979 = vcmp.lt.s32.totalorder %v1978, 0
        %v1980 = vsub.s32 0, %v1978
        %v1981 = vsel %vm1979, %v1980, %v1978
        %v1982 = vclz %v1981
        %v1983 = vsub.s32 %v1982, 2
        %vm1984 = vcmp.gt.s32.totalorder 0, %v1983
        %v1985 = vsel %vm1984, 0, %v1983
        %v1986 = vsub.s32 32, %v1985
        %v1987 = vshll.u32 %v1978, %v1985
        %v1988 = vshrl.u32 %v1970, %v1986
        %v1989 = vor.u32 %v1987, %v1988
        %v1990 = vsub.s32 4294967266, %v1985
        %v1991 = vadd.s32 %v1990, 127
        %v1992 = vshll.u32 %v1991, 23
        %v1993 = vor.u32 4788187, %v1992
        %v1994 = vand.u32 2147483647, %v1993
        %v1996 = vcvt.s32.f32 %v1989
        %v1997 = vmul.f32 %v1996, %v1994
        %v1998 = vxor.u32 %v1997, 2147483648
        %v1999 = vsel %vm1916, %v1998, %v1997
        %v2000 = vsub.s32 4, %v1976
        %v2001 = vsel %vm1916, %v2000, %v1976
        %v2002 = vsel %vm1915, %v456, %v1999
        %v2003 = vsel %vm1915, 0, %v2001
        %v2004 = vcosq.f32.pop %v2002
        %v2005 = vsinq.f32.pop %v2002
        %vm2006 = vweird.f32 %v456
        %v2007 = vadd.s32 %v2003, 3
        %v2008 = vand.u32 %v2007, 3
        %vm2009 = vcmp.lt.s32.totalorder %v2008, 2
        %vm2010 = vcmp.eq.s32.totalorder %v2008, 0
        %v2011 = vxor.u32 %v2005, 2147483648
        %v2012 = vsel %vm2010, %v2004, %v2011
        %vm2013 = vcmp.eq.s32.totalorder %v2008, 2
        %v2014 = vxor.u32 %v2004, 2147483648
        %v2015 = vsel %vm2013, %v2014, %v2005
        %v2016 = vsel %vm2009, %v2012, %v2015
        %v2017 = vsel %vm2006, nan, %v2016
        %v2018 = vand.u32 2147483647, %v457
        %vm2019 = vcmp.le.f32.partialorder %v2018, 0.7853982
        %vm2020 = vcmp.lt.s32.totalorder %v457, 0
        %v2021 = vand.u32 %v457, 2139095040
        %v2022 = vshrl.u32 %v2021, 23
        %v2023 = vsub.s32 %v2022, 127
        %v2024 = vand.u32 2147483647, %v457
        %v2025 = vand.u32 %v2024, 8388607
        %v2026 = vor.u32 %v2025, 8388608
        %v2027 = vsub.s32 0, %v2026
        %v2028 = vadd.s32 %v2023, 1
        %vm2029 = vcmp.gt.s32.totalorder %v2028, 0
        %v2030 = vsel %vm2029, %v2028, 0
        %v2031 = vshrl.u32 %v2030, 5
        %v2032 = vand.u32 %v2030, 31
        %v2033 = vsub.s32 32, %v2032
        %v2034 = vshrl.u32 683565275, %v2033
        %v2035 = vshll.u32 683565275, %v2032
        %v2036 = vshrl.u32 2475754826, %v2033
        %v2037 = vor.u32 %v2035, %v2036
        %v2038 = vshll.u32 2475754826, %v2032
        %v2039 = vshrl.u32 2131351028, %v2033
        %v2040 = vor.u32 %v2038, %v2039
        %v2041 = vshll.u32 2131351028, %v2032
        %v2042 = vshrl.u32 2102212464, %v2033
        %v2043 = vor.u32 %v2041, %v2042
        %v2044 = vshll.u32 2102212464, %v2032
        %v2045 = vshrl.u32 920167782, %v2033
        %v2046 = vor.u32 %v2044, %v2045
        %v2047 = vshll.u32 920167782, %v2032
        %v2048 = vshrl.u32 1326507024, %v2033
        %v2049 = vor.u32 %v2047, %v2048
        %vm2050 = vcmp.lt.s32.totalorder %v2031, 1
        %vm2051 = vcmp.lt.s32.totalorder %v2031, 2
        %vm2052 = vcmp.lt.s32.totalorder %v2031, 3
        %vm2053 = vcmp.lt.s32.totalorder %v2031, 4
        %v2054 = vsel %vm2050, %v2034, %v2037
        %v2055 = vsel %vm2053, %v2043, 2102212464
        %v2056 = vsel %vm2052, %v2040, %v2055
        %v2057 = vsel %vm2051, %v2054, %v2056
        %v2058 = vsel %vm2050, %v2037, %v2040
        %v2059 = vsel %vm2053, %v2046, 920167782
        %v2060 = vsel %vm2052, %v2043, %v2059
        %v2061 = vsel %vm2051, %v2058, %v2060
        %v2062 = vsel %vm2050, %v2040, %v2043
        %v2063 = vsel %vm2053, %v2049, 1326507024
        %v2064 = vsel %vm2052, %v2046, %v2063
        %v2065 = vsel %vm2051, %v2062, %v2064
        %v2066 = vshll.u32 %v2026, 8
        %v2067 = vmul.u32.u64.compose %v2066, %v2065
        %v2068 = vextract.low.u32 %v2067
        %v2069 = vextract.high.u32 %v2067
        %v2070 = vmul.u32.u64.compose %v2066, %v2061
        %v2071 = vextract.low.u32 %v2070
        %v2072 = vextract.high.u32 %v2070
        %v2073 = vmul.u32 %v2066, %v2057
        %v2074 = vadd.s32 %v2069, %v2071
        %vm2075 = vc.u32 %v2069, %v2071
        %v2076 = vadd.s32 %v2072, 1
        %v2077 = vsel %vm2075, %v2076, %v2072
        %v2078 = vadd.s32 %v2073, %v2077
        %v2079 = vadd.s32 %v2078, 536870912
        %v2080 = vshrl.u32 %v2079, 30
        %v2081 = vshll.u32 %v2080, 30
        %v2082 = vsub.s32 %v2078, %v2081
        %vm2083 = vcmp.lt.s32.totalorder %v2082, 0
        %v2084 = vsub.s32 0, %v2082
        %v2085 = vsel %vm2083, %v2084, %v2082
        %v2086 = vclz %v2085
        %v2087 = vsub.s32 %v2086, 2
        %vm2088 = vcmp.gt.s32.totalorder 0, %v2087
        %v2089 = vsel %vm2088, 0, %v2087
        %v2090 = vsub.s32 32, %v2089
        %v2091 = vshll.u32 %v2082, %v2089
        %v2092 = vshrl.u32 %v2074, %v2090
        %v2093 = vor.u32 %v2091, %v2092
        %v2094 = vsub.s32 4294967266, %v2089
        %v2095 = vadd.s32 %v2094, 127
        %v2096 = vshll.u32 %v2095, 23
        %v2097 = vor.u32 4788187, %v2096
        %v2098 = vand.u32 2147483647, %v2097
        %v2100 = vcvt.s32.f32 %v2093
        %v2101 = vmul.f32 %v2100, %v2098
        %v2102 = vxor.u32 %v2101, 2147483648
        %v2103 = vsel %vm2020, %v2102, %v2101
        %v2104 = vsub.s32 4, %v2080
        %v2105 = vsel %vm2020, %v2104, %v2080
        %v2106 = vsel %vm2019, %v457, %v2103
        %v2107 = vsel %vm2019, 0, %v2105
        %v2108 = vcosq.f32.pop %v2106
        %v2109 = vsinq.f32.pop %v2106
        %vm2110 = vweird.f32 %v457
        %v2111 = vadd.s32 %v2107, 3
        %v2112 = vand.u32 %v2111, 3
        %vm2113 = vcmp.lt.s32.totalorder %v2112, 2
        %vm2114 = vcmp.eq.s32.totalorder %v2112, 0
        %v2115 = vxor.u32 %v2109, 2147483648
        %v2116 = vsel %vm2114, %v2108, %v2115
        %vm2117 = vcmp.eq.s32.totalorder %v2112, 2
        %v2118 = vxor.u32 %v2108, 2147483648
        %v2119 = vsel %vm2117, %v2118, %v2109
        %v2120 = vsel %vm2113, %v2116, %v2119
        %v2121 = vsel %vm2110, nan, %v2120
        %v2122 = vand.u32 2147483647, %v442
        %vm2123 = vcmp.le.f32.partialorder %v2122, 0.7853982
        %vm2124 = vcmp.lt.s32.totalorder %v442, 0
        %v2125 = vand.u32 %v442, 2139095040
        %v2126 = vshrl.u32 %v2125, 23
        %v2127 = vsub.s32 %v2126, 127
        %v2128 = vand.u32 2147483647, %v442
        %v2129 = vand.u32 %v2128, 8388607
        %v2130 = vor.u32 %v2129, 8388608
        %v2131 = vsub.s32 0, %v2130
        %v2132 = vadd.s32 %v2127, 1
        %vm2133 = vcmp.gt.s32.totalorder %v2132, 0
        %v2134 = vsel %vm2133, %v2132, 0
        %v2135 = vshrl.u32 %v2134, 5
        %v2136 = vand.u32 %v2134, 31
        %v2137 = vsub.s32 32, %v2136
        %v2138 = vshrl.u32 683565275, %v2137
        %v2139 = vshll.u32 683565275, %v2136
        %v2140 = vshrl.u32 2475754826, %v2137
        %v2141 = vor.u32 %v2139, %v2140
        %v2142 = vshll.u32 2475754826, %v2136
        %v2143 = vshrl.u32 2131351028, %v2137
        %v2144 = vor.u32 %v2142, %v2143
        %v2145 = vshll.u32 2131351028, %v2136
        %v2146 = vshrl.u32 2102212464, %v2137
        %v2147 = vor.u32 %v2145, %v2146
        %v2148 = vshll.u32 2102212464, %v2136
        %v2149 = vshrl.u32 920167782, %v2137
        %v2150 = vor.u32 %v2148, %v2149
        %v2151 = vshll.u32 920167782, %v2136
        %v2152 = vshrl.u32 1326507024, %v2137
        %v2153 = vor.u32 %v2151, %v2152
        %vm2154 = vcmp.lt.s32.totalorder %v2135, 1
        %vm2155 = vcmp.lt.s32.totalorder %v2135, 2
        %vm2156 = vcmp.lt.s32.totalorder %v2135, 3
        %vm2157 = vcmp.lt.s32.totalorder %v2135, 4
        %v2158 = vsel %vm2154, %v2138, %v2141
        %v2159 = vsel %vm2157, %v2147, 2102212464
        %v2160 = vsel %vm2156, %v2144, %v2159
        %v2161 = vsel %vm2155, %v2158, %v2160
        %v2162 = vsel %vm2154, %v2141, %v2144
        %v2163 = vsel %vm2157, %v2150, 920167782
        %v2164 = vsel %vm2156, %v2147, %v2163
        %v2165 = vsel %vm2155, %v2162, %v2164
        %v2166 = vsel %vm2154, %v2144, %v2147
        %v2167 = vsel %vm2157, %v2153, 1326507024
        %v2168 = vsel %vm2156, %v2150, %v2167
        %v2169 = vsel %vm2155, %v2166, %v2168
        %v2170 = vshll.u32 %v2130, 8
        %v2171 = vmul.u32.u64.compose %v2170, %v2169
        %v2172 = vextract.low.u32 %v2171
        %v2173 = vextract.high.u32 %v2171
        %v2174 = vmul.u32.u64.compose %v2170, %v2165
        %v2175 = vextract.low.u32 %v2174
        %v2176 = vextract.high.u32 %v2174
        %v2177 = vmul.u32 %v2170, %v2161
        %v2178 = vadd.s32 %v2173, %v2175
        %vm2179 = vc.u32 %v2173, %v2175
        %v2180 = vadd.s32 %v2176, 1
        %v2181 = vsel %vm2179, %v2180, %v2176
        %v2182 = vadd.s32 %v2177, %v2181
        %v2183 = vadd.s32 %v2182, 536870912
        %v2184 = vshrl.u32 %v2183, 30
        %v2185 = vshll.u32 %v2184, 30
        %v2186 = vsub.s32 %v2182, %v2185
        %vm2187 = vcmp.lt.s32.totalorder %v2186, 0
        %v2188 = vsub.s32 0, %v2186
        %v2189 = vsel %vm2187, %v2188, %v2186
        %v2190 = vclz %v2189
        %v2191 = vsub.s32 %v2190, 2
        %vm2192 = vcmp.gt.s32.totalorder 0, %v2191
        %v2193 = vsel %vm2192, 0, %v2191
        %v2194 = vsub.s32 32, %v2193
        %v2195 = vshll.u32 %v2186, %v2193
        %v2196 = vshrl.u32 %v2178, %v2194
        %v2197 = vor.u32 %v2195, %v2196
        %v2198 = vsub.s32 4294967266, %v2193
        %v2199 = vadd.s32 %v2198, 127
        %v2200 = vshll.u32 %v2199, 23
        %v2201 = vor.u32 4788187, %v2200
        %v2202 = vand.u32 2147483647, %v2201
        %v2204 = vcvt.s32.f32 %v2197
        %v2205 = vmul.f32 %v2204, %v2202
        %v2206 = vxor.u32 %v2205, 2147483648
        %v2207 = vsel %vm2124, %v2206, %v2205
        %v2208 = vsub.s32 4, %v2184
        %v2209 = vsel %vm2124, %v2208, %v2184
        %v2210 = vsel %vm2123, %v442, %v2207
        %v2211 = vsel %vm2123, 0, %v2209
        %v2212 = vcosq.f32.pop %v2210
        %v2213 = vsinq.f32.pop %v2210
        %vm2214 = vweird.f32 %v442
        %v2215 = vand.u32 %v2211, 3
        %vm2216 = vcmp.lt.s32.totalorder %v2215, 2
        %vm2217 = vcmp.eq.s32.totalorder %v2215, 0
        %v2218 = vxor.u32 %v2213, 2147483648
        %v2219 = vsel %vm2217, %v2212, %v2218
        %vm2220 = vcmp.eq.s32.totalorder %v2215, 2
        %v2221 = vxor.u32 %v2212, 2147483648
        %v2222 = vsel %vm2220, %v2221, %v2213
        %v2223 = vsel %vm2216, %v2219, %v2222
        %v2224 = vsel %vm2214, nan, %v2223
        %v2225 = vand.u32 2147483647, %v443
        %vm2226 = vcmp.le.f32.partialorder %v2225, 0.7853982
        %vm2227 = vcmp.lt.s32.totalorder %v443, 0
        %v2228 = vand.u32 %v443, 2139095040
        %v2229 = vshrl.u32 %v2228, 23
        %v2230 = vsub.s32 %v2229, 127
        %v2231 = vand.u32 2147483647, %v443
        %v2232 = vand.u32 %v2231, 8388607
        %v2233 = vor.u32 %v2232, 8388608
        %v2234 = vsub.s32 0, %v2233
        %v2235 = vadd.s32 %v2230, 1
        %vm2236 = vcmp.gt.s32.totalorder %v2235, 0
        %v2237 = vsel %vm2236, %v2235, 0
        %v2238 = vshrl.u32 %v2237, 5
        %v2239 = vand.u32 %v2237, 31
        %v2240 = vsub.s32 32, %v2239
        %v2241 = vshrl.u32 683565275, %v2240
        %v2242 = vshll.u32 683565275, %v2239
        %v2243 = vshrl.u32 2475754826, %v2240
        %v2244 = vor.u32 %v2242, %v2243
        %v2245 = vshll.u32 2475754826, %v2239
        %v2246 = vshrl.u32 2131351028, %v2240
        %v2247 = vor.u32 %v2245, %v2246
        %v2248 = vshll.u32 2131351028, %v2239
        %v2249 = vshrl.u32 2102212464, %v2240
        %v2250 = vor.u32 %v2248, %v2249
        %v2251 = vshll.u32 2102212464, %v2239
        %v2252 = vshrl.u32 920167782, %v2240
        %v2253 = vor.u32 %v2251, %v2252
        %v2254 = vshll.u32 920167782, %v2239
        %v2255 = vshrl.u32 1326507024, %v2240
        %v2256 = vor.u32 %v2254, %v2255
        %vm2257 = vcmp.lt.s32.totalorder %v2238, 1
        %vm2258 = vcmp.lt.s32.totalorder %v2238, 2
        %vm2259 = vcmp.lt.s32.totalorder %v2238, 3
        %vm2260 = vcmp.lt.s32.totalorder %v2238, 4
        %v2261 = vsel %vm2257, %v2241, %v2244
        %v2262 = vsel %vm2260, %v2250, 2102212464
        %v2263 = vsel %vm2259, %v2247, %v2262
        %v2264 = vsel %vm2258, %v2261, %v2263
        %v2265 = vsel %vm2257, %v2244, %v2247
        %v2266 = vsel %vm2260, %v2253, 920167782
        %v2267 = vsel %vm2259, %v2250, %v2266
        %v2268 = vsel %vm2258, %v2265, %v2267
        %v2269 = vsel %vm2257, %v2247, %v2250
        %v2270 = vsel %vm2260, %v2256, 1326507024
        %v2271 = vsel %vm2259, %v2253, %v2270
        %v2272 = vsel %vm2258, %v2269, %v2271
        %v2273 = vshll.u32 %v2233, 8
        %v2274 = vmul.u32.u64.compose %v2273, %v2272
        %v2275 = vextract.low.u32 %v2274
        %v2276 = vextract.high.u32 %v2274
        %v2277 = vmul.u32.u64.compose %v2273, %v2268
        %v2278 = vextract.low.u32 %v2277
        %v2279 = vextract.high.u32 %v2277
        %v2280 = vmul.u32 %v2273, %v2264
        %v2281 = vadd.s32 %v2276, %v2278
        %vm2282 = vc.u32 %v2276, %v2278
        %v2283 = vadd.s32 %v2279, 1
        %v2284 = vsel %vm2282, %v2283, %v2279
        %v2285 = vadd.s32 %v2280, %v2284
        %v2286 = vadd.s32 %v2285, 536870912
        %v2287 = vshrl.u32 %v2286, 30
        %v2288 = vshll.u32 %v2287, 30
        %v2289 = vsub.s32 %v2285, %v2288
        %vm2290 = vcmp.lt.s32.totalorder %v2289, 0
        %v2291 = vsub.s32 0, %v2289
        %v2292 = vsel %vm2290, %v2291, %v2289
        %v2293 = vclz %v2292
        %v2294 = vsub.s32 %v2293, 2
        %vm2295 = vcmp.gt.s32.totalorder 0, %v2294
        %v2296 = vsel %vm2295, 0, %v2294
        %v2297 = vsub.s32 32, %v2296
        %v2298 = vshll.u32 %v2289, %v2296
        %v2299 = vshrl.u32 %v2281, %v2297
        %v2300 = vor.u32 %v2298, %v2299
        %v2301 = vsub.s32 4294967266, %v2296
        %v2302 = vadd.s32 %v2301, 127
        %v2303 = vshll.u32 %v2302, 23
        %v2304 = vor.u32 4788187, %v2303
        %v2305 = vand.u32 2147483647, %v2304
        %v2307 = vcvt.s32.f32 %v2300
        %v2308 = vmul.f32 %v2307, %v2305
        %v2309 = vxor.u32 %v2308, 2147483648
        %v2310 = vsel %vm2227, %v2309, %v2308
        %v2311 = vsub.s32 4, %v2287
        %v2312 = vsel %vm2227, %v2311, %v2287
        %v2313 = vsel %vm2226, %v443, %v2310
        %v2314 = vsel %vm2226, 0, %v2312
        %v2315 = vcosq.f32.pop %v2313
        %v2316 = vsinq.f32.pop %v2313
        %vm2317 = vweird.f32 %v443
        %v2318 = vand.u32 %v2314, 3
        %vm2319 = vcmp.lt.s32.totalorder %v2318, 2
        %vm2320 = vcmp.eq.s32.totalorder %v2318, 0
        %v2321 = vxor.u32 %v2316, 2147483648
        %v2322 = vsel %vm2320, %v2315, %v2321
        %vm2323 = vcmp.eq.s32.totalorder %v2318, 2
        %v2324 = vxor.u32 %v2315, 2147483648
        %v2325 = vsel %vm2323, %v2324, %v2316
        %v2326 = vsel %vm2319, %v2322, %v2325
        %v2327 = vsel %vm2317, nan, %v2326
        %v2328 = vand.u32 2147483647, %v444
        %vm2329 = vcmp.le.f32.partialorder %v2328, 0.7853982
        %vm2330 = vcmp.lt.s32.totalorder %v444, 0
        %v2331 = vand.u32 %v444, 2139095040
        %v2332 = vshrl.u32 %v2331, 23
        %v2333 = vsub.s32 %v2332, 127
        %v2334 = vand.u32 2147483647, %v444
        %v2335 = vand.u32 %v2334, 8388607
        %v2336 = vor.u32 %v2335, 8388608
        %v2337 = vsub.s32 0, %v2336
        %v2338 = vadd.s32 %v2333, 1
        %vm2339 = vcmp.gt.s32.totalorder %v2338, 0
        %v2340 = vsel %vm2339, %v2338, 0
        %v2341 = vshrl.u32 %v2340, 5
        %v2342 = vand.u32 %v2340, 31
        %v2343 = vsub.s32 32, %v2342
        %v2344 = vshrl.u32 683565275, %v2343
        %v2345 = vshll.u32 683565275, %v2342
        %v2346 = vshrl.u32 2475754826, %v2343
        %v2347 = vor.u32 %v2345, %v2346
        %v2348 = vshll.u32 2475754826, %v2342
        %v2349 = vshrl.u32 2131351028, %v2343
        %v2350 = vor.u32 %v2348, %v2349
        %v2351 = vshll.u32 2131351028, %v2342
        %v2352 = vshrl.u32 2102212464, %v2343
        %v2353 = vor.u32 %v2351, %v2352
        %v2354 = vshll.u32 2102212464, %v2342
        %v2355 = vshrl.u32 920167782, %v2343
        %v2356 = vor.u32 %v2354, %v2355
        %v2357 = vshll.u32 920167782, %v2342
        %v2358 = vshrl.u32 1326507024, %v2343
        %v2359 = vor.u32 %v2357, %v2358
        %vm2360 = vcmp.lt.s32.totalorder %v2341, 1
        %vm2361 = vcmp.lt.s32.totalorder %v2341, 2
        %vm2362 = vcmp.lt.s32.totalorder %v2341, 3
        %vm2363 = vcmp.lt.s32.totalorder %v2341, 4
        %v2364 = vsel %vm2360, %v2344, %v2347
        %v2365 = vsel %vm2363, %v2353, 2102212464
        %v2366 = vsel %vm2362, %v2350, %v2365
        %v2367 = vsel %vm2361, %v2364, %v2366
        %v2368 = vsel %vm2360, %v2347, %v2350
        %v2369 = vsel %vm2363, %v2356, 920167782
        %v2370 = vsel %vm2362, %v2353, %v2369
        %v2371 = vsel %vm2361, %v2368, %v2370
        %v2372 = vsel %vm2360, %v2350, %v2353
        %v2373 = vsel %vm2363, %v2359, 1326507024
        %v2374 = vsel %vm2362, %v2356, %v2373
        %v2375 = vsel %vm2361, %v2372, %v2374
        %v2376 = vshll.u32 %v2336, 8
        %v2377 = vmul.u32.u64.compose %v2376, %v2375
        %v2378 = vextract.low.u32 %v2377
        %v2379 = vextract.high.u32 %v2377
        %v2380 = vmul.u32.u64.compose %v2376, %v2371
        %v2381 = vextract.low.u32 %v2380
        %v2382 = vextract.high.u32 %v2380
        %v2383 = vmul.u32 %v2376, %v2367
        %v2384 = vadd.s32 %v2379, %v2381
        %vm2385 = vc.u32 %v2379, %v2381
        %v2386 = vadd.s32 %v2382, 1
        %v2387 = vsel %vm2385, %v2386, %v2382
        %v2388 = vadd.s32 %v2383, %v2387
        %v2389 = vadd.s32 %v2388, 536870912
        %v2390 = vshrl.u32 %v2389, 30
        %v2391 = vshll.u32 %v2390, 30
        %v2392 = vsub.s32 %v2388, %v2391
        %vm2393 = vcmp.lt.s32.totalorder %v2392, 0
        %v2394 = vsub.s32 0, %v2392
        %v2395 = vsel %vm2393, %v2394, %v2392
        %v2396 = vclz %v2395
        %v2397 = vsub.s32 %v2396, 2
        %vm2398 = vcmp.gt.s32.totalorder 0, %v2397
        %v2399 = vsel %vm2398, 0, %v2397
        %v2400 = vsub.s32 32, %v2399
        %v2401 = vshll.u32 %v2392, %v2399
        %v2402 = vshrl.u32 %v2384, %v2400
        %v2403 = vor.u32 %v2401, %v2402
        %v2404 = vsub.s32 4294967266, %v2399
        %v2405 = vadd.s32 %v2404, 127
        %v2406 = vshll.u32 %v2405, 23
        %v2407 = vor.u32 4788187, %v2406
        %v2408 = vand.u32 2147483647, %v2407
        %v2410 = vcvt.s32.f32 %v2403
        %v2411 = vmul.f32 %v2410, %v2408
        %v2412 = vxor.u32 %v2411, 2147483648
        %v2413 = vsel %vm2330, %v2412, %v2411
        %v2414 = vsub.s32 4, %v2390
        %v2415 = vsel %vm2330, %v2414, %v2390
        %v2416 = vsel %vm2329, %v444, %v2413
        %v2417 = vsel %vm2329, 0, %v2415
        %v2418 = vcosq.f32.pop %v2416
        %v2419 = vsinq.f32.pop %v2416
        %vm2420 = vweird.f32 %v444
        %v2421 = vand.u32 %v2417, 3
        %vm2422 = vcmp.lt.s32.totalorder %v2421, 2
        %vm2423 = vcmp.eq.s32.totalorder %v2421, 0
        %v2424 = vxor.u32 %v2419, 2147483648
        %v2425 = vsel %vm2423, %v2418, %v2424
        %vm2426 = vcmp.eq.s32.totalorder %v2421, 2
        %v2427 = vxor.u32 %v2418, 2147483648
        %v2428 = vsel %vm2426, %v2427, %v2419
        %v2429 = vsel %vm2422, %v2425, %v2428
        %v2430 = vsel %vm2420, nan, %v2429
        %v2431 = vand.u32 2147483647, %v445
        %vm2432 = vcmp.le.f32.partialorder %v2431, 0.7853982
        %vm2433 = vcmp.lt.s32.totalorder %v445, 0
        %v2434 = vand.u32 %v445, 2139095040
        %v2435 = vshrl.u32 %v2434, 23
        %v2436 = vsub.s32 %v2435, 127
        %v2437 = vand.u32 2147483647, %v445
        %v2438 = vand.u32 %v2437, 8388607
        %v2439 = vor.u32 %v2438, 8388608
        %v2440 = vsub.s32 0, %v2439
        %v2441 = vadd.s32 %v2436, 1
        %vm2442 = vcmp.gt.s32.totalorder %v2441, 0
        %v2443 = vsel %vm2442, %v2441, 0
        %v2444 = vshrl.u32 %v2443, 5
        %v2445 = vand.u32 %v2443, 31
        %v2446 = vsub.s32 32, %v2445
        %v2447 = vshrl.u32 683565275, %v2446
        %v2448 = vshll.u32 683565275, %v2445
        %v2449 = vshrl.u32 2475754826, %v2446
        %v2450 = vor.u32 %v2448, %v2449
        %v2451 = vshll.u32 2475754826, %v2445
        %v2452 = vshrl.u32 2131351028, %v2446
        %v2453 = vor.u32 %v2451, %v2452
        %v2454 = vshll.u32 2131351028, %v2445
        %v2455 = vshrl.u32 2102212464, %v2446
        %v2456 = vor.u32 %v2454, %v2455
        %v2457 = vshll.u32 2102212464, %v2445
        %v2458 = vshrl.u32 920167782, %v2446
        %v2459 = vor.u32 %v2457, %v2458
        %v2460 = vshll.u32 920167782, %v2445
        %v2461 = vshrl.u32 1326507024, %v2446
        %v2462 = vor.u32 %v2460, %v2461
        %vm2463 = vcmp.lt.s32.totalorder %v2444, 1
        %vm2464 = vcmp.lt.s32.totalorder %v2444, 2
        %vm2465 = vcmp.lt.s32.totalorder %v2444, 3
        %vm2466 = vcmp.lt.s32.totalorder %v2444, 4
        %v2467 = vsel %vm2463, %v2447, %v2450
        %v2468 = vsel %vm2466, %v2456, 2102212464
        %v2469 = vsel %vm2465, %v2453, %v2468
        %v2470 = vsel %vm2464, %v2467, %v2469
        %v2471 = vsel %vm2463, %v2450, %v2453
        %v2472 = vsel %vm2466, %v2459, 920167782
        %v2473 = vsel %vm2465, %v2456, %v2472
        %v2474 = vsel %vm2464, %v2471, %v2473
        %v2475 = vsel %vm2463, %v2453, %v2456
        %v2476 = vsel %vm2466, %v2462, 1326507024
        %v2477 = vsel %vm2465, %v2459, %v2476
        %v2478 = vsel %vm2464, %v2475, %v2477
        %v2479 = vshll.u32 %v2439, 8
        %v2480 = vmul.u32.u64.compose %v2479, %v2478
        %v2481 = vextract.low.u32 %v2480
        %v2482 = vextract.high.u32 %v2480
        %v2483 = vmul.u32.u64.compose %v2479, %v2474
        %v2484 = vextract.low.u32 %v2483
        %v2485 = vextract.high.u32 %v2483
        %v2486 = vmul.u32 %v2479, %v2470
        %v2487 = vadd.s32 %v2482, %v2484
        %vm2488 = vc.u32 %v2482, %v2484
        %v2489 = vadd.s32 %v2485, 1
        %v2490 = vsel %vm2488, %v2489, %v2485
        %v2491 = vadd.s32 %v2486, %v2490
        %v2492 = vadd.s32 %v2491, 536870912
        %v2493 = vshrl.u32 %v2492, 30
        %v2494 = vshll.u32 %v2493, 30
        %v2495 = vsub.s32 %v2491, %v2494
        %vm2496 = vcmp.lt.s32.totalorder %v2495, 0
        %v2497 = vsub.s32 0, %v2495
        %v2498 = vsel %vm2496, %v2497, %v2495
        %v2499 = vclz %v2498
        %v2500 = vsub.s32 %v2499, 2
        %vm2501 = vcmp.gt.s32.totalorder 0, %v2500
        %v2502 = vsel %vm2501, 0, %v2500
        %v2503 = vsub.s32 32, %v2502
        %v2504 = vshll.u32 %v2495, %v2502
        %v2505 = vshrl.u32 %v2487, %v2503
        %v2506 = vor.u32 %v2504, %v2505
        %v2507 = vsub.s32 4294967266, %v2502
        %v2508 = vadd.s32 %v2507, 127
        %v2509 = vshll.u32 %v2508, 23
        %v2510 = vor.u32 4788187, %v2509
        %v2511 = vand.u32 2147483647, %v2510
        %v2513 = vcvt.s32.f32 %v2506
        %v2514 = vmul.f32 %v2513, %v2511
        %v2515 = vxor.u32 %v2514, 2147483648
        %v2516 = vsel %vm2433, %v2515, %v2514
        %v2517 = vsub.s32 4, %v2493
        %v2518 = vsel %vm2433, %v2517, %v2493
        %v2519 = vsel %vm2432, %v445, %v2516
        %v2520 = vsel %vm2432, 0, %v2518
        %v2521 = vcosq.f32.pop %v2519
        %v2522 = vsinq.f32.pop %v2519
        %vm2523 = vweird.f32 %v445
        %v2524 = vand.u32 %v2520, 3
        %vm2525 = vcmp.lt.s32.totalorder %v2524, 2
        %vm2526 = vcmp.eq.s32.totalorder %v2524, 0
        %v2527 = vxor.u32 %v2522, 2147483648
        %v2528 = vsel %vm2526, %v2521, %v2527
        %vm2529 = vcmp.eq.s32.totalorder %v2524, 2
        %v2530 = vxor.u32 %v2521, 2147483648
        %v2531 = vsel %vm2529, %v2530, %v2522
        %v2532 = vsel %vm2525, %v2528, %v2531
        %v2533 = vsel %vm2523, nan, %v2532
        %v2534 = vand.u32 2147483647, %v446
        %vm2535 = vcmp.le.f32.partialorder %v2534, 0.7853982
        %vm2536 = vcmp.lt.s32.totalorder %v446, 0
        %v2537 = vand.u32 %v446, 2139095040
        %v2538 = vshrl.u32 %v2537, 23
        %v2539 = vsub.s32 %v2538, 127
        %v2540 = vand.u32 2147483647, %v446
        %v2541 = vand.u32 %v2540, 8388607
        %v2542 = vor.u32 %v2541, 8388608
        %v2543 = vsub.s32 0, %v2542
        %v2544 = vadd.s32 %v2539, 1
        %vm2545 = vcmp.gt.s32.totalorder %v2544, 0
        %v2546 = vsel %vm2545, %v2544, 0
        %v2547 = vshrl.u32 %v2546, 5
        %v2548 = vand.u32 %v2546, 31
        %v2549 = vsub.s32 32, %v2548
        %v2550 = vshrl.u32 683565275, %v2549
        %v2551 = vshll.u32 683565275, %v2548
        %v2552 = vshrl.u32 2475754826, %v2549
        %v2553 = vor.u32 %v2551, %v2552
        %v2554 = vshll.u32 2475754826, %v2548
        %v2555 = vshrl.u32 2131351028, %v2549
        %v2556 = vor.u32 %v2554, %v2555
        %v2557 = vshll.u32 2131351028, %v2548
        %v2558 = vshrl.u32 2102212464, %v2549
        %v2559 = vor.u32 %v2557, %v2558
        %v2560 = vshll.u32 2102212464, %v2548
        %v2561 = vshrl.u32 920167782, %v2549
        %v2562 = vor.u32 %v2560, %v2561
        %v2563 = vshll.u32 920167782, %v2548
        %v2564 = vshrl.u32 1326507024, %v2549
        %v2565 = vor.u32 %v2563, %v2564
        %vm2566 = vcmp.lt.s32.totalorder %v2547, 1
        %vm2567 = vcmp.lt.s32.totalorder %v2547, 2
        %vm2568 = vcmp.lt.s32.totalorder %v2547, 3
        %vm2569 = vcmp.lt.s32.totalorder %v2547, 4
        %v2570 = vsel %vm2566, %v2550, %v2553
        %v2571 = vsel %vm2569, %v2559, 2102212464
        %v2572 = vsel %vm2568, %v2556, %v2571
        %v2573 = vsel %vm2567, %v2570, %v2572
        %v2574 = vsel %vm2566, %v2553, %v2556
        %v2575 = vsel %vm2569, %v2562, 920167782
        %v2576 = vsel %vm2568, %v2559, %v2575
        %v2577 = vsel %vm2567, %v2574, %v2576
        %v2578 = vsel %vm2566, %v2556, %v2559
        %v2579 = vsel %vm2569, %v2565, 1326507024
        %v2580 = vsel %vm2568, %v2562, %v2579
        %v2581 = vsel %vm2567, %v2578, %v2580
        %v2582 = vshll.u32 %v2542, 8
        %v2583 = vmul.u32.u64.compose %v2582, %v2581
        %v2584 = vextract.low.u32 %v2583
        %v2585 = vextract.high.u32 %v2583
        %v2586 = vmul.u32.u64.compose %v2582, %v2577
        %v2587 = vextract.low.u32 %v2586
        %v2588 = vextract.high.u32 %v2586
        %v2589 = vmul.u32 %v2582, %v2573
        %v2590 = vadd.s32 %v2585, %v2587
        %vm2591 = vc.u32 %v2585, %v2587
        %v2592 = vadd.s32 %v2588, 1
        %v2593 = vsel %vm2591, %v2592, %v2588
        %v2594 = vadd.s32 %v2589, %v2593
        %v2595 = vadd.s32 %v2594, 536870912
        %v2596 = vshrl.u32 %v2595, 30
        %v2597 = vshll.u32 %v2596, 30
        %v2598 = vsub.s32 %v2594, %v2597
        %vm2599 = vcmp.lt.s32.totalorder %v2598, 0
        %v2600 = vsub.s32 0, %v2598
        %v2601 = vsel %vm2599, %v2600, %v2598
        %v2602 = vclz %v2601
        %v2603 = vsub.s32 %v2602, 2
        %vm2604 = vcmp.gt.s32.totalorder 0, %v2603
        %v2605 = vsel %vm2604, 0, %v2603
        %v2606 = vsub.s32 32, %v2605
        %v2607 = vshll.u32 %v2598, %v2605
        %v2608 = vshrl.u32 %v2590, %v2606
        %v2609 = vor.u32 %v2607, %v2608
        %v2610 = vsub.s32 4294967266, %v2605
        %v2611 = vadd.s32 %v2610, 127
        %v2612 = vshll.u32 %v2611, 23
        %v2613 = vor.u32 4788187, %v2612
        %v2614 = vand.u32 2147483647, %v2613
        %v2616 = vcvt.s32.f32 %v2609
        %v2617 = vmul.f32 %v2616, %v2614
        %v2618 = vxor.u32 %v2617, 2147483648
        %v2619 = vsel %vm2536, %v2618, %v2617
        %v2620 = vsub.s32 4, %v2596
        %v2621 = vsel %vm2536, %v2620, %v2596
        %v2622 = vsel %vm2535, %v446, %v2619
        %v2623 = vsel %vm2535, 0, %v2621
        %v2624 = vcosq.f32.pop %v2622
        %v2625 = vsinq.f32.pop %v2622
        %vm2626 = vweird.f32 %v446
        %v2627 = vand.u32 %v2623, 3
        %vm2628 = vcmp.lt.s32.totalorder %v2627, 2
        %vm2629 = vcmp.eq.s32.totalorder %v2627, 0
        %v2630 = vxor.u32 %v2625, 2147483648
        %v2631 = vsel %vm2629, %v2624, %v2630
        %vm2632 = vcmp.eq.s32.totalorder %v2627, 2
        %v2633 = vxor.u32 %v2624, 2147483648
        %v2634 = vsel %vm2632, %v2633, %v2625
        %v2635 = vsel %vm2628, %v2631, %v2634
        %v2636 = vsel %vm2626, nan, %v2635
        %v2637 = vand.u32 2147483647, %v447
        %vm2638 = vcmp.le.f32.partialorder %v2637, 0.7853982
        %vm2639 = vcmp.lt.s32.totalorder %v447, 0
        %v2640 = vand.u32 %v447, 2139095040
        %v2641 = vshrl.u32 %v2640, 23
        %v2642 = vsub.s32 %v2641, 127
        %v2643 = vand.u32 2147483647, %v447
        %v2644 = vand.u32 %v2643, 8388607
        %v2645 = vor.u32 %v2644, 8388608
        %v2646 = vsub.s32 0, %v2645
        %v2647 = vadd.s32 %v2642, 1
        %vm2648 = vcmp.gt.s32.totalorder %v2647, 0
        %v2649 = vsel %vm2648, %v2647, 0
        %v2650 = vshrl.u32 %v2649, 5
        %v2651 = vand.u32 %v2649, 31
        %v2652 = vsub.s32 32, %v2651
        %v2653 = vshrl.u32 683565275, %v2652
        %v2654 = vshll.u32 683565275, %v2651
        %v2655 = vshrl.u32 2475754826, %v2652
        %v2656 = vor.u32 %v2654, %v2655
        %v2657 = vshll.u32 2475754826, %v2651
        %v2658 = vshrl.u32 2131351028, %v2652
        %v2659 = vor.u32 %v2657, %v2658
        %v2660 = vshll.u32 2131351028, %v2651
        %v2661 = vshrl.u32 2102212464, %v2652
        %v2662 = vor.u32 %v2660, %v2661
        %v2663 = vshll.u32 2102212464, %v2651
        %v2664 = vshrl.u32 920167782, %v2652
        %v2665 = vor.u32 %v2663, %v2664
        %v2666 = vshll.u32 920167782, %v2651
        %v2667 = vshrl.u32 1326507024, %v2652
        %v2668 = vor.u32 %v2666, %v2667
        %vm2669 = vcmp.lt.s32.totalorder %v2650, 1
        %vm2670 = vcmp.lt.s32.totalorder %v2650, 2
        %vm2671 = vcmp.lt.s32.totalorder %v2650, 3
        %vm2672 = vcmp.lt.s32.totalorder %v2650, 4
        %v2673 = vsel %vm2669, %v2653, %v2656
        %v2674 = vsel %vm2672, %v2662, 2102212464
        %v2675 = vsel %vm2671, %v2659, %v2674
        %v2676 = vsel %vm2670, %v2673, %v2675
        %v2677 = vsel %vm2669, %v2656, %v2659
        %v2678 = vsel %vm2672, %v2665, 920167782
        %v2679 = vsel %vm2671, %v2662, %v2678
        %v2680 = vsel %vm2670, %v2677, %v2679
        %v2681 = vsel %vm2669, %v2659, %v2662
        %v2682 = vsel %vm2672, %v2668, 1326507024
        %v2683 = vsel %vm2671, %v2665, %v2682
        %v2684 = vsel %vm2670, %v2681, %v2683
        %v2685 = vshll.u32 %v2645, 8
        %v2686 = vmul.u32.u64.compose %v2685, %v2684
        %v2687 = vextract.low.u32 %v2686
        %v2688 = vextract.high.u32 %v2686
        %v2689 = vmul.u32.u64.compose %v2685, %v2680
        %v2690 = vextract.low.u32 %v2689
        %v2691 = vextract.high.u32 %v2689
        %v2692 = vmul.u32 %v2685, %v2676
        %v2693 = vadd.s32 %v2688, %v2690
        %vm2694 = vc.u32 %v2688, %v2690
        %v2695 = vadd.s32 %v2691, 1
        %v2696 = vsel %vm2694, %v2695, %v2691
        %v2697 = vadd.s32 %v2692, %v2696
        %v2698 = vadd.s32 %v2697, 536870912
        %v2699 = vshrl.u32 %v2698, 30
        %v2700 = vshll.u32 %v2699, 30
        %v2701 = vsub.s32 %v2697, %v2700
        %vm2702 = vcmp.lt.s32.totalorder %v2701, 0
        %v2703 = vsub.s32 0, %v2701
        %v2704 = vsel %vm2702, %v2703, %v2701
        %v2705 = vclz %v2704
        %v2706 = vsub.s32 %v2705, 2
        %vm2707 = vcmp.gt.s32.totalorder 0, %v2706
        %v2708 = vsel %vm2707, 0, %v2706
        %v2709 = vsub.s32 32, %v2708
        %v2710 = vshll.u32 %v2701, %v2708
        %v2711 = vshrl.u32 %v2693, %v2709
        %v2712 = vor.u32 %v2710, %v2711
        %v2713 = vsub.s32 4294967266, %v2708
        %v2714 = vadd.s32 %v2713, 127
        %v2715 = vshll.u32 %v2714, 23
        %v2716 = vor.u32 4788187, %v2715
        %v2717 = vand.u32 2147483647, %v2716
        %v2719 = vcvt.s32.f32 %v2712
        %v2720 = vmul.f32 %v2719, %v2717
        %v2721 = vxor.u32 %v2720, 2147483648
        %v2722 = vsel %vm2639, %v2721, %v2720
        %v2723 = vsub.s32 4, %v2699
        %v2724 = vsel %vm2639, %v2723, %v2699
        %v2725 = vsel %vm2638, %v447, %v2722
        %v2726 = vsel %vm2638, 0, %v2724
        %v2727 = vcosq.f32.pop %v2725
        %v2728 = vsinq.f32.pop %v2725
        %vm2729 = vweird.f32 %v447
        %v2730 = vand.u32 %v2726, 3
        %vm2731 = vcmp.lt.s32.totalorder %v2730, 2
        %vm2732 = vcmp.eq.s32.totalorder %v2730, 0
        %v2733 = vxor.u32 %v2728, 2147483648
        %v2734 = vsel %vm2732, %v2727, %v2733
        %vm2735 = vcmp.eq.s32.totalorder %v2730, 2
        %v2736 = vxor.u32 %v2727, 2147483648
        %v2737 = vsel %vm2735, %v2736, %v2728
        %v2738 = vsel %vm2731, %v2734, %v2737
        %v2739 = vsel %vm2729, nan, %v2738
        %v2740 = vand.u32 2147483647, %v448
        %vm2741 = vcmp.le.f32.partialorder %v2740, 0.7853982
        %vm2742 = vcmp.lt.s32.totalorder %v448, 0
        %v2743 = vand.u32 %v448, 2139095040
        %v2744 = vshrl.u32 %v2743, 23
        %v2745 = vsub.s32 %v2744, 127
        %v2746 = vand.u32 2147483647, %v448
        %v2747 = vand.u32 %v2746, 8388607
        %v2748 = vor.u32 %v2747, 8388608
        %v2749 = vsub.s32 0, %v2748
        %v2750 = vadd.s32 %v2745, 1
        %vm2751 = vcmp.gt.s32.totalorder %v2750, 0
        %v2752 = vsel %vm2751, %v2750, 0
        %v2753 = vshrl.u32 %v2752, 5
        %v2754 = vand.u32 %v2752, 31
        %v2755 = vsub.s32 32, %v2754
        %v2756 = vshrl.u32 683565275, %v2755
        %v2757 = vshll.u32 683565275, %v2754
        %v2758 = vshrl.u32 2475754826, %v2755
        %v2759 = vor.u32 %v2757, %v2758
        %v2760 = vshll.u32 2475754826, %v2754
        %v2761 = vshrl.u32 2131351028, %v2755
        %v2762 = vor.u32 %v2760, %v2761
        %v2763 = vshll.u32 2131351028, %v2754
        %v2764 = vshrl.u32 2102212464, %v2755
        %v2765 = vor.u32 %v2763, %v2764
        %v2766 = vshll.u32 2102212464, %v2754
        %v2767 = vshrl.u32 920167782, %v2755
        %v2768 = vor.u32 %v2766, %v2767
        %v2769 = vshll.u32 920167782, %v2754
        %v2770 = vshrl.u32 1326507024, %v2755
        %v2771 = vor.u32 %v2769, %v2770
        %vm2772 = vcmp.lt.s32.totalorder %v2753, 1
        %vm2773 = vcmp.lt.s32.totalorder %v2753, 2
        %vm2774 = vcmp.lt.s32.totalorder %v2753, 3
        %vm2775 = vcmp.lt.s32.totalorder %v2753, 4
        %v2776 = vsel %vm2772, %v2756, %v2759
        %v2777 = vsel %vm2775, %v2765, 2102212464
        %v2778 = vsel %vm2774, %v2762, %v2777
        %v2779 = vsel %vm2773, %v2776, %v2778
        %v2780 = vsel %vm2772, %v2759, %v2762
        %v2781 = vsel %vm2775, %v2768, 920167782
        %v2782 = vsel %vm2774, %v2765, %v2781
        %v2783 = vsel %vm2773, %v2780, %v2782
        %v2784 = vsel %vm2772, %v2762, %v2765
        %v2785 = vsel %vm2775, %v2771, 1326507024
        %v2786 = vsel %vm2774, %v2768, %v2785
        %v2787 = vsel %vm2773, %v2784, %v2786
        %v2788 = vshll.u32 %v2748, 8
        %v2789 = vmul.u32.u64.compose %v2788, %v2787
        %v2790 = vextract.low.u32 %v2789
        %v2791 = vextract.high.u32 %v2789
        %v2792 = vmul.u32.u64.compose %v2788, %v2783
        %v2793 = vextract.low.u32 %v2792
        %v2794 = vextract.high.u32 %v2792
        %v2795 = vmul.u32 %v2788, %v2779
        %v2796 = vadd.s32 %v2791, %v2793
        %vm2797 = vc.u32 %v2791, %v2793
        %v2798 = vadd.s32 %v2794, 1
        %v2799 = vsel %vm2797, %v2798, %v2794
        %v2800 = vadd.s32 %v2795, %v2799
        %v2801 = vadd.s32 %v2800, 536870912
        %v2802 = vshrl.u32 %v2801, 30
        %v2803 = vshll.u32 %v2802, 30
        %v2804 = vsub.s32 %v2800, %v2803
        %vm2805 = vcmp.lt.s32.totalorder %v2804, 0
        %v2806 = vsub.s32 0, %v2804
        %v2807 = vsel %vm2805, %v2806, %v2804
        %v2808 = vclz %v2807
        %v2809 = vsub.s32 %v2808, 2
        %vm2810 = vcmp.gt.s32.totalorder 0, %v2809
        %v2811 = vsel %vm2810, 0, %v2809
        %v2812 = vsub.s32 32, %v2811
        %v2813 = vshll.u32 %v2804, %v2811
        %v2814 = vshrl.u32 %v2796, %v2812
        %v2815 = vor.u32 %v2813, %v2814
        %v2816 = vsub.s32 4294967266, %v2811
        %v2817 = vadd.s32 %v2816, 127
        %v2818 = vshll.u32 %v2817, 23
        %v2819 = vor.u32 4788187, %v2818
        %v2820 = vand.u32 2147483647, %v2819
        %v2822 = vcvt.s32.f32 %v2815
        %v2823 = vmul.f32 %v2822, %v2820
        %v2824 = vxor.u32 %v2823, 2147483648
        %v2825 = vsel %vm2742, %v2824, %v2823
        %v2826 = vsub.s32 4, %v2802
        %v2827 = vsel %vm2742, %v2826, %v2802
        %v2828 = vsel %vm2741, %v448, %v2825
        %v2829 = vsel %vm2741, 0, %v2827
        %v2830 = vcosq.f32.pop %v2828
        %v2831 = vsinq.f32.pop %v2828
        %vm2832 = vweird.f32 %v448
        %v2833 = vand.u32 %v2829, 3
        %vm2834 = vcmp.lt.s32.totalorder %v2833, 2
        %vm2835 = vcmp.eq.s32.totalorder %v2833, 0
        %v2836 = vxor.u32 %v2831, 2147483648
        %v2837 = vsel %vm2835, %v2830, %v2836
        %vm2838 = vcmp.eq.s32.totalorder %v2833, 2
        %v2839 = vxor.u32 %v2830, 2147483648
        %v2840 = vsel %vm2838, %v2839, %v2831
        %v2841 = vsel %vm2834, %v2837, %v2840
        %v2842 = vsel %vm2832, nan, %v2841
        %v2843 = vand.u32 2147483647, %v449
        %vm2844 = vcmp.le.f32.partialorder %v2843, 0.7853982
        %vm2845 = vcmp.lt.s32.totalorder %v449, 0
        %v2846 = vand.u32 %v449, 2139095040
        %v2847 = vshrl.u32 %v2846, 23
        %v2848 = vsub.s32 %v2847, 127
        %v2849 = vand.u32 2147483647, %v449
        %v2850 = vand.u32 %v2849, 8388607
        %v2851 = vor.u32 %v2850, 8388608
        %v2852 = vsub.s32 0, %v2851
        %v2853 = vadd.s32 %v2848, 1
        %vm2854 = vcmp.gt.s32.totalorder %v2853, 0
        %v2855 = vsel %vm2854, %v2853, 0
        %v2856 = vshrl.u32 %v2855, 5
        %v2857 = vand.u32 %v2855, 31
        %v2858 = vsub.s32 32, %v2857
        %v2859 = vshrl.u32 683565275, %v2858
        %v2860 = vshll.u32 683565275, %v2857
        %v2861 = vshrl.u32 2475754826, %v2858
        %v2862 = vor.u32 %v2860, %v2861
        %v2863 = vshll.u32 2475754826, %v2857
        %v2864 = vshrl.u32 2131351028, %v2858
        %v2865 = vor.u32 %v2863, %v2864
        %v2866 = vshll.u32 2131351028, %v2857
        %v2867 = vshrl.u32 2102212464, %v2858
        %v2868 = vor.u32 %v2866, %v2867
        %v2869 = vshll.u32 2102212464, %v2857
        %v2870 = vshrl.u32 920167782, %v2858
        %v2871 = vor.u32 %v2869, %v2870
        %v2872 = vshll.u32 920167782, %v2857
        %v2873 = vshrl.u32 1326507024, %v2858
        %v2874 = vor.u32 %v2872, %v2873
        %vm2875 = vcmp.lt.s32.totalorder %v2856, 1
        %vm2876 = vcmp.lt.s32.totalorder %v2856, 2
        %vm2877 = vcmp.lt.s32.totalorder %v2856, 3
        %vm2878 = vcmp.lt.s32.totalorder %v2856, 4
        %v2879 = vsel %vm2875, %v2859, %v2862
        %v2880 = vsel %vm2878, %v2868, 2102212464
        %v2881 = vsel %vm2877, %v2865, %v2880
        %v2882 = vsel %vm2876, %v2879, %v2881
        %v2883 = vsel %vm2875, %v2862, %v2865
        %v2884 = vsel %vm2878, %v2871, 920167782
        %v2885 = vsel %vm2877, %v2868, %v2884
        %v2886 = vsel %vm2876, %v2883, %v2885
        %v2887 = vsel %vm2875, %v2865, %v2868
        %v2888 = vsel %vm2878, %v2874, 1326507024
        %v2889 = vsel %vm2877, %v2871, %v2888
        %v2890 = vsel %vm2876, %v2887, %v2889
        %v2891 = vshll.u32 %v2851, 8
        %v2892 = vmul.u32.u64.compose %v2891, %v2890
        %v2893 = vextract.low.u32 %v2892
        %v2894 = vextract.high.u32 %v2892
        %v2895 = vmul.u32.u64.compose %v2891, %v2886
        %v2896 = vextract.low.u32 %v2895
        %v2897 = vextract.high.u32 %v2895
        %v2898 = vmul.u32 %v2891, %v2882
        %v2899 = vadd.s32 %v2894, %v2896
        %vm2900 = vc.u32 %v2894, %v2896
        %v2901 = vadd.s32 %v2897, 1
        %v2902 = vsel %vm2900, %v2901, %v2897
        %v2903 = vadd.s32 %v2898, %v2902
        %v2904 = vadd.s32 %v2903, 536870912
        %v2905 = vshrl.u32 %v2904, 30
        %v2906 = vshll.u32 %v2905, 30
        %v2907 = vsub.s32 %v2903, %v2906
        %vm2908 = vcmp.lt.s32.totalorder %v2907, 0
        %v2909 = vsub.s32 0, %v2907
        %v2910 = vsel %vm2908, %v2909, %v2907
        %v2911 = vclz %v2910
        %v2912 = vsub.s32 %v2911, 2
        %vm2913 = vcmp.gt.s32.totalorder 0, %v2912
        %v2914 = vsel %vm2913, 0, %v2912
        %v2915 = vsub.s32 32, %v2914
        %v2916 = vshll.u32 %v2907, %v2914
        %v2917 = vshrl.u32 %v2899, %v2915
        %v2918 = vor.u32 %v2916, %v2917
        %v2919 = vsub.s32 4294967266, %v2914
        %v2920 = vadd.s32 %v2919, 127
        %v2921 = vshll.u32 %v2920, 23
        %v2922 = vor.u32 4788187, %v2921
        %v2923 = vand.u32 2147483647, %v2922
        %v2925 = vcvt.s32.f32 %v2918
        %v2926 = vmul.f32 %v2925, %v2923
        %v2927 = vxor.u32 %v2926, 2147483648
        %v2928 = vsel %vm2845, %v2927, %v2926
        %v2929 = vsub.s32 4, %v2905
        %v2930 = vsel %vm2845, %v2929, %v2905
        %v2931 = vsel %vm2844, %v449, %v2928
        %v2932 = vsel %vm2844, 0, %v2930
        %v2933 = vcosq.f32.pop %v2931
        %v2934 = vsinq.f32.pop %v2931
        %vm2935 = vweird.f32 %v449
        %v2936 = vand.u32 %v2932, 3
        %vm2937 = vcmp.lt.s32.totalorder %v2936, 2
        %vm2938 = vcmp.eq.s32.totalorder %v2936, 0
        %v2939 = vxor.u32 %v2934, 2147483648
        %v2940 = vsel %vm2938, %v2933, %v2939
        %vm2941 = vcmp.eq.s32.totalorder %v2936, 2
        %v2942 = vxor.u32 %v2933, 2147483648
        %v2943 = vsel %vm2941, %v2942, %v2934
        %v2944 = vsel %vm2937, %v2940, %v2943
        %v2945 = vsel %vm2935, nan, %v2944
        %v2946 = vand.u32 2147483647, %v450
        %vm2947 = vcmp.le.f32.partialorder %v2946, 0.7853982
        %vm2948 = vcmp.lt.s32.totalorder %v450, 0
        %v2949 = vand.u32 %v450, 2139095040
        %v2950 = vshrl.u32 %v2949, 23
        %v2951 = vsub.s32 %v2950, 127
        %v2952 = vand.u32 2147483647, %v450
        %v2953 = vand.u32 %v2952, 8388607
        %v2954 = vor.u32 %v2953, 8388608
        %v2955 = vsub.s32 0, %v2954
        %v2956 = vadd.s32 %v2951, 1
        %vm2957 = vcmp.gt.s32.totalorder %v2956, 0
        %v2958 = vsel %vm2957, %v2956, 0
        %v2959 = vshrl.u32 %v2958, 5
        %v2960 = vand.u32 %v2958, 31
        %v2961 = vsub.s32 32, %v2960
        %v2962 = vshrl.u32 683565275, %v2961
        %v2963 = vshll.u32 683565275, %v2960
        %v2964 = vshrl.u32 2475754826, %v2961
        %v2965 = vor.u32 %v2963, %v2964
        %v2966 = vshll.u32 2475754826, %v2960
        %v2967 = vshrl.u32 2131351028, %v2961
        %v2968 = vor.u32 %v2966, %v2967
        %v2969 = vshll.u32 2131351028, %v2960
        %v2970 = vshrl.u32 2102212464, %v2961
        %v2971 = vor.u32 %v2969, %v2970
        %v2972 = vshll.u32 2102212464, %v2960
        %v2973 = vshrl.u32 920167782, %v2961
        %v2974 = vor.u32 %v2972, %v2973
        %v2975 = vshll.u32 920167782, %v2960
        %v2976 = vshrl.u32 1326507024, %v2961
        %v2977 = vor.u32 %v2975, %v2976
        %vm2978 = vcmp.lt.s32.totalorder %v2959, 1
        %vm2979 = vcmp.lt.s32.totalorder %v2959, 2
        %vm2980 = vcmp.lt.s32.totalorder %v2959, 3
        %vm2981 = vcmp.lt.s32.totalorder %v2959, 4
        %v2982 = vsel %vm2978, %v2962, %v2965
        %v2983 = vsel %vm2981, %v2971, 2102212464
        %v2984 = vsel %vm2980, %v2968, %v2983
        %v2985 = vsel %vm2979, %v2982, %v2984
        %v2986 = vsel %vm2978, %v2965, %v2968
        %v2987 = vsel %vm2981, %v2974, 920167782
        %v2988 = vsel %vm2980, %v2971, %v2987
        %v2989 = vsel %vm2979, %v2986, %v2988
        %v2990 = vsel %vm2978, %v2968, %v2971
        %v2991 = vsel %vm2981, %v2977, 1326507024
        %v2992 = vsel %vm2980, %v2974, %v2991
        %v2993 = vsel %vm2979, %v2990, %v2992
        %v2994 = vshll.u32 %v2954, 8
        %v2995 = vmul.u32.u64.compose %v2994, %v2993
        %v2996 = vextract.low.u32 %v2995
        %v2997 = vextract.high.u32 %v2995
        %v2998 = vmul.u32.u64.compose %v2994, %v2989
        %v2999 = vextract.low.u32 %v2998
        %v3000 = vextract.high.u32 %v2998
        %v3001 = vmul.u32 %v2994, %v2985
        %v3002 = vadd.s32 %v2997, %v2999
        %vm3003 = vc.u32 %v2997, %v2999
        %v3004 = vadd.s32 %v3000, 1
        %v3005 = vsel %vm3003, %v3004, %v3000
        %v3006 = vadd.s32 %v3001, %v3005
        %v3007 = vadd.s32 %v3006, 536870912
        %v3008 = vshrl.u32 %v3007, 30
        %v3009 = vshll.u32 %v3008, 30
        %v3010 = vsub.s32 %v3006, %v3009
        %vm3011 = vcmp.lt.s32.totalorder %v3010, 0
        %v3012 = vsub.s32 0, %v3010
        %v3013 = vsel %vm3011, %v3012, %v3010
        %v3014 = vclz %v3013
        %v3015 = vsub.s32 %v3014, 2
        %vm3016 = vcmp.gt.s32.totalorder 0, %v3015
        %v3017 = vsel %vm3016, 0, %v3015
        %v3018 = vsub.s32 32, %v3017
        %v3019 = vshll.u32 %v3010, %v3017
        %v3020 = vshrl.u32 %v3002, %v3018
        %v3021 = vor.u32 %v3019, %v3020
        %v3022 = vsub.s32 4294967266, %v3017
        %v3023 = vadd.s32 %v3022, 127
        %v3024 = vshll.u32 %v3023, 23
        %v3025 = vor.u32 4788187, %v3024
        %v3026 = vand.u32 2147483647, %v3025
        %v3028 = vcvt.s32.f32 %v3021
        %v3029 = vmul.f32 %v3028, %v3026
        %v3030 = vxor.u32 %v3029, 2147483648
        %v3031 = vsel %vm2948, %v3030, %v3029
        %v3032 = vsub.s32 4, %v3008
        %v3033 = vsel %vm2948, %v3032, %v3008
        %v3034 = vsel %vm2947, %v450, %v3031
        %v3035 = vsel %vm2947, 0, %v3033
        %v3036 = vcosq.f32.pop %v3034
        %v3037 = vsinq.f32.pop %v3034
        %vm3038 = vweird.f32 %v450
        %v3039 = vand.u32 %v3035, 3
        %vm3040 = vcmp.lt.s32.totalorder %v3039, 2
        %vm3041 = vcmp.eq.s32.totalorder %v3039, 0
        %v3042 = vxor.u32 %v3037, 2147483648
        %v3043 = vsel %vm3041, %v3036, %v3042
        %vm3044 = vcmp.eq.s32.totalorder %v3039, 2
        %v3045 = vxor.u32 %v3036, 2147483648
        %v3046 = vsel %vm3044, %v3045, %v3037
        %v3047 = vsel %vm3040, %v3043, %v3046
        %v3048 = vsel %vm3038, nan, %v3047
        %v3049 = vand.u32 2147483647, %v451
        %vm3050 = vcmp.le.f32.partialorder %v3049, 0.7853982
        %vm3051 = vcmp.lt.s32.totalorder %v451, 0
        %v3052 = vand.u32 %v451, 2139095040
        %v3053 = vshrl.u32 %v3052, 23
        %v3054 = vsub.s32 %v3053, 127
        %v3055 = vand.u32 2147483647, %v451
        %v3056 = vand.u32 %v3055, 8388607
        %v3057 = vor.u32 %v3056, 8388608
        %v3058 = vsub.s32 0, %v3057
        %v3059 = vadd.s32 %v3054, 1
        %vm3060 = vcmp.gt.s32.totalorder %v3059, 0
        %v3061 = vsel %vm3060, %v3059, 0
        %v3062 = vshrl.u32 %v3061, 5
        %v3063 = vand.u32 %v3061, 31
        %v3064 = vsub.s32 32, %v3063
        %v3065 = vshrl.u32 683565275, %v3064
        %v3066 = vshll.u32 683565275, %v3063
        %v3067 = vshrl.u32 2475754826, %v3064
        %v3068 = vor.u32 %v3066, %v3067
        %v3069 = vshll.u32 2475754826, %v3063
        %v3070 = vshrl.u32 2131351028, %v3064
        %v3071 = vor.u32 %v3069, %v3070
        %v3072 = vshll.u32 2131351028, %v3063
        %v3073 = vshrl.u32 2102212464, %v3064
        %v3074 = vor.u32 %v3072, %v3073
        %v3075 = vshll.u32 2102212464, %v3063
        %v3076 = vshrl.u32 920167782, %v3064
        %v3077 = vor.u32 %v3075, %v3076
        %v3078 = vshll.u32 920167782, %v3063
        %v3079 = vshrl.u32 1326507024, %v3064
        %v3080 = vor.u32 %v3078, %v3079
        %vm3081 = vcmp.lt.s32.totalorder %v3062, 1
        %vm3082 = vcmp.lt.s32.totalorder %v3062, 2
        %vm3083 = vcmp.lt.s32.totalorder %v3062, 3
        %vm3084 = vcmp.lt.s32.totalorder %v3062, 4
        %v3085 = vsel %vm3081, %v3065, %v3068
        %v3086 = vsel %vm3084, %v3074, 2102212464
        %v3087 = vsel %vm3083, %v3071, %v3086
        %v3088 = vsel %vm3082, %v3085, %v3087
        %v3089 = vsel %vm3081, %v3068, %v3071
        %v3090 = vsel %vm3084, %v3077, 920167782
        %v3091 = vsel %vm3083, %v3074, %v3090
        %v3092 = vsel %vm3082, %v3089, %v3091
        %v3093 = vsel %vm3081, %v3071, %v3074
        %v3094 = vsel %vm3084, %v3080, 1326507024
        %v3095 = vsel %vm3083, %v3077, %v3094
        %v3096 = vsel %vm3082, %v3093, %v3095
        %v3097 = vshll.u32 %v3057, 8
        %v3098 = vmul.u32.u64.compose %v3097, %v3096
        %v3099 = vextract.low.u32 %v3098
        %v3100 = vextract.high.u32 %v3098
        %v3101 = vmul.u32.u64.compose %v3097, %v3092
        %v3102 = vextract.low.u32 %v3101
        %v3103 = vextract.high.u32 %v3101
        %v3104 = vmul.u32 %v3097, %v3088
        %v3105 = vadd.s32 %v3100, %v3102
        %vm3106 = vc.u32 %v3100, %v3102
        %v3107 = vadd.s32 %v3103, 1
        %v3108 = vsel %vm3106, %v3107, %v3103
        %v3109 = vadd.s32 %v3104, %v3108
        %v3110 = vadd.s32 %v3109, 536870912
        %v3111 = vshrl.u32 %v3110, 30
        %v3112 = vshll.u32 %v3111, 30
        %v3113 = vsub.s32 %v3109, %v3112
        %vm3114 = vcmp.lt.s32.totalorder %v3113, 0
        %v3115 = vsub.s32 0, %v3113
        %v3116 = vsel %vm3114, %v3115, %v3113
        %v3117 = vclz %v3116
        %v3118 = vsub.s32 %v3117, 2
        %vm3119 = vcmp.gt.s32.totalorder 0, %v3118
        %v3120 = vsel %vm3119, 0, %v3118
        %v3121 = vsub.s32 32, %v3120
        %v3122 = vshll.u32 %v3113, %v3120
        %v3123 = vshrl.u32 %v3105, %v3121
        %v3124 = vor.u32 %v3122, %v3123
        %v3125 = vsub.s32 4294967266, %v3120
        %v3126 = vadd.s32 %v3125, 127
        %v3127 = vshll.u32 %v3126, 23
        %v3128 = vor.u32 4788187, %v3127
        %v3129 = vand.u32 2147483647, %v3128
        %v3131 = vcvt.s32.f32 %v3124
        %v3132 = vmul.f32 %v3131, %v3129
        %v3133 = vxor.u32 %v3132, 2147483648
        %v3134 = vsel %vm3051, %v3133, %v3132
        %v3135 = vsub.s32 4, %v3111
        %v3136 = vsel %vm3051, %v3135, %v3111
        %v3137 = vsel %vm3050, %v451, %v3134
        %v3138 = vsel %vm3050, 0, %v3136
        %v3139 = vcosq.f32.pop %v3137
        %v3140 = vsinq.f32.pop %v3137
        %vm3141 = vweird.f32 %v451
        %v3142 = vand.u32 %v3138, 3
        %vm3143 = vcmp.lt.s32.totalorder %v3142, 2
        %vm3144 = vcmp.eq.s32.totalorder %v3142, 0
        %v3145 = vxor.u32 %v3140, 2147483648
        %v3146 = vsel %vm3144, %v3139, %v3145
        %vm3147 = vcmp.eq.s32.totalorder %v3142, 2
        %v3148 = vxor.u32 %v3139, 2147483648
        %v3149 = vsel %vm3147, %v3148, %v3140
        %v3150 = vsel %vm3143, %v3146, %v3149
        %v3151 = vsel %vm3141, nan, %v3150
        %v3152 = vand.u32 2147483647, %v452
        %vm3153 = vcmp.le.f32.partialorder %v3152, 0.7853982
        %vm3154 = vcmp.lt.s32.totalorder %v452, 0
        %v3155 = vand.u32 %v452, 2139095040
        %v3156 = vshrl.u32 %v3155, 23
        %v3157 = vsub.s32 %v3156, 127
        %v3158 = vand.u32 2147483647, %v452
        %v3159 = vand.u32 %v3158, 8388607
        %v3160 = vor.u32 %v3159, 8388608
        %v3161 = vsub.s32 0, %v3160
        %v3162 = vadd.s32 %v3157, 1
        %vm3163 = vcmp.gt.s32.totalorder %v3162, 0
        %v3164 = vsel %vm3163, %v3162, 0
        %v3165 = vshrl.u32 %v3164, 5
        %v3166 = vand.u32 %v3164, 31
        %v3167 = vsub.s32 32, %v3166
        %v3168 = vshrl.u32 683565275, %v3167
        %v3169 = vshll.u32 683565275, %v3166
        %v3170 = vshrl.u32 2475754826, %v3167
        %v3171 = vor.u32 %v3169, %v3170
        %v3172 = vshll.u32 2475754826, %v3166
        %v3173 = vshrl.u32 2131351028, %v3167
        %v3174 = vor.u32 %v3172, %v3173
        %v3175 = vshll.u32 2131351028, %v3166
        %v3176 = vshrl.u32 2102212464, %v3167
        %v3177 = vor.u32 %v3175, %v3176
        %v3178 = vshll.u32 2102212464, %v3166
        %v3179 = vshrl.u32 920167782, %v3167
        %v3180 = vor.u32 %v3178, %v3179
        %v3181 = vshll.u32 920167782, %v3166
        %v3182 = vshrl.u32 1326507024, %v3167
        %v3183 = vor.u32 %v3181, %v3182
        %vm3184 = vcmp.lt.s32.totalorder %v3165, 1
        %vm3185 = vcmp.lt.s32.totalorder %v3165, 2
        %vm3186 = vcmp.lt.s32.totalorder %v3165, 3
        %vm3187 = vcmp.lt.s32.totalorder %v3165, 4
        %v3188 = vsel %vm3184, %v3168, %v3171
        %v3189 = vsel %vm3187, %v3177, 2102212464
        %v3190 = vsel %vm3186, %v3174, %v3189
        %v3191 = vsel %vm3185, %v3188, %v3190
        %v3192 = vsel %vm3184, %v3171, %v3174
        %v3193 = vsel %vm3187, %v3180, 920167782
        %v3194 = vsel %vm3186, %v3177, %v3193
        %v3195 = vsel %vm3185, %v3192, %v3194
        %v3196 = vsel %vm3184, %v3174, %v3177
        %v3197 = vsel %vm3187, %v3183, 1326507024
        %v3198 = vsel %vm3186, %v3180, %v3197
        %v3199 = vsel %vm3185, %v3196, %v3198
        %v3200 = vshll.u32 %v3160, 8
        %v3201 = vmul.u32.u64.compose %v3200, %v3199
        %v3202 = vextract.low.u32 %v3201
        %v3203 = vextract.high.u32 %v3201
        %v3204 = vmul.u32.u64.compose %v3200, %v3195
        %v3205 = vextract.low.u32 %v3204
        %v3206 = vextract.high.u32 %v3204
        %v3207 = vmul.u32 %v3200, %v3191
        %v3208 = vadd.s32 %v3203, %v3205
        %vm3209 = vc.u32 %v3203, %v3205
        %v3210 = vadd.s32 %v3206, 1
        %v3211 = vsel %vm3209, %v3210, %v3206
        %v3212 = vadd.s32 %v3207, %v3211
        %v3213 = vadd.s32 %v3212, 536870912
        %v3214 = vshrl.u32 %v3213, 30
        %v3215 = vshll.u32 %v3214, 30
        %v3216 = vsub.s32 %v3212, %v3215
        %vm3217 = vcmp.lt.s32.totalorder %v3216, 0
        %v3218 = vsub.s32 0, %v3216
        %v3219 = vsel %vm3217, %v3218, %v3216
        %v3220 = vclz %v3219
        %v3221 = vsub.s32 %v3220, 2
        %vm3222 = vcmp.gt.s32.totalorder 0, %v3221
        %v3223 = vsel %vm3222, 0, %v3221
        %v3224 = vsub.s32 32, %v3223
        %v3225 = vshll.u32 %v3216, %v3223
        %v3226 = vshrl.u32 %v3208, %v3224
        %v3227 = vor.u32 %v3225, %v3226
        %v3228 = vsub.s32 4294967266, %v3223
        %v3229 = vadd.s32 %v3228, 127
        %v3230 = vshll.u32 %v3229, 23
        %v3231 = vor.u32 4788187, %v3230
        %v3232 = vand.u32 2147483647, %v3231
        %v3234 = vcvt.s32.f32 %v3227
        %v3235 = vmul.f32 %v3234, %v3232
        %v3236 = vxor.u32 %v3235, 2147483648
        %v3237 = vsel %vm3154, %v3236, %v3235
        %v3238 = vsub.s32 4, %v3214
        %v3239 = vsel %vm3154, %v3238, %v3214
        %v3240 = vsel %vm3153, %v452, %v3237
        %v3241 = vsel %vm3153, 0, %v3239
        %v3242 = vcosq.f32.pop %v3240
        %v3243 = vsinq.f32.pop %v3240
        %vm3244 = vweird.f32 %v452
        %v3245 = vand.u32 %v3241, 3
        %vm3246 = vcmp.lt.s32.totalorder %v3245, 2
        %vm3247 = vcmp.eq.s32.totalorder %v3245, 0
        %v3248 = vxor.u32 %v3243, 2147483648
        %v3249 = vsel %vm3247, %v3242, %v3248
        %vm3250 = vcmp.eq.s32.totalorder %v3245, 2
        %v3251 = vxor.u32 %v3242, 2147483648
        %v3252 = vsel %vm3250, %v3251, %v3243
        %v3253 = vsel %vm3246, %v3249, %v3252
        %v3254 = vsel %vm3244, nan, %v3253
        %v3255 = vand.u32 2147483647, %v453
        %vm3256 = vcmp.le.f32.partialorder %v3255, 0.7853982
        %vm3257 = vcmp.lt.s32.totalorder %v453, 0
        %v3258 = vand.u32 %v453, 2139095040
        %v3259 = vshrl.u32 %v3258, 23
        %v3260 = vsub.s32 %v3259, 127
        %v3261 = vand.u32 2147483647, %v453
        %v3262 = vand.u32 %v3261, 8388607
        %v3263 = vor.u32 %v3262, 8388608
        %v3264 = vsub.s32 0, %v3263
        %v3265 = vadd.s32 %v3260, 1
        %vm3266 = vcmp.gt.s32.totalorder %v3265, 0
        %v3267 = vsel %vm3266, %v3265, 0
        %v3268 = vshrl.u32 %v3267, 5
        %v3269 = vand.u32 %v3267, 31
        %v3270 = vsub.s32 32, %v3269
        %v3271 = vshrl.u32 683565275, %v3270
        %v3272 = vshll.u32 683565275, %v3269
        %v3273 = vshrl.u32 2475754826, %v3270
        %v3274 = vor.u32 %v3272, %v3273
        %v3275 = vshll.u32 2475754826, %v3269
        %v3276 = vshrl.u32 2131351028, %v3270
        %v3277 = vor.u32 %v3275, %v3276
        %v3278 = vshll.u32 2131351028, %v3269
        %v3279 = vshrl.u32 2102212464, %v3270
        %v3280 = vor.u32 %v3278, %v3279
        %v3281 = vshll.u32 2102212464, %v3269
        %v3282 = vshrl.u32 920167782, %v3270
        %v3283 = vor.u32 %v3281, %v3282
        %v3284 = vshll.u32 920167782, %v3269
        %v3285 = vshrl.u32 1326507024, %v3270
        %v3286 = vor.u32 %v3284, %v3285
        %vm3287 = vcmp.lt.s32.totalorder %v3268, 1
        %vm3288 = vcmp.lt.s32.totalorder %v3268, 2
        %vm3289 = vcmp.lt.s32.totalorder %v3268, 3
        %vm3290 = vcmp.lt.s32.totalorder %v3268, 4
        %v3291 = vsel %vm3287, %v3271, %v3274
        %v3292 = vsel %vm3290, %v3280, 2102212464
        %v3293 = vsel %vm3289, %v3277, %v3292
        %v3294 = vsel %vm3288, %v3291, %v3293
        %v3295 = vsel %vm3287, %v3274, %v3277
        %v3296 = vsel %vm3290, %v3283, 920167782
        %v3297 = vsel %vm3289, %v3280, %v3296
        %v3298 = vsel %vm3288, %v3295, %v3297
        %v3299 = vsel %vm3287, %v3277, %v3280
        %v3300 = vsel %vm3290, %v3286, 1326507024
        %v3301 = vsel %vm3289, %v3283, %v3300
        %v3302 = vsel %vm3288, %v3299, %v3301
        %v3303 = vshll.u32 %v3263, 8
        %v3304 = vmul.u32.u64.compose %v3303, %v3302
        %v3305 = vextract.low.u32 %v3304
        %v3306 = vextract.high.u32 %v3304
        %v3307 = vmul.u32.u64.compose %v3303, %v3298
        %v3308 = vextract.low.u32 %v3307
        %v3309 = vextract.high.u32 %v3307
        %v3310 = vmul.u32 %v3303, %v3294
        %v3311 = vadd.s32 %v3306, %v3308
        %vm3312 = vc.u32 %v3306, %v3308
        %v3313 = vadd.s32 %v3309, 1
        %v3314 = vsel %vm3312, %v3313, %v3309
        %v3315 = vadd.s32 %v3310, %v3314
        %v3316 = vadd.s32 %v3315, 536870912
        %v3317 = vshrl.u32 %v3316, 30
        %v3318 = vshll.u32 %v3317, 30
        %v3319 = vsub.s32 %v3315, %v3318
        %vm3320 = vcmp.lt.s32.totalorder %v3319, 0
        %v3321 = vsub.s32 0, %v3319
        %v3322 = vsel %vm3320, %v3321, %v3319
        %v3323 = vclz %v3322
        %v3324 = vsub.s32 %v3323, 2
        %vm3325 = vcmp.gt.s32.totalorder 0, %v3324
        %v3326 = vsel %vm3325, 0, %v3324
        %v3327 = vsub.s32 32, %v3326
        %v3328 = vshll.u32 %v3319, %v3326
        %v3329 = vshrl.u32 %v3311, %v3327
        %v3330 = vor.u32 %v3328, %v3329
        %v3331 = vsub.s32 4294967266, %v3326
        %v3332 = vadd.s32 %v3331, 127
        %v3333 = vshll.u32 %v3332, 23
        %v3334 = vor.u32 4788187, %v3333
        %v3335 = vand.u32 2147483647, %v3334
        %v3337 = vcvt.s32.f32 %v3330
        %v3338 = vmul.f32 %v3337, %v3335
        %v3339 = vxor.u32 %v3338, 2147483648
        %v3340 = vsel %vm3257, %v3339, %v3338
        %v3341 = vsub.s32 4, %v3317
        %v3342 = vsel %vm3257, %v3341, %v3317
        %v3343 = vsel %vm3256, %v453, %v3340
        %v3344 = vsel %vm3256, 0, %v3342
        %v3345 = vcosq.f32.pop %v3343
        %v3346 = vsinq.f32.pop %v3343
        %vm3347 = vweird.f32 %v453
        %v3348 = vand.u32 %v3344, 3
        %vm3349 = vcmp.lt.s32.totalorder %v3348, 2
        %vm3350 = vcmp.eq.s32.totalorder %v3348, 0
        %v3351 = vxor.u32 %v3346, 2147483648
        %v3352 = vsel %vm3350, %v3345, %v3351
        %vm3353 = vcmp.eq.s32.totalorder %v3348, 2
        %v3354 = vxor.u32 %v3345, 2147483648
        %v3355 = vsel %vm3353, %v3354, %v3346
        %v3356 = vsel %vm3349, %v3352, %v3355
        %v3357 = vsel %vm3347, nan, %v3356
        %v3358 = vand.u32 2147483647, %v454
        %vm3359 = vcmp.le.f32.partialorder %v3358, 0.7853982
        %vm3360 = vcmp.lt.s32.totalorder %v454, 0
        %v3361 = vand.u32 %v454, 2139095040
        %v3362 = vshrl.u32 %v3361, 23
        %v3363 = vsub.s32 %v3362, 127
        %v3364 = vand.u32 2147483647, %v454
        %v3365 = vand.u32 %v3364, 8388607
        %v3366 = vor.u32 %v3365, 8388608
        %v3367 = vsub.s32 0, %v3366
        %v3368 = vadd.s32 %v3363, 1
        %vm3369 = vcmp.gt.s32.totalorder %v3368, 0
        %v3370 = vsel %vm3369, %v3368, 0
        %v3371 = vshrl.u32 %v3370, 5
        %v3372 = vand.u32 %v3370, 31
        %v3373 = vsub.s32 32, %v3372
        %v3374 = vshrl.u32 683565275, %v3373
        %v3375 = vshll.u32 683565275, %v3372
        %v3376 = vshrl.u32 2475754826, %v3373
        %v3377 = vor.u32 %v3375, %v3376
        %v3378 = vshll.u32 2475754826, %v3372
        %v3379 = vshrl.u32 2131351028, %v3373
        %v3380 = vor.u32 %v3378, %v3379
        %v3381 = vshll.u32 2131351028, %v3372
        %v3382 = vshrl.u32 2102212464, %v3373
        %v3383 = vor.u32 %v3381, %v3382
        %v3384 = vshll.u32 2102212464, %v3372
        %v3385 = vshrl.u32 920167782, %v3373
        %v3386 = vor.u32 %v3384, %v3385
        %v3387 = vshll.u32 920167782, %v3372
        %v3388 = vshrl.u32 1326507024, %v3373
        %v3389 = vor.u32 %v3387, %v3388
        %vm3390 = vcmp.lt.s32.totalorder %v3371, 1
        %vm3391 = vcmp.lt.s32.totalorder %v3371, 2
        %vm3392 = vcmp.lt.s32.totalorder %v3371, 3
        %vm3393 = vcmp.lt.s32.totalorder %v3371, 4
        %v3394 = vsel %vm3390, %v3374, %v3377
        %v3395 = vsel %vm3393, %v3383, 2102212464
        %v3396 = vsel %vm3392, %v3380, %v3395
        %v3397 = vsel %vm3391, %v3394, %v3396
        %v3398 = vsel %vm3390, %v3377, %v3380
        %v3399 = vsel %vm3393, %v3386, 920167782
        %v3400 = vsel %vm3392, %v3383, %v3399
        %v3401 = vsel %vm3391, %v3398, %v3400
        %v3402 = vsel %vm3390, %v3380, %v3383
        %v3403 = vsel %vm3393, %v3389, 1326507024
        %v3404 = vsel %vm3392, %v3386, %v3403
        %v3405 = vsel %vm3391, %v3402, %v3404
        %v3406 = vshll.u32 %v3366, 8
        %v3407 = vmul.u32.u64.compose %v3406, %v3405
        %v3408 = vextract.low.u32 %v3407
        %v3409 = vextract.high.u32 %v3407
        %v3410 = vmul.u32.u64.compose %v3406, %v3401
        %v3411 = vextract.low.u32 %v3410
        %v3412 = vextract.high.u32 %v3410
        %v3413 = vmul.u32 %v3406, %v3397
        %v3414 = vadd.s32 %v3409, %v3411
        %vm3415 = vc.u32 %v3409, %v3411
        %v3416 = vadd.s32 %v3412, 1
        %v3417 = vsel %vm3415, %v3416, %v3412
        %v3418 = vadd.s32 %v3413, %v3417
        %v3419 = vadd.s32 %v3418, 536870912
        %v3420 = vshrl.u32 %v3419, 30
        %v3421 = vshll.u32 %v3420, 30
        %v3422 = vsub.s32 %v3418, %v3421
        %vm3423 = vcmp.lt.s32.totalorder %v3422, 0
        %v3424 = vsub.s32 0, %v3422
        %v3425 = vsel %vm3423, %v3424, %v3422
        %v3426 = vclz %v3425
        %v3427 = vsub.s32 %v3426, 2
        %vm3428 = vcmp.gt.s32.totalorder 0, %v3427
        %v3429 = vsel %vm3428, 0, %v3427
        %v3430 = vsub.s32 32, %v3429
        %v3431 = vshll.u32 %v3422, %v3429
        %v3432 = vshrl.u32 %v3414, %v3430
        %v3433 = vor.u32 %v3431, %v3432
        %v3434 = vsub.s32 4294967266, %v3429
        %v3435 = vadd.s32 %v3434, 127
        %v3436 = vshll.u32 %v3435, 23
        %v3437 = vor.u32 4788187, %v3436
        %v3438 = vand.u32 2147483647, %v3437
        %v3440 = vcvt.s32.f32 %v3433
        %v3441 = vmul.f32 %v3440, %v3438
        %v3442 = vxor.u32 %v3441, 2147483648
        %v3443 = vsel %vm3360, %v3442, %v3441
        %v3444 = vsub.s32 4, %v3420
        %v3445 = vsel %vm3360, %v3444, %v3420
        %v3446 = vsel %vm3359, %v454, %v3443
        %v3447 = vsel %vm3359, 0, %v3445
        %v3448 = vcosq.f32.pop %v3446
        %v3449 = vsinq.f32.pop %v3446
        %vm3450 = vweird.f32 %v454
        %v3451 = vand.u32 %v3447, 3
        %vm3452 = vcmp.lt.s32.totalorder %v3451, 2
        %vm3453 = vcmp.eq.s32.totalorder %v3451, 0
        %v3454 = vxor.u32 %v3449, 2147483648
        %v3455 = vsel %vm3453, %v3448, %v3454
        %vm3456 = vcmp.eq.s32.totalorder %v3451, 2
        %v3457 = vxor.u32 %v3448, 2147483648
        %v3458 = vsel %vm3456, %v3457, %v3449
        %v3459 = vsel %vm3452, %v3455, %v3458
        %v3460 = vsel %vm3450, nan, %v3459
        %v3461 = vand.u32 2147483647, %v455
        %vm3462 = vcmp.le.f32.partialorder %v3461, 0.7853982
        %vm3463 = vcmp.lt.s32.totalorder %v455, 0
        %v3464 = vand.u32 %v455, 2139095040
        %v3465 = vshrl.u32 %v3464, 23
        %v3466 = vsub.s32 %v3465, 127
        %v3467 = vand.u32 2147483647, %v455
        %v3468 = vand.u32 %v3467, 8388607
        %v3469 = vor.u32 %v3468, 8388608
        %v3470 = vsub.s32 0, %v3469
        %v3471 = vadd.s32 %v3466, 1
        %vm3472 = vcmp.gt.s32.totalorder %v3471, 0
        %v3473 = vsel %vm3472, %v3471, 0
        %v3474 = vshrl.u32 %v3473, 5
        %v3475 = vand.u32 %v3473, 31
        %v3476 = vsub.s32 32, %v3475
        %v3477 = vshrl.u32 683565275, %v3476
        %v3478 = vshll.u32 683565275, %v3475
        %v3479 = vshrl.u32 2475754826, %v3476
        %v3480 = vor.u32 %v3478, %v3479
        %v3481 = vshll.u32 2475754826, %v3475
        %v3482 = vshrl.u32 2131351028, %v3476
        %v3483 = vor.u32 %v3481, %v3482
        %v3484 = vshll.u32 2131351028, %v3475
        %v3485 = vshrl.u32 2102212464, %v3476
        %v3486 = vor.u32 %v3484, %v3485
        %v3487 = vshll.u32 2102212464, %v3475
        %v3488 = vshrl.u32 920167782, %v3476
        %v3489 = vor.u32 %v3487, %v3488
        %v3490 = vshll.u32 920167782, %v3475
        %v3491 = vshrl.u32 1326507024, %v3476
        %v3492 = vor.u32 %v3490, %v3491
        %vm3493 = vcmp.lt.s32.totalorder %v3474, 1
        %vm3494 = vcmp.lt.s32.totalorder %v3474, 2
        %vm3495 = vcmp.lt.s32.totalorder %v3474, 3
        %vm3496 = vcmp.lt.s32.totalorder %v3474, 4
        %v3497 = vsel %vm3493, %v3477, %v3480
        %v3498 = vsel %vm3496, %v3486, 2102212464
        %v3499 = vsel %vm3495, %v3483, %v3498
        %v3500 = vsel %vm3494, %v3497, %v3499
        %v3501 = vsel %vm3493, %v3480, %v3483
        %v3502 = vsel %vm3496, %v3489, 920167782
        %v3503 = vsel %vm3495, %v3486, %v3502
        %v3504 = vsel %vm3494, %v3501, %v3503
        %v3505 = vsel %vm3493, %v3483, %v3486
        %v3506 = vsel %vm3496, %v3492, 1326507024
        %v3507 = vsel %vm3495, %v3489, %v3506
        %v3508 = vsel %vm3494, %v3505, %v3507
        %v3509 = vshll.u32 %v3469, 8
        %v3510 = vmul.u32.u64.compose %v3509, %v3508
        %v3511 = vextract.low.u32 %v3510
        %v3512 = vextract.high.u32 %v3510
        %v3513 = vmul.u32.u64.compose %v3509, %v3504
        %v3514 = vextract.low.u32 %v3513
        %v3515 = vextract.high.u32 %v3513
        %v3516 = vmul.u32 %v3509, %v3500
        %v3517 = vadd.s32 %v3512, %v3514
        %vm3518 = vc.u32 %v3512, %v3514
        %v3519 = vadd.s32 %v3515, 1
        %v3520 = vsel %vm3518, %v3519, %v3515
        %v3521 = vadd.s32 %v3516, %v3520
        %v3522 = vadd.s32 %v3521, 536870912
        %v3523 = vshrl.u32 %v3522, 30
        %v3524 = vshll.u32 %v3523, 30
        %v3525 = vsub.s32 %v3521, %v3524
        %vm3526 = vcmp.lt.s32.totalorder %v3525, 0
        %v3527 = vsub.s32 0, %v3525
        %v3528 = vsel %vm3526, %v3527, %v3525
        %v3529 = vclz %v3528
        %v3530 = vsub.s32 %v3529, 2
        %vm3531 = vcmp.gt.s32.totalorder 0, %v3530
        %v3532 = vsel %vm3531, 0, %v3530
        %v3533 = vsub.s32 32, %v3532
        %v3534 = vshll.u32 %v3525, %v3532
        %v3535 = vshrl.u32 %v3517, %v3533
        %v3536 = vor.u32 %v3534, %v3535
        %v3537 = vsub.s32 4294967266, %v3532
        %v3538 = vadd.s32 %v3537, 127
        %v3539 = vshll.u32 %v3538, 23
        %v3540 = vor.u32 4788187, %v3539
        %v3541 = vand.u32 2147483647, %v3540
        %v3543 = vcvt.s32.f32 %v3536
        %v3544 = vmul.f32 %v3543, %v3541
        %v3545 = vxor.u32 %v3544, 2147483648
        %v3546 = vsel %vm3463, %v3545, %v3544
        %v3547 = vsub.s32 4, %v3523
        %v3548 = vsel %vm3463, %v3547, %v3523
        %v3549 = vsel %vm3462, %v455, %v3546
        %v3550 = vsel %vm3462, 0, %v3548
        %v3551 = vcosq.f32.pop %v3549
        %v3552 = vsinq.f32.pop %v3549
        %vm3553 = vweird.f32 %v455
        %v3554 = vand.u32 %v3550, 3
        %vm3555 = vcmp.lt.s32.totalorder %v3554, 2
        %vm3556 = vcmp.eq.s32.totalorder %v3554, 0
        %v3557 = vxor.u32 %v3552, 2147483648
        %v3558 = vsel %vm3556, %v3551, %v3557
        %vm3559 = vcmp.eq.s32.totalorder %v3554, 2
        %v3560 = vxor.u32 %v3551, 2147483648
        %v3561 = vsel %vm3559, %v3560, %v3552
        %v3562 = vsel %vm3555, %v3558, %v3561
        %v3563 = vsel %vm3553, nan, %v3562
        %v3564 = vand.u32 2147483647, %v456
        %vm3565 = vcmp.le.f32.partialorder %v3564, 0.7853982
        %vm3566 = vcmp.lt.s32.totalorder %v456, 0
        %v3567 = vand.u32 %v456, 2139095040
        %v3568 = vshrl.u32 %v3567, 23
        %v3569 = vsub.s32 %v3568, 127
        %v3570 = vand.u32 2147483647, %v456
        %v3571 = vand.u32 %v3570, 8388607
        %v3572 = vor.u32 %v3571, 8388608
        %v3573 = vsub.s32 0, %v3572
        %v3574 = vadd.s32 %v3569, 1
        %vm3575 = vcmp.gt.s32.totalorder %v3574, 0
        %v3576 = vsel %vm3575, %v3574, 0
        %v3577 = vshrl.u32 %v3576, 5
        %v3578 = vand.u32 %v3576, 31
        %v3579 = vsub.s32 32, %v3578
        %v3580 = vshrl.u32 683565275, %v3579
        %v3581 = vshll.u32 683565275, %v3578
        %v3582 = vshrl.u32 2475754826, %v3579
        %v3583 = vor.u32 %v3581, %v3582
        %v3584 = vshll.u32 2475754826, %v3578
        %v3585 = vshrl.u32 2131351028, %v3579
        %v3586 = vor.u32 %v3584, %v3585
        %v3587 = vshll.u32 2131351028, %v3578
        %v3588 = vshrl.u32 2102212464, %v3579
        %v3589 = vor.u32 %v3587, %v3588
        %v3590 = vshll.u32 2102212464, %v3578
        %v3591 = vshrl.u32 920167782, %v3579
        %v3592 = vor.u32 %v3590, %v3591
        %v3593 = vshll.u32 920167782, %v3578
        %v3594 = vshrl.u32 1326507024, %v3579
        %v3595 = vor.u32 %v3593, %v3594
        %vm3596 = vcmp.lt.s32.totalorder %v3577, 1
        %vm3597 = vcmp.lt.s32.totalorder %v3577, 2
        %vm3598 = vcmp.lt.s32.totalorder %v3577, 3
        %vm3599 = vcmp.lt.s32.totalorder %v3577, 4
        %v3600 = vsel %vm3596, %v3580, %v3583
        %v3601 = vsel %vm3599, %v3589, 2102212464
        %v3602 = vsel %vm3598, %v3586, %v3601
        %v3603 = vsel %vm3597, %v3600, %v3602
        %v3604 = vsel %vm3596, %v3583, %v3586
        %v3605 = vsel %vm3599, %v3592, 920167782
        %v3606 = vsel %vm3598, %v3589, %v3605
        %v3607 = vsel %vm3597, %v3604, %v3606
        %v3608 = vsel %vm3596, %v3586, %v3589
        %v3609 = vsel %vm3599, %v3595, 1326507024
        %v3610 = vsel %vm3598, %v3592, %v3609
        %v3611 = vsel %vm3597, %v3608, %v3610
        %v3612 = vshll.u32 %v3572, 8
        %v3613 = vmul.u32.u64.compose %v3612, %v3611
        %v3614 = vextract.low.u32 %v3613
        %v3615 = vextract.high.u32 %v3613
        %v3616 = vmul.u32.u64.compose %v3612, %v3607
        %v3617 = vextract.low.u32 %v3616
        %v3618 = vextract.high.u32 %v3616
        %v3619 = vmul.u32 %v3612, %v3603
        %v3620 = vadd.s32 %v3615, %v3617
        %vm3621 = vc.u32 %v3615, %v3617
        %v3622 = vadd.s32 %v3618, 1
        %v3623 = vsel %vm3621, %v3622, %v3618
        %v3624 = vadd.s32 %v3619, %v3623
        %v3625 = vadd.s32 %v3624, 536870912
        %v3626 = vshrl.u32 %v3625, 30
        %v3627 = vshll.u32 %v3626, 30
        %v3628 = vsub.s32 %v3624, %v3627
        %vm3629 = vcmp.lt.s32.totalorder %v3628, 0
        %v3630 = vsub.s32 0, %v3628
        %v3631 = vsel %vm3629, %v3630, %v3628
        %v3632 = vclz %v3631
        %v3633 = vsub.s32 %v3632, 2
        %vm3634 = vcmp.gt.s32.totalorder 0, %v3633
        %v3635 = vsel %vm3634, 0, %v3633
        %v3636 = vsub.s32 32, %v3635
        %v3637 = vshll.u32 %v3628, %v3635
        %v3638 = vshrl.u32 %v3620, %v3636
        %v3639 = vor.u32 %v3637, %v3638
        %v3640 = vsub.s32 4294967266, %v3635
        %v3641 = vadd.s32 %v3640, 127
        %v3642 = vshll.u32 %v3641, 23
        %v3643 = vor.u32 4788187, %v3642
        %v3644 = vand.u32 2147483647, %v3643
        %v3646 = vcvt.s32.f32 %v3639
        %v3647 = vmul.f32 %v3646, %v3644
        %v3648 = vxor.u32 %v3647, 2147483648
        %v3649 = vsel %vm3566, %v3648, %v3647
        %v3650 = vsub.s32 4, %v3626
        %v3651 = vsel %vm3566, %v3650, %v3626
        %v3652 = vsel %vm3565, %v456, %v3649
        %v3653 = vsel %vm3565, 0, %v3651
        %v3654 = vcosq.f32.pop %v3652
        %v3655 = vsinq.f32.pop %v3652
        %vm3656 = vweird.f32 %v456
        %v3657 = vand.u32 %v3653, 3
        %vm3658 = vcmp.lt.s32.totalorder %v3657, 2
        %vm3659 = vcmp.eq.s32.totalorder %v3657, 0
        %v3660 = vxor.u32 %v3655, 2147483648
        %v3661 = vsel %vm3659, %v3654, %v3660
        %vm3662 = vcmp.eq.s32.totalorder %v3657, 2
        %v3663 = vxor.u32 %v3654, 2147483648
        %v3664 = vsel %vm3662, %v3663, %v3655
        %v3665 = vsel %vm3658, %v3661, %v3664
        %v3666 = vsel %vm3656, nan, %v3665
        %v3667 = vand.u32 2147483647, %v457
        %vm3668 = vcmp.le.f32.partialorder %v3667, 0.7853982
        %vm3669 = vcmp.lt.s32.totalorder %v457, 0
        %v3670 = vand.u32 %v457, 2139095040
        %v3671 = vshrl.u32 %v3670, 23
        %v3672 = vsub.s32 %v3671, 127
        %v3673 = vand.u32 2147483647, %v457
        %v3674 = vand.u32 %v3673, 8388607
        %v3675 = vor.u32 %v3674, 8388608
        %v3676 = vsub.s32 0, %v3675
        %v3677 = vadd.s32 %v3672, 1
        %vm3678 = vcmp.gt.s32.totalorder %v3677, 0
        %v3679 = vsel %vm3678, %v3677, 0
        %v3680 = vshrl.u32 %v3679, 5
        %v3681 = vand.u32 %v3679, 31
        %v3682 = vsub.s32 32, %v3681
        %v3683 = vshrl.u32 683565275, %v3682
        %v3684 = vshll.u32 683565275, %v3681
        %v3685 = vshrl.u32 2475754826, %v3682
        %v3686 = vor.u32 %v3684, %v3685
        %v3687 = vshll.u32 2475754826, %v3681
        %v3688 = vshrl.u32 2131351028, %v3682
        %v3689 = vor.u32 %v3687, %v3688
        %v3690 = vshll.u32 2131351028, %v3681
        %v3691 = vshrl.u32 2102212464, %v3682
        %v3692 = vor.u32 %v3690, %v3691
        %v3693 = vshll.u32 2102212464, %v3681
        %v3694 = vshrl.u32 920167782, %v3682
        %v3695 = vor.u32 %v3693, %v3694
        %v3696 = vshll.u32 920167782, %v3681
        %v3697 = vshrl.u32 1326507024, %v3682
        %v3698 = vor.u32 %v3696, %v3697
        %vm3699 = vcmp.lt.s32.totalorder %v3680, 1
        %vm3700 = vcmp.lt.s32.totalorder %v3680, 2
        %vm3701 = vcmp.lt.s32.totalorder %v3680, 3
        %vm3702 = vcmp.lt.s32.totalorder %v3680, 4
        %v3703 = vsel %vm3699, %v3683, %v3686
        %v3704 = vsel %vm3702, %v3692, 2102212464
        %v3705 = vsel %vm3701, %v3689, %v3704
        %v3706 = vsel %vm3700, %v3703, %v3705
        %v3707 = vsel %vm3699, %v3686, %v3689
        %v3708 = vsel %vm3702, %v3695, 920167782
        %v3709 = vsel %vm3701, %v3692, %v3708
        %v3710 = vsel %vm3700, %v3707, %v3709
        %v3711 = vsel %vm3699, %v3689, %v3692
        %v3712 = vsel %vm3702, %v3698, 1326507024
        %v3713 = vsel %vm3701, %v3695, %v3712
        %v3714 = vsel %vm3700, %v3711, %v3713
        %v3715 = vshll.u32 %v3675, 8
        %v3716 = vmul.u32.u64.compose %v3715, %v3714
        %v3717 = vextract.low.u32 %v3716
        %v3718 = vextract.high.u32 %v3716
        %v3719 = vmul.u32.u64.compose %v3715, %v3710
        %v3720 = vextract.low.u32 %v3719
        %v3721 = vextract.high.u32 %v3719
        %v3722 = vmul.u32 %v3715, %v3706
        %v3723 = vadd.s32 %v3718, %v3720
        %vm3724 = vc.u32 %v3718, %v3720
        %v3725 = vadd.s32 %v3721, 1
        %v3726 = vsel %vm3724, %v3725, %v3721
        %v3727 = vadd.s32 %v3722, %v3726
        %v3728 = vadd.s32 %v3727, 536870912
        %v3729 = vshrl.u32 %v3728, 30
        %v3730 = vshll.u32 %v3729, 30
        %v3731 = vsub.s32 %v3727, %v3730
        %vm3732 = vcmp.lt.s32.totalorder %v3731, 0
        %v3733 = vsub.s32 0, %v3731
        %v3734 = vsel %vm3732, %v3733, %v3731
        %v3735 = vclz %v3734
        %v3736 = vsub.s32 %v3735, 2
        %vm3737 = vcmp.gt.s32.totalorder 0, %v3736
        %v3738 = vsel %vm3737, 0, %v3736
        %v3739 = vsub.s32 32, %v3738
        %v3740 = vshll.u32 %v3731, %v3738
        %v3741 = vshrl.u32 %v3723, %v3739
        %v3742 = vor.u32 %v3740, %v3741
        %v3743 = vsub.s32 4294967266, %v3738
        %v3744 = vadd.s32 %v3743, 127
        %v3745 = vshll.u32 %v3744, 23
        %v3746 = vor.u32 4788187, %v3745
        %v3747 = vand.u32 2147483647, %v3746
        %v3749 = vcvt.s32.f32 %v3742
        %v3750 = vmul.f32 %v3749, %v3747
        %v3751 = vxor.u32 %v3750, 2147483648
        %v3752 = vsel %vm3669, %v3751, %v3750
        %v3753 = vsub.s32 4, %v3729
        %v3754 = vsel %vm3669, %v3753, %v3729
        %v3755 = vsel %vm3668, %v457, %v3752
        %v3756 = vsel %vm3668, 0, %v3754
        %v3757 = vcosq.f32.pop %v3755
        %v3758 = vsinq.f32.pop %v3755
        %vm3759 = vweird.f32 %v457
        %v3760 = vand.u32 %v3756, 3
        %vm3761 = vcmp.lt.s32.totalorder %v3760, 2
        %vm3762 = vcmp.eq.s32.totalorder %v3760, 0
        %v3763 = vxor.u32 %v3758, 2147483648
        %v3764 = vsel %vm3762, %v3757, %v3763
        %vm3765 = vcmp.eq.s32.totalorder %v3760, 2
        %v3766 = vxor.u32 %v3757, 2147483648
        %v3767 = vsel %vm3765, %v3766, %v3758
        %v3768 = vsel %vm3761, %v3764, %v3767
        %v3769 = vsel %vm3759, nan, %v3768
        %v3770 = vld [vmem:[%s6] sm:$0xff]
        %v3771 = vld [vmem:[%s6 + $0x8] sm:$0xff]
        %v3772 = vld [vmem:[%s6 + $0x10] sm:$0xff]
        %v3773 = vld [vmem:[%s6 + $0x18] sm:$0xff]
        %v3774 = vld [vmem:[%s6 + $0x20] sm:$0xff]
        %v3775 = vld [vmem:[%s6 + $0x28] sm:$0xff]
        %v3776 = vld [vmem:[%s6 + $0x30] sm:$0xff]
        %v3777 = vld [vmem:[%s6 + $0x38] sm:$0xff]
        %v3778 = vld [vmem:[%s2] sm:$0xf]
        %v3779 = vld [vmem:[%s2 + $0x4] sm:$0xf]
        %v3780 = vld [vmem:[%s2 + $0x8] sm:$0xf]
        %v3781 = vld [vmem:[%s2 + $0xc] sm:$0xf]
        %v3782 = vld [vmem:[%s2 + $0x10] sm:$0xf]
        %v3783 = vld [vmem:[%s2 + $0x14] sm:$0xf]
        %v3784 = vld [vmem:[%s2 + $0x18] sm:$0xf]
        %v3785 = vld [vmem:[%s2 + $0x1c] sm:$0xf]
        %v3786 = vpack.c.bf16 %v977, %v561
        %v3787 = vpack.c.bf16 %v1081, %v665
        %v3788 = vpack.c.bf16 %v1185, %v769
        %v3789 = vpack.c.bf16 %v1289, %v873
        %v3790 = vpack.c.bf16 %v1809, %v1393
        %v3791 = vpack.c.bf16 %v1913, %v1497
        %v3792 = vpack.c.bf16 %v2017, %v1601
        %v3793 = vpack.c.bf16 %v2121, %v1705
        %v3794 = vpack.c.bf16 %v2636, %v2224
        %v3795 = vpack.c.bf16 %v2739, %v2327
        %v3796 = vpack.c.bf16 %v2842, %v2430
        %v3797 = vpack.c.bf16 %v2945, %v2533
        %v3798 = vpack.c.bf16 %v3460, %v3048
        %v3799 = vpack.c.bf16 %v3563, %v3151
        %v3800 = vpack.c.bf16 %v3666, %v3254
        %v3801 = vpack.c.bf16 %v3769, %v3357
        %3803 = vset.pattern.permute.xlu0 0
        %3804 = vperm.xlu0 %3803, %v3770
        %v3805 = vpop.permute.xlu0 %3804
        %3808 = vset.pattern.permute.xlu0 0
        %3809 = vperm.xlu0 %3808, %v3771
        %v3810 = vpop.permute.xlu0 %3809
        %3813 = vset.pattern.permute.xlu0 0
        %3814 = vperm.xlu0 %3813, %v3772
        %v3815 = vpop.permute.xlu0 %3814
        %3818 = vset.pattern.permute.xlu0 0
        %3819 = vperm.xlu0 %3818, %v3773
        %v3820 = vpop.permute.xlu0 %3819
        %3823 = vset.pattern.permute.xlu0 0
        %3824 = vperm.xlu0 %3823, %v3774
        %v3825 = vpop.permute.xlu0 %3824
        %3828 = vset.pattern.permute.xlu0 0
        %3829 = vperm.xlu0 %3828, %v3775
        %v3830 = vpop.permute.xlu0 %3829
        %3833 = vset.pattern.permute.xlu0 0
        %3834 = vperm.xlu0 %3833, %v3776
        %v3835 = vpop.permute.xlu0 %3834
        %3838 = vset.pattern.permute.xlu0 0
        %3839 = vperm.xlu0 %3838, %v3777
        %v3840 = vpop.permute.xlu0 %3839
        %v3850 = vunpack.c.l.b16 %v3778
        %v3851 = vunpack.c.l.b16 %v3779
        %v3852 = vunpack.c.l.b16 %v3780
        %v3853 = vunpack.c.l.b16 %v3781
        %v3854 = vunpack.c.l.b16 %v3782
        %v3855 = vunpack.c.l.b16 %v3783
        %v3856 = vunpack.c.l.b16 %v3784
        %v3857 = vunpack.c.l.b16 %v3785
        %v3858 = vpack.c.b16 %v3851, %v3850
        %v3859 = vpack.c.b16 %v3853, %v3852
        %v3860 = vpack.c.b16 %v3855, %v3854
        %v3861 = vpack.c.b16 %v3857, %v3856
        %vm3862 = vcmask 523264
        %v3864 = vsel %vm3862, %v3858, 0
        %v3867 = vsel %vm3862, %v3859, 0
        %v3870 = vsel %vm3862, %v3860, 0
        %v3873 = vsel %vm3862, %v3861, 0
        %3875 = vmatprep.subr.bf16.mxu0 %v3787
        %3876 = vmatpush1.bf16.msra.mxu0 %v3786
        %3877 = vmatprep.subr.bf16.mxu0 %v3791
        %3878 = vmatpush1.bf16.msra.mxu0 %v3790
        %3879 = vmatprep.subr.bf16.mxu0 %v3795
        %3880 = vmatpush1.bf16.msra.mxu0 %v3794
        %3881 = vmatprep.subr.bf16.mxu0 %v3799
        %3882 = vmatpush1.bf16.msra.mxu0 %v3798
        %3883 = vmatprep.subr.bf16.mxu0 0
        %3884 = vmatpush1.bf16.msra.mxu0 0
        %3885 = vmatprep.subr.bf16.mxu0 0
        %3886 = vmatpush1.bf16.msra.mxu0 0
        %3887 = vmatprep.subr.bf16.mxu0 0
        %3888 = vmatpush1.bf16.msra.mxu0 0
        %3889 = vmatprep.subr.bf16.mxu0 0
        %3890 = vmatpush1.bf16.msra.mxu0 0
        %3891 = vmatprep.subr.bf16.mxu0 0
        %3892 = vmatpush1.bf16.msra.mxu0 0
        %3893 = vmatprep.subr.bf16.mxu0 0
        %3894 = vmatpush1.bf16.msra.mxu0 0
        %3895 = vmatprep.subr.bf16.mxu0 0
        %3896 = vmatpush1.bf16.msra.mxu0 0
        %3897 = vmatprep.subr.bf16.mxu0 0
        %3898 = vmatpush1.bf16.msra.mxu0 0
        %3899 = vmatprep.subr.bf16.mxu0 0
        %3900 = vmatpush1.bf16.msra.mxu0 0
        %3901 = vmatprep.subr.bf16.mxu0 0
        %3902 = vmatpush1.bf16.msra.mxu0 0
        %3903 = vmatprep.subr.bf16.mxu0 0
        %3904 = vmatpush1.bf16.msra.mxu0 0
        %3905 = vmatprep.subr.bf16.mxu0 0
        %3906 = vmatpush1.bf16.msra.mxu0 0
        %3907 = vmatprep.mubr.bf16.mxu0 0
        %3908 = vmatmul.mubr.bf16.gmra.mrb[0].mxu0 %v3864
        %v3909 = vpop.f32.mrb[0].mxu0
        %v3910 = vadd.f32 %v3805, %v3909
        %v3911 = vpop.f32.mrb[0].mxu0
        %v3912 = vadd.f32 %v3805, %v3911
        %v3913 = vpop.f32.mrb[0].mxu0
        %v3914 = vadd.f32 %v3810, %v3913
        %v3915 = vpop.f32.mrb[0].mxu0
        %v3916 = vadd.f32 %v3810, %v3915
        %3917 = vmatprep.mubr.bf16.mxu0 0
        %3918 = vmatmul.mubr.bf16.gmra.mrb[0].mxu0 %v3867
        %v3919 = vpop.f32.mrb[0].mxu0
        %v3920 = vadd.f32 %v3815, %v3919
        %v3921 = vpop.f32.mrb[0].mxu0
        %v3922 = vadd.f32 %v3815, %v3921
        %v3923 = vpop.f32.mrb[0].mxu0
        %v3924 = vadd.f32 %v3820, %v3923
        %v3925 = vpop.f32.mrb[0].mxu0
        %v3926 = vadd.f32 %v3820, %v3925
        %3927 = vmatprep.mubr.bf16.mxu0 0
        %3928 = vmatmul.mubr.bf16.gmra.mrb[0].mxu0 %v3870
        %v3929 = vpop.f32.mrb[0].mxu0
        %v3930 = vadd.f32 %v3825, %v3929
        %v3931 = vpop.f32.mrb[0].mxu0
        %v3932 = vadd.f32 %v3825, %v3931
        %v3933 = vpop.f32.mrb[0].mxu0
        %v3934 = vadd.f32 %v3830, %v3933
        %v3935 = vpop.f32.mrb[0].mxu0
        %v3936 = vadd.f32 %v3830, %v3935
        %3937 = vmatprep.mubr.bf16.mxu0 0
        %3938 = vmatmul.mubr.bf16.gmra.mrb[0].mxu0 %v3873
        %v3939 = vpop.f32.mrb[0].mxu0
        %v3940 = vadd.f32 %v3835, %v3939
        %v3941 = vpop.f32.mrb[0].mxu0
        %v3942 = vadd.f32 %v3835, %v3941
        %v3943 = vpop.f32.mrb[0].mxu0
        %v3944 = vadd.f32 %v3840, %v3943
        %v3945 = vpop.f32.mrb[0].mxu0
        %v3946 = vadd.f32 %v3840, %v3945
        %3947 = vdwg.mxu0
        %3948 = vmatprep.subr.bf16.mxu0 %v3789
        %3949 = vmatpush1.bf16.msra.mxu0 %v3788
        %3950 = vmatprep.subr.bf16.mxu0 %v3793
        %3951 = vmatpush1.bf16.msra.mxu0 %v3792
        %3952 = vmatprep.subr.bf16.mxu0 %v3797
        %3953 = vmatpush1.bf16.msra.mxu0 %v3796
        %3954 = vmatprep.subr.bf16.mxu0 %v3801
        %3955 = vmatpush1.bf16.msra.mxu0 %v3800
        %3956 = vmatprep.subr.bf16.mxu0 0
        %3957 = vmatpush1.bf16.msra.mxu0 0
        %3958 = vmatprep.subr.bf16.mxu0 0
        %3959 = vmatpush1.bf16.msra.mxu0 0
        %3960 = vmatprep.subr.bf16.mxu0 0
        %3961 = vmatpush1.bf16.msra.mxu0 0
        %3962 = vmatprep.subr.bf16.mxu0 0
        %3963 = vmatpush1.bf16.msra.mxu0 0
        %3964 = vmatprep.subr.bf16.mxu0 0
        %3965 = vmatpush1.bf16.msra.mxu0 0
        %3966 = vmatprep.subr.bf16.mxu0 0
        %3967 = vmatpush1.bf16.msra.mxu0 0
        %3968 = vmatprep.subr.bf16.mxu0 0
        %3969 = vmatpush1.bf16.msra.mxu0 0
        %3970 = vmatprep.subr.bf16.mxu0 0
        %3971 = vmatpush1.bf16.msra.mxu0 0
        %3972 = vmatprep.subr.bf16.mxu0 0
        %3973 = vmatpush1.bf16.msra.mxu0 0
        %3974 = vmatprep.subr.bf16.mxu0 0
        %3975 = vmatpush1.bf16.msra.mxu0 0
        %3976 = vmatprep.subr.bf16.mxu0 0
        %3977 = vmatpush1.bf16.msra.mxu0 0
        %3978 = vmatprep.subr.bf16.mxu0 0
        %3979 = vmatpush1.bf16.msra.mxu0 0
        %3980 = vmatprep.mubr.bf16.mxu0 0
        %3981 = vmatmul.mubr.bf16.gmra.mrb[0].mxu0 %v3864
        %v3982 = vpop.f32.mrb[0].mxu0
        %v3983 = vadd.f32 %v3805, %v3982
        %v3984 = vpop.f32.mrb[0].mxu0
        %v3985 = vadd.f32 %v3805, %v3984
        %v3986 = vpop.f32.mrb[0].mxu0
        %v3987 = vadd.f32 %v3810, %v3986
        %v3988 = vpop.f32.mrb[0].mxu0
        %v3989 = vadd.f32 %v3810, %v3988
        %3990 = vmatprep.mubr.bf16.mxu0 0
        %3991 = vmatmul.mubr.bf16.gmra.mrb[0].mxu0 %v3867
        %v3992 = vpop.f32.mrb[0].mxu0
        %v3993 = vadd.f32 %v3815, %v3992
        %v3994 = vpop.f32.mrb[0].mxu0
        %v3995 = vadd.f32 %v3815, %v3994
        %v3996 = vpop.f32.mrb[0].mxu0
        %v3997 = vadd.f32 %v3820, %v3996
        %v3998 = vpop.f32.mrb[0].mxu0
        %v3999 = vadd.f32 %v3820, %v3998
        %4000 = vmatprep.mubr.bf16.mxu0 0
        %4001 = vmatmul.mubr.bf16.gmra.mrb[0].mxu0 %v3870
        %v4002 = vpop.f32.mrb[0].mxu0
        %v4003 = vadd.f32 %v3825, %v4002
        %v4004 = vpop.f32.mrb[0].mxu0
        %v4005 = vadd.f32 %v3825, %v4004
        %v4006 = vpop.f32.mrb[0].mxu0
        %v4007 = vadd.f32 %v3830, %v4006
        %v4008 = vpop.f32.mrb[0].mxu0
        %v4009 = vadd.f32 %v3830, %v4008
        %4010 = vmatprep.mubr.bf16.mxu0 0
        %4011 = vmatmul.mubr.bf16.gmra.mrb[0].mxu0 %v3873
        %v4012 = vpop.f32.mrb[0].mxu0
        %v4013 = vadd.f32 %v3835, %v4012
        %v4014 = vpop.f32.mrb[0].mxu0
        %v4015 = vadd.f32 %v3835, %v4014
        %v4016 = vpop.f32.mrb[0].mxu0
        %v4017 = vadd.f32 %v3840, %v4016
        %v4018 = vpop.f32.mrb[0].mxu0
        %v4019 = vadd.f32 %v3840, %v4018
        %4020 = vdwg.mxu0
        %v4021 = vmul.f32 %v3910, 0.5
        %v4022 = vmul.f32 %v3912, 0.5
        %v4023 = vmul.f32 %v3983, 0.5
        %v4024 = vmul.f32 %v3985, 0.5
        %v4025 = vmul.f32 %v3914, 0.5
        %v4026 = vmul.f32 %v3916, 0.5
        %v4027 = vmul.f32 %v3987, 0.5
        %v4028 = vmul.f32 %v3989, 0.5
        %v4029 = vmul.f32 %v3920, 0.5
        %v4030 = vmul.f32 %v3922, 0.5
        %v4031 = vmul.f32 %v3993, 0.5
        %v4032 = vmul.f32 %v3995, 0.5
        %v4033 = vmul.f32 %v3924, 0.5
        %v4034 = vmul.f32 %v3926, 0.5
        %v4035 = vmul.f32 %v3997, 0.5
        %v4036 = vmul.f32 %v3999, 0.5
        %v4037 = vmul.f32 %v3930, 0.5
        %v4038 = vmul.f32 %v3932, 0.5
        %v4039 = vmul.f32 %v4003, 0.5
        %v4040 = vmul.f32 %v4005, 0.5
        %v4041 = vmul.f32 %v3934, 0.5
        %v4042 = vmul.f32 %v3936, 0.5
        %v4043 = vmul.f32 %v4007, 0.5
        %v4044 = vmul.f32 %v4009, 0.5
        %v4045 = vmul.f32 %v3940, 0.5
        %v4046 = vmul.f32 %v3942, 0.5
        %v4047 = vmul.f32 %v4013, 0.5
        %v4048 = vmul.f32 %v4015, 0.5
        %v4049 = vmul.f32 %v3944, 0.5
        %v4050 = vmul.f32 %v3946, 0.5
        %v4051 = vmul.f32 %v4017, 0.5
        %v4052 = vmul.f32 %v4019, 0.5
        %v4053 = vmul.f32 %v3910, 0.70710677
        %v4054 = vmul.f32 %v3912, 0.70710677
        %v4055 = vmul.f32 %v3983, 0.70710677
        %v4056 = vmul.f32 %v3985, 0.70710677
        %v4057 = vmul.f32 %v3914, 0.70710677
        %v4058 = vmul.f32 %v3916, 0.70710677
        %v4059 = vmul.f32 %v3987, 0.70710677
        %v4060 = vmul.f32 %v3989, 0.70710677
        %v4061 = vmul.f32 %v3920, 0.70710677
        %v4062 = vmul.f32 %v3922, 0.70710677
        %v4063 = vmul.f32 %v3993, 0.70710677
        %v4064 = vmul.f32 %v3995, 0.70710677
        %v4065 = vmul.f32 %v3924, 0.70710677
        %v4066 = vmul.f32 %v3926, 0.70710677
        %v4067 = vmul.f32 %v3997, 0.70710677
        %v4068 = vmul.f32 %v3999, 0.70710677
        %v4069 = vmul.f32 %v3930, 0.70710677
        %v4070 = vmul.f32 %v3932, 0.70710677
        %v4071 = vmul.f32 %v4003, 0.70710677
        %v4072 = vmul.f32 %v4005, 0.70710677
        %v4073 = vmul.f32 %v3934, 0.70710677
        %v4074 = vmul.f32 %v3936, 0.70710677
        %v4075 = vmul.f32 %v4007, 0.70710677
        %v4076 = vmul.f32 %v4009, 0.70710677
        %v4077 = vmul.f32 %v3940, 0.70710677
        %v4078 = vmul.f32 %v3942, 0.70710677
        %v4079 = vmul.f32 %v4013, 0.70710677
        %v4080 = vmul.f32 %v4015, 0.70710677
        %v4081 = vmul.f32 %v3944, 0.70710677
        %v4082 = vmul.f32 %v3946, 0.70710677
        %v4083 = vmul.f32 %v4017, 0.70710677
        %v4084 = vmul.f32 %v4019, 0.70710677
        %v4085 = vand.u32 2147483647, %v4053
        %v4086 = vand.u32 2147483647, %v4054
        %v4087 = vand.u32 2147483647, %v4055
        %v4088 = vand.u32 2147483647, %v4056
        %v4089 = vand.u32 2147483647, %v4057
        %v4090 = vand.u32 2147483647, %v4058
        %v4091 = vand.u32 2147483647, %v4059
        %v4092 = vand.u32 2147483647, %v4060
        %v4093 = vand.u32 2147483647, %v4061
        %v4094 = vand.u32 2147483647, %v4062
        %v4095 = vand.u32 2147483647, %v4063
        %v4096 = vand.u32 2147483647, %v4064
        %v4097 = vand.u32 2147483647, %v4065
        %v4098 = vand.u32 2147483647, %v4066
        %v4099 = vand.u32 2147483647, %v4067
        %v4100 = vand.u32 2147483647, %v4068
        %v4101 = vand.u32 2147483647, %v4069
        %v4102 = vand.u32 2147483647, %v4070
        %v4103 = vand.u32 2147483647, %v4071
        %v4104 = vand.u32 2147483647, %v4072
        %v4105 = vand.u32 2147483647, %v4073
        %v4106 = vand.u32 2147483647, %v4074
        %v4107 = vand.u32 2147483647, %v4075
        %v4108 = vand.u32 2147483647, %v4076
        %v4109 = vand.u32 2147483647, %v4077
        %v4110 = vand.u32 2147483647, %v4078
        %v4111 = vand.u32 2147483647, %v4079
        %v4112 = vand.u32 2147483647, %v4080
        %v4113 = vand.u32 2147483647, %v4081
        %v4114 = vand.u32 2147483647, %v4082
        %v4115 = vand.u32 2147483647, %v4083
        %v4116 = vand.u32 2147483647, %v4084
        %v4117 = vmul.f32 %v4085, 0.3275911
        %v4118 = vmul.f32 %v4086, 0.3275911
        %v4119 = vmul.f32 %v4087, 0.3275911
        %v4120 = vmul.f32 %v4088, 0.3275911
        %v4121 = vmul.f32 %v4089, 0.3275911
        %v4122 = vmul.f32 %v4090, 0.3275911
        %v4123 = vmul.f32 %v4091, 0.3275911
        %v4124 = vmul.f32 %v4092, 0.3275911
        %v4125 = vmul.f32 %v4093, 0.3275911
        %v4126 = vmul.f32 %v4094, 0.3275911
        %v4127 = vmul.f32 %v4095, 0.3275911
        %v4128 = vmul.f32 %v4096, 0.3275911
        %v4129 = vmul.f32 %v4097, 0.3275911
        %v4130 = vmul.f32 %v4098, 0.3275911
        %v4131 = vmul.f32 %v4099, 0.3275911
        %v4132 = vmul.f32 %v4100, 0.3275911
        %v4133 = vmul.f32 %v4101, 0.3275911
        %v4134 = vmul.f32 %v4102, 0.3275911
        %v4135 = vmul.f32 %v4103, 0.3275911
        %v4136 = vmul.f32 %v4104, 0.3275911
        %v4137 = vmul.f32 %v4105, 0.3275911
        %v4138 = vmul.f32 %v4106, 0.3275911
        %v4139 = vmul.f32 %v4107, 0.3275911
        %v4140 = vmul.f32 %v4108, 0.3275911
        %v4141 = vmul.f32 %v4109, 0.3275911
        %v4142 = vmul.f32 %v4110, 0.3275911
        %v4143 = vmul.f32 %v4111, 0.3275911
        %v4144 = vmul.f32 %v4112, 0.3275911
        %v4145 = vmul.f32 %v4113, 0.3275911
        %v4146 = vmul.f32 %v4114, 0.3275911
        %v4147 = vmul.f32 %v4115, 0.3275911
        %v4148 = vmul.f32 %v4116, 0.3275911
        %v4149 = vadd.f32 %v4117, 1.0
        %v4150 = vadd.f32 %v4118, 1.0
        %v4151 = vadd.f32 %v4119, 1.0
        %v4152 = vadd.f32 %v4120, 1.0
        %v4153 = vadd.f32 %v4121, 1.0
        %v4154 = vadd.f32 %v4122, 1.0
        %v4155 = vadd.f32 %v4123, 1.0
        %v4156 = vadd.f32 %v4124, 1.0
        %v4157 = vadd.f32 %v4125, 1.0
        %v4158 = vadd.f32 %v4126, 1.0
        %v4159 = vadd.f32 %v4127, 1.0
        %v4160 = vadd.f32 %v4128, 1.0
        %v4161 = vadd.f32 %v4129, 1.0
        %v4162 = vadd.f32 %v4130, 1.0
        %v4163 = vadd.f32 %v4131, 1.0
        %v4164 = vadd.f32 %v4132, 1.0
        %v4165 = vadd.f32 %v4133, 1.0
        %v4166 = vadd.f32 %v4134, 1.0
        %v4167 = vadd.f32 %v4135, 1.0
        %v4168 = vadd.f32 %v4136, 1.0
        %v4169 = vadd.f32 %v4137, 1.0
        %v4170 = vadd.f32 %v4138, 1.0
        %v4171 = vadd.f32 %v4139, 1.0
        %v4172 = vadd.f32 %v4140, 1.0
        %v4173 = vadd.f32 %v4141, 1.0
        %v4174 = vadd.f32 %v4142, 1.0
        %v4175 = vadd.f32 %v4143, 1.0
        %v4176 = vadd.f32 %v4144, 1.0
        %v4177 = vadd.f32 %v4145, 1.0
        %v4178 = vadd.f32 %v4146, 1.0
        %v4179 = vadd.f32 %v4147, 1.0
        %v4180 = vadd.f32 %v4148, 1.0
        %v4181 = vrcp.pop %v4149
        %v4182 = vrcp.pop %v4150
        %v4183 = vrcp.pop %v4151
        %v4184 = vrcp.pop %v4152
        %v4185 = vrcp.pop %v4153
        %v4186 = vrcp.pop %v4154
        %v4187 = vrcp.pop %v4155
        %v4188 = vrcp.pop %v4156
        %v4189 = vrcp.pop %v4157
        %v4190 = vrcp.pop %v4158
        %v4191 = vrcp.pop %v4159
        %v4192 = vrcp.pop %v4160
        %v4193 = vrcp.pop %v4161
        %v4194 = vrcp.pop %v4162
        %v4195 = vrcp.pop %v4163
        %v4196 = vrcp.pop %v4164
        %v4197 = vrcp.pop %v4165
        %v4198 = vrcp.pop %v4166
        %v4199 = vrcp.pop %v4167
        %v4200 = vrcp.pop %v4168
        %v4201 = vrcp.pop %v4169
        %v4202 = vrcp.pop %v4170
        %v4203 = vrcp.pop %v4171
        %v4204 = vrcp.pop %v4172
        %v4205 = vrcp.pop %v4173
        %v4206 = vrcp.pop %v4174
        %v4207 = vrcp.pop %v4175
        %v4208 = vrcp.pop %v4176
        %v4209 = vrcp.pop %v4177
        %v4210 = vrcp.pop %v4178
        %v4211 = vrcp.pop %v4179
        %v4212 = vrcp.pop %v4180
        %v4213 = vmul.f32 %v4181, 1.0614054
        %v4214 = vmul.f32 %v4182, 1.0614054
        %v4215 = vmul.f32 %v4183, 1.0614054
        %v4216 = vmul.f32 %v4184, 1.0614054
        %v4217 = vmul.f32 %v4185, 1.0614054
        %v4218 = vmul.f32 %v4186, 1.0614054
        %v4219 = vmul.f32 %v4187, 1.0614054
        %v4220 = vmul.f32 %v4188, 1.0614054
        %v4221 = vmul.f32 %v4189, 1.0614054
        %v4222 = vmul.f32 %v4190, 1.0614054
        %v4223 = vmul.f32 %v4191, 1.0614054
        %v4224 = vmul.f32 %v4192, 1.0614054
        %v4225 = vmul.f32 %v4193, 1.0614054
        %v4226 = vmul.f32 %v4194, 1.0614054
        %v4227 = vmul.f32 %v4195, 1.0614054
        %v4228 = vmul.f32 %v4196, 1.0614054
        %v4229 = vmul.f32 %v4197, 1.0614054
        %v4230 = vmul.f32 %v4198, 1.0614054
        %v4231 = vmul.f32 %v4199, 1.0614054
        %v4232 = vmul.f32 %v4200, 1.0614054
        %v4233 = vmul.f32 %v4201, 1.0614054
        %v4234 = vmul.f32 %v4202, 1.0614054
        %v4235 = vmul.f32 %v4203, 1.0614054
        %v4236 = vmul.f32 %v4204, 1.0614054
        %v4237 = vmul.f32 %v4205, 1.0614054
        %v4238 = vmul.f32 %v4206, 1.0614054
        %v4239 = vmul.f32 %v4207, 1.0614054
        %v4240 = vmul.f32 %v4208, 1.0614054
        %v4241 = vmul.f32 %v4209, 1.0614054
        %v4242 = vmul.f32 %v4210, 1.0614054
        %v4243 = vmul.f32 %v4211, 1.0614054
        %v4244 = vmul.f32 %v4212, 1.0614054
        %v4245 = vadd.f32 %v4213, -1.4531521
        %v4246 = vadd.f32 %v4214, -1.4531521
        %v4247 = vadd.f32 %v4215, -1.4531521
        %v4248 = vadd.f32 %v4216, -1.4531521
        %v4249 = vadd.f32 %v4217, -1.4531521
        %v4250 = vadd.f32 %v4218, -1.4531521
        %v4251 = vadd.f32 %v4219, -1.4531521
        %v4252 = vadd.f32 %v4220, -1.4531521
        %v4253 = vadd.f32 %v4221, -1.4531521
        %v4254 = vadd.f32 %v4222, -1.4531521
        %v4255 = vadd.f32 %v4223, -1.4531521
        %v4256 = vadd.f32 %v4224, -1.4531521
        %v4257 = vadd.f32 %v4225, -1.4531521
        %v4258 = vadd.f32 %v4226, -1.4531521
        %v4259 = vadd.f32 %v4227, -1.4531521
        %v4260 = vadd.f32 %v4228, -1.4531521
        %v4261 = vadd.f32 %v4229, -1.4531521
        %v4262 = vadd.f32 %v4230, -1.4531521
        %v4263 = vadd.f32 %v4231, -1.4531521
        %v4264 = vadd.f32 %v4232, -1.4531521
        %v4265 = vadd.f32 %v4233, -1.4531521
        %v4266 = vadd.f32 %v4234, -1.4531521
        %v4267 = vadd.f32 %v4235, -1.4531521
        %v4268 = vadd.f32 %v4236, -1.4531521
        %v4269 = vadd.f32 %v4237, -1.4531521
        %v4270 = vadd.f32 %v4238, -1.4531521
        %v4271 = vadd.f32 %v4239, -1.4531521
        %v4272 = vadd.f32 %v4240, -1.4531521
        %v4273 = vadd.f32 %v4241, -1.4531521
        %v4274 = vadd.f32 %v4242, -1.4531521
        %v4275 = vadd.f32 %v4243, -1.4531521
        %v4276 = vadd.f32 %v4244, -1.4531521
        %v4277 = vmul.f32 %v4245, %v4181
        %v4278 = vmul.f32 %v4246, %v4182
        %v4279 = vmul.f32 %v4247, %v4183
        %v4280 = vmul.f32 %v4248, %v4184
        %v4281 = vmul.f32 %v4249, %v4185
        %v4282 = vmul.f32 %v4250, %v4186
        %v4283 = vmul.f32 %v4251, %v4187
        %v4284 = vmul.f32 %v4252, %v4188
        %v4285 = vmul.f32 %v4253, %v4189
        %v4286 = vmul.f32 %v4254, %v4190
        %v4287 = vmul.f32 %v4255, %v4191
        %v4288 = vmul.f32 %v4256, %v4192
        %v4289 = vmul.f32 %v4257, %v4193
        %v4290 = vmul.f32 %v4258, %v4194
        %v4291 = vmul.f32 %v4259, %v4195
        %v4292 = vmul.f32 %v4260, %v4196
        %v4293 = vmul.f32 %v4261, %v4197
        %v4294 = vmul.f32 %v4262, %v4198
        %v4295 = vmul.f32 %v4263, %v4199
        %v4296 = vmul.f32 %v4264, %v4200
        %v4297 = vmul.f32 %v4265, %v4201
        %v4298 = vmul.f32 %v4266, %v4202
        %v4299 = vmul.f32 %v4267, %v4203
        %v4300 = vmul.f32 %v4268, %v4204
        %v4301 = vmul.f32 %v4269, %v4205
        %v4302 = vmul.f32 %v4270, %v4206
        %v4303 = vmul.f32 %v4271, %v4207
        %v4304 = vmul.f32 %v4272, %v4208
        %v4305 = vmul.f32 %v4273, %v4209
        %v4306 = vmul.f32 %v4274, %v4210
        %v4307 = vmul.f32 %v4275, %v4211
        %v4308 = vmul.f32 %v4276, %v4212
        %v4309 = vadd.f32 %v4277, 1.4214138
        %v4310 = vadd.f32 %v4278, 1.4214138
        %v4311 = vadd.f32 %v4279, 1.4214138
        %v4312 = vadd.f32 %v4280, 1.4214138
        %v4313 = vadd.f32 %v4281, 1.4214138
        %v4314 = vadd.f32 %v4282, 1.4214138
        %v4315 = vadd.f32 %v4283, 1.4214138
        %v4316 = vadd.f32 %v4284, 1.4214138
        %v4317 = vadd.f32 %v4285, 1.4214138
        %v4318 = vadd.f32 %v4286, 1.4214138
        %v4319 = vadd.f32 %v4287, 1.4214138
        %v4320 = vadd.f32 %v4288, 1.4214138
        %v4321 = vadd.f32 %v4289, 1.4214138
        %v4322 = vadd.f32 %v4290, 1.4214138
        %v4323 = vadd.f32 %v4291, 1.4214138
        %v4324 = vadd.f32 %v4292, 1.4214138
        %v4325 = vadd.f32 %v4293, 1.4214138
        %v4326 = vadd.f32 %v4294, 1.4214138
        %v4327 = vadd.f32 %v4295, 1.4214138
        %v4328 = vadd.f32 %v4296, 1.4214138
        %v4329 = vadd.f32 %v4297, 1.4214138
        %v4330 = vadd.f32 %v4298, 1.4214138
        %v4331 = vadd.f32 %v4299, 1.4214138
        %v4332 = vadd.f32 %v4300, 1.4214138
        %v4333 = vadd.f32 %v4301, 1.4214138
        %v4334 = vadd.f32 %v4302, 1.4214138
        %v4335 = vadd.f32 %v4303, 1.4214138
        %v4336 = vadd.f32 %v4304, 1.4214138
        %v4337 = vadd.f32 %v4305, 1.4214138
        %v4338 = vadd.f32 %v4306, 1.4214138
        %v4339 = vadd.f32 %v4307, 1.4214138
        %v4340 = vadd.f32 %v4308, 1.4214138
        %v4341 = vmul.f32 %v4309, %v4181
        %v4342 = vmul.f32 %v4310, %v4182
        %v4343 = vmul.f32 %v4311, %v4183
        %v4344 = vmul.f32 %v4312, %v4184
        %v4345 = vmul.f32 %v4313, %v4185
        %v4346 = vmul.f32 %v4314, %v4186
        %v4347 = vmul.f32 %v4315, %v4187
        %v4348 = vmul.f32 %v4316, %v4188
        %v4349 = vmul.f32 %v4317, %v4189
        %v4350 = vmul.f32 %v4318, %v4190
        %v4351 = vmul.f32 %v4319, %v4191
        %v4352 = vmul.f32 %v4320, %v4192
        %v4353 = vmul.f32 %v4321, %v4193
        %v4354 = vmul.f32 %v4322, %v4194
        %v4355 = vmul.f32 %v4323, %v4195
        %v4356 = vmul.f32 %v4324, %v4196
        %v4357 = vmul.f32 %v4325, %v4197
        %v4358 = vmul.f32 %v4326, %v4198
        %v4359 = vmul.f32 %v4327, %v4199
        %v4360 = vmul.f32 %v4328, %v4200
        %v4361 = vmul.f32 %v4329, %v4201
        %v4362 = vmul.f32 %v4330, %v4202
        %v4363 = vmul.f32 %v4331, %v4203
        %v4364 = vmul.f32 %v4332, %v4204
        %v4365 = vmul.f32 %v4333, %v4205
        %v4366 = vmul.f32 %v4334, %v4206
        %v4367 = vmul.f32 %v4335, %v4207
        %v4368 = vmul.f32 %v4336, %v4208
        %v4369 = vmul.f32 %v4337, %v4209
        %v4370 = vmul.f32 %v4338, %v4210
        %v4371 = vmul.f32 %v4339, %v4211
        %v4372 = vmul.f32 %v4340, %v4212
        %v4373 = vadd.f32 %v4341, -0.28449672
        %v4374 = vadd.f32 %v4342, -0.28449672
        %v4375 = vadd.f32 %v4343, -0.28449672
        %v4376 = vadd.f32 %v4344, -0.28449672
        %v4377 = vadd.f32 %v4345, -0.28449672
        %v4378 = vadd.f32 %v4346, -0.28449672
        %v4379 = vadd.f32 %v4347, -0.28449672
        %v4380 = vadd.f32 %v4348, -0.28449672
        %v4381 = vadd.f32 %v4349, -0.28449672
        %v4382 = vadd.f32 %v4350, -0.28449672
        %v4383 = vadd.f32 %v4351, -0.28449672
        %v4384 = vadd.f32 %v4352, -0.28449672
        %v4385 = vadd.f32 %v4353, -0.28449672
        %v4386 = vadd.f32 %v4354, -0.28449672
        %v4387 = vadd.f32 %v4355, -0.28449672
        %v4388 = vadd.f32 %v4356, -0.28449672
        %v4389 = vadd.f32 %v4357, -0.28449672
        %v4390 = vadd.f32 %v4358, -0.28449672
        %v4391 = vadd.f32 %v4359, -0.28449672
        %v4392 = vadd.f32 %v4360, -0.28449672
        %v4393 = vadd.f32 %v4361, -0.28449672
        %v4394 = vadd.f32 %v4362, -0.28449672
        %v4395 = vadd.f32 %v4363, -0.28449672
        %v4396 = vadd.f32 %v4364, -0.28449672
        %v4397 = vadd.f32 %v4365, -0.28449672
        %v4398 = vadd.f32 %v4366, -0.28449672
        %v4399 = vadd.f32 %v4367, -0.28449672
        %v4400 = vadd.f32 %v4368, -0.28449672
        %v4401 = vadd.f32 %v4369, -0.28449672
        %v4402 = vadd.f32 %v4370, -0.28449672
        %v4403 = vadd.f32 %v4371, -0.28449672
        %v4404 = vadd.f32 %v4372, -0.28449672
        %v4405 = vmul.f32 %v4373, %v4181
        %v4406 = vmul.f32 %v4374, %v4182
        %v4407 = vmul.f32 %v4375, %v4183
        %v4408 = vmul.f32 %v4376, %v4184
        %v4409 = vmul.f32 %v4377, %v4185
        %v4410 = vmul.f32 %v4378, %v4186
        %v4411 = vmul.f32 %v4379, %v4187
        %v4412 = vmul.f32 %v4380, %v4188
        %v4413 = vmul.f32 %v4381, %v4189
        %v4414 = vmul.f32 %v4382, %v4190
        %v4415 = vmul.f32 %v4383, %v4191
        %v4416 = vmul.f32 %v4384, %v4192
        %v4417 = vmul.f32 %v4385, %v4193
        %v4418 = vmul.f32 %v4386, %v4194
        %v4419 = vmul.f32 %v4387, %v4195
        %v4420 = vmul.f32 %v4388, %v4196
        %v4421 = vmul.f32 %v4389, %v4197
        %v4422 = vmul.f32 %v4390, %v4198
        %v4423 = vmul.f32 %v4391, %v4199
        %v4424 = vmul.f32 %v4392, %v4200
        %v4425 = vmul.f32 %v4393, %v4201
        %v4426 = vmul.f32 %v4394, %v4202
        %v4427 = vmul.f32 %v4395, %v4203
        %v4428 = vmul.f32 %v4396, %v4204
        %v4429 = vmul.f32 %v4397, %v4205
        %v4430 = vmul.f32 %v4398, %v4206
        %v4431 = vmul.f32 %v4399, %v4207
        %v4432 = vmul.f32 %v4400, %v4208
        %v4433 = vmul.f32 %v4401, %v4209
        %v4434 = vmul.f32 %v4402, %v4210
        %v4435 = vmul.f32 %v4403, %v4211
        %v4436 = vmul.f32 %v4404, %v4212
        %v4437 = vadd.f32 %v4405, 0.2548296
        %v4438 = vadd.f32 %v4406, 0.2548296
        %v4439 = vadd.f32 %v4407, 0.2548296
        %v4440 = vadd.f32 %v4408, 0.2548296
        %v4441 = vadd.f32 %v4409, 0.2548296
        %v4442 = vadd.f32 %v4410, 0.2548296
        %v4443 = vadd.f32 %v4411, 0.2548296
        %v4444 = vadd.f32 %v4412, 0.2548296
        %v4445 = vadd.f32 %v4413, 0.2548296
        %v4446 = vadd.f32 %v4414, 0.2548296
        %v4447 = vadd.f32 %v4415, 0.2548296
        %v4448 = vadd.f32 %v4416, 0.2548296
        %v4449 = vadd.f32 %v4417, 0.2548296
        %v4450 = vadd.f32 %v4418, 0.2548296
        %v4451 = vadd.f32 %v4419, 0.2548296
        %v4452 = vadd.f32 %v4420, 0.2548296
        %v4453 = vadd.f32 %v4421, 0.2548296
        %v4454 = vadd.f32 %v4422, 0.2548296
        %v4455 = vadd.f32 %v4423, 0.2548296
        %v4456 = vadd.f32 %v4424, 0.2548296
        %v4457 = vadd.f32 %v4425, 0.2548296
        %v4458 = vadd.f32 %v4426, 0.2548296
        %v4459 = vadd.f32 %v4427, 0.2548296
        %v4460 = vadd.f32 %v4428, 0.2548296
        %v4461 = vadd.f32 %v4429, 0.2548296
        %v4462 = vadd.f32 %v4430, 0.2548296
        %v4463 = vadd.f32 %v4431, 0.2548296
        %v4464 = vadd.f32 %v4432, 0.2548296
        %v4465 = vadd.f32 %v4433, 0.2548296
        %v4466 = vadd.f32 %v4434, 0.2548296
        %v4467 = vadd.f32 %v4435, 0.2548296
        %v4468 = vadd.f32 %v4436, 0.2548296
        %v4469 = vmul.f32 %v4437, %v4181
        %v4470 = vmul.f32 %v4438, %v4182
        %v4471 = vmul.f32 %v4439, %v4183
        %v4472 = vmul.f32 %v4440, %v4184
        %v4473 = vmul.f32 %v4441, %v4185
        %v4474 = vmul.f32 %v4442, %v4186
        %v4475 = vmul.f32 %v4443, %v4187
        %v4476 = vmul.f32 %v4444, %v4188
        %v4477 = vmul.f32 %v4445, %v4189
        %v4478 = vmul.f32 %v4446, %v4190
        %v4479 = vmul.f32 %v4447, %v4191
        %v4480 = vmul.f32 %v4448, %v4192
        %v4481 = vmul.f32 %v4449, %v4193
        %v4482 = vmul.f32 %v4450, %v4194
        %v4483 = vmul.f32 %v4451, %v4195
        %v4484 = vmul.f32 %v4452, %v4196
        %v4485 = vmul.f32 %v4453, %v4197
        %v4486 = vmul.f32 %v4454, %v4198
        %v4487 = vmul.f32 %v4455, %v4199
        %v4488 = vmul.f32 %v4456, %v4200
        %v4489 = vmul.f32 %v4457, %v4201
        %v4490 = vmul.f32 %v4458, %v4202
        %v4491 = vmul.f32 %v4459, %v4203
        %v4492 = vmul.f32 %v4460, %v4204
        %v4493 = vmul.f32 %v4461, %v4205
        %v4494 = vmul.f32 %v4462, %v4206
        %v4495 = vmul.f32 %v4463, %v4207
        %v4496 = vmul.f32 %v4464, %v4208
        %v4497 = vmul.f32 %v4465, %v4209
        %v4498 = vmul.f32 %v4466, %v4210
        %v4499 = vmul.f32 %v4467, %v4211
        %v4500 = vmul.f32 %v4468, %v4212
        %v4501 = vsub.f32 0.0, %v4085
        %v4502 = vsub.f32 0.0, %v4086
        %v4503 = vsub.f32 0.0, %v4087
        %v4504 = vsub.f32 0.0, %v4088
        %v4505 = vsub.f32 0.0, %v4089
        %v4506 = vsub.f32 0.0, %v4090
        %v4507 = vsub.f32 0.0, %v4091
        %v4508 = vsub.f32 0.0, %v4092
        %v4509 = vsub.f32 0.0, %v4093
        %v4510 = vsub.f32 0.0, %v4094
        %v4511 = vsub.f32 0.0, %v4095
        %v4512 = vsub.f32 0.0, %v4096
        %v4513 = vsub.f32 0.0, %v4097
        %v4514 = vsub.f32 0.0, %v4098
        %v4515 = vsub.f32 0.0, %v4099
        %v4516 = vsub.f32 0.0, %v4100
        %v4517 = vsub.f32 0.0, %v4101
        %v4518 = vsub.f32 0.0, %v4102
        %v4519 = vsub.f32 0.0, %v4103
        %v4520 = vsub.f32 0.0, %v4104
        %v4521 = vsub.f32 0.0, %v4105
        %v4522 = vsub.f32 0.0, %v4106
        %v4523 = vsub.f32 0.0, %v4107
        %v4524 = vsub.f32 0.0, %v4108
        %v4525 = vsub.f32 0.0, %v4109
        %v4526 = vsub.f32 0.0, %v4110
        %v4527 = vsub.f32 0.0, %v4111
        %v4528 = vsub.f32 0.0, %v4112
        %v4529 = vsub.f32 0.0, %v4113
        %v4530 = vsub.f32 0.0, %v4114
        %v4531 = vsub.f32 0.0, %v4115
        %v4532 = vsub.f32 0.0, %v4116
        %v4533 = vmul.f32 %v4501, %v4085
        %v4534 = vmul.f32 %v4502, %v4086
        %v4535 = vmul.f32 %v4503, %v4087
        %v4536 = vmul.f32 %v4504, %v4088
        %v4537 = vmul.f32 %v4505, %v4089
        %v4538 = vmul.f32 %v4506, %v4090
        %v4539 = vmul.f32 %v4507, %v4091
        %v4540 = vmul.f32 %v4508, %v4092
        %v4541 = vmul.f32 %v4509, %v4093
        %v4542 = vmul.f32 %v4510, %v4094
        %v4543 = vmul.f32 %v4511, %v4095
        %v4544 = vmul.f32 %v4512, %v4096
        %v4545 = vmul.f32 %v4513, %v4097
        %v4546 = vmul.f32 %v4514, %v4098
        %v4547 = vmul.f32 %v4515, %v4099
        %v4548 = vmul.f32 %v4516, %v4100
        %v4549 = vmul.f32 %v4517, %v4101
        %v4550 = vmul.f32 %v4518, %v4102
        %v4551 = vmul.f32 %v4519, %v4103
        %v4552 = vmul.f32 %v4520, %v4104
        %v4553 = vmul.f32 %v4521, %v4105
        %v4554 = vmul.f32 %v4522, %v4106
        %v4555 = vmul.f32 %v4523, %v4107
        %v4556 = vmul.f32 %v4524, %v4108
        %v4557 = vmul.f32 %v4525, %v4109
        %v4558 = vmul.f32 %v4526, %v4110
        %v4559 = vmul.f32 %v4527, %v4111
        %v4560 = vmul.f32 %v4528, %v4112
        %v4561 = vmul.f32 %v4529, %v4113
        %v4562 = vmul.f32 %v4530, %v4114
        %v4563 = vmul.f32 %v4531, %v4115
        %v4564 = vmul.f32 %v4532, %v4116
        %v4565 = vmul.f32 %v4533, 1.442695
        %v4566 = vpow.pop %v4565
        %v4567 = vmul.f32 %v4534, 1.442695
        %v4568 = vpow.pop %v4567
        %v4569 = vmul.f32 %v4535, 1.442695
        %v4570 = vpow.pop %v4569
        %v4571 = vmul.f32 %v4536, 1.442695
        %v4572 = vpow.pop %v4571
        %v4573 = vmul.f32 %v4537, 1.442695
        %v4574 = vpow.pop %v4573
        %v4575 = vmul.f32 %v4538, 1.442695
        %v4576 = vpow.pop %v4575
        %v4577 = vmul.f32 %v4539, 1.442695
        %v4578 = vpow.pop %v4577
        %v4579 = vmul.f32 %v4540, 1.442695
        %v4580 = vpow.pop %v4579
        %v4581 = vmul.f32 %v4541, 1.442695
        %v4582 = vpow.pop %v4581
        %v4583 = vmul.f32 %v4542, 1.442695
        %v4584 = vpow.pop %v4583
        %v4585 = vmul.f32 %v4543, 1.442695
        %v4586 = vpow.pop %v4585
        %v4587 = vmul.f32 %v4544, 1.442695
        %v4588 = vpow.pop %v4587
        %v4589 = vmul.f32 %v4545, 1.442695
        %v4590 = vpow.pop %v4589
        %v4591 = vmul.f32 %v4546, 1.442695
        %v4592 = vpow.pop %v4591
        %v4593 = vmul.f32 %v4547, 1.442695
        %v4594 = vpow.pop %v4593
        %v4595 = vmul.f32 %v4548, 1.442695
        %v4596 = vpow.pop %v4595
        %v4597 = vmul.f32 %v4549, 1.442695
        %v4598 = vpow.pop %v4597
        %v4599 = vmul.f32 %v4550, 1.442695
        %v4600 = vpow.pop %v4599
        %v4601 = vmul.f32 %v4551, 1.442695
        %v4602 = vpow.pop %v4601
        %v4603 = vmul.f32 %v4552, 1.442695
        %v4604 = vpow.pop %v4603
        %v4605 = vmul.f32 %v4553, 1.442695
        %v4606 = vpow.pop %v4605
        %v4607 = vmul.f32 %v4554, 1.442695
        %v4608 = vpow.pop %v4607
        %v4609 = vmul.f32 %v4555, 1.442695
        %v4610 = vpow.pop %v4609
        %v4611 = vmul.f32 %v4556, 1.442695
        %v4612 = vpow.pop %v4611
        %v4613 = vmul.f32 %v4557, 1.442695
        %v4614 = vpow.pop %v4613
        %v4615 = vmul.f32 %v4558, 1.442695
        %v4616 = vpow.pop %v4615
        %v4617 = vmul.f32 %v4559, 1.442695
        %v4618 = vpow.pop %v4617
        %v4619 = vmul.f32 %v4560, 1.442695
        %v4620 = vpow.pop %v4619
        %v4621 = vmul.f32 %v4561, 1.442695
        %v4622 = vpow.pop %v4621
        %v4623 = vmul.f32 %v4562, 1.442695
        %v4624 = vpow.pop %v4623
        %v4625 = vmul.f32 %v4563, 1.442695
        %v4626 = vpow.pop %v4625
        %v4627 = vmul.f32 %v4564, 1.442695
        %v4628 = vpow.pop %v4627
        %v4629 = vmul.f32 %v4469, %v4566
        %v4630 = vmul.f32 %v4470, %v4568
        %v4631 = vmul.f32 %v4471, %v4570
        %v4632 = vmul.f32 %v4472, %v4572
        %v4633 = vmul.f32 %v4473, %v4574
        %v4634 = vmul.f32 %v4474, %v4576
        %v4635 = vmul.f32 %v4475, %v4578
        %v4636 = vmul.f32 %v4476, %v4580
        %v4637 = vmul.f32 %v4477, %v4582
        %v4638 = vmul.f32 %v4478, %v4584
        %v4639 = vmul.f32 %v4479, %v4586
        %v4640 = vmul.f32 %v4480, %v4588
        %v4641 = vmul.f32 %v4481, %v4590
        %v4642 = vmul.f32 %v4482, %v4592
        %v4643 = vmul.f32 %v4483, %v4594
        %v4644 = vmul.f32 %v4484, %v4596
        %v4645 = vmul.f32 %v4485, %v4598
        %v4646 = vmul.f32 %v4486, %v4600
        %v4647 = vmul.f32 %v4487, %v4602
        %v4648 = vmul.f32 %v4488, %v4604
        %v4649 = vmul.f32 %v4489, %v4606
        %v4650 = vmul.f32 %v4490, %v4608
        %v4651 = vmul.f32 %v4491, %v4610
        %v4652 = vmul.f32 %v4492, %v4612
        %v4653 = vmul.f32 %v4493, %v4614
        %v4654 = vmul.f32 %v4494, %v4616
        %v4655 = vmul.f32 %v4495, %v4618
        %v4656 = vmul.f32 %v4496, %v4620
        %v4657 = vmul.f32 %v4497, %v4622
        %v4658 = vmul.f32 %v4498, %v4624
        %v4659 = vmul.f32 %v4499, %v4626
        %v4660 = vmul.f32 %v4500, %v4628
        %v4661 = vsub.f32 1.0, %v4629
        %v4662 = vsub.f32 1.0, %v4630
        %v4663 = vsub.f32 1.0, %v4631
        %v4664 = vsub.f32 1.0, %v4632
        %v4665 = vsub.f32 1.0, %v4633
        %v4666 = vsub.f32 1.0, %v4634
        %v4667 = vsub.f32 1.0, %v4635
        %v4668 = vsub.f32 1.0, %v4636
        %v4669 = vsub.f32 1.0, %v4637
        %v4670 = vsub.f32 1.0, %v4638
        %v4671 = vsub.f32 1.0, %v4639
        %v4672 = vsub.f32 1.0, %v4640
        %v4673 = vsub.f32 1.0, %v4641
        %v4674 = vsub.f32 1.0, %v4642
        %v4675 = vsub.f32 1.0, %v4643
        %v4676 = vsub.f32 1.0, %v4644
        %v4677 = vsub.f32 1.0, %v4645
        %v4678 = vsub.f32 1.0, %v4646
        %v4679 = vsub.f32 1.0, %v4647
        %v4680 = vsub.f32 1.0, %v4648
        %v4681 = vsub.f32 1.0, %v4649
        %v4682 = vsub.f32 1.0, %v4650
        %v4683 = vsub.f32 1.0, %v4651
        %v4684 = vsub.f32 1.0, %v4652
        %v4685 = vsub.f32 1.0, %v4653
        %v4686 = vsub.f32 1.0, %v4654
        %v4687 = vsub.f32 1.0, %v4655
        %v4688 = vsub.f32 1.0, %v4656
        %v4689 = vsub.f32 1.0, %v4657
        %v4690 = vsub.f32 1.0, %v4658
        %v4691 = vsub.f32 1.0, %v4659
        %v4692 = vsub.f32 1.0, %v4660
        %vm4693 = vcmp.ge.f32.partialorder %v4053, 0.0
        %vm4694 = vcmp.ge.f32.partialorder %v4054, 0.0
        %vm4695 = vcmp.ge.f32.partialorder %v4055, 0.0
        %vm4696 = vcmp.ge.f32.partialorder %v4056, 0.0
        %vm4697 = vcmp.ge.f32.partialorder %v4057, 0.0
        %vm4698 = vcmp.ge.f32.partialorder %v4058, 0.0
        %vm4699 = vcmp.ge.f32.partialorder %v4059, 0.0
        %vm4700 = vcmp.ge.f32.partialorder %v4060, 0.0
        %vm4701 = vcmp.ge.f32.partialorder %v4061, 0.0
        %vm4702 = vcmp.ge.f32.partialorder %v4062, 0.0
        %vm4703 = vcmp.ge.f32.partialorder %v4063, 0.0
        %vm4704 = vcmp.ge.f32.partialorder %v4064, 0.0
        %vm4705 = vcmp.ge.f32.partialorder %v4065, 0.0
        %vm4706 = vcmp.ge.f32.partialorder %v4066, 0.0
        %vm4707 = vcmp.ge.f32.partialorder %v4067, 0.0
        %vm4708 = vcmp.ge.f32.partialorder %v4068, 0.0
        %vm4709 = vcmp.ge.f32.partialorder %v4069, 0.0
        %vm4710 = vcmp.ge.f32.partialorder %v4070, 0.0
        %vm4711 = vcmp.ge.f32.partialorder %v4071, 0.0
        %vm4712 = vcmp.ge.f32.partialorder %v4072, 0.0
        %vm4713 = vcmp.ge.f32.partialorder %v4073, 0.0
        %vm4714 = vcmp.ge.f32.partialorder %v4074, 0.0
        %vm4715 = vcmp.ge.f32.partialorder %v4075, 0.0
        %vm4716 = vcmp.ge.f32.partialorder %v4076, 0.0
        %vm4717 = vcmp.ge.f32.partialorder %v4077, 0.0
        %vm4718 = vcmp.ge.f32.partialorder %v4078, 0.0
        %vm4719 = vcmp.ge.f32.partialorder %v4079, 0.0
        %vm4720 = vcmp.ge.f32.partialorder %v4080, 0.0
        %vm4721 = vcmp.ge.f32.partialorder %v4081, 0.0
        %vm4722 = vcmp.ge.f32.partialorder %v4082, 0.0
        %vm4723 = vcmp.ge.f32.partialorder %v4083, 0.0
        %vm4724 = vcmp.ge.f32.partialorder %v4084, 0.0
        %v4725 = vsub.f32 0.0, %v4661
        %v4726 = vsub.f32 0.0, %v4662
        %v4727 = vsub.f32 0.0, %v4663
        %v4728 = vsub.f32 0.0, %v4664
        %v4729 = vsub.f32 0.0, %v4665
        %v4730 = vsub.f32 0.0, %v4666
        %v4731 = vsub.f32 0.0, %v4667
        %v4732 = vsub.f32 0.0, %v4668
        %v4733 = vsub.f32 0.0, %v4669
        %v4734 = vsub.f32 0.0, %v4670
        %v4735 = vsub.f32 0.0, %v4671
        %v4736 = vsub.f32 0.0, %v4672
        %v4737 = vsub.f32 0.0, %v4673
        %v4738 = vsub.f32 0.0, %v4674
        %v4739 = vsub.f32 0.0, %v4675
        %v4740 = vsub.f32 0.0, %v4676
        %v4741 = vsub.f32 0.0, %v4677
        %v4742 = vsub.f32 0.0, %v4678
        %v4743 = vsub.f32 0.0, %v4679
        %v4744 = vsub.f32 0.0, %v4680
        %v4745 = vsub.f32 0.0, %v4681
        %v4746 = vsub.f32 0.0, %v4682
        %v4747 = vsub.f32 0.0, %v4683
        %v4748 = vsub.f32 0.0, %v4684
        %v4749 = vsub.f32 0.0, %v4685
        %v4750 = vsub.f32 0.0, %v4686
        %v4751 = vsub.f32 0.0, %v4687
        %v4752 = vsub.f32 0.0, %v4688
        %v4753 = vsub.f32 0.0, %v4689
        %v4754 = vsub.f32 0.0, %v4690
        %v4755 = vsub.f32 0.0, %v4691
        %v4756 = vsub.f32 0.0, %v4692
        %v4757 = vsel %vm4693, %v4661, %v4725
        %v4758 = vsel %vm4694, %v4662, %v4726
        %v4759 = vsel %vm4695, %v4663, %v4727
        %v4760 = vsel %vm4696, %v4664, %v4728
        %v4761 = vsel %vm4697, %v4665, %v4729
        %v4762 = vsel %vm4698, %v4666, %v4730
        %v4763 = vsel %vm4699, %v4667, %v4731
        %v4764 = vsel %vm4700, %v4668, %v4732
        %v4765 = vsel %vm4701, %v4669, %v4733
        %v4766 = vsel %vm4702, %v4670, %v4734
        %v4767 = vsel %vm4703, %v4671, %v4735
        %v4768 = vsel %vm4704, %v4672, %v4736
        %v4769 = vsel %vm4705, %v4673, %v4737
        %v4770 = vsel %vm4706, %v4674, %v4738
        %v4771 = vsel %vm4707, %v4675, %v4739
        %v4772 = vsel %vm4708, %v4676, %v4740
        %v4773 = vsel %vm4709, %v4677, %v4741
        %v4774 = vsel %vm4710, %v4678, %v4742
        %v4775 = vsel %vm4711, %v4679, %v4743
        %v4776 = vsel %vm4712, %v4680, %v4744
        %v4777 = vsel %vm4713, %v4681, %v4745
        %v4778 = vsel %vm4714, %v4682, %v4746
        %v4779 = vsel %vm4715, %v4683, %v4747
        %v4780 = vsel %vm4716, %v4684, %v4748
        %v4781 = vsel %vm4717, %v4685, %v4749
        %v4782 = vsel %vm4718, %v4686, %v4750
        %v4783 = vsel %vm4719, %v4687, %v4751
        %v4784 = vsel %vm4720, %v4688, %v4752
        %v4785 = vsel %vm4721, %v4689, %v4753
        %v4786 = vsel %vm4722, %v4690, %v4754
        %v4787 = vsel %vm4723, %v4691, %v4755
        %v4788 = vsel %vm4724, %v4692, %v4756
        %v4789 = vadd.f32 %v4757, 1.0
        %v4790 = vadd.f32 %v4758, 1.0
        %v4791 = vadd.f32 %v4759, 1.0
        %v4792 = vadd.f32 %v4760, 1.0
        %v4793 = vadd.f32 %v4761, 1.0
        %v4794 = vadd.f32 %v4762, 1.0
        %v4795 = vadd.f32 %v4763, 1.0
        %v4796 = vadd.f32 %v4764, 1.0
        %v4797 = vadd.f32 %v4765, 1.0
        %v4798 = vadd.f32 %v4766, 1.0
        %v4799 = vadd.f32 %v4767, 1.0
        %v4800 = vadd.f32 %v4768, 1.0
        %v4801 = vadd.f32 %v4769, 1.0
        %v4802 = vadd.f32 %v4770, 1.0
        %v4803 = vadd.f32 %v4771, 1.0
        %v4804 = vadd.f32 %v4772, 1.0
        %v4805 = vadd.f32 %v4773, 1.0
        %v4806 = vadd.f32 %v4774, 1.0
        %v4807 = vadd.f32 %v4775, 1.0
        %v4808 = vadd.f32 %v4776, 1.0
        %v4809 = vadd.f32 %v4777, 1.0
        %v4810 = vadd.f32 %v4778, 1.0
        %v4811 = vadd.f32 %v4779, 1.0
        %v4812 = vadd.f32 %v4780, 1.0
        %v4813 = vadd.f32 %v4781, 1.0
        %v4814 = vadd.f32 %v4782, 1.0
        %v4815 = vadd.f32 %v4783, 1.0
        %v4816 = vadd.f32 %v4784, 1.0
        %v4817 = vadd.f32 %v4785, 1.0
        %v4818 = vadd.f32 %v4786, 1.0
        %v4819 = vadd.f32 %v4787, 1.0
        %v4820 = vadd.f32 %v4788, 1.0
        %v4821 = vmul.f32 %v4021, %v4789
        %v4822 = vmul.f32 %v4022, %v4790
        %v4823 = vmul.f32 %v4023, %v4791
        %v4824 = vmul.f32 %v4024, %v4792
        %v4825 = vmul.f32 %v4025, %v4793
        %v4826 = vmul.f32 %v4026, %v4794
        %v4827 = vmul.f32 %v4027, %v4795
        %v4828 = vmul.f32 %v4028, %v4796
        %v4829 = vmul.f32 %v4029, %v4797
        %v4830 = vmul.f32 %v4030, %v4798
        %v4831 = vmul.f32 %v4031, %v4799
        %v4832 = vmul.f32 %v4032, %v4800
        %v4833 = vmul.f32 %v4033, %v4801
        %v4834 = vmul.f32 %v4034, %v4802
        %v4835 = vmul.f32 %v4035, %v4803
        %v4836 = vmul.f32 %v4036, %v4804
        %v4837 = vmul.f32 %v4037, %v4805
        %v4838 = vmul.f32 %v4038, %v4806
        %v4839 = vmul.f32 %v4039, %v4807
        %v4840 = vmul.f32 %v4040, %v4808
        %v4841 = vmul.f32 %v4041, %v4809
        %v4842 = vmul.f32 %v4042, %v4810
        %v4843 = vmul.f32 %v4043, %v4811
        %v4844 = vmul.f32 %v4044, %v4812
        %v4845 = vmul.f32 %v4045, %v4813
        %v4846 = vmul.f32 %v4046, %v4814
        %v4847 = vmul.f32 %v4047, %v4815
        %v4848 = vmul.f32 %v4048, %v4816
        %v4849 = vmul.f32 %v4049, %v4817
        %v4850 = vmul.f32 %v4050, %v4818
        %v4851 = vmul.f32 %v4051, %v4819
        %v4852 = vmul.f32 %v4052, %v4820
        %v4853 = vld [vmem:[%s3] sm:$0xf]
        %v4854 = vld [vmem:[%s3 + $0x4] sm:$0xf]
        %v4855 = vld [vmem:[%s3 + $0x8] sm:$0xf]
        %v4856 = vld [vmem:[%s3 + $0xc] sm:$0xf]
        %v4857 = vld [vmem:[%s3 + $0x10] sm:$0xf]
        %v4858 = vld [vmem:[%s3 + $0x14] sm:$0xf]
        %v4859 = vld [vmem:[%s3 + $0x18] sm:$0xf]
        %v4860 = vld [vmem:[%s3 + $0x1c] sm:$0xf]
        %v4861 = vpack.c.bf16 %v4825, %v4821
        %v4862 = vpack.c.bf16 %v4826, %v4822
        %v4863 = vpack.c.bf16 %v4827, %v4823
        %v4864 = vpack.c.bf16 %v4828, %v4824
        %v4865 = vpack.c.bf16 %v4833, %v4829
        %v4866 = vpack.c.bf16 %v4834, %v4830
        %v4867 = vpack.c.bf16 %v4835, %v4831
        %v4868 = vpack.c.bf16 %v4836, %v4832
        %v4869 = vpack.c.bf16 %v4841, %v4837
        %v4870 = vpack.c.bf16 %v4842, %v4838
        %v4871 = vpack.c.bf16 %v4843, %v4839
        %v4872 = vpack.c.bf16 %v4844, %v4840
        %v4873 = vpack.c.bf16 %v4849, %v4845
        %v4874 = vpack.c.bf16 %v4850, %v4846
        %v4875 = vpack.c.bf16 %v4851, %v4847
        %v4876 = vpack.c.bf16 %v4852, %v4848
        %4877 = vset.pattern.permute.xlu0 1
        %4878 = vperm.xlu0 %4877, %v3770
        %v4879 = vpop.permute.xlu0 %4878
        %4881 = vset.pattern.permute.xlu0 1
        %4882 = vperm.xlu0 %4881, %v3771
        %v4883 = vpop.permute.xlu0 %4882
        %4885 = vset.pattern.permute.xlu0 1
        %4886 = vperm.xlu0 %4885, %v3772
        %v4887 = vpop.permute.xlu0 %4886
        %4889 = vset.pattern.permute.xlu0 1
        %4890 = vperm.xlu0 %4889, %v3773
        %v4891 = vpop.permute.xlu0 %4890
        %4893 = vset.pattern.permute.xlu0 1
        %4894 = vperm.xlu0 %4893, %v3774
        %v4895 = vpop.permute.xlu0 %4894
        %4897 = vset.pattern.permute.xlu0 1
        %4898 = vperm.xlu0 %4897, %v3775
        %v4899 = vpop.permute.xlu0 %4898
        %4901 = vset.pattern.permute.xlu0 1
        %4902 = vperm.xlu0 %4901, %v3776
        %v4903 = vpop.permute.xlu0 %4902
        %4905 = vset.pattern.permute.xlu0 1
        %4906 = vperm.xlu0 %4905, %v3777
        %v4907 = vpop.permute.xlu0 %4906
        %v4917 = vunpack.c.l.b16 %v4853
        %v4918 = vunpack.c.l.b16 %v4854
        %v4919 = vunpack.c.l.b16 %v4855
        %v4920 = vunpack.c.l.b16 %v4856
        %v4921 = vunpack.c.l.b16 %v4857
        %v4922 = vunpack.c.l.b16 %v4858
        %v4923 = vunpack.c.l.b16 %v4859
        %v4924 = vunpack.c.l.b16 %v4860
        %v4925 = vpack.c.b16 %v4918, %v4917
        %v4926 = vpack.c.b16 %v4920, %v4919
        %v4927 = vpack.c.b16 %v4922, %v4921
        %v4928 = vpack.c.b16 %v4924, %v4923
        %v4930 = vsel %vm3862, %v4925, 0
        %v4933 = vsel %vm3862, %v4926, 0
        %v4936 = vsel %vm3862, %v4927, 0
        %v4939 = vsel %vm3862, %v4928, 0
        %4941 = vmatprep.subr.bf16.mxu0 %v4862
        %4942 = vmatpush1.bf16.msra.mxu0 %v4861
        %4943 = vmatprep.subr.bf16.mxu0 %v4866
        %4944 = vmatpush1.bf16.msra.mxu0 %v4865
        %4945 = vmatprep.subr.bf16.mxu0 %v4870
        %4946 = vmatpush1.bf16.msra.mxu0 %v4869
        %4947 = vmatprep.subr.bf16.mxu0 %v4874
        %4948 = vmatpush1.bf16.msra.mxu0 %v4873
        %4949 = vmatprep.subr.bf16.mxu0 0
        %4950 = vmatpush1.bf16.msra.mxu0 0
        %4951 = vmatprep.subr.bf16.mxu0 0
        %4952 = vmatpush1.bf16.msra.mxu0 0
        %4953 = vmatprep.subr.bf16.mxu0 0
        %4954 = vmatpush1.bf16.msra.mxu0 0
        %4955 = vmatprep.subr.bf16.mxu0 0
        %4956 = vmatpush1.bf16.msra.mxu0 0
        %4957 = vmatprep.subr.bf16.mxu0 0
        %4958 = vmatpush1.bf16.msra.mxu0 0
        %4959 = vmatprep.subr.bf16.mxu0 0
        %4960 = vmatpush1.bf16.msra.mxu0 0
        %4961 = vmatprep.subr.bf16.mxu0 0
        %4962 = vmatpush1.bf16.msra.mxu0 0
        %4963 = vmatprep.subr.bf16.mxu0 0
        %4964 = vmatpush1.bf16.msra.mxu0 0
        %4965 = vmatprep.subr.bf16.mxu0 0
        %4966 = vmatpush1.bf16.msra.mxu0 0
        %4967 = vmatprep.subr.bf16.mxu0 0
        %4968 = vmatpush1.bf16.msra.mxu0 0
        %4969 = vmatprep.subr.bf16.mxu0 0
        %4970 = vmatpush1.bf16.msra.mxu0 0
        %4971 = vmatprep.subr.bf16.mxu0 0
        %4972 = vmatpush1.bf16.msra.mxu0 0
        %4973 = vmatprep.mubr.bf16.mxu0 0
        %4974 = vmatmul.mubr.bf16.gmra.mrb[0].mxu0 %v4930
        %v4975 = vpop.f32.mrb[0].mxu0
        %v4976 = vadd.f32 %v4879, %v4975
        %v4977 = vpop.f32.mrb[0].mxu0
        %v4978 = vadd.f32 %v4879, %v4977
        %v4979 = vpop.f32.mrb[0].mxu0
        %v4980 = vadd.f32 %v4883, %v4979
        %v4981 = vpop.f32.mrb[0].mxu0
        %v4982 = vadd.f32 %v4883, %v4981
        %4983 = vmatprep.mubr.bf16.mxu0 0
        %4984 = vmatmul.mubr.bf16.gmra.mrb[0].mxu0 %v4933
        %v4985 = vpop.f32.mrb[0].mxu0
        %v4986 = vadd.f32 %v4887, %v4985
        %v4987 = vpop.f32.mrb[0].mxu0
        %v4988 = vadd.f32 %v4887, %v4987
        %v4989 = vpop.f32.mrb[0].mxu0
        %v4990 = vadd.f32 %v4891, %v4989
        %v4991 = vpop.f32.mrb[0].mxu0
        %v4992 = vadd.f32 %v4891, %v4991
        %4993 = vmatprep.mubr.bf16.mxu0 0
        %4994 = vmatmul.mubr.bf16.gmra.mrb[0].mxu0 %v4936
        %v4995 = vpop.f32.mrb[0].mxu0
        %v4996 = vadd.f32 %v4895, %v4995
        %v4997 = vpop.f32.mrb[0].mxu0
        %v4998 = vadd.f32 %v4895, %v4997
        %v4999 = vpop.f32.mrb[0].mxu0
        %v5000 = vadd.f32 %v4899, %v4999
        %v5001 = vpop.f32.mrb[0].mxu0
        %v5002 = vadd.f32 %v4899, %v5001
        %5003 = vmatprep.mubr.bf16.mxu0 0
        %5004 = vmatmul.mubr.bf16.gmra.mrb[0].mxu0 %v4939
        %v5005 = vpop.f32.mrb[0].mxu0
        %v5006 = vadd.f32 %v4903, %v5005
        %v5007 = vpop.f32.mrb[0].mxu0
        %v5008 = vadd.f32 %v4903, %v5007
        %v5009 = vpop.f32.mrb[0].mxu0
        %v5010 = vadd.f32 %v4907, %v5009
        %v5011 = vpop.f32.mrb[0].mxu0
        %v5012 = vadd.f32 %v4907, %v5011
        %5013 = vdwg.mxu0
        %5014 = vmatprep.subr.bf16.mxu0 %v4864
        %5015 = vmatpush1.bf16.msra.mxu0 %v4863
        %5016 = vmatprep.subr.bf16.mxu0 %v4868
        %5017 = vmatpush1.bf16.msra.mxu0 %v4867
        %5018 = vmatprep.subr.bf16.mxu0 %v4872
        %5019 = vmatpush1.bf16.msra.mxu0 %v4871
        %5020 = vmatprep.subr.bf16.mxu0 %v4876
        %5021 = vmatpush1.bf16.msra.mxu0 %v4875
        %5022 = vmatprep.subr.bf16.mxu0 0
        %5023 = vmatpush1.bf16.msra.mxu0 0
        %5024 = vmatprep.subr.bf16.mxu0 0
        %5025 = vmatpush1.bf16.msra.mxu0 0
        %5026 = vmatprep.subr.bf16.mxu0 0
        %5027 = vmatpush1.bf16.msra.mxu0 0
        %5028 = vmatprep.subr.bf16.mxu0 0
        %5029 = vmatpush1.bf16.msra.mxu0 0
        %5030 = vmatprep.subr.bf16.mxu0 0
        %5031 = vmatpush1.bf16.msra.mxu0 0
        %5032 = vmatprep.subr.bf16.mxu0 0
        %5033 = vmatpush1.bf16.msra.mxu0 0
        %5034 = vmatprep.subr.bf16.mxu0 0
        %5035 = vmatpush1.bf16.msra.mxu0 0
        %5036 = vmatprep.subr.bf16.mxu0 0
        %5037 = vmatpush1.bf16.msra.mxu0 0
        %5038 = vmatprep.subr.bf16.mxu0 0
        %5039 = vmatpush1.bf16.msra.mxu0 0
        %5040 = vmatprep.subr.bf16.mxu0 0
        %5041 = vmatpush1.bf16.msra.mxu0 0
        %5042 = vmatprep.subr.bf16.mxu0 0
        %5043 = vmatpush1.bf16.msra.mxu0 0
        %5044 = vmatprep.subr.bf16.mxu0 0
        %5045 = vmatpush1.bf16.msra.mxu0 0
        %5046 = vmatprep.mubr.bf16.mxu0 0
        %5047 = vmatmul.mubr.bf16.gmra.mrb[0].mxu0 %v4930
        %v5048 = vpop.f32.mrb[0].mxu0
        %v5049 = vadd.f32 %v4879, %v5048
        %v5050 = vpop.f32.mrb[0].mxu0
        %v5051 = vadd.f32 %v4879, %v5050
        %v5052 = vpop.f32.mrb[0].mxu0
        %v5053 = vadd.f32 %v4883, %v5052
        %v5054 = vpop.f32.mrb[0].mxu0
        %v5055 = vadd.f32 %v4883, %v5054
        %5056 = vmatprep.mubr.bf16.mxu0 0
        %5057 = vmatmul.mubr.bf16.gmra.mrb[0].mxu0 %v4933
        %v5058 = vpop.f32.mrb[0].mxu0
        %v5059 = vadd.f32 %v4887, %v5058
        %v5060 = vpop.f32.mrb[0].mxu0
        %v5061 = vadd.f32 %v4887, %v5060
        %v5062 = vpop.f32.mrb[0].mxu0
        %v5063 = vadd.f32 %v4891, %v5062
        %v5064 = vpop.f32.mrb[0].mxu0
        %v5065 = vadd.f32 %v4891, %v5064
        %5066 = vmatprep.mubr.bf16.mxu0 0
        %5067 = vmatmul.mubr.bf16.gmra.mrb[0].mxu0 %v4936
        %v5068 = vpop.f32.mrb[0].mxu0
        %v5069 = vadd.f32 %v4895, %v5068
        %v5070 = vpop.f32.mrb[0].mxu0
        %v5071 = vadd.f32 %v4895, %v5070
        %v5072 = vpop.f32.mrb[0].mxu0
        %v5073 = vadd.f32 %v4899, %v5072
        %v5074 = vpop.f32.mrb[0].mxu0
        %v5075 = vadd.f32 %v4899, %v5074
        %5076 = vmatprep.mubr.bf16.mxu0 0
        %5077 = vmatmul.mubr.bf16.gmra.mrb[0].mxu0 %v4939
        %v5078 = vpop.f32.mrb[0].mxu0
        %v5079 = vadd.f32 %v4903, %v5078
        %v5080 = vpop.f32.mrb[0].mxu0
        %v5081 = vadd.f32 %v4903, %v5080
        %v5082 = vpop.f32.mrb[0].mxu0
        %v5083 = vadd.f32 %v4907, %v5082
        %v5084 = vpop.f32.mrb[0].mxu0
        %v5085 = vadd.f32 %v4907, %v5084
        %5086 = vdwg.mxu0
        %v5087 = vmul.f32 %v4976, 0.5
        %v5088 = vmul.f32 %v4978, 0.5
        %v5089 = vmul.f32 %v5049, 0.5
        %v5090 = vmul.f32 %v5051, 0.5
        %v5091 = vmul.f32 %v4980, 0.5
        %v5092 = vmul.f32 %v4982, 0.5
        %v5093 = vmul.f32 %v5053, 0.5
        %v5094 = vmul.f32 %v5055, 0.5
        %v5095 = vmul.f32 %v4986, 0.5
        %v5096 = vmul.f32 %v4988, 0.5
        %v5097 = vmul.f32 %v5059, 0.5
        %v5098 = vmul.f32 %v5061, 0.5
        %v5099 = vmul.f32 %v4990, 0.5
        %v5100 = vmul.f32 %v4992, 0.5
        %v5101 = vmul.f32 %v5063, 0.5
        %v5102 = vmul.f32 %v5065, 0.5
        %v5103 = vmul.f32 %v4996, 0.5
        %v5104 = vmul.f32 %v4998, 0.5
        %v5105 = vmul.f32 %v5069, 0.5
        %v5106 = vmul.f32 %v5071, 0.5
        %v5107 = vmul.f32 %v5000, 0.5
        %v5108 = vmul.f32 %v5002, 0.5
        %v5109 = vmul.f32 %v5073, 0.5
        %v5110 = vmul.f32 %v5075, 0.5
        %v5111 = vmul.f32 %v5006, 0.5
        %v5112 = vmul.f32 %v5008, 0.5
        %v5113 = vmul.f32 %v5079, 0.5
        %v5114 = vmul.f32 %v5081, 0.5
        %v5115 = vmul.f32 %v5010, 0.5
        %v5116 = vmul.f32 %v5012, 0.5
        %v5117 = vmul.f32 %v5083, 0.5
        %v5118 = vmul.f32 %v5085, 0.5
        %v5119 = vmul.f32 %v4976, 0.70710677
        %v5120 = vmul.f32 %v4978, 0.70710677
        %v5121 = vmul.f32 %v5049, 0.70710677
        %v5122 = vmul.f32 %v5051, 0.70710677
        %v5123 = vmul.f32 %v4980, 0.70710677
        %v5124 = vmul.f32 %v4982, 0.70710677
        %v5125 = vmul.f32 %v5053, 0.70710677
        %v5126 = vmul.f32 %v5055, 0.70710677
        %v5127 = vmul.f32 %v4986, 0.70710677
        %v5128 = vmul.f32 %v4988, 0.70710677
        %v5129 = vmul.f32 %v5059, 0.70710677
        %v5130 = vmul.f32 %v5061, 0.70710677
        %v5131 = vmul.f32 %v4990, 0.70710677
        %v5132 = vmul.f32 %v4992, 0.70710677
        %v5133 = vmul.f32 %v5063, 0.70710677
        %v5134 = vmul.f32 %v5065, 0.70710677
        %v5135 = vmul.f32 %v4996, 0.70710677
        %v5136 = vmul.f32 %v4998, 0.70710677
        %v5137 = vmul.f32 %v5069, 0.70710677
        %v5138 = vmul.f32 %v5071, 0.70710677
        %v5139 = vmul.f32 %v5000, 0.70710677
        %v5140 = vmul.f32 %v5002, 0.70710677
        %v5141 = vmul.f32 %v5073, 0.70710677
        %v5142 = vmul.f32 %v5075, 0.70710677
        %v5143 = vmul.f32 %v5006, 0.70710677
        %v5144 = vmul.f32 %v5008, 0.70710677
        %v5145 = vmul.f32 %v5079, 0.70710677
        %v5146 = vmul.f32 %v5081, 0.70710677
        %v5147 = vmul.f32 %v5010, 0.70710677
        %v5148 = vmul.f32 %v5012, 0.70710677
        %v5149 = vmul.f32 %v5083, 0.70710677
        %v5150 = vmul.f32 %v5085, 0.70710677
        %v5151 = vand.u32 2147483647, %v5119
        %v5152 = vand.u32 2147483647, %v5120
        %v5153 = vand.u32 2147483647, %v5121
        %v5154 = vand.u32 2147483647, %v5122
        %v5155 = vand.u32 2147483647, %v5123
        %v5156 = vand.u32 2147483647, %v5124
        %v5157 = vand.u32 2147483647, %v5125
        %v5158 = vand.u32 2147483647, %v5126
        %v5159 = vand.u32 2147483647, %v5127
        %v5160 = vand.u32 2147483647, %v5128
        %v5161 = vand.u32 2147483647, %v5129
        %v5162 = vand.u32 2147483647, %v5130
        %v5163 = vand.u32 2147483647, %v5131
        %v5164 = vand.u32 2147483647, %v5132
        %v5165 = vand.u32 2147483647, %v5133
        %v5166 = vand.u32 2147483647, %v5134
        %v5167 = vand.u32 2147483647, %v5135
        %v5168 = vand.u32 2147483647, %v5136
        %v5169 = vand.u32 2147483647, %v5137
        %v5170 = vand.u32 2147483647, %v5138
        %v5171 = vand.u32 2147483647, %v5139
        %v5172 = vand.u32 2147483647, %v5140
        %v5173 = vand.u32 2147483647, %v5141
        %v5174 = vand.u32 2147483647, %v5142
        %v5175 = vand.u32 2147483647, %v5143
        %v5176 = vand.u32 2147483647, %v5144
        %v5177 = vand.u32 2147483647, %v5145
        %v5178 = vand.u32 2147483647, %v5146
        %v5179 = vand.u32 2147483647, %v5147
        %v5180 = vand.u32 2147483647, %v5148
        %v5181 = vand.u32 2147483647, %v5149
        %v5182 = vand.u32 2147483647, %v5150
        %v5183 = vmul.f32 %v5151, 0.3275911
        %v5184 = vmul.f32 %v5152, 0.3275911
        %v5185 = vmul.f32 %v5153, 0.3275911
        %v5186 = vmul.f32 %v5154, 0.3275911
        %v5187 = vmul.f32 %v5155, 0.3275911
        %v5188 = vmul.f32 %v5156, 0.3275911
        %v5189 = vmul.f32 %v5157, 0.3275911
        %v5190 = vmul.f32 %v5158, 0.3275911
        %v5191 = vmul.f32 %v5159, 0.3275911
        %v5192 = vmul.f32 %v5160, 0.3275911
        %v5193 = vmul.f32 %v5161, 0.3275911
        %v5194 = vmul.f32 %v5162, 0.3275911
        %v5195 = vmul.f32 %v5163, 0.3275911
        %v5196 = vmul.f32 %v5164, 0.3275911
        %v5197 = vmul.f32 %v5165, 0.3275911
        %v5198 = vmul.f32 %v5166, 0.3275911
        %v5199 = vmul.f32 %v5167, 0.3275911
        %v5200 = vmul.f32 %v5168, 0.3275911
        %v5201 = vmul.f32 %v5169, 0.3275911
        %v5202 = vmul.f32 %v5170, 0.3275911
        %v5203 = vmul.f32 %v5171, 0.3275911
        %v5204 = vmul.f32 %v5172, 0.3275911
        %v5205 = vmul.f32 %v5173, 0.3275911
        %v5206 = vmul.f32 %v5174, 0.3275911
        %v5207 = vmul.f32 %v5175, 0.3275911
        %v5208 = vmul.f32 %v5176, 0.3275911
        %v5209 = vmul.f32 %v5177, 0.3275911
        %v5210 = vmul.f32 %v5178, 0.3275911
        %v5211 = vmul.f32 %v5179, 0.3275911
        %v5212 = vmul.f32 %v5180, 0.3275911
        %v5213 = vmul.f32 %v5181, 0.3275911
        %v5214 = vmul.f32 %v5182, 0.3275911
        %v5215 = vadd.f32 %v5183, 1.0
        %v5216 = vadd.f32 %v5184, 1.0
        %v5217 = vadd.f32 %v5185, 1.0
        %v5218 = vadd.f32 %v5186, 1.0
        %v5219 = vadd.f32 %v5187, 1.0
        %v5220 = vadd.f32 %v5188, 1.0
        %v5221 = vadd.f32 %v5189, 1.0
        %v5222 = vadd.f32 %v5190, 1.0
        %v5223 = vadd.f32 %v5191, 1.0
        %v5224 = vadd.f32 %v5192, 1.0
        %v5225 = vadd.f32 %v5193, 1.0
        %v5226 = vadd.f32 %v5194, 1.0
        %v5227 = vadd.f32 %v5195, 1.0
        %v5228 = vadd.f32 %v5196, 1.0
        %v5229 = vadd.f32 %v5197, 1.0
        %v5230 = vadd.f32 %v5198, 1.0
        %v5231 = vadd.f32 %v5199, 1.0
        %v5232 = vadd.f32 %v5200, 1.0
        %v5233 = vadd.f32 %v5201, 1.0
        %v5234 = vadd.f32 %v5202, 1.0
        %v5235 = vadd.f32 %v5203, 1.0
        %v5236 = vadd.f32 %v5204, 1.0
        %v5237 = vadd.f32 %v5205, 1.0
        %v5238 = vadd.f32 %v5206, 1.0
        %v5239 = vadd.f32 %v5207, 1.0
        %v5240 = vadd.f32 %v5208, 1.0
        %v5241 = vadd.f32 %v5209, 1.0
        %v5242 = vadd.f32 %v5210, 1.0
        %v5243 = vadd.f32 %v5211, 1.0
        %v5244 = vadd.f32 %v5212, 1.0
        %v5245 = vadd.f32 %v5213, 1.0
        %v5246 = vadd.f32 %v5214, 1.0
        %v5247 = vrcp.pop %v5215
        %v5248 = vrcp.pop %v5216
        %v5249 = vrcp.pop %v5217
        %v5250 = vrcp.pop %v5218
        %v5251 = vrcp.pop %v5219
        %v5252 = vrcp.pop %v5220
        %v5253 = vrcp.pop %v5221
        %v5254 = vrcp.pop %v5222
        %v5255 = vrcp.pop %v5223
        %v5256 = vrcp.pop %v5224
        %v5257 = vrcp.pop %v5225
        %v5258 = vrcp.pop %v5226
        %v5259 = vrcp.pop %v5227
        %v5260 = vrcp.pop %v5228
        %v5261 = vrcp.pop %v5229
        %v5262 = vrcp.pop %v5230
        %v5263 = vrcp.pop %v5231
        %v5264 = vrcp.pop %v5232
        %v5265 = vrcp.pop %v5233
        %v5266 = vrcp.pop %v5234
        %v5267 = vrcp.pop %v5235
        %v5268 = vrcp.pop %v5236
        %v5269 = vrcp.pop %v5237
        %v5270 = vrcp.pop %v5238
        %v5271 = vrcp.pop %v5239
        %v5272 = vrcp.pop %v5240
        %v5273 = vrcp.pop %v5241
        %v5274 = vrcp.pop %v5242
        %v5275 = vrcp.pop %v5243
        %v5276 = vrcp.pop %v5244
        %v5277 = vrcp.pop %v5245
        %v5278 = vrcp.pop %v5246
        %v5279 = vmul.f32 %v5247, 1.0614054
        %v5280 = vmul.f32 %v5248, 1.0614054
        %v5281 = vmul.f32 %v5249, 1.0614054
        %v5282 = vmul.f32 %v5250, 1.0614054
        %v5283 = vmul.f32 %v5251, 1.0614054
        %v5284 = vmul.f32 %v5252, 1.0614054
        %v5285 = vmul.f32 %v5253, 1.0614054
        %v5286 = vmul.f32 %v5254, 1.0614054
        %v5287 = vmul.f32 %v5255, 1.0614054
        %v5288 = vmul.f32 %v5256, 1.0614054
        %v5289 = vmul.f32 %v5257, 1.0614054
        %v5290 = vmul.f32 %v5258, 1.0614054
        %v5291 = vmul.f32 %v5259, 1.0614054
        %v5292 = vmul.f32 %v5260, 1.0614054
        %v5293 = vmul.f32 %v5261, 1.0614054
        %v5294 = vmul.f32 %v5262, 1.0614054
        %v5295 = vmul.f32 %v5263, 1.0614054
        %v5296 = vmul.f32 %v5264, 1.0614054
        %v5297 = vmul.f32 %v5265, 1.0614054
        %v5298 = vmul.f32 %v5266, 1.0614054
        %v5299 = vmul.f32 %v5267, 1.0614054
        %v5300 = vmul.f32 %v5268, 1.0614054
        %v5301 = vmul.f32 %v5269, 1.0614054
        %v5302 = vmul.f32 %v5270, 1.0614054
        %v5303 = vmul.f32 %v5271, 1.0614054
        %v5304 = vmul.f32 %v5272, 1.0614054
        %v5305 = vmul.f32 %v5273, 1.0614054
        %v5306 = vmul.f32 %v5274, 1.0614054
        %v5307 = vmul.f32 %v5275, 1.0614054
        %v5308 = vmul.f32 %v5276, 1.0614054
        %v5309 = vmul.f32 %v5277, 1.0614054
        %v5310 = vmul.f32 %v5278, 1.0614054
        %v5311 = vadd.f32 %v5279, -1.4531521
        %v5312 = vadd.f32 %v5280, -1.4531521
        %v5313 = vadd.f32 %v5281, -1.4531521
        %v5314 = vadd.f32 %v5282, -1.4531521
        %v5315 = vadd.f32 %v5283, -1.4531521
        %v5316 = vadd.f32 %v5284, -1.4531521
        %v5317 = vadd.f32 %v5285, -1.4531521
        %v5318 = vadd.f32 %v5286, -1.4531521
        %v5319 = vadd.f32 %v5287, -1.4531521
        %v5320 = vadd.f32 %v5288, -1.4531521
        %v5321 = vadd.f32 %v5289, -1.4531521
        %v5322 = vadd.f32 %v5290, -1.4531521
        %v5323 = vadd.f32 %v5291, -1.4531521
        %v5324 = vadd.f32 %v5292, -1.4531521
        %v5325 = vadd.f32 %v5293, -1.4531521
        %v5326 = vadd.f32 %v5294, -1.4531521
        %v5327 = vadd.f32 %v5295, -1.4531521
        %v5328 = vadd.f32 %v5296, -1.4531521
        %v5329 = vadd.f32 %v5297, -1.4531521
        %v5330 = vadd.f32 %v5298, -1.4531521
        %v5331 = vadd.f32 %v5299, -1.4531521
        %v5332 = vadd.f32 %v5300, -1.4531521
        %v5333 = vadd.f32 %v5301, -1.4531521
        %v5334 = vadd.f32 %v5302, -1.4531521
        %v5335 = vadd.f32 %v5303, -1.4531521
        %v5336 = vadd.f32 %v5304, -1.4531521
        %v5337 = vadd.f32 %v5305, -1.4531521
        %v5338 = vadd.f32 %v5306, -1.4531521
        %v5339 = vadd.f32 %v5307, -1.4531521
        %v5340 = vadd.f32 %v5308, -1.4531521
        %v5341 = vadd.f32 %v5309, -1.4531521
        %v5342 = vadd.f32 %v5310, -1.4531521
        %v5343 = vmul.f32 %v5311, %v5247
        %v5344 = vmul.f32 %v5312, %v5248
        %v5345 = vmul.f32 %v5313, %v5249
        %v5346 = vmul.f32 %v5314, %v5250
        %v5347 = vmul.f32 %v5315, %v5251
        %v5348 = vmul.f32 %v5316, %v5252
        %v5349 = vmul.f32 %v5317, %v5253
        %v5350 = vmul.f32 %v5318, %v5254
        %v5351 = vmul.f32 %v5319, %v5255
        %v5352 = vmul.f32 %v5320, %v5256
        %v5353 = vmul.f32 %v5321, %v5257
        %v5354 = vmul.f32 %v5322, %v5258
        %v5355 = vmul.f32 %v5323, %v5259
        %v5356 = vmul.f32 %v5324, %v5260
        %v5357 = vmul.f32 %v5325, %v5261
        %v5358 = vmul.f32 %v5326, %v5262
        %v5359 = vmul.f32 %v5327, %v5263
        %v5360 = vmul.f32 %v5328, %v5264
        %v5361 = vmul.f32 %v5329, %v5265
        %v5362 = vmul.f32 %v5330, %v5266
        %v5363 = vmul.f32 %v5331, %v5267
        %v5364 = vmul.f32 %v5332, %v5268
        %v5365 = vmul.f32 %v5333, %v5269
        %v5366 = vmul.f32 %v5334, %v5270
        %v5367 = vmul.f32 %v5335, %v5271
        %v5368 = vmul.f32 %v5336, %v5272
        %v5369 = vmul.f32 %v5337, %v5273
        %v5370 = vmul.f32 %v5338, %v5274
        %v5371 = vmul.f32 %v5339, %v5275
        %v5372 = vmul.f32 %v5340, %v5276
        %v5373 = vmul.f32 %v5341, %v5277
        %v5374 = vmul.f32 %v5342, %v5278
        %v5375 = vadd.f32 %v5343, 1.4214138
        %v5376 = vadd.f32 %v5344, 1.4214138
        %v5377 = vadd.f32 %v5345, 1.4214138
        %v5378 = vadd.f32 %v5346, 1.4214138
        %v5379 = vadd.f32 %v5347, 1.4214138
        %v5380 = vadd.f32 %v5348, 1.4214138
        %v5381 = vadd.f32 %v5349, 1.4214138
        %v5382 = vadd.f32 %v5350, 1.4214138
        %v5383 = vadd.f32 %v5351, 1.4214138
        %v5384 = vadd.f32 %v5352, 1.4214138
        %v5385 = vadd.f32 %v5353, 1.4214138
        %v5386 = vadd.f32 %v5354, 1.4214138
        %v5387 = vadd.f32 %v5355, 1.4214138
        %v5388 = vadd.f32 %v5356, 1.4214138
        %v5389 = vadd.f32 %v5357, 1.4214138
        %v5390 = vadd.f32 %v5358, 1.4214138
        %v5391 = vadd.f32 %v5359, 1.4214138
        %v5392 = vadd.f32 %v5360, 1.4214138
        %v5393 = vadd.f32 %v5361, 1.4214138
        %v5394 = vadd.f32 %v5362, 1.4214138
        %v5395 = vadd.f32 %v5363, 1.4214138
        %v5396 = vadd.f32 %v5364, 1.4214138
        %v5397 = vadd.f32 %v5365, 1.4214138
        %v5398 = vadd.f32 %v5366, 1.4214138
        %v5399 = vadd.f32 %v5367, 1.4214138
        %v5400 = vadd.f32 %v5368, 1.4214138
        %v5401 = vadd.f32 %v5369, 1.4214138
        %v5402 = vadd.f32 %v5370, 1.4214138
        %v5403 = vadd.f32 %v5371, 1.4214138
        %v5404 = vadd.f32 %v5372, 1.4214138
        %v5405 = vadd.f32 %v5373, 1.4214138
        %v5406 = vadd.f32 %v5374, 1.4214138
        %v5407 = vmul.f32 %v5375, %v5247
        %v5408 = vmul.f32 %v5376, %v5248
        %v5409 = vmul.f32 %v5377, %v5249
        %v5410 = vmul.f32 %v5378, %v5250
        %v5411 = vmul.f32 %v5379, %v5251
        %v5412 = vmul.f32 %v5380, %v5252
        %v5413 = vmul.f32 %v5381, %v5253
        %v5414 = vmul.f32 %v5382, %v5254
        %v5415 = vmul.f32 %v5383, %v5255
        %v5416 = vmul.f32 %v5384, %v5256
        %v5417 = vmul.f32 %v5385, %v5257
        %v5418 = vmul.f32 %v5386, %v5258
        %v5419 = vmul.f32 %v5387, %v5259
        %v5420 = vmul.f32 %v5388, %v5260
        %v5421 = vmul.f32 %v5389, %v5261
        %v5422 = vmul.f32 %v5390, %v5262
        %v5423 = vmul.f32 %v5391, %v5263
        %v5424 = vmul.f32 %v5392, %v5264
        %v5425 = vmul.f32 %v5393, %v5265
        %v5426 = vmul.f32 %v5394, %v5266
        %v5427 = vmul.f32 %v5395, %v5267
        %v5428 = vmul.f32 %v5396, %v5268
        %v5429 = vmul.f32 %v5397, %v5269
        %v5430 = vmul.f32 %v5398, %v5270
        %v5431 = vmul.f32 %v5399, %v5271
        %v5432 = vmul.f32 %v5400, %v5272
        %v5433 = vmul.f32 %v5401, %v5273
        %v5434 = vmul.f32 %v5402, %v5274
        %v5435 = vmul.f32 %v5403, %v5275
        %v5436 = vmul.f32 %v5404, %v5276
        %v5437 = vmul.f32 %v5405, %v5277
        %v5438 = vmul.f32 %v5406, %v5278
        %v5439 = vadd.f32 %v5407, -0.28449672
        %v5440 = vadd.f32 %v5408, -0.28449672
        %v5441 = vadd.f32 %v5409, -0.28449672
        %v5442 = vadd.f32 %v5410, -0.28449672
        %v5443 = vadd.f32 %v5411, -0.28449672
        %v5444 = vadd.f32 %v5412, -0.28449672
        %v5445 = vadd.f32 %v5413, -0.28449672
        %v5446 = vadd.f32 %v5414, -0.28449672
        %v5447 = vadd.f32 %v5415, -0.28449672
        %v5448 = vadd.f32 %v5416, -0.28449672
        %v5449 = vadd.f32 %v5417, -0.28449672
        %v5450 = vadd.f32 %v5418, -0.28449672
        %v5451 = vadd.f32 %v5419, -0.28449672
        %v5452 = vadd.f32 %v5420, -0.28449672
        %v5453 = vadd.f32 %v5421, -0.28449672
        %v5454 = vadd.f32 %v5422, -0.28449672
        %v5455 = vadd.f32 %v5423, -0.28449672
        %v5456 = vadd.f32 %v5424, -0.28449672
        %v5457 = vadd.f32 %v5425, -0.28449672
        %v5458 = vadd.f32 %v5426, -0.28449672
        %v5459 = vadd.f32 %v5427, -0.28449672
        %v5460 = vadd.f32 %v5428, -0.28449672
        %v5461 = vadd.f32 %v5429, -0.28449672
        %v5462 = vadd.f32 %v5430, -0.28449672
        %v5463 = vadd.f32 %v5431, -0.28449672
        %v5464 = vadd.f32 %v5432, -0.28449672
        %v5465 = vadd.f32 %v5433, -0.28449672
        %v5466 = vadd.f32 %v5434, -0.28449672
        %v5467 = vadd.f32 %v5435, -0.28449672
        %v5468 = vadd.f32 %v5436, -0.28449672
        %v5469 = vadd.f32 %v5437, -0.28449672
        %v5470 = vadd.f32 %v5438, -0.28449672
        %v5471 = vmul.f32 %v5439, %v5247
        %v5472 = vmul.f32 %v5440, %v5248
        %v5473 = vmul.f32 %v5441, %v5249
        %v5474 = vmul.f32 %v5442, %v5250
        %v5475 = vmul.f32 %v5443, %v5251
        %v5476 = vmul.f32 %v5444, %v5252
        %v5477 = vmul.f32 %v5445, %v5253
        %v5478 = vmul.f32 %v5446, %v5254
        %v5479 = vmul.f32 %v5447, %v5255
        %v5480 = vmul.f32 %v5448, %v5256
        %v5481 = vmul.f32 %v5449, %v5257
        %v5482 = vmul.f32 %v5450, %v5258
        %v5483 = vmul.f32 %v5451, %v5259
        %v5484 = vmul.f32 %v5452, %v5260
        %v5485 = vmul.f32 %v5453, %v5261
        %v5486 = vmul.f32 %v5454, %v5262
        %v5487 = vmul.f32 %v5455, %v5263
        %v5488 = vmul.f32 %v5456, %v5264
        %v5489 = vmul.f32 %v5457, %v5265
        %v5490 = vmul.f32 %v5458, %v5266
        %v5491 = vmul.f32 %v5459, %v5267
        %v5492 = vmul.f32 %v5460, %v5268
        %v5493 = vmul.f32 %v5461, %v5269
        %v5494 = vmul.f32 %v5462, %v5270
        %v5495 = vmul.f32 %v5463, %v5271
        %v5496 = vmul.f32 %v5464, %v5272
        %v5497 = vmul.f32 %v5465, %v5273
        %v5498 = vmul.f32 %v5466, %v5274
        %v5499 = vmul.f32 %v5467, %v5275
        %v5500 = vmul.f32 %v5468, %v5276
        %v5501 = vmul.f32 %v5469, %v5277
        %v5502 = vmul.f32 %v5470, %v5278
        %v5503 = vadd.f32 %v5471, 0.2548296
        %v5504 = vadd.f32 %v5472, 0.2548296
        %v5505 = vadd.f32 %v5473, 0.2548296
        %v5506 = vadd.f32 %v5474, 0.2548296
        %v5507 = vadd.f32 %v5475, 0.2548296
        %v5508 = vadd.f32 %v5476, 0.2548296
        %v5509 = vadd.f32 %v5477, 0.2548296
        %v5510 = vadd.f32 %v5478, 0.2548296
        %v5511 = vadd.f32 %v5479, 0.2548296
        %v5512 = vadd.f32 %v5480, 0.2548296
        %v5513 = vadd.f32 %v5481, 0.2548296
        %v5514 = vadd.f32 %v5482, 0.2548296
        %v5515 = vadd.f32 %v5483, 0.2548296
        %v5516 = vadd.f32 %v5484, 0.2548296
        %v5517 = vadd.f32 %v5485, 0.2548296
        %v5518 = vadd.f32 %v5486, 0.2548296
        %v5519 = vadd.f32 %v5487, 0.2548296
        %v5520 = vadd.f32 %v5488, 0.2548296
        %v5521 = vadd.f32 %v5489, 0.2548296
        %v5522 = vadd.f32 %v5490, 0.2548296
        %v5523 = vadd.f32 %v5491, 0.2548296
        %v5524 = vadd.f32 %v5492, 0.2548296
        %v5525 = vadd.f32 %v5493, 0.2548296
        %v5526 = vadd.f32 %v5494, 0.2548296
        %v5527 = vadd.f32 %v5495, 0.2548296
        %v5528 = vadd.f32 %v5496, 0.2548296
        %v5529 = vadd.f32 %v5497, 0.2548296
        %v5530 = vadd.f32 %v5498, 0.2548296
        %v5531 = vadd.f32 %v5499, 0.2548296
        %v5532 = vadd.f32 %v5500, 0.2548296
        %v5533 = vadd.f32 %v5501, 0.2548296
        %v5534 = vadd.f32 %v5502, 0.2548296
        %v5535 = vmul.f32 %v5503, %v5247
        %v5536 = vmul.f32 %v5504, %v5248
        %v5537 = vmul.f32 %v5505, %v5249
        %v5538 = vmul.f32 %v5506, %v5250
        %v5539 = vmul.f32 %v5507, %v5251
        %v5540 = vmul.f32 %v5508, %v5252
        %v5541 = vmul.f32 %v5509, %v5253
        %v5542 = vmul.f32 %v5510, %v5254
        %v5543 = vmul.f32 %v5511, %v5255
        %v5544 = vmul.f32 %v5512, %v5256
        %v5545 = vmul.f32 %v5513, %v5257
        %v5546 = vmul.f32 %v5514, %v5258
        %v5547 = vmul.f32 %v5515, %v5259
        %v5548 = vmul.f32 %v5516, %v5260
        %v5549 = vmul.f32 %v5517, %v5261
        %v5550 = vmul.f32 %v5518, %v5262
        %v5551 = vmul.f32 %v5519, %v5263
        %v5552 = vmul.f32 %v5520, %v5264
        %v5553 = vmul.f32 %v5521, %v5265
        %v5554 = vmul.f32 %v5522, %v5266
        %v5555 = vmul.f32 %v5523, %v5267
        %v5556 = vmul.f32 %v5524, %v5268
        %v5557 = vmul.f32 %v5525, %v5269
        %v5558 = vmul.f32 %v5526, %v5270
        %v5559 = vmul.f32 %v5527, %v5271
        %v5560 = vmul.f32 %v5528, %v5272
        %v5561 = vmul.f32 %v5529, %v5273
        %v5562 = vmul.f32 %v5530, %v5274
        %v5563 = vmul.f32 %v5531, %v5275
        %v5564 = vmul.f32 %v5532, %v5276
        %v5565 = vmul.f32 %v5533, %v5277
        %v5566 = vmul.f32 %v5534, %v5278
        %v5567 = vsub.f32 0.0, %v5151
        %v5568 = vsub.f32 0.0, %v5152
        %v5569 = vsub.f32 0.0, %v5153
        %v5570 = vsub.f32 0.0, %v5154
        %v5571 = vsub.f32 0.0, %v5155
        %v5572 = vsub.f32 0.0, %v5156
        %v5573 = vsub.f32 0.0, %v5157
        %v5574 = vsub.f32 0.0, %v5158
        %v5575 = vsub.f32 0.0, %v5159
        %v5576 = vsub.f32 0.0, %v5160
        %v5577 = vsub.f32 0.0, %v5161
        %v5578 = vsub.f32 0.0, %v5162
        %v5579 = vsub.f32 0.0, %v5163
        %v5580 = vsub.f32 0.0, %v5164
        %v5581 = vsub.f32 0.0, %v5165
        %v5582 = vsub.f32 0.0, %v5166
        %v5583 = vsub.f32 0.0, %v5167
        %v5584 = vsub.f32 0.0, %v5168
        %v5585 = vsub.f32 0.0, %v5169
        %v5586 = vsub.f32 0.0, %v5170
        %v5587 = vsub.f32 0.0, %v5171
        %v5588 = vsub.f32 0.0, %v5172
        %v5589 = vsub.f32 0.0, %v5173
        %v5590 = vsub.f32 0.0, %v5174
        %v5591 = vsub.f32 0.0, %v5175
        %v5592 = vsub.f32 0.0, %v5176
        %v5593 = vsub.f32 0.0, %v5177
        %v5594 = vsub.f32 0.0, %v5178
        %v5595 = vsub.f32 0.0, %v5179
        %v5596 = vsub.f32 0.0, %v5180
        %v5597 = vsub.f32 0.0, %v5181
        %v5598 = vsub.f32 0.0, %v5182
        %v5599 = vmul.f32 %v5567, %v5151
        %v5600 = vmul.f32 %v5568, %v5152
        %v5601 = vmul.f32 %v5569, %v5153
        %v5602 = vmul.f32 %v5570, %v5154
        %v5603 = vmul.f32 %v5571, %v5155
        %v5604 = vmul.f32 %v5572, %v5156
        %v5605 = vmul.f32 %v5573, %v5157
        %v5606 = vmul.f32 %v5574, %v5158
        %v5607 = vmul.f32 %v5575, %v5159
        %v5608 = vmul.f32 %v5576, %v5160
        %v5609 = vmul.f32 %v5577, %v5161
        %v5610 = vmul.f32 %v5578, %v5162
        %v5611 = vmul.f32 %v5579, %v5163
        %v5612 = vmul.f32 %v5580, %v5164
        %v5613 = vmul.f32 %v5581, %v5165
        %v5614 = vmul.f32 %v5582, %v5166
        %v5615 = vmul.f32 %v5583, %v5167
        %v5616 = vmul.f32 %v5584, %v5168
        %v5617 = vmul.f32 %v5585, %v5169
        %v5618 = vmul.f32 %v5586, %v5170
        %v5619 = vmul.f32 %v5587, %v5171
        %v5620 = vmul.f32 %v5588, %v5172
        %v5621 = vmul.f32 %v5589, %v5173
        %v5622 = vmul.f32 %v5590, %v5174
        %v5623 = vmul.f32 %v5591, %v5175
        %v5624 = vmul.f32 %v5592, %v5176
        %v5625 = vmul.f32 %v5593, %v5177
        %v5626 = vmul.f32 %v5594, %v5178
        %v5627 = vmul.f32 %v5595, %v5179
        %v5628 = vmul.f32 %v5596, %v5180
        %v5629 = vmul.f32 %v5597, %v5181
        %v5630 = vmul.f32 %v5598, %v5182
        %v5631 = vmul.f32 %v5599, 1.442695
        %v5632 = vpow.pop %v5631
        %v5633 = vmul.f32 %v5600, 1.442695
        %v5634 = vpow.pop %v5633
        %v5635 = vmul.f32 %v5601, 1.442695
        %v5636 = vpow.pop %v5635
        %v5637 = vmul.f32 %v5602, 1.442695
        %v5638 = vpow.pop %v5637
        %v5639 = vmul.f32 %v5603, 1.442695
        %v5640 = vpow.pop %v5639
        %v5641 = vmul.f32 %v5604, 1.442695
        %v5642 = vpow.pop %v5641
        %v5643 = vmul.f32 %v5605, 1.442695
        %v5644 = vpow.pop %v5643
        %v5645 = vmul.f32 %v5606, 1.442695
        %v5646 = vpow.pop %v5645
        %v5647 = vmul.f32 %v5607, 1.442695
        %v5648 = vpow.pop %v5647
        %v5649 = vmul.f32 %v5608, 1.442695
        %v5650 = vpow.pop %v5649
        %v5651 = vmul.f32 %v5609, 1.442695
        %v5652 = vpow.pop %v5651
        %v5653 = vmul.f32 %v5610, 1.442695
        %v5654 = vpow.pop %v5653
        %v5655 = vmul.f32 %v5611, 1.442695
        %v5656 = vpow.pop %v5655
        %v5657 = vmul.f32 %v5612, 1.442695
        %v5658 = vpow.pop %v5657
        %v5659 = vmul.f32 %v5613, 1.442695
        %v5660 = vpow.pop %v5659
        %v5661 = vmul.f32 %v5614, 1.442695
        %v5662 = vpow.pop %v5661
        %v5663 = vmul.f32 %v5615, 1.442695
        %v5664 = vpow.pop %v5663
        %v5665 = vmul.f32 %v5616, 1.442695
        %v5666 = vpow.pop %v5665
        %v5667 = vmul.f32 %v5617, 1.442695
        %v5668 = vpow.pop %v5667
        %v5669 = vmul.f32 %v5618, 1.442695
        %v5670 = vpow.pop %v5669
        %v5671 = vmul.f32 %v5619, 1.442695
        %v5672 = vpow.pop %v5671
        %v5673 = vmul.f32 %v5620, 1.442695
        %v5674 = vpow.pop %v5673
        %v5675 = vmul.f32 %v5621, 1.442695
        %v5676 = vpow.pop %v5675
        %v5677 = vmul.f32 %v5622, 1.442695
        %v5678 = vpow.pop %v5677
        %v5679 = vmul.f32 %v5623, 1.442695
        %v5680 = vpow.pop %v5679
        %v5681 = vmul.f32 %v5624, 1.442695
        %v5682 = vpow.pop %v5681
        %v5683 = vmul.f32 %v5625, 1.442695
        %v5684 = vpow.pop %v5683
        %v5685 = vmul.f32 %v5626, 1.442695
        %v5686 = vpow.pop %v5685
        %v5687 = vmul.f32 %v5627, 1.442695
        %v5688 = vpow.pop %v5687
        %v5689 = vmul.f32 %v5628, 1.442695
        %v5690 = vpow.pop %v5689
        %v5691 = vmul.f32 %v5629, 1.442695
        %v5692 = vpow.pop %v5691
        %v5693 = vmul.f32 %v5630, 1.442695
        %v5694 = vpow.pop %v5693
        %v5695 = vmul.f32 %v5535, %v5632
        %v5696 = vmul.f32 %v5536, %v5634
        %v5697 = vmul.f32 %v5537, %v5636
        %v5698 = vmul.f32 %v5538, %v5638
        %v5699 = vmul.f32 %v5539, %v5640
        %v5700 = vmul.f32 %v5540, %v5642
        %v5701 = vmul.f32 %v5541, %v5644
        %v5702 = vmul.f32 %v5542, %v5646
        %v5703 = vmul.f32 %v5543, %v5648
        %v5704 = vmul.f32 %v5544, %v5650
        %v5705 = vmul.f32 %v5545, %v5652
        %v5706 = vmul.f32 %v5546, %v5654
        %v5707 = vmul.f32 %v5547, %v5656
        %v5708 = vmul.f32 %v5548, %v5658
        %v5709 = vmul.f32 %v5549, %v5660
        %v5710 = vmul.f32 %v5550, %v5662
        %v5711 = vmul.f32 %v5551, %v5664
        %v5712 = vmul.f32 %v5552, %v5666
        %v5713 = vmul.f32 %v5553, %v5668
        %v5714 = vmul.f32 %v5554, %v5670
        %v5715 = vmul.f32 %v5555, %v5672
        %v5716 = vmul.f32 %v5556, %v5674
        %v5717 = vmul.f32 %v5557, %v5676
        %v5718 = vmul.f32 %v5558, %v5678
        %v5719 = vmul.f32 %v5559, %v5680
        %v5720 = vmul.f32 %v5560, %v5682
        %v5721 = vmul.f32 %v5561, %v5684
        %v5722 = vmul.f32 %v5562, %v5686
        %v5723 = vmul.f32 %v5563, %v5688
        %v5724 = vmul.f32 %v5564, %v5690
        %v5725 = vmul.f32 %v5565, %v5692
        %v5726 = vmul.f32 %v5566, %v5694
        %v5727 = vsub.f32 1.0, %v5695
        %v5728 = vsub.f32 1.0, %v5696
        %v5729 = vsub.f32 1.0, %v5697
        %v5730 = vsub.f32 1.0, %v5698
        %v5731 = vsub.f32 1.0, %v5699
        %v5732 = vsub.f32 1.0, %v5700
        %v5733 = vsub.f32 1.0, %v5701
        %v5734 = vsub.f32 1.0, %v5702
        %v5735 = vsub.f32 1.0, %v5703
        %v5736 = vsub.f32 1.0, %v5704
        %v5737 = vsub.f32 1.0, %v5705
        %v5738 = vsub.f32 1.0, %v5706
        %v5739 = vsub.f32 1.0, %v5707
        %v5740 = vsub.f32 1.0, %v5708
        %v5741 = vsub.f32 1.0, %v5709
        %v5742 = vsub.f32 1.0, %v5710
        %v5743 = vsub.f32 1.0, %v5711
        %v5744 = vsub.f32 1.0, %v5712
        %v5745 = vsub.f32 1.0, %v5713
        %v5746 = vsub.f32 1.0, %v5714
        %v5747 = vsub.f32 1.0, %v5715
        %v5748 = vsub.f32 1.0, %v5716
        %v5749 = vsub.f32 1.0, %v5717
        %v5750 = vsub.f32 1.0, %v5718
        %v5751 = vsub.f32 1.0, %v5719
        %v5752 = vsub.f32 1.0, %v5720
        %v5753 = vsub.f32 1.0, %v5721
        %v5754 = vsub.f32 1.0, %v5722
        %v5755 = vsub.f32 1.0, %v5723
        %v5756 = vsub.f32 1.0, %v5724
        %v5757 = vsub.f32 1.0, %v5725
        %v5758 = vsub.f32 1.0, %v5726
        %vm5759 = vcmp.ge.f32.partialorder %v5119, 0.0
        %vm5760 = vcmp.ge.f32.partialorder %v5120, 0.0
        %vm5761 = vcmp.ge.f32.partialorder %v5121, 0.0
        %vm5762 = vcmp.ge.f32.partialorder %v5122, 0.0
        %vm5763 = vcmp.ge.f32.partialorder %v5123, 0.0
        %vm5764 = vcmp.ge.f32.partialorder %v5124, 0.0
        %vm5765 = vcmp.ge.f32.partialorder %v5125, 0.0
        %vm5766 = vcmp.ge.f32.partialorder %v5126, 0.0
        %vm5767 = vcmp.ge.f32.partialorder %v5127, 0.0
        %vm5768 = vcmp.ge.f32.partialorder %v5128, 0.0
        %vm5769 = vcmp.ge.f32.partialorder %v5129, 0.0
        %vm5770 = vcmp.ge.f32.partialorder %v5130, 0.0
        %vm5771 = vcmp.ge.f32.partialorder %v5131, 0.0
        %vm5772 = vcmp.ge.f32.partialorder %v5132, 0.0
        %vm5773 = vcmp.ge.f32.partialorder %v5133, 0.0
        %vm5774 = vcmp.ge.f32.partialorder %v5134, 0.0
        %vm5775 = vcmp.ge.f32.partialorder %v5135, 0.0
        %vm5776 = vcmp.ge.f32.partialorder %v5136, 0.0
        %vm5777 = vcmp.ge.f32.partialorder %v5137, 0.0
        %vm5778 = vcmp.ge.f32.partialorder %v5138, 0.0
        %vm5779 = vcmp.ge.f32.partialorder %v5139, 0.0
        %vm5780 = vcmp.ge.f32.partialorder %v5140, 0.0
        %vm5781 = vcmp.ge.f32.partialorder %v5141, 0.0
        %vm5782 = vcmp.ge.f32.partialorder %v5142, 0.0
        %vm5783 = vcmp.ge.f32.partialorder %v5143, 0.0
        %vm5784 = vcmp.ge.f32.partialorder %v5144, 0.0
        %vm5785 = vcmp.ge.f32.partialorder %v5145, 0.0
        %vm5786 = vcmp.ge.f32.partialorder %v5146, 0.0
        %vm5787 = vcmp.ge.f32.partialorder %v5147, 0.0
        %vm5788 = vcmp.ge.f32.partialorder %v5148, 0.0
        %vm5789 = vcmp.ge.f32.partialorder %v5149, 0.0
        %vm5790 = vcmp.ge.f32.partialorder %v5150, 0.0
        %v5791 = vsub.f32 0.0, %v5727
        %v5792 = vsub.f32 0.0, %v5728
        %v5793 = vsub.f32 0.0, %v5729
        %v5794 = vsub.f32 0.0, %v5730
        %v5795 = vsub.f32 0.0, %v5731
        %v5796 = vsub.f32 0.0, %v5732
        %v5797 = vsub.f32 0.0, %v5733
        %v5798 = vsub.f32 0.0, %v5734
        %v5799 = vsub.f32 0.0, %v5735
        %v5800 = vsub.f32 0.0, %v5736
        %v5801 = vsub.f32 0.0, %v5737
        %v5802 = vsub.f32 0.0, %v5738
        %v5803 = vsub.f32 0.0, %v5739
        %v5804 = vsub.f32 0.0, %v5740
        %v5805 = vsub.f32 0.0, %v5741
        %v5806 = vsub.f32 0.0, %v5742
        %v5807 = vsub.f32 0.0, %v5743
        %v5808 = vsub.f32 0.0, %v5744
        %v5809 = vsub.f32 0.0, %v5745
        %v5810 = vsub.f32 0.0, %v5746
        %v5811 = vsub.f32 0.0, %v5747
        %v5812 = vsub.f32 0.0, %v5748
        %v5813 = vsub.f32 0.0, %v5749
        %v5814 = vsub.f32 0.0, %v5750
        %v5815 = vsub.f32 0.0, %v5751
        %v5816 = vsub.f32 0.0, %v5752
        %v5817 = vsub.f32 0.0, %v5753
        %v5818 = vsub.f32 0.0, %v5754
        %v5819 = vsub.f32 0.0, %v5755
        %v5820 = vsub.f32 0.0, %v5756
        %v5821 = vsub.f32 0.0, %v5757
        %v5822 = vsub.f32 0.0, %v5758
        %v5823 = vsel %vm5759, %v5727, %v5791
        %v5824 = vsel %vm5760, %v5728, %v5792
        %v5825 = vsel %vm5761, %v5729, %v5793
        %v5826 = vsel %vm5762, %v5730, %v5794
        %v5827 = vsel %vm5763, %v5731, %v5795
        %v5828 = vsel %vm5764, %v5732, %v5796
        %v5829 = vsel %vm5765, %v5733, %v5797
        %v5830 = vsel %vm5766, %v5734, %v5798
        %v5831 = vsel %vm5767, %v5735, %v5799
        %v5832 = vsel %vm5768, %v5736, %v5800
        %v5833 = vsel %vm5769, %v5737, %v5801
        %v5834 = vsel %vm5770, %v5738, %v5802
        %v5835 = vsel %vm5771, %v5739, %v5803
        %v5836 = vsel %vm5772, %v5740, %v5804
        %v5837 = vsel %vm5773, %v5741, %v5805
        %v5838 = vsel %vm5774, %v5742, %v5806
        %v5839 = vsel %vm5775, %v5743, %v5807
        %v5840 = vsel %vm5776, %v5744, %v5808
        %v5841 = vsel %vm5777, %v5745, %v5809
        %v5842 = vsel %vm5778, %v5746, %v5810
        %v5843 = vsel %vm5779, %v5747, %v5811
        %v5844 = vsel %vm5780, %v5748, %v5812
        %v5845 = vsel %vm5781, %v5749, %v5813
        %v5846 = vsel %vm5782, %v5750, %v5814
        %v5847 = vsel %vm5783, %v5751, %v5815
        %v5848 = vsel %vm5784, %v5752, %v5816
        %v5849 = vsel %vm5785, %v5753, %v5817
        %v5850 = vsel %vm5786, %v5754, %v5818
        %v5851 = vsel %vm5787, %v5755, %v5819
        %v5852 = vsel %vm5788, %v5756, %v5820
        %v5853 = vsel %vm5789, %v5757, %v5821
        %v5854 = vsel %vm5790, %v5758, %v5822
        %v5855 = vadd.f32 %v5823, 1.0
        %v5856 = vadd.f32 %v5824, 1.0
        %v5857 = vadd.f32 %v5825, 1.0
        %v5858 = vadd.f32 %v5826, 1.0
        %v5859 = vadd.f32 %v5827, 1.0
        %v5860 = vadd.f32 %v5828, 1.0
        %v5861 = vadd.f32 %v5829, 1.0
        %v5862 = vadd.f32 %v5830, 1.0
        %v5863 = vadd.f32 %v5831, 1.0
        %v5864 = vadd.f32 %v5832, 1.0
        %v5865 = vadd.f32 %v5833, 1.0
        %v5866 = vadd.f32 %v5834, 1.0
        %v5867 = vadd.f32 %v5835, 1.0
        %v5868 = vadd.f32 %v5836, 1.0
        %v5869 = vadd.f32 %v5837, 1.0
        %v5870 = vadd.f32 %v5838, 1.0
        %v5871 = vadd.f32 %v5839, 1.0
        %v5872 = vadd.f32 %v5840, 1.0
        %v5873 = vadd.f32 %v5841, 1.0
        %v5874 = vadd.f32 %v5842, 1.0
        %v5875 = vadd.f32 %v5843, 1.0
        %v5876 = vadd.f32 %v5844, 1.0
        %v5877 = vadd.f32 %v5845, 1.0
        %v5878 = vadd.f32 %v5846, 1.0
        %v5879 = vadd.f32 %v5847, 1.0
        %v5880 = vadd.f32 %v5848, 1.0
        %v5881 = vadd.f32 %v5849, 1.0
        %v5882 = vadd.f32 %v5850, 1.0
        %v5883 = vadd.f32 %v5851, 1.0
        %v5884 = vadd.f32 %v5852, 1.0
        %v5885 = vadd.f32 %v5853, 1.0
        %v5886 = vadd.f32 %v5854, 1.0
        %v5887 = vmul.f32 %v5087, %v5855
        %v5888 = vmul.f32 %v5088, %v5856
        %v5889 = vmul.f32 %v5089, %v5857
        %v5890 = vmul.f32 %v5090, %v5858
        %v5891 = vmul.f32 %v5091, %v5859
        %v5892 = vmul.f32 %v5092, %v5860
        %v5893 = vmul.f32 %v5093, %v5861
        %v5894 = vmul.f32 %v5094, %v5862
        %v5895 = vmul.f32 %v5095, %v5863
        %v5896 = vmul.f32 %v5096, %v5864
        %v5897 = vmul.f32 %v5097, %v5865
        %v5898 = vmul.f32 %v5098, %v5866
        %v5899 = vmul.f32 %v5099, %v5867
        %v5900 = vmul.f32 %v5100, %v5868
        %v5901 = vmul.f32 %v5101, %v5869
        %v5902 = vmul.f32 %v5102, %v5870
        %v5903 = vmul.f32 %v5103, %v5871
        %v5904 = vmul.f32 %v5104, %v5872
        %v5905 = vmul.f32 %v5105, %v5873
        %v5906 = vmul.f32 %v5106, %v5874
        %v5907 = vmul.f32 %v5107, %v5875
        %v5908 = vmul.f32 %v5108, %v5876
        %v5909 = vmul.f32 %v5109, %v5877
        %v5910 = vmul.f32 %v5110, %v5878
        %v5911 = vmul.f32 %v5111, %v5879
        %v5912 = vmul.f32 %v5112, %v5880
        %v5913 = vmul.f32 %v5113, %v5881
        %v5914 = vmul.f32 %v5114, %v5882
        %v5915 = vmul.f32 %v5115, %v5883
        %v5916 = vmul.f32 %v5116, %v5884
        %v5917 = vmul.f32 %v5117, %v5885
        %v5918 = vmul.f32 %v5118, %v5886
        %v5919 = vld [vmem:[#allocation2] sm:$0xf]
        %v5920 = vld [vmem:[#allocation2 + $0x4] sm:$0xf]
        %v5921 = vld [vmem:[#allocation2 + $0x8] sm:$0xf]
        %v5922 = vld [vmem:[#allocation2 + $0xc] sm:$0xf]
        %v5923 = vld [vmem:[#allocation2 + $0x10] sm:$0xf]
        %v5924 = vld [vmem:[#allocation2 + $0x14] sm:$0xf]
        %v5925 = vld [vmem:[#allocation2 + $0x18] sm:$0xf]
        %v5926 = vld [vmem:[#allocation2 + $0x1c] sm:$0xf]
        %v5927 = vpack.c.bf16 %v5891, %v5887
        %v5928 = vpack.c.bf16 %v5892, %v5888
        %v5929 = vpack.c.bf16 %v5893, %v5889
        %v5930 = vpack.c.bf16 %v5894, %v5890
        %v5931 = vpack.c.bf16 %v5899, %v5895
        %v5932 = vpack.c.bf16 %v5900, %v5896
        %v5933 = vpack.c.bf16 %v5901, %v5897
        %v5934 = vpack.c.bf16 %v5902, %v5898
        %v5935 = vpack.c.bf16 %v5907, %v5903
        %v5936 = vpack.c.bf16 %v5908, %v5904
        %v5937 = vpack.c.bf16 %v5909, %v5905
        %v5938 = vpack.c.bf16 %v5910, %v5906
        %v5939 = vpack.c.bf16 %v5915, %v5911
        %v5940 = vpack.c.bf16 %v5916, %v5912
        %v5941 = vpack.c.bf16 %v5917, %v5913
        %v5942 = vpack.c.bf16 %v5918, %v5914
        %5943 = vset.pattern.permute.xlu0 2
        %5944 = vperm.xlu0 %5943, %v3770
        %v5945 = vpop.permute.xlu0 %5944
        %5947 = vset.pattern.permute.xlu0 2
        %5948 = vperm.xlu0 %5947, %v3771
        %v5949 = vpop.permute.xlu0 %5948
        %5951 = vset.pattern.permute.xlu0 2
        %5952 = vperm.xlu0 %5951, %v3772
        %v5953 = vpop.permute.xlu0 %5952
        %5955 = vset.pattern.permute.xlu0 2
        %5956 = vperm.xlu0 %5955, %v3773
        %v5957 = vpop.permute.xlu0 %5956
        %5959 = vset.pattern.permute.xlu0 2
        %5960 = vperm.xlu0 %5959, %v3774
        %v5961 = vpop.permute.xlu0 %5960
        %5963 = vset.pattern.permute.xlu0 2
        %5964 = vperm.xlu0 %5963, %v3775
        %v5965 = vpop.permute.xlu0 %5964
        %5967 = vset.pattern.permute.xlu0 2
        %5968 = vperm.xlu0 %5967, %v3776
        %v5969 = vpop.permute.xlu0 %5968
        %5971 = vset.pattern.permute.xlu0 2
        %5972 = vperm.xlu0 %5971, %v3777
        %v5973 = vpop.permute.xlu0 %5972
        %v5983 = vunpack.c.l.b16 %v5919
        %v5984 = vunpack.c.l.b16 %v5920
        %v5985 = vunpack.c.l.b16 %v5921
        %v5986 = vunpack.c.l.b16 %v5922
        %v5987 = vunpack.c.l.b16 %v5923
        %v5988 = vunpack.c.l.b16 %v5924
        %v5989 = vunpack.c.l.b16 %v5925
        %v5990 = vunpack.c.l.b16 %v5926
        %v5991 = vpack.c.b16 %v5984, %v5983
        %v5992 = vpack.c.b16 %v5986, %v5985
        %v5993 = vpack.c.b16 %v5988, %v5987
        %v5994 = vpack.c.b16 %v5990, %v5989
        %v5996 = vsel %vm3862, %v5991, 0
        %v5999 = vsel %vm3862, %v5992, 0
        %v6002 = vsel %vm3862, %v5993, 0
        %v6005 = vsel %vm3862, %v5994, 0
        %6007 = vmatprep.subr.bf16.mxu0 %v5928
        %6008 = vmatpush1.bf16.msra.mxu0 %v5927
        %6009 = vmatprep.subr.bf16.mxu0 %v5932
        %6010 = vmatpush1.bf16.msra.mxu0 %v5931
        %6011 = vmatprep.subr.bf16.mxu0 %v5936
        %6012 = vmatpush1.bf16.msra.mxu0 %v5935
        %6013 = vmatprep.subr.bf16.mxu0 %v5940
        %6014 = vmatpush1.bf16.msra.mxu0 %v5939
        %6015 = vmatprep.subr.bf16.mxu0 0
        %6016 = vmatpush1.bf16.msra.mxu0 0
        %6017 = vmatprep.subr.bf16.mxu0 0
        %6018 = vmatpush1.bf16.msra.mxu0 0
        %6019 = vmatprep.subr.bf16.mxu0 0
        %6020 = vmatpush1.bf16.msra.mxu0 0
        %6021 = vmatprep.subr.bf16.mxu0 0
        %6022 = vmatpush1.bf16.msra.mxu0 0
        %6023 = vmatprep.subr.bf16.mxu0 0
        %6024 = vmatpush1.bf16.msra.mxu0 0
        %6025 = vmatprep.subr.bf16.mxu0 0
        %6026 = vmatpush1.bf16.msra.mxu0 0
        %6027 = vmatprep.subr.bf16.mxu0 0
        %6028 = vmatpush1.bf16.msra.mxu0 0
        %6029 = vmatprep.subr.bf16.mxu0 0
        %6030 = vmatpush1.bf16.msra.mxu0 0
        %6031 = vmatprep.subr.bf16.mxu0 0
        %6032 = vmatpush1.bf16.msra.mxu0 0
        %6033 = vmatprep.subr.bf16.mxu0 0
        %6034 = vmatpush1.bf16.msra.mxu0 0
        %6035 = vmatprep.subr.bf16.mxu0 0
        %6036 = vmatpush1.bf16.msra.mxu0 0
        %6037 = vmatprep.subr.bf16.mxu0 0
        %6038 = vmatpush1.bf16.msra.mxu0 0
        %6039 = vmatprep.mubr.bf16.mxu0 0
        %6040 = vmatmul.mubr.bf16.gmra.mrb[0].mxu0 %v5996
        %v6041 = vpop.f32.mrb[0].mxu0
        %v6042 = vadd.f32 %v5945, %v6041
        %v6043 = vpop.f32.mrb[0].mxu0
        %v6044 = vadd.f32 %v5945, %v6043
        %v6045 = vpop.f32.mrb[0].mxu0
        %v6046 = vadd.f32 %v5949, %v6045
        %v6047 = vpop.f32.mrb[0].mxu0
        %v6048 = vadd.f32 %v5949, %v6047
        %6049 = vmatprep.mubr.bf16.mxu0 0
        %6050 = vmatmul.mubr.bf16.gmra.mrb[0].mxu0 %v5999
        %v6051 = vpop.f32.mrb[0].mxu0
        %v6052 = vadd.f32 %v5953, %v6051
        %v6053 = vpop.f32.mrb[0].mxu0
        %v6054 = vadd.f32 %v5953, %v6053
        %v6055 = vpop.f32.mrb[0].mxu0
        %v6056 = vadd.f32 %v5957, %v6055
        %v6057 = vpop.f32.mrb[0].mxu0
        %v6058 = vadd.f32 %v5957, %v6057
        %6059 = vmatprep.mubr.bf16.mxu0 0
        %6060 = vmatmul.mubr.bf16.gmra.mrb[0].mxu0 %v6002
        %v6061 = vpop.f32.mrb[0].mxu0
        %v6062 = vadd.f32 %v5961, %v6061
        %v6063 = vpop.f32.mrb[0].mxu0
        %v6064 = vadd.f32 %v5961, %v6063
        %v6065 = vpop.f32.mrb[0].mxu0
        %v6066 = vadd.f32 %v5965, %v6065
        %v6067 = vpop.f32.mrb[0].mxu0
        %v6068 = vadd.f32 %v5965, %v6067
        %6069 = vmatprep.mubr.bf16.mxu0 0
        %6070 = vmatmul.mubr.bf16.gmra.mrb[0].mxu0 %v6005
        %v6071 = vpop.f32.mrb[0].mxu0
        %v6072 = vadd.f32 %v5969, %v6071
        %v6073 = vpop.f32.mrb[0].mxu0
        %v6074 = vadd.f32 %v5969, %v6073
        %v6075 = vpop.f32.mrb[0].mxu0
        %v6076 = vadd.f32 %v5973, %v6075
        %v6077 = vpop.f32.mrb[0].mxu0
        %v6078 = vadd.f32 %v5973, %v6077
        %6079 = vdwg.mxu0
        %6080 = vmatprep.subr.bf16.mxu0 %v5930
        %6081 = vmatpush1.bf16.msra.mxu0 %v5929
        %6082 = vmatprep.subr.bf16.mxu0 %v5934
        %6083 = vmatpush1.bf16.msra.mxu0 %v5933
        %6084 = vmatprep.subr.bf16.mxu0 %v5938
        %6085 = vmatpush1.bf16.msra.mxu0 %v5937
        %6086 = vmatprep.subr.bf16.mxu0 %v5942
        %6087 = vmatpush1.bf16.msra.mxu0 %v5941
        %6088 = vmatprep.subr.bf16.mxu0 0
        %6089 = vmatpush1.bf16.msra.mxu0 0
        %6090 = vmatprep.subr.bf16.mxu0 0
        %6091 = vmatpush1.bf16.msra.mxu0 0
        %6092 = vmatprep.subr.bf16.mxu0 0
        %6093 = vmatpush1.bf16.msra.mxu0 0
        %6094 = vmatprep.subr.bf16.mxu0 0
        %6095 = vmatpush1.bf16.msra.mxu0 0
        %6096 = vmatprep.subr.bf16.mxu0 0
        %6097 = vmatpush1.bf16.msra.mxu0 0
        %6098 = vmatprep.subr.bf16.mxu0 0
        %6099 = vmatpush1.bf16.msra.mxu0 0
        %6100 = vmatprep.subr.bf16.mxu0 0
        %6101 = vmatpush1.bf16.msra.mxu0 0
        %6102 = vmatprep.subr.bf16.mxu0 0
        %6103 = vmatpush1.bf16.msra.mxu0 0
        %6104 = vmatprep.subr.bf16.mxu0 0
        %6105 = vmatpush1.bf16.msra.mxu0 0
        %6106 = vmatprep.subr.bf16.mxu0 0
        %6107 = vmatpush1.bf16.msra.mxu0 0
        %6108 = vmatprep.subr.bf16.mxu0 0
        %6109 = vmatpush1.bf16.msra.mxu0 0
        %6110 = vmatprep.subr.bf16.mxu0 0
        %6111 = vmatpush1.bf16.msra.mxu0 0
        %6112 = vmatprep.mubr.bf16.mxu0 0
        %6113 = vmatmul.mubr.bf16.gmra.mrb[0].mxu0 %v5996
        %v6114 = vpop.f32.mrb[0].mxu0
        %v6115 = vadd.f32 %v5945, %v6114
        %v6116 = vpop.f32.mrb[0].mxu0
        %v6117 = vadd.f32 %v5945, %v6116
        %v6118 = vpop.f32.mrb[0].mxu0
        %v6119 = vadd.f32 %v5949, %v6118
        %v6120 = vpop.f32.mrb[0].mxu0
        %v6121 = vadd.f32 %v5949, %v6120
        %6122 = vmatprep.mubr.bf16.mxu0 0
        %6123 = vmatmul.mubr.bf16.gmra.mrb[0].mxu0 %v5999
        %v6124 = vpop.f32.mrb[0].mxu0
        %v6125 = vadd.f32 %v5953, %v6124
        %v6126 = vpop.f32.mrb[0].mxu0
        %v6127 = vadd.f32 %v5953, %v6126
        %v6128 = vpop.f32.mrb[0].mxu0
        %v6129 = vadd.f32 %v5957, %v6128
        %v6130 = vpop.f32.mrb[0].mxu0
        %v6131 = vadd.f32 %v5957, %v6130
        %6132 = vmatprep.mubr.bf16.mxu0 0
        %6133 = vmatmul.mubr.bf16.gmra.mrb[0].mxu0 %v6002
        %v6134 = vpop.f32.mrb[0].mxu0
        %v6135 = vadd.f32 %v5961, %v6134
        %v6136 = vpop.f32.mrb[0].mxu0
        %v6137 = vadd.f32 %v5961, %v6136
        %v6138 = vpop.f32.mrb[0].mxu0
        %v6139 = vadd.f32 %v5965, %v6138
        %v6140 = vpop.f32.mrb[0].mxu0
        %v6141 = vadd.f32 %v5965, %v6140
        %6142 = vmatprep.mubr.bf16.mxu0 0
        %6143 = vmatmul.mubr.bf16.gmra.mrb[0].mxu0 %v6005
        %v6144 = vpop.f32.mrb[0].mxu0
        %v6145 = vadd.f32 %v5969, %v6144
        %v6146 = vpop.f32.mrb[0].mxu0
        %v6147 = vadd.f32 %v5969, %v6146
        %v6148 = vpop.f32.mrb[0].mxu0
        %v6149 = vadd.f32 %v5973, %v6148
        %v6150 = vpop.f32.mrb[0].mxu0
        %v6151 = vadd.f32 %v5973, %v6150
        %6152 = vdwg.mxu0
        %v6153 = vmul.f32 %v6042, 0.5
        %v6154 = vmul.f32 %v6044, 0.5
        %v6155 = vmul.f32 %v6115, 0.5
        %v6156 = vmul.f32 %v6117, 0.5
        %v6157 = vmul.f32 %v6046, 0.5
        %v6158 = vmul.f32 %v6048, 0.5
        %v6159 = vmul.f32 %v6119, 0.5
        %v6160 = vmul.f32 %v6121, 0.5
        %v6161 = vmul.f32 %v6052, 0.5
        %v6162 = vmul.f32 %v6054, 0.5
        %v6163 = vmul.f32 %v6125, 0.5
        %v6164 = vmul.f32 %v6127, 0.5
        %v6165 = vmul.f32 %v6056, 0.5
        %v6166 = vmul.f32 %v6058, 0.5
        %v6167 = vmul.f32 %v6129, 0.5
        %v6168 = vmul.f32 %v6131, 0.5
        %v6169 = vmul.f32 %v6062, 0.5
        %v6170 = vmul.f32 %v6064, 0.5
        %v6171 = vmul.f32 %v6135, 0.5
        %v6172 = vmul.f32 %v6137, 0.5
        %v6173 = vmul.f32 %v6066, 0.5
        %v6174 = vmul.f32 %v6068, 0.5
        %v6175 = vmul.f32 %v6139, 0.5
        %v6176 = vmul.f32 %v6141, 0.5
        %v6177 = vmul.f32 %v6072, 0.5
        %v6178 = vmul.f32 %v6074, 0.5
        %v6179 = vmul.f32 %v6145, 0.5
        %v6180 = vmul.f32 %v6147, 0.5
        %v6181 = vmul.f32 %v6076, 0.5
        %v6182 = vmul.f32 %v6078, 0.5
        %v6183 = vmul.f32 %v6149, 0.5
        %v6184 = vmul.f32 %v6151, 0.5
        %v6185 = vmul.f32 %v6042, 0.70710677
        %v6186 = vmul.f32 %v6044, 0.70710677
        %v6187 = vmul.f32 %v6115, 0.70710677
        %v6188 = vmul.f32 %v6117, 0.70710677
        %v6189 = vmul.f32 %v6046, 0.70710677
        %v6190 = vmul.f32 %v6048, 0.70710677
        %v6191 = vmul.f32 %v6119, 0.70710677
        %v6192 = vmul.f32 %v6121, 0.70710677
        %v6193 = vmul.f32 %v6052, 0.70710677
        %v6194 = vmul.f32 %v6054, 0.70710677
        %v6195 = vmul.f32 %v6125, 0.70710677
        %v6196 = vmul.f32 %v6127, 0.70710677
        %v6197 = vmul.f32 %v6056, 0.70710677
        %v6198 = vmul.f32 %v6058, 0.70710677
        %v6199 = vmul.f32 %v6129, 0.70710677
        %v6200 = vmul.f32 %v6131, 0.70710677
        %v6201 = vmul.f32 %v6062, 0.70710677
        %v6202 = vmul.f32 %v6064, 0.70710677
        %v6203 = vmul.f32 %v6135, 0.70710677
        %v6204 = vmul.f32 %v6137, 0.70710677
        %v6205 = vmul.f32 %v6066, 0.70710677
        %v6206 = vmul.f32 %v6068, 0.70710677
        %v6207 = vmul.f32 %v6139, 0.70710677
        %v6208 = vmul.f32 %v6141, 0.70710677
        %v6209 = vmul.f32 %v6072, 0.70710677
        %v6210 = vmul.f32 %v6074, 0.70710677
        %v6211 = vmul.f32 %v6145, 0.70710677
        %v6212 = vmul.f32 %v6147, 0.70710677
        %v6213 = vmul.f32 %v6076, 0.70710677
        %v6214 = vmul.f32 %v6078, 0.70710677
        %v6215 = vmul.f32 %v6149, 0.70710677
        %v6216 = vmul.f32 %v6151, 0.70710677
        %v6217 = vand.u32 2147483647, %v6185
        %v6218 = vand.u32 2147483647, %v6186
        %v6219 = vand.u32 2147483647, %v6187
        %v6220 = vand.u32 2147483647, %v6188
        %v6221 = vand.u32 2147483647, %v6189
        %v6222 = vand.u32 2147483647, %v6190
        %v6223 = vand.u32 2147483647, %v6191
        %v6224 = vand.u32 2147483647, %v6192
        %v6225 = vand.u32 2147483647, %v6193
        %v6226 = vand.u32 2147483647, %v6194
        %v6227 = vand.u32 2147483647, %v6195
        %v6228 = vand.u32 2147483647, %v6196
        %v6229 = vand.u32 2147483647, %v6197
        %v6230 = vand.u32 2147483647, %v6198
        %v6231 = vand.u32 2147483647, %v6199
        %v6232 = vand.u32 2147483647, %v6200
        %v6233 = vand.u32 2147483647, %v6201
        %v6234 = vand.u32 2147483647, %v6202
        %v6235 = vand.u32 2147483647, %v6203
        %v6236 = vand.u32 2147483647, %v6204
        %v6237 = vand.u32 2147483647, %v6205
        %v6238 = vand.u32 2147483647, %v6206
        %v6239 = vand.u32 2147483647, %v6207
        %v6240 = vand.u32 2147483647, %v6208
        %v6241 = vand.u32 2147483647, %v6209
        %v6242 = vand.u32 2147483647, %v6210
        %v6243 = vand.u32 2147483647, %v6211
        %v6244 = vand.u32 2147483647, %v6212
        %v6245 = vand.u32 2147483647, %v6213
        %v6246 = vand.u32 2147483647, %v6214
        %v6247 = vand.u32 2147483647, %v6215
        %v6248 = vand.u32 2147483647, %v6216
        %v6249 = vmul.f32 %v6217, 0.3275911
        %v6250 = vmul.f32 %v6218, 0.3275911
        %v6251 = vmul.f32 %v6219, 0.3275911
        %v6252 = vmul.f32 %v6220, 0.3275911
        %v6253 = vmul.f32 %v6221, 0.3275911
        %v6254 = vmul.f32 %v6222, 0.3275911
        %v6255 = vmul.f32 %v6223, 0.3275911
        %v6256 = vmul.f32 %v6224, 0.3275911
        %v6257 = vmul.f32 %v6225, 0.3275911
        %v6258 = vmul.f32 %v6226, 0.3275911
        %v6259 = vmul.f32 %v6227, 0.3275911
        %v6260 = vmul.f32 %v6228, 0.3275911
        %v6261 = vmul.f32 %v6229, 0.3275911
        %v6262 = vmul.f32 %v6230, 0.3275911
        %v6263 = vmul.f32 %v6231, 0.3275911
        %v6264 = vmul.f32 %v6232, 0.3275911
        %v6265 = vmul.f32 %v6233, 0.3275911
        %v6266 = vmul.f32 %v6234, 0.3275911
        %v6267 = vmul.f32 %v6235, 0.3275911
        %v6268 = vmul.f32 %v6236, 0.3275911
        %v6269 = vmul.f32 %v6237, 0.3275911
        %v6270 = vmul.f32 %v6238, 0.3275911
        %v6271 = vmul.f32 %v6239, 0.3275911
        %v6272 = vmul.f32 %v6240, 0.3275911
        %v6273 = vmul.f32 %v6241, 0.3275911
        %v6274 = vmul.f32 %v6242, 0.3275911
        %v6275 = vmul.f32 %v6243, 0.3275911
        %v6276 = vmul.f32 %v6244, 0.3275911
        %v6277 = vmul.f32 %v6245, 0.3275911
        %v6278 = vmul.f32 %v6246, 0.3275911
        %v6279 = vmul.f32 %v6247, 0.3275911
        %v6280 = vmul.f32 %v6248, 0.3275911
        %v6281 = vadd.f32 %v6249, 1.0
        %v6282 = vadd.f32 %v6250, 1.0
        %v6283 = vadd.f32 %v6251, 1.0
        %v6284 = vadd.f32 %v6252, 1.0
        %v6285 = vadd.f32 %v6253, 1.0
        %v6286 = vadd.f32 %v6254, 1.0
        %v6287 = vadd.f32 %v6255, 1.0
        %v6288 = vadd.f32 %v6256, 1.0
        %v6289 = vadd.f32 %v6257, 1.0
        %v6290 = vadd.f32 %v6258, 1.0
        %v6291 = vadd.f32 %v6259, 1.0
        %v6292 = vadd.f32 %v6260, 1.0
        %v6293 = vadd.f32 %v6261, 1.0
        %v6294 = vadd.f32 %v6262, 1.0
        %v6295 = vadd.f32 %v6263, 1.0
        %v6296 = vadd.f32 %v6264, 1.0
        %v6297 = vadd.f32 %v6265, 1.0
        %v6298 = vadd.f32 %v6266, 1.0
        %v6299 = vadd.f32 %v6267, 1.0
        %v6300 = vadd.f32 %v6268, 1.0
        %v6301 = vadd.f32 %v6269, 1.0
        %v6302 = vadd.f32 %v6270, 1.0
        %v6303 = vadd.f32 %v6271, 1.0
        %v6304 = vadd.f32 %v6272, 1.0
        %v6305 = vadd.f32 %v6273, 1.0
        %v6306 = vadd.f32 %v6274, 1.0
        %v6307 = vadd.f32 %v6275, 1.0
        %v6308 = vadd.f32 %v6276, 1.0
        %v6309 = vadd.f32 %v6277, 1.0
        %v6310 = vadd.f32 %v6278, 1.0
        %v6311 = vadd.f32 %v6279, 1.0
        %v6312 = vadd.f32 %v6280, 1.0
        %v6313 = vrcp.pop %v6281
        %v6314 = vrcp.pop %v6282
        %v6315 = vrcp.pop %v6283
        %v6316 = vrcp.pop %v6284
        %v6317 = vrcp.pop %v6285
        %v6318 = vrcp.pop %v6286
        %v6319 = vrcp.pop %v6287
        %v6320 = vrcp.pop %v6288
        %v6321 = vrcp.pop %v6289
        %v6322 = vrcp.pop %v6290
        %v6323 = vrcp.pop %v6291
        %v6324 = vrcp.pop %v6292
        %v6325 = vrcp.pop %v6293
        %v6326 = vrcp.pop %v6294
        %v6327 = vrcp.pop %v6295
        %v6328 = vrcp.pop %v6296
        %v6329 = vrcp.pop %v6297
        %v6330 = vrcp.pop %v6298
        %v6331 = vrcp.pop %v6299
        %v6332 = vrcp.pop %v6300
        %v6333 = vrcp.pop %v6301
        %v6334 = vrcp.pop %v6302
        %v6335 = vrcp.pop %v6303
        %v6336 = vrcp.pop %v6304
        %v6337 = vrcp.pop %v6305
        %v6338 = vrcp.pop %v6306
        %v6339 = vrcp.pop %v6307
        %v6340 = vrcp.pop %v6308
        %v6341 = vrcp.pop %v6309
        %v6342 = vrcp.pop %v6310
        %v6343 = vrcp.pop %v6311
        %v6344 = vrcp.pop %v6312
        %v6345 = vmul.f32 %v6313, 1.0614054
        %v6346 = vmul.f32 %v6314, 1.0614054
        %v6347 = vmul.f32 %v6315, 1.0614054
        %v6348 = vmul.f32 %v6316, 1.0614054
        %v6349 = vmul.f32 %v6317, 1.0614054
        %v6350 = vmul.f32 %v6318, 1.0614054
        %v6351 = vmul.f32 %v6319, 1.0614054
        %v6352 = vmul.f32 %v6320, 1.0614054
        %v6353 = vmul.f32 %v6321, 1.0614054
        %v6354 = vmul.f32 %v6322, 1.0614054
        %v6355 = vmul.f32 %v6323, 1.0614054
        %v6356 = vmul.f32 %v6324, 1.0614054
        %v6357 = vmul.f32 %v6325, 1.0614054
        %v6358 = vmul.f32 %v6326, 1.0614054
        %v6359 = vmul.f32 %v6327, 1.0614054
        %v6360 = vmul.f32 %v6328, 1.0614054
        %v6361 = vmul.f32 %v6329, 1.0614054
        %v6362 = vmul.f32 %v6330, 1.0614054
        %v6363 = vmul.f32 %v6331, 1.0614054
        %v6364 = vmul.f32 %v6332, 1.0614054
        %v6365 = vmul.f32 %v6333, 1.0614054
        %v6366 = vmul.f32 %v6334, 1.0614054
        %v6367 = vmul.f32 %v6335, 1.0614054
        %v6368 = vmul.f32 %v6336, 1.0614054
        %v6369 = vmul.f32 %v6337, 1.0614054
        %v6370 = vmul.f32 %v6338, 1.0614054
        %v6371 = vmul.f32 %v6339, 1.0614054
        %v6372 = vmul.f32 %v6340, 1.0614054
        %v6373 = vmul.f32 %v6341, 1.0614054
        %v6374 = vmul.f32 %v6342, 1.0614054
        %v6375 = vmul.f32 %v6343, 1.0614054
        %v6376 = vmul.f32 %v6344, 1.0614054
        %v6377 = vadd.f32 %v6345, -1.4531521
        %v6378 = vadd.f32 %v6346, -1.4531521
        %v6379 = vadd.f32 %v6347, -1.4531521
        %v6380 = vadd.f32 %v6348, -1.4531521
        %v6381 = vadd.f32 %v6349, -1.4531521
        %v6382 = vadd.f32 %v6350, -1.4531521
        %v6383 = vadd.f32 %v6351, -1.4531521
        %v6384 = vadd.f32 %v6352, -1.4531521
        %v6385 = vadd.f32 %v6353, -1.4531521
        %v6386 = vadd.f32 %v6354, -1.4531521
        %v6387 = vadd.f32 %v6355, -1.4531521
        %v6388 = vadd.f32 %v6356, -1.4531521
        %v6389 = vadd.f32 %v6357, -1.4531521
        %v6390 = vadd.f32 %v6358, -1.4531521
        %v6391 = vadd.f32 %v6359, -1.4531521
        %v6392 = vadd.f32 %v6360, -1.4531521
        %v6393 = vadd.f32 %v6361, -1.4531521
        %v6394 = vadd.f32 %v6362, -1.4531521
        %v6395 = vadd.f32 %v6363, -1.4531521
        %v6396 = vadd.f32 %v6364, -1.4531521
        %v6397 = vadd.f32 %v6365, -1.4531521
        %v6398 = vadd.f32 %v6366, -1.4531521
        %v6399 = vadd.f32 %v6367, -1.4531521
        %v6400 = vadd.f32 %v6368, -1.4531521
        %v6401 = vadd.f32 %v6369, -1.4531521
        %v6402 = vadd.f32 %v6370, -1.4531521
        %v6403 = vadd.f32 %v6371, -1.4531521
        %v6404 = vadd.f32 %v6372, -1.4531521
        %v6405 = vadd.f32 %v6373, -1.4531521
        %v6406 = vadd.f32 %v6374, -1.4531521
        %v6407 = vadd.f32 %v6375, -1.4531521
        %v6408 = vadd.f32 %v6376, -1.4531521
        %v6409 = vmul.f32 %v6377, %v6313
        %v6410 = vmul.f32 %v6378, %v6314
        %v6411 = vmul.f32 %v6379, %v6315
        %v6412 = vmul.f32 %v6380, %v6316
        %v6413 = vmul.f32 %v6381, %v6317
        %v6414 = vmul.f32 %v6382, %v6318
        %v6415 = vmul.f32 %v6383, %v6319
        %v6416 = vmul.f32 %v6384, %v6320
        %v6417 = vmul.f32 %v6385, %v6321
        %v6418 = vmul.f32 %v6386, %v6322
        %v6419 = vmul.f32 %v6387, %v6323
        %v6420 = vmul.f32 %v6388, %v6324
        %v6421 = vmul.f32 %v6389, %v6325
        %v6422 = vmul.f32 %v6390, %v6326
        %v6423 = vmul.f32 %v6391, %v6327
        %v6424 = vmul.f32 %v6392, %v6328
        %v6425 = vmul.f32 %v6393, %v6329
        %v6426 = vmul.f32 %v6394, %v6330
        %v6427 = vmul.f32 %v6395, %v6331
        %v6428 = vmul.f32 %v6396, %v6332
        %v6429 = vmul.f32 %v6397, %v6333
        %v6430 = vmul.f32 %v6398, %v6334
        %v6431 = vmul.f32 %v6399, %v6335
        %v6432 = vmul.f32 %v6400, %v6336
        %v6433 = vmul.f32 %v6401, %v6337
        %v6434 = vmul.f32 %v6402, %v6338
        %v6435 = vmul.f32 %v6403, %v6339
        %v6436 = vmul.f32 %v6404, %v6340
        %v6437 = vmul.f32 %v6405, %v6341
        %v6438 = vmul.f32 %v6406, %v6342
        %v6439 = vmul.f32 %v6407, %v6343
        %v6440 = vmul.f32 %v6408, %v6344
        %v6441 = vadd.f32 %v6409, 1.4214138
        %v6442 = vadd.f32 %v6410, 1.4214138
        %v6443 = vadd.f32 %v6411, 1.4214138
        %v6444 = vadd.f32 %v6412, 1.4214138
        %v6445 = vadd.f32 %v6413, 1.4214138
        %v6446 = vadd.f32 %v6414, 1.4214138
        %v6447 = vadd.f32 %v6415, 1.4214138
        %v6448 = vadd.f32 %v6416, 1.4214138
        %v6449 = vadd.f32 %v6417, 1.4214138
        %v6450 = vadd.f32 %v6418, 1.4214138
        %v6451 = vadd.f32 %v6419, 1.4214138
        %v6452 = vadd.f32 %v6420, 1.4214138
        %v6453 = vadd.f32 %v6421, 1.4214138
        %v6454 = vadd.f32 %v6422, 1.4214138
        %v6455 = vadd.f32 %v6423, 1.4214138
        %v6456 = vadd.f32 %v6424, 1.4214138
        %v6457 = vadd.f32 %v6425, 1.4214138
        %v6458 = vadd.f32 %v6426, 1.4214138
        %v6459 = vadd.f32 %v6427, 1.4214138
        %v6460 = vadd.f32 %v6428, 1.4214138
        %v6461 = vadd.f32 %v6429, 1.4214138
        %v6462 = vadd.f32 %v6430, 1.4214138
        %v6463 = vadd.f32 %v6431, 1.4214138
        %v6464 = vadd.f32 %v6432, 1.4214138
        %v6465 = vadd.f32 %v6433, 1.4214138
        %v6466 = vadd.f32 %v6434, 1.4214138
        %v6467 = vadd.f32 %v6435, 1.4214138
        %v6468 = vadd.f32 %v6436, 1.4214138
        %v6469 = vadd.f32 %v6437, 1.4214138
        %v6470 = vadd.f32 %v6438, 1.4214138
        %v6471 = vadd.f32 %v6439, 1.4214138
        %v6472 = vadd.f32 %v6440, 1.4214138
        %v6473 = vmul.f32 %v6441, %v6313
        %v6474 = vmul.f32 %v6442, %v6314
        %v6475 = vmul.f32 %v6443, %v6315
        %v6476 = vmul.f32 %v6444, %v6316
        %v6477 = vmul.f32 %v6445, %v6317
        %v6478 = vmul.f32 %v6446, %v6318
        %v6479 = vmul.f32 %v6447, %v6319
        %v6480 = vmul.f32 %v6448, %v6320
        %v6481 = vmul.f32 %v6449, %v6321
        %v6482 = vmul.f32 %v6450, %v6322
        %v6483 = vmul.f32 %v6451, %v6323
        %v6484 = vmul.f32 %v6452, %v6324
        %v6485 = vmul.f32 %v6453, %v6325
        %v6486 = vmul.f32 %v6454, %v6326
        %v6487 = vmul.f32 %v6455, %v6327
        %v6488 = vmul.f32 %v6456, %v6328
        %v6489 = vmul.f32 %v6457, %v6329
        %v6490 = vmul.f32 %v6458, %v6330
        %v6491 = vmul.f32 %v6459, %v6331
        %v6492 = vmul.f32 %v6460, %v6332
        %v6493 = vmul.f32 %v6461, %v6333
        %v6494 = vmul.f32 %v6462, %v6334
        %v6495 = vmul.f32 %v6463, %v6335
        %v6496 = vmul.f32 %v6464, %v6336
        %v6497 = vmul.f32 %v6465, %v6337
        %v6498 = vmul.f32 %v6466, %v6338
        %v6499 = vmul.f32 %v6467, %v6339
        %v6500 = vmul.f32 %v6468, %v6340
        %v6501 = vmul.f32 %v6469, %v6341
        %v6502 = vmul.f32 %v6470, %v6342
        %v6503 = vmul.f32 %v6471, %v6343
        %v6504 = vmul.f32 %v6472, %v6344
        %v6505 = vadd.f32 %v6473, -0.28449672
        %v6506 = vadd.f32 %v6474, -0.28449672
        %v6507 = vadd.f32 %v6475, -0.28449672
        %v6508 = vadd.f32 %v6476, -0.28449672
        %v6509 = vadd.f32 %v6477, -0.28449672
        %v6510 = vadd.f32 %v6478, -0.28449672
        %v6511 = vadd.f32 %v6479, -0.28449672
        %v6512 = vadd.f32 %v6480, -0.28449672
        %v6513 = vadd.f32 %v6481, -0.28449672
        %v6514 = vadd.f32 %v6482, -0.28449672
        %v6515 = vadd.f32 %v6483, -0.28449672
        %v6516 = vadd.f32 %v6484, -0.28449672
        %v6517 = vadd.f32 %v6485, -0.28449672
        %v6518 = vadd.f32 %v6486, -0.28449672
        %v6519 = vadd.f32 %v6487, -0.28449672
        %v6520 = vadd.f32 %v6488, -0.28449672
        %v6521 = vadd.f32 %v6489, -0.28449672
        %v6522 = vadd.f32 %v6490, -0.28449672
        %v6523 = vadd.f32 %v6491, -0.28449672
        %v6524 = vadd.f32 %v6492, -0.28449672
        %v6525 = vadd.f32 %v6493, -0.28449672
        %v6526 = vadd.f32 %v6494, -0.28449672
        %v6527 = vadd.f32 %v6495, -0.28449672
        %v6528 = vadd.f32 %v6496, -0.28449672
        %v6529 = vadd.f32 %v6497, -0.28449672
        %v6530 = vadd.f32 %v6498, -0.28449672
        %v6531 = vadd.f32 %v6499, -0.28449672
        %v6532 = vadd.f32 %v6500, -0.28449672
        %v6533 = vadd.f32 %v6501, -0.28449672
        %v6534 = vadd.f32 %v6502, -0.28449672
        %v6535 = vadd.f32 %v6503, -0.28449672
        %v6536 = vadd.f32 %v6504, -0.28449672
        %v6537 = vmul.f32 %v6505, %v6313
        %v6538 = vmul.f32 %v6506, %v6314
        %v6539 = vmul.f32 %v6507, %v6315
        %v6540 = vmul.f32 %v6508, %v6316
        %v6541 = vmul.f32 %v6509, %v6317
        %v6542 = vmul.f32 %v6510, %v6318
        %v6543 = vmul.f32 %v6511, %v6319
        %v6544 = vmul.f32 %v6512, %v6320
        %v6545 = vmul.f32 %v6513, %v6321
        %v6546 = vmul.f32 %v6514, %v6322
        %v6547 = vmul.f32 %v6515, %v6323
        %v6548 = vmul.f32 %v6516, %v6324
        %v6549 = vmul.f32 %v6517, %v6325
        %v6550 = vmul.f32 %v6518, %v6326
        %v6551 = vmul.f32 %v6519, %v6327
        %v6552 = vmul.f32 %v6520, %v6328
        %v6553 = vmul.f32 %v6521, %v6329
        %v6554 = vmul.f32 %v6522, %v6330
        %v6555 = vmul.f32 %v6523, %v6331
        %v6556 = vmul.f32 %v6524, %v6332
        %v6557 = vmul.f32 %v6525, %v6333
        %v6558 = vmul.f32 %v6526, %v6334
        %v6559 = vmul.f32 %v6527, %v6335
        %v6560 = vmul.f32 %v6528, %v6336
        %v6561 = vmul.f32 %v6529, %v6337
        %v6562 = vmul.f32 %v6530, %v6338
        %v6563 = vmul.f32 %v6531, %v6339
        %v6564 = vmul.f32 %v6532, %v6340
        %v6565 = vmul.f32 %v6533, %v6341
        %v6566 = vmul.f32 %v6534, %v6342
        %v6567 = vmul.f32 %v6535, %v6343
        %v6568 = vmul.f32 %v6536, %v6344
        %v6569 = vadd.f32 %v6537, 0.2548296
        %v6570 = vadd.f32 %v6538, 0.2548296
        %v6571 = vadd.f32 %v6539, 0.2548296
        %v6572 = vadd.f32 %v6540, 0.2548296
        %v6573 = vadd.f32 %v6541, 0.2548296
        %v6574 = vadd.f32 %v6542, 0.2548296
        %v6575 = vadd.f32 %v6543, 0.2548296
        %v6576 = vadd.f32 %v6544, 0.2548296
        %v6577 = vadd.f32 %v6545, 0.2548296
        %v6578 = vadd.f32 %v6546, 0.2548296
        %v6579 = vadd.f32 %v6547, 0.2548296
        %v6580 = vadd.f32 %v6548, 0.2548296
        %v6581 = vadd.f32 %v6549, 0.2548296
        %v6582 = vadd.f32 %v6550, 0.2548296
        %v6583 = vadd.f32 %v6551, 0.2548296
        %v6584 = vadd.f32 %v6552, 0.2548296
        %v6585 = vadd.f32 %v6553, 0.2548296
        %v6586 = vadd.f32 %v6554, 0.2548296
        %v6587 = vadd.f32 %v6555, 0.2548296
        %v6588 = vadd.f32 %v6556, 0.2548296
        %v6589 = vadd.f32 %v6557, 0.2548296
        %v6590 = vadd.f32 %v6558, 0.2548296
        %v6591 = vadd.f32 %v6559, 0.2548296
        %v6592 = vadd.f32 %v6560, 0.2548296
        %v6593 = vadd.f32 %v6561, 0.2548296
        %v6594 = vadd.f32 %v6562, 0.2548296
        %v6595 = vadd.f32 %v6563, 0.2548296
        %v6596 = vadd.f32 %v6564, 0.2548296
        %v6597 = vadd.f32 %v6565, 0.2548296
        %v6598 = vadd.f32 %v6566, 0.2548296
        %v6599 = vadd.f32 %v6567, 0.2548296
        %v6600 = vadd.f32 %v6568, 0.2548296
        %v6601 = vmul.f32 %v6569, %v6313
        %v6602 = vmul.f32 %v6570, %v6314
        %v6603 = vmul.f32 %v6571, %v6315
        %v6604 = vmul.f32 %v6572, %v6316
        %v6605 = vmul.f32 %v6573, %v6317
        %v6606 = vmul.f32 %v6574, %v6318
        %v6607 = vmul.f32 %v6575, %v6319
        %v6608 = vmul.f32 %v6576, %v6320
        %v6609 = vmul.f32 %v6577, %v6321
        %v6610 = vmul.f32 %v6578, %v6322
        %v6611 = vmul.f32 %v6579, %v6323
        %v6612 = vmul.f32 %v6580, %v6324
        %v6613 = vmul.f32 %v6581, %v6325
        %v6614 = vmul.f32 %v6582, %v6326
        %v6615 = vmul.f32 %v6583, %v6327
        %v6616 = vmul.f32 %v6584, %v6328
        %v6617 = vmul.f32 %v6585, %v6329
        %v6618 = vmul.f32 %v6586, %v6330
        %v6619 = vmul.f32 %v6587, %v6331
        %v6620 = vmul.f32 %v6588, %v6332
        %v6621 = vmul.f32 %v6589, %v6333
        %v6622 = vmul.f32 %v6590, %v6334
        %v6623 = vmul.f32 %v6591, %v6335
        %v6624 = vmul.f32 %v6592, %v6336
        %v6625 = vmul.f32 %v6593, %v6337
        %v6626 = vmul.f32 %v6594, %v6338
        %v6627 = vmul.f32 %v6595, %v6339
        %v6628 = vmul.f32 %v6596, %v6340
        %v6629 = vmul.f32 %v6597, %v6341
        %v6630 = vmul.f32 %v6598, %v6342
        %v6631 = vmul.f32 %v6599, %v6343
        %v6632 = vmul.f32 %v6600, %v6344
        %v6633 = vsub.f32 0.0, %v6217
        %v6634 = vsub.f32 0.0, %v6218
        %v6635 = vsub.f32 0.0, %v6219
        %v6636 = vsub.f32 0.0, %v6220
        %v6637 = vsub.f32 0.0, %v6221
        %v6638 = vsub.f32 0.0, %v6222
        %v6639 = vsub.f32 0.0, %v6223
        %v6640 = vsub.f32 0.0, %v6224
        %v6641 = vsub.f32 0.0, %v6225
        %v6642 = vsub.f32 0.0, %v6226
        %v6643 = vsub.f32 0.0, %v6227
        %v6644 = vsub.f32 0.0, %v6228
        %v6645 = vsub.f32 0.0, %v6229
        %v6646 = vsub.f32 0.0, %v6230
        %v6647 = vsub.f32 0.0, %v6231
        %v6648 = vsub.f32 0.0, %v6232
        %v6649 = vsub.f32 0.0, %v6233
        %v6650 = vsub.f32 0.0, %v6234
        %v6651 = vsub.f32 0.0, %v6235
        %v6652 = vsub.f32 0.0, %v6236
        %v6653 = vsub.f32 0.0, %v6237
        %v6654 = vsub.f32 0.0, %v6238
        %v6655 = vsub.f32 0.0, %v6239
        %v6656 = vsub.f32 0.0, %v6240
        %v6657 = vsub.f32 0.0, %v6241
        %v6658 = vsub.f32 0.0, %v6242
        %v6659 = vsub.f32 0.0, %v6243
        %v6660 = vsub.f32 0.0, %v6244
        %v6661 = vsub.f32 0.0, %v6245
        %v6662 = vsub.f32 0.0, %v6246
        %v6663 = vsub.f32 0.0, %v6247
        %v6664 = vsub.f32 0.0, %v6248
        %v6665 = vmul.f32 %v6633, %v6217
        %v6666 = vmul.f32 %v6634, %v6218
        %v6667 = vmul.f32 %v6635, %v6219
        %v6668 = vmul.f32 %v6636, %v6220
        %v6669 = vmul.f32 %v6637, %v6221
        %v6670 = vmul.f32 %v6638, %v6222
        %v6671 = vmul.f32 %v6639, %v6223
        %v6672 = vmul.f32 %v6640, %v6224
        %v6673 = vmul.f32 %v6641, %v6225
        %v6674 = vmul.f32 %v6642, %v6226
        %v6675 = vmul.f32 %v6643, %v6227
        %v6676 = vmul.f32 %v6644, %v6228
        %v6677 = vmul.f32 %v6645, %v6229
        %v6678 = vmul.f32 %v6646, %v6230
        %v6679 = vmul.f32 %v6647, %v6231
        %v6680 = vmul.f32 %v6648, %v6232
        %v6681 = vmul.f32 %v6649, %v6233
        %v6682 = vmul.f32 %v6650, %v6234
        %v6683 = vmul.f32 %v6651, %v6235
        %v6684 = vmul.f32 %v6652, %v6236
        %v6685 = vmul.f32 %v6653, %v6237
        %v6686 = vmul.f32 %v6654, %v6238
        %v6687 = vmul.f32 %v6655, %v6239
        %v6688 = vmul.f32 %v6656, %v6240
        %v6689 = vmul.f32 %v6657, %v6241
        %v6690 = vmul.f32 %v6658, %v6242
        %v6691 = vmul.f32 %v6659, %v6243
        %v6692 = vmul.f32 %v6660, %v6244
        %v6693 = vmul.f32 %v6661, %v6245
        %v6694 = vmul.f32 %v6662, %v6246
        %v6695 = vmul.f32 %v6663, %v6247
        %v6696 = vmul.f32 %v6664, %v6248
        %v6697 = vmul.f32 %v6665, 1.442695
        %v6698 = vpow.pop %v6697
        %v6699 = vmul.f32 %v6666, 1.442695
        %v6700 = vpow.pop %v6699
        %v6701 = vmul.f32 %v6667, 1.442695
        %v6702 = vpow.pop %v6701
        %v6703 = vmul.f32 %v6668, 1.442695
        %v6704 = vpow.pop %v6703
        %v6705 = vmul.f32 %v6669, 1.442695
        %v6706 = vpow.pop %v6705
        %v6707 = vmul.f32 %v6670, 1.442695
        %v6708 = vpow.pop %v6707
        %v6709 = vmul.f32 %v6671, 1.442695
        %v6710 = vpow.pop %v6709
        %v6711 = vmul.f32 %v6672, 1.442695
        %v6712 = vpow.pop %v6711
        %v6713 = vmul.f32 %v6673, 1.442695
        %v6714 = vpow.pop %v6713
        %v6715 = vmul.f32 %v6674, 1.442695
        %v6716 = vpow.pop %v6715
        %v6717 = vmul.f32 %v6675, 1.442695
        %v6718 = vpow.pop %v6717
        %v6719 = vmul.f32 %v6676, 1.442695
        %v6720 = vpow.pop %v6719
        %v6721 = vmul.f32 %v6677, 1.442695
        %v6722 = vpow.pop %v6721
        %v6723 = vmul.f32 %v6678, 1.442695
        %v6724 = vpow.pop %v6723
        %v6725 = vmul.f32 %v6679, 1.442695
        %v6726 = vpow.pop %v6725
        %v6727 = vmul.f32 %v6680, 1.442695
        %v6728 = vpow.pop %v6727
        %v6729 = vmul.f32 %v6681, 1.442695
        %v6730 = vpow.pop %v6729
        %v6731 = vmul.f32 %v6682, 1.442695
        %v6732 = vpow.pop %v6731
        %v6733 = vmul.f32 %v6683, 1.442695
        %v6734 = vpow.pop %v6733
        %v6735 = vmul.f32 %v6684, 1.442695
        %v6736 = vpow.pop %v6735
        %v6737 = vmul.f32 %v6685, 1.442695
        %v6738 = vpow.pop %v6737
        %v6739 = vmul.f32 %v6686, 1.442695
        %v6740 = vpow.pop %v6739
        %v6741 = vmul.f32 %v6687, 1.442695
        %v6742 = vpow.pop %v6741
        %v6743 = vmul.f32 %v6688, 1.442695
        %v6744 = vpow.pop %v6743
        %v6745 = vmul.f32 %v6689, 1.442695
        %v6746 = vpow.pop %v6745
        %v6747 = vmul.f32 %v6690, 1.442695
        %v6748 = vpow.pop %v6747
        %v6749 = vmul.f32 %v6691, 1.442695
        %v6750 = vpow.pop %v6749
        %v6751 = vmul.f32 %v6692, 1.442695
        %v6752 = vpow.pop %v6751
        %v6753 = vmul.f32 %v6693, 1.442695
        %v6754 = vpow.pop %v6753
        %v6755 = vmul.f32 %v6694, 1.442695
        %v6756 = vpow.pop %v6755
        %v6757 = vmul.f32 %v6695, 1.442695
        %v6758 = vpow.pop %v6757
        %v6759 = vmul.f32 %v6696, 1.442695
        %v6760 = vpow.pop %v6759
        %v6761 = vmul.f32 %v6601, %v6698
        %v6762 = vmul.f32 %v6602, %v6700
        %v6763 = vmul.f32 %v6603, %v6702
        %v6764 = vmul.f32 %v6604, %v6704
        %v6765 = vmul.f32 %v6605, %v6706
        %v6766 = vmul.f32 %v6606, %v6708
        %v6767 = vmul.f32 %v6607, %v6710
        %v6768 = vmul.f32 %v6608, %v6712
        %v6769 = vmul.f32 %v6609, %v6714
        %v6770 = vmul.f32 %v6610, %v6716
        %v6771 = vmul.f32 %v6611, %v6718
        %v6772 = vmul.f32 %v6612, %v6720
        %v6773 = vmul.f32 %v6613, %v6722
        %v6774 = vmul.f32 %v6614, %v6724
        %v6775 = vmul.f32 %v6615, %v6726
        %v6776 = vmul.f32 %v6616, %v6728
        %v6777 = vmul.f32 %v6617, %v6730
        %v6778 = vmul.f32 %v6618, %v6732
        %v6779 = vmul.f32 %v6619, %v6734
        %v6780 = vmul.f32 %v6620, %v6736
        %v6781 = vmul.f32 %v6621, %v6738
        %v6782 = vmul.f32 %v6622, %v6740
        %v6783 = vmul.f32 %v6623, %v6742
        %v6784 = vmul.f32 %v6624, %v6744
        %v6785 = vmul.f32 %v6625, %v6746
        %v6786 = vmul.f32 %v6626, %v6748
        %v6787 = vmul.f32 %v6627, %v6750
        %v6788 = vmul.f32 %v6628, %v6752
        %v6789 = vmul.f32 %v6629, %v6754
        %v6790 = vmul.f32 %v6630, %v6756
        %v6791 = vmul.f32 %v6631, %v6758
        %v6792 = vmul.f32 %v6632, %v6760
        %v6793 = vsub.f32 1.0, %v6761
        %v6794 = vsub.f32 1.0, %v6762
        %v6795 = vsub.f32 1.0, %v6763
        %v6796 = vsub.f32 1.0, %v6764
        %v6797 = vsub.f32 1.0, %v6765
        %v6798 = vsub.f32 1.0, %v6766
        %v6799 = vsub.f32 1.0, %v6767
        %v6800 = vsub.f32 1.0, %v6768
        %v6801 = vsub.f32 1.0, %v6769
        %v6802 = vsub.f32 1.0, %v6770
        %v6803 = vsub.f32 1.0, %v6771
        %v6804 = vsub.f32 1.0, %v6772
        %v6805 = vsub.f32 1.0, %v6773
        %v6806 = vsub.f32 1.0, %v6774
        %v6807 = vsub.f32 1.0, %v6775
        %v6808 = vsub.f32 1.0, %v6776
        %v6809 = vsub.f32 1.0, %v6777
        %v6810 = vsub.f32 1.0, %v6778
        %v6811 = vsub.f32 1.0, %v6779
        %v6812 = vsub.f32 1.0, %v6780
        %v6813 = vsub.f32 1.0, %v6781
        %v6814 = vsub.f32 1.0, %v6782
        %v6815 = vsub.f32 1.0, %v6783
        %v6816 = vsub.f32 1.0, %v6784
        %v6817 = vsub.f32 1.0, %v6785
        %v6818 = vsub.f32 1.0, %v6786
        %v6819 = vsub.f32 1.0, %v6787
        %v6820 = vsub.f32 1.0, %v6788
        %v6821 = vsub.f32 1.0, %v6789
        %v6822 = vsub.f32 1.0, %v6790
        %v6823 = vsub.f32 1.0, %v6791
        %v6824 = vsub.f32 1.0, %v6792
        %vm6825 = vcmp.ge.f32.partialorder %v6185, 0.0
        %vm6826 = vcmp.ge.f32.partialorder %v6186, 0.0
        %vm6827 = vcmp.ge.f32.partialorder %v6187, 0.0
        %vm6828 = vcmp.ge.f32.partialorder %v6188, 0.0
        %vm6829 = vcmp.ge.f32.partialorder %v6189, 0.0
        %vm6830 = vcmp.ge.f32.partialorder %v6190, 0.0
        %vm6831 = vcmp.ge.f32.partialorder %v6191, 0.0
        %vm6832 = vcmp.ge.f32.partialorder %v6192, 0.0
        %vm6833 = vcmp.ge.f32.partialorder %v6193, 0.0
        %vm6834 = vcmp.ge.f32.partialorder %v6194, 0.0
        %vm6835 = vcmp.ge.f32.partialorder %v6195, 0.0
        %vm6836 = vcmp.ge.f32.partialorder %v6196, 0.0
        %vm6837 = vcmp.ge.f32.partialorder %v6197, 0.0
        %vm6838 = vcmp.ge.f32.partialorder %v6198, 0.0
        %vm6839 = vcmp.ge.f32.partialorder %v6199, 0.0
        %vm6840 = vcmp.ge.f32.partialorder %v6200, 0.0
        %vm6841 = vcmp.ge.f32.partialorder %v6201, 0.0
        %vm6842 = vcmp.ge.f32.partialorder %v6202, 0.0
        %vm6843 = vcmp.ge.f32.partialorder %v6203, 0.0
        %vm6844 = vcmp.ge.f32.partialorder %v6204, 0.0
        %vm6845 = vcmp.ge.f32.partialorder %v6205, 0.0
        %vm6846 = vcmp.ge.f32.partialorder %v6206, 0.0
        %vm6847 = vcmp.ge.f32.partialorder %v6207, 0.0
        %vm6848 = vcmp.ge.f32.partialorder %v6208, 0.0
        %vm6849 = vcmp.ge.f32.partialorder %v6209, 0.0
        %vm6850 = vcmp.ge.f32.partialorder %v6210, 0.0
        %vm6851 = vcmp.ge.f32.partialorder %v6211, 0.0
        %vm6852 = vcmp.ge.f32.partialorder %v6212, 0.0
        %vm6853 = vcmp.ge.f32.partialorder %v6213, 0.0
        %vm6854 = vcmp.ge.f32.partialorder %v6214, 0.0
        %vm6855 = vcmp.ge.f32.partialorder %v6215, 0.0
        %vm6856 = vcmp.ge.f32.partialorder %v6216, 0.0
        %v6857 = vsub.f32 0.0, %v6793
        %v6858 = vsub.f32 0.0, %v6794
        %v6859 = vsub.f32 0.0, %v6795
        %v6860 = vsub.f32 0.0, %v6796
        %v6861 = vsub.f32 0.0, %v6797
        %v6862 = vsub.f32 0.0, %v6798
        %v6863 = vsub.f32 0.0, %v6799
        %v6864 = vsub.f32 0.0, %v6800
        %v6865 = vsub.f32 0.0, %v6801
        %v6866 = vsub.f32 0.0, %v6802
        %v6867 = vsub.f32 0.0, %v6803
        %v6868 = vsub.f32 0.0, %v6804
        %v6869 = vsub.f32 0.0, %v6805
        %v6870 = vsub.f32 0.0, %v6806
        %v6871 = vsub.f32 0.0, %v6807
        %v6872 = vsub.f32 0.0, %v6808
        %v6873 = vsub.f32 0.0, %v6809
        %v6874 = vsub.f32 0.0, %v6810
        %v6875 = vsub.f32 0.0, %v6811
        %v6876 = vsub.f32 0.0, %v6812
        %v6877 = vsub.f32 0.0, %v6813
        %v6878 = vsub.f32 0.0, %v6814
        %v6879 = vsub.f32 0.0, %v6815
        %v6880 = vsub.f32 0.0, %v6816
        %v6881 = vsub.f32 0.0, %v6817
        %v6882 = vsub.f32 0.0, %v6818
        %v6883 = vsub.f32 0.0, %v6819
        %v6884 = vsub.f32 0.0, %v6820
        %v6885 = vsub.f32 0.0, %v6821
        %v6886 = vsub.f32 0.0, %v6822
        %v6887 = vsub.f32 0.0, %v6823
        %v6888 = vsub.f32 0.0, %v6824
        %v6889 = vsel %vm6825, %v6793, %v6857
        %v6890 = vsel %vm6826, %v6794, %v6858
        %v6891 = vsel %vm6827, %v6795, %v6859
        %v6892 = vsel %vm6828, %v6796, %v6860
        %v6893 = vsel %vm6829, %v6797, %v6861
        %v6894 = vsel %vm6830, %v6798, %v6862
        %v6895 = vsel %vm6831, %v6799, %v6863
        %v6896 = vsel %vm6832, %v6800, %v6864
        %v6897 = vsel %vm6833, %v6801, %v6865
        %v6898 = vsel %vm6834, %v6802, %v6866
        %v6899 = vsel %vm6835, %v6803, %v6867
        %v6900 = vsel %vm6836, %v6804, %v6868
        %v6901 = vsel %vm6837, %v6805, %v6869
        %v6902 = vsel %vm6838, %v6806, %v6870
        %v6903 = vsel %vm6839, %v6807, %v6871
        %v6904 = vsel %vm6840, %v6808, %v6872
        %v6905 = vsel %vm6841, %v6809, %v6873
        %v6906 = vsel %vm6842, %v6810, %v6874
        %v6907 = vsel %vm6843, %v6811, %v6875
        %v6908 = vsel %vm6844, %v6812, %v6876
        %v6909 = vsel %vm6845, %v6813, %v6877
        %v6910 = vsel %vm6846, %v6814, %v6878
        %v6911 = vsel %vm6847, %v6815, %v6879
        %v6912 = vsel %vm6848, %v6816, %v6880
        %v6913 = vsel %vm6849, %v6817, %v6881
        %v6914 = vsel %vm6850, %v6818, %v6882
        %v6915 = vsel %vm6851, %v6819, %v6883
        %v6916 = vsel %vm6852, %v6820, %v6884
        %v6917 = vsel %vm6853, %v6821, %v6885
        %v6918 = vsel %vm6854, %v6822, %v6886
        %v6919 = vsel %vm6855, %v6823, %v6887
        %v6920 = vsel %vm6856, %v6824, %v6888
        %v6921 = vadd.f32 %v6889, 1.0
        %v6922 = vadd.f32 %v6890, 1.0
        %v6923 = vadd.f32 %v6891, 1.0
        %v6924 = vadd.f32 %v6892, 1.0
        %v6925 = vadd.f32 %v6893, 1.0
        %v6926 = vadd.f32 %v6894, 1.0
        %v6927 = vadd.f32 %v6895, 1.0
        %v6928 = vadd.f32 %v6896, 1.0
        %v6929 = vadd.f32 %v6897, 1.0
        %v6930 = vadd.f32 %v6898, 1.0
        %v6931 = vadd.f32 %v6899, 1.0
        %v6932 = vadd.f32 %v6900, 1.0
        %v6933 = vadd.f32 %v6901, 1.0
        %v6934 = vadd.f32 %v6902, 1.0
        %v6935 = vadd.f32 %v6903, 1.0
        %v6936 = vadd.f32 %v6904, 1.0
        %v6937 = vadd.f32 %v6905, 1.0
        %v6938 = vadd.f32 %v6906, 1.0
        %v6939 = vadd.f32 %v6907, 1.0
        %v6940 = vadd.f32 %v6908, 1.0
        %v6941 = vadd.f32 %v6909, 1.0
        %v6942 = vadd.f32 %v6910, 1.0
        %v6943 = vadd.f32 %v6911, 1.0
        %v6944 = vadd.f32 %v6912, 1.0
        %v6945 = vadd.f32 %v6913, 1.0
        %v6946 = vadd.f32 %v6914, 1.0
        %v6947 = vadd.f32 %v6915, 1.0
        %v6948 = vadd.f32 %v6916, 1.0
        %v6949 = vadd.f32 %v6917, 1.0
        %v6950 = vadd.f32 %v6918, 1.0
        %v6951 = vadd.f32 %v6919, 1.0
        %v6952 = vadd.f32 %v6920, 1.0
        %v6953 = vmul.f32 %v6153, %v6921
        %v6954 = vmul.f32 %v6154, %v6922
        %v6955 = vmul.f32 %v6155, %v6923
        %v6956 = vmul.f32 %v6156, %v6924
        %v6957 = vmul.f32 %v6157, %v6925
        %v6958 = vmul.f32 %v6158, %v6926
        %v6959 = vmul.f32 %v6159, %v6927
        %v6960 = vmul.f32 %v6160, %v6928
        %v6961 = vmul.f32 %v6161, %v6929
        %v6962 = vmul.f32 %v6162, %v6930
        %v6963 = vmul.f32 %v6163, %v6931
        %v6964 = vmul.f32 %v6164, %v6932
        %v6965 = vmul.f32 %v6165, %v6933
        %v6966 = vmul.f32 %v6166, %v6934
        %v6967 = vmul.f32 %v6167, %v6935
        %v6968 = vmul.f32 %v6168, %v6936
        %v6969 = vmul.f32 %v6169, %v6937
        %v6970 = vmul.f32 %v6170, %v6938
        %v6971 = vmul.f32 %v6171, %v6939
        %v6972 = vmul.f32 %v6172, %v6940
        %v6973 = vmul.f32 %v6173, %v6941
        %v6974 = vmul.f32 %v6174, %v6942
        %v6975 = vmul.f32 %v6175, %v6943
        %v6976 = vmul.f32 %v6176, %v6944
        %v6977 = vmul.f32 %v6177, %v6945
        %v6978 = vmul.f32 %v6178, %v6946
        %v6979 = vmul.f32 %v6179, %v6947
        %v6980 = vmul.f32 %v6180, %v6948
        %v6981 = vmul.f32 %v6181, %v6949
        %v6982 = vmul.f32 %v6182, %v6950
        %v6983 = vmul.f32 %v6183, %v6951
        %v6984 = vmul.f32 %v6184, %v6952
        %v6985 = vld [vmem:[%s5] sm:$0x3]
        %v6986 = vpack.c.bf16 %v6957, %v6953
        %v6987 = vpack.c.bf16 %v6958, %v6954
        %v6988 = vpack.c.bf16 %v6959, %v6955
        %v6989 = vpack.c.bf16 %v6960, %v6956
        %v6990 = vpack.c.bf16 %v6965, %v6961
        %v6991 = vpack.c.bf16 %v6966, %v6962
        %v6992 = vpack.c.bf16 %v6967, %v6963
        %v6993 = vpack.c.bf16 %v6968, %v6964
        %v6994 = vpack.c.bf16 %v6973, %v6969
        %v6995 = vpack.c.bf16 %v6974, %v6970
        %v6996 = vpack.c.bf16 %v6975, %v6971
        %v6997 = vpack.c.bf16 %v6976, %v6972
        %v6998 = vpack.c.bf16 %v6981, %v6977
        %v6999 = vpack.c.bf16 %v6982, %v6978
        %v7000 = vpack.c.bf16 %v6983, %v6979
        %v7001 = vpack.c.bf16 %v6984, %v6980
        %7002 = vset.pattern.permute.xlu0 3
        %7003 = vperm.xlu0 %7002, %v3770
        %v7004 = vpop.permute.xlu0 %7003
        %v7007 = vsel %vm3862, %v6985, 0
        %7009 = vmatprep.subr.bf16.mxu0 %v6987
        %7010 = vmatpush1.bf16.msra.mxu0 %v6986
        %7011 = vmatprep.subr.bf16.mxu0 %v6991
        %7012 = vmatpush1.bf16.msra.mxu0 %v6990
        %7013 = vmatprep.subr.bf16.mxu0 %v6995
        %7014 = vmatpush1.bf16.msra.mxu0 %v6994
        %7015 = vmatprep.subr.bf16.mxu0 %v6999
        %7016 = vmatpush1.bf16.msra.mxu0 %v6998
        %7017 = vmatprep.subr.bf16.mxu0 0
        %7018 = vmatpush1.bf16.msra.mxu0 0
        %7019 = vmatprep.subr.bf16.mxu0 0
        %7020 = vmatpush1.bf16.msra.mxu0 0
        %7021 = vmatprep.subr.bf16.mxu0 0
        %7022 = vmatpush1.bf16.msra.mxu0 0
        %7023 = vmatprep.subr.bf16.mxu0 0
        %7024 = vmatpush1.bf16.msra.mxu0 0
        %7025 = vmatprep.subr.bf16.mxu0 0
        %7026 = vmatpush1.bf16.msra.mxu0 0
        %7027 = vmatprep.subr.bf16.mxu0 0
        %7028 = vmatpush1.bf16.msra.mxu0 0
        %7029 = vmatprep.subr.bf16.mxu0 0
        %7030 = vmatpush1.bf16.msra.mxu0 0
        %7031 = vmatprep.subr.bf16.mxu0 0
        %7032 = vmatpush1.bf16.msra.mxu0 0
        %7033 = vmatprep.subr.bf16.mxu0 0
        %7034 = vmatpush1.bf16.msra.mxu0 0
        %7035 = vmatprep.subr.bf16.mxu0 0
        %7036 = vmatpush1.bf16.msra.mxu0 0
        %7037 = vmatprep.subr.bf16.mxu0 0
        %7038 = vmatpush1.bf16.msra.mxu0 0
        %7039 = vmatprep.subr.bf16.mxu0 0
        %7040 = vmatpush1.bf16.msra.mxu0 0
        %7041 = vmatprep.mubr.bf16.mxu0 0
        %7042 = vmatmul.mubr.bf16.gmra.mrb[0].mxu0 %v7007
        %v7043 = vpop.f32.mrb[0].mxu0
        %v7044 = vadd.f32 %v7004, %v7043
        %v7045 = vpop.f32.mrb[0].mxu0
        %v7046 = vadd.f32 %v7004, %v7045
        %v7047 = vpop.f32.mrb[0].mxu0
        %v7048 = vpop.f32.mrb[0].mxu0
        %7049 = vdwg.mxu0
        %7050 = vmatprep.subr.bf16.mxu0 %v6989
        %7051 = vmatpush1.bf16.msra.mxu0 %v6988
        %7052 = vmatprep.subr.bf16.mxu0 %v6993
        %7053 = vmatpush1.bf16.msra.mxu0 %v6992
        %7054 = vmatprep.subr.bf16.mxu0 %v6997
        %7055 = vmatpush1.bf16.msra.mxu0 %v6996
        %7056 = vmatprep.subr.bf16.mxu0 %v7001
        %7057 = vmatpush1.bf16.msra.mxu0 %v7000
        %7058 = vmatprep.subr.bf16.mxu0 0
        %7059 = vmatpush1.bf16.msra.mxu0 0
        %7060 = vmatprep.subr.bf16.mxu0 0
        %7061 = vmatpush1.bf16.msra.mxu0 0
        %7062 = vmatprep.subr.bf16.mxu0 0
        %7063 = vmatpush1.bf16.msra.mxu0 0
        %7064 = vmatprep.subr.bf16.mxu0 0
        %7065 = vmatpush1.bf16.msra.mxu0 0
        %7066 = vmatprep.subr.bf16.mxu0 0
        %7067 = vmatpush1.bf16.msra.mxu0 0
        %7068 = vmatprep.subr.bf16.mxu0 0
        %7069 = vmatpush1.bf16.msra.mxu0 0
        %7070 = vmatprep.subr.bf16.mxu0 0
        %7071 = vmatpush1.bf16.msra.mxu0 0
        %7072 = vmatprep.subr.bf16.mxu0 0
        %7073 = vmatpush1.bf16.msra.mxu0 0
        %7074 = vmatprep.subr.bf16.mxu0 0
        %7075 = vmatpush1.bf16.msra.mxu0 0
        %7076 = vmatprep.subr.bf16.mxu0 0
        %7077 = vmatpush1.bf16.msra.mxu0 0
        %7078 = vmatprep.subr.bf16.mxu0 0
        %7079 = vmatpush1.bf16.msra.mxu0 0
        %7080 = vmatprep.subr.bf16.mxu0 0
        %7081 = vmatpush1.bf16.msra.mxu0 0
        %7082 = vmatprep.mubr.bf16.mxu0 0
        %7083 = vmatmul.mubr.bf16.gmra.mrb[0].mxu0 %v7007
        %v7084 = vpop.f32.mrb[0].mxu0
        %v7085 = vadd.f32 %v7004, %v7084
        %v7086 = vpop.f32.mrb[0].mxu0
        %v7087 = vadd.f32 %v7004, %v7086
        %v7088 = vpop.f32.mrb[0].mxu0
        %v7089 = vpop.f32.mrb[0].mxu0
        %7090 = vdwg.mxu0
        %v7091 = vxor.u32 %v7044, 2147483648
        %v7092 = vxor.u32 %v7046, 2147483648
        %v7093 = vxor.u32 %v7085, 2147483648
        %v7094 = vxor.u32 %v7087, 2147483648
        %v7095 = vmul.f32 %v7091, 1.442695
        %v7096 = vpow.pop %v7095
        %v7097 = vmul.f32 %v7092, 1.442695
        %v7098 = vpow.pop %v7097
        %v7099 = vmul.f32 %v7093, 1.442695
        %v7100 = vpow.pop %v7099
        %v7101 = vmul.f32 %v7094, 1.442695
        %v7102 = vpow.pop %v7101
        %v7103 = vadd.f32 %v7096, 1.0
        %v7104 = vadd.f32 %v7098, 1.0
        %v7105 = vadd.f32 %v7100, 1.0
        %v7106 = vadd.f32 %v7102, 1.0
        %v7107 = vrcp.pop %v7103
        %v7108 = vmul.f32 1.0, %v7107
        %v7109 = vrcp.pop %v7104
        %v7110 = vmul.f32 1.0, %v7109
        %v7111 = vrcp.pop %v7105
        %v7112 = vmul.f32 1.0, %v7111
        %v7113 = vrcp.pop %v7106
        %v7114 = vmul.f32 1.0, %v7113
        %v7119 = vcombine.low %v7108, %v7110
        %v7120 = vcombine.low %v7112, %v7114
        %7123 = vst [vmem:[%s287] sm:$0x77] %v7119
        %7124 = vst [vmem:[%s287 + $0x8] sm:$0x77] %v7120
        %s7125 = sand.u32 %s182, 1
        %s7126 = scalar_lea.sflag [#allocation4], %s7125
        %s7127 = sand.u32 %s182, 1
        %s7128 = smul.addr %s7127, 16
        %s7129 = scalar_lea.vmem [#allocation5], %s7128
        // Predicated region
        $region53: #{tpu_custom_call.1} parent=47 // pred_check
          %p7130 = pneg %p192
        $region54: #{tpu_custom_call.1} parent=47 // pred_check_branch
          %7132 = sbr.rel (%p7130) target = $region56
        $region55: #{tpu_custom_call.1} parent=47 // pred_region
          %s7133 = smul.u32 4, %s22
          %s7135 = ssub.s32 256, 256
          %7136 = vsyncadd %s7126, %s7135
          %s7137 = smul.addr %s7133, 64
          %s7138 = scalar_lea.hbm %s7, %s7137
          %s7140 = sshll.u32 %s7129, 4
          %s7141 = int_to_ptr.vmem [resolvable:$true] %s7140
          %7143 = dma.vmem_to_hbm [thread:$0]  %s7141, 256, %s7138, %s7126
        $region56: #{tpu_custom_call.1} parent=47 // pred_fallthru
          _
      $region48: #{tpu_custom_call.1} parent=5 // pred_fallthru
        _
      %p7144 = scmp.le.s32.totalorder 2, %s17
      // Predicated region
      $region57: #{tpu_custom_call.1} parent=5 // pred_check
        %p7145 = pneg %p7144
      $region58: #{tpu_custom_call.1} parent=5 // pred_check_branch
        %7147 = sbr.rel (%p7145) target = $region60
      $region59: #{tpu_custom_call.1} parent=5 // pred_region
        %s7148 = ssub.s32 %s17, 2
        // Predicated region
        $region61: #{tpu_custom_call.1} parent=59 // pred_check
          %p7149 = pneg %p198
        $region62: #{tpu_custom_call.1} parent=59 // pred_check_branch
          %7151 = sbr.rel (%p7149) target = $region64
        $region63: #{tpu_custom_call.1} parent=59 // pred_region
          %s7152 = sand.u32 %s183, 1
          %s7153 = scalar_lea.sflag [#allocation4], %s7152
          %s7154 = sand.u32 %s183, 1
          %s7155 = smul.addr %s7154, 16
          %s7156 = scalar_lea.vmem [#allocation5], %s7155
          %7157 = dma.done %s7153, 256
        $region64: #{tpu_custom_call.1} parent=59 // pred_fallthru
          _
      $region60: #{tpu_custom_call.1} parent=5 // pred_fallthru
        _
    $region6: #{tpu_custom_call.1} parent=1 // loop_footer
      %s21 = sadd.s32 1, %s17
    $region7: #{tpu_custom_call.1} parent=1 // loop_footer_branch
      %16 = sbr.rel target = $region3
    $region8: #{tpu_custom_call.1} parent=1 // loop_exit
      _
    %7158 = vsyncpa [#allocation3], 1
    %s7159 = scalar_lea.sflag [#allocation3], 1
    %7160 = vsyncpa %s7159, 1
    %7161 = vsyncpa [#allocation4], 1
    %s7162 = scalar_lea.sflag [#allocation4], 1
    %7163 = vsyncpa %s7162, 1

</llo_original>
